<compile_context>
chip_gen: v7x
topology: tpu7x:2x2x1
jax: 0.10.0
libtpu: 0.0.40
codegen_flags: <defaults>
</compile_context>

<pallas_src>
import functools

import jax
import jax.numpy as jnp
from jax import lax
from jax.experimental import pallas as pl
from jax.experimental.pallas import tpu as pltpu

BN_EPS = 1e-5


def _mod(x, n):
    # n is a Python int; the power-of-two case avoids integer vector division on the VPU.
    if n & (n - 1) == 0:
        return x & (n - 1)
    return x % n


# ----------------------------------------------------------------------------
# Fused kernel: conv1+bn1+relu -> conv2+bn2 -> SE gate -> +residual -> relu
# One grid step = one chunk of images, batch flattened into the matmul M dim.
# ----------------------------------------------------------------------------
def _se_block_kernel(x_ref, w1_ref, sc1_ref, sh1_ref, w2_ref, sc2_ref, sh2_ref,
                     sew1_ref, sew2_ref, out_ref, pad1_ref, pad2_ref,
                     *, H, W, chunk, guard):
    f32 = jnp.float32
    bf16 = jnp.bfloat16
    HW = H * W
    M = chunk * HW
    Cin = x_ref.shape[1]

    xv = x_ref[...]                                   # (M, Cin) f32
    # Interior of the guard-row scratch; guard rows are never consumed unmasked, so they
    # are left uninitialized (no per-step zero fill, no double write of the interior).
    pad1_ref[guard:guard + M, :] = xv

    # Border-validity masks, computed once and shared by both convs (shape (M, 1)).
    ridx = lax.broadcasted_iota(jnp.int32, (M, 1), 0)
    pos = _mod(ridx, HW)                              # position of the row inside its image
    col = _mod(ridx, W)                               # column inside its image row
    h_ok = {-1: pos >= W, 0: None, 1: pos < HW - W}
    w_ok = {-1: col >= 1, 0: None, 1: col < W - 1}

    def conv3x3(pad_ref, w_ref, center):
        # 3x3 conv as 9 sublane-shifted taps of the 2-D (M, C) activation; each tap is a
        # bf16 MXU matmul with f32 accumulation.  Out-of-image rows (H/W borders and the
        # wrap between images of the chunk) are zeroed with jnp.where before the matmul.
        acc = None
        k = 0
        for dh in (-1, 0, 1):
            for dw in (-1, 0, 1):
                if dh == 0 and dw == 0:
                    tap = center                      # reuse the in-register value
                else:
                    off = guard + dh * W + dw
                    tap = pad_ref[off:off + M, :]
                    m = h_ok[dh]
                    if w_ok[dw] is not None:
                        m = w_ok[dw] if m is None else (m & w_ok[dw])
                    tap = jnp.where(m, tap, 0.0)
                d = jnp.dot(tap.astype(bf16), w_ref[k], preferred_element_type=f32)
                acc = d if acc is None else acc + d
                k += 1
        return acc

    # ---- conv1 + bn1 + relu  (dropout p=0 == identity) -------------------------------
    y1 = conv3x3(pad1_ref, w1_ref, xv)
    y1 = jnp.maximum(y1 * sc1_ref[...] + sh1_ref[...], 0.0)        # (M, planes) f32

    # ---- conv2 + bn2 ------------------------------------------------------------------
    pad2_ref[guard:guard + M, :] = y1
    y2 = conv3x3(pad2_ref, w2_ref, y1)
    y2 = y2 * sc2_ref[...] + sh2_ref[...]                          # (M, Cin) f32

    # ---- SE gate (per image) + residual + final relu ----------------------------------
    # Pooling/broadcast as reshape reduce/broadcast (leading-dim splits are layout no-ops
    # since HW is a multiple of 8); the sublane reduce runs on the XLU.
    y3 = y2.reshape(chunk, HW, Cin)
    pooled = jnp.sum(y3, axis=1) * (1.0 / HW)                      # (chunk, Cin)
    hid = jnp.maximum(jnp.dot(pooled, sew1_ref[...], preferred_element_type=f32), 0.0)
    logits = jnp.dot(hid, sew2_ref[...], preferred_element_type=f32)
    gate = pl.reciprocal(1.0 + jnp.exp(-logits), approx=False)     # sigmoid, (chunk, Cin)

    out3 = jnp.maximum(y3 * gate[:, None, :] + xv.reshape(chunk, HW, Cin), 0.0)
    out_ref[...] = out3.reshape(M, Cin).astype(out_ref.dtype)


def _pick_num_chunks(B, per_image_bytes):
    """Fewest grid steps whose per-chunk footprint fits a conservative VMEM budget."""
    budget = 20 * 1024 * 1024          # headroom vs 32 MiB default scoped VMEM (v6e/v7x)
    nc = 1
    while nc < B and B % (2 * nc) == 0 and (B // nc) * per_image_bytes > budget:
        nc *= 2
    # At real batch sizes use >=4 steps so the in/out DMAs pipeline behind compute and
    # both v7x TensorCores get work; tiny batches stay at one step (extra grid steps are
    # pure ~0.35us overhead on single-TC v5e/v6e).
    if B >= 16:
        while nc < 4 and B % (2 * nc) == 0:
            nc *= 2
    return nc


def fused_se_block(x_nhwc, p):
    """relu(SE(bn2(conv2(relu(bn1(conv1(x)))))) + x) on an NHWC batch, one pallas_call."""
    B, H, W, Cin = x_nhwc.shape
    planes = p["w1"].shape[-1]
    hidden = p["se_w1"].shape[-1]
    HW = H * W

    # Fold inference BatchNorm (+ conv bias) into per-channel scale/shift.
    inv1 = p["g1"] / jnp.sqrt(p["v1"] + BN_EPS)
    sc1, sh1 = inv1, p["beta1"] + (p["b1"] - p["m1"]) * inv1
    inv2 = p["g2"] / jnp.sqrt(p["v2"] + BN_EPS)
    sc2, sh2 = inv2, p["beta2"] + (p["b2"] - p["m2"]) * inv2

    # bf16 MXU operands (f32 accumulation in-kernel); tap k = 3*(dh+1) + (dw+1), matching
    # the kernel loop order.
    w1 = p["w1"].reshape(9, Cin, planes).astype(jnp.bfloat16)
    w2 = p["w2"].reshape(9, planes, Cin).astype(jnp.bfloat16)

    # Rough per-image VMEM bytes: double-buffered lane-padded in/out blocks, the two
    # guard-row scratches, and a handful of live f32 (HW, C) temporaries.
    per_image = HW * 4 * (4 * 128 + (Cin + planes) + 8 * max(Cin, planes))
    num_chunks = _pick_num_chunks(B, per_image)
    chunk = B // num_chunks
    M = chunk * HW
    guard = ((W + 1 + 7) // 8) * 8          # sublane-aligned guard band, >= W+1 rows
    assert M % 8 == 0

    x2d = x_nhwc.reshape(B * HW, Cin)       # free metadata reshape (NHWC is contiguous)

    kernel = functools.partial(_se_block_kernel, H=H, W=W, chunk=chunk, guard=guard)
    vmem_limit = int(min(64 << 20, max(16 << 20, 3 * chunk * per_image)))

    out2d = pl.pallas_call(
        kernel,
        out_shape=jax.ShapeDtypeStruct((B * HW, Cin), x_nhwc.dtype),
        grid_spec=pltpu.PrefetchScalarGridSpec(
            num_scalar_prefetch=0,
            grid=(num_chunks,),
            in_specs=[
                pl.BlockSpec((M, Cin), lambda i: (i, 0)),
                pl.BlockSpec((9, Cin, planes), lambda i: (0, 0, 0)),
                pl.BlockSpec((1, planes), lambda i: (0, 0)),
                pl.BlockSpec((1, planes), lambda i: (0, 0)),
                pl.BlockSpec((9, planes, Cin), lambda i: (0, 0, 0)),
                pl.BlockSpec((1, Cin), lambda i: (0, 0)),
                pl.BlockSpec((1, Cin), lambda i: (0, 0)),
                pl.BlockSpec((Cin, hidden), lambda i: (0, 0)),
                pl.BlockSpec((hidden, Cin), lambda i: (0, 0)),
            ],
            out_specs=pl.BlockSpec((M, Cin), lambda i: (i, 0)),
            scratch_shapes=[
                pltpu.VMEM((M + 2 * guard, Cin), jnp.float32),     # conv1 guard-row slab
                pltpu.VMEM((M + 2 * guard, planes), jnp.float32),  # conv2 guard-row slab
            ],
        ),
        compiler_params=pltpu.CompilerParams(
            dimension_semantics=("parallel",),
            vmem_limit_bytes=vmem_limit,
        ),
    )(x2d, w1, sc1.reshape(1, planes), sh1.reshape(1, planes),
      w2, sc2.reshape(1, Cin), sh2.reshape(1, Cin),
      p["se_w1"], p["se_w2"])
    return out2d.reshape(B, H, W, Cin)


# ----------------------------------------------------------------------------
# ConvBlock(block_name='se') forward
# ----------------------------------------------------------------------------
def conv_block_se_forward(x_bnchw, params):
    b, n, c, h, w = x_bnchw.shape
    # 'b n c h w -> (b n) c h w' is a pure reshape; NCHW -> NHWC is one XLA layout pass.
    x_nhwc = x_bnchw.reshape(b * n, c, h, w).transpose(0, 2, 3, 1)
    out = fused_se_block(x_nhwc, params)
    return out.transpose(0, 3, 1, 2).reshape(b, n, c, h, w)


# ----------------------------------------------------------------------------
# Pure-JAX reference (same math, f32 throughout) for correctness checking
# ----------------------------------------------------------------------------
def _reference_forward(x_bnchw, p):
    b, n, c, h, w = x_bnchw.shape
    xi = x_bnchw.reshape(b * n, c, h, w).transpose(0, 2, 3, 1)

    def conv(z, wk, bias):
        y = jax.lax.conv_general_dilated(
            z, wk, window_strides=(1, 1), padding="SAME",
            dimension_numbers=("NHWC", "HWIO", "NHWC"))
        return y + bias

    def bn(z, g, bta, m, v):
        return (z - m) / jnp.sqrt(v + BN_EPS) * g + bta

    out = jnp.maximum(bn(conv(xi, p["w1"], p["b1"]), p["g1"], p["beta1"], p["m1"], p["v1"]), 0.0)
    out = bn(conv(out, p["w2"], p["b2"]), p["g2"], p["beta2"], p["m2"], p["v2"])
    pooled = out.mean(axis=(1, 2))
    hid = jnp.maximum(pooled @ p["se_w1"], 0.0)
    s = jax.nn.sigmoid(hid @ p["se_w2"])
    out = out * s[:, None, None, :] + xi
    out = jnp.maximum(out, 0.0)
    return out.transpose(0, 3, 1, 2).reshape(b, n, c, h, w)


# ----------------------------------------------------------------------------
# Deterministic synthetic parameter init
# ----------------------------------------------------------------------------
def init_params(key, inplanes, planes, reduction):
    ks = jax.random.split(key, 12)
    hidden = inplanes // reduction
    f32 = jnp.float32
    return {
        # conv1: inplanes -> planes, HWIO weights
        "w1": 0.1 * jax.random.normal(ks[0], (3, 3, inplanes, planes), f32),
        "b1": 0.05 * jax.random.normal(ks[1], (planes,), f32),
        "g1": 1.0 + 0.1 * jax.random.normal(ks[2], (planes,), f32),
        "beta1": 0.05 * jax.random.normal(ks[3], (planes,), f32),
        "m1": 0.05 * jax.random.normal(ks[4], (planes,), f32),
        "v1": 1.0 + 0.1 * jnp.abs(jax.random.normal(ks[5], (planes,), f32)),
        # conv2: planes -> inplanes
        "w2": 0.1 * jax.random.normal(ks[6], (3, 3, planes, inplanes), f32),
        "b2": 0.05 * jax.random.normal(ks[7], (inplanes,), f32),
        "g2": 1.0 + 0.1 * jax.random.normal(ks[8], (inplanes,), f32),
        "beta2": 0.05 * jax.random.normal(ks[9], (inplanes,), f32),
        "m2": 0.05 * jax.random.normal(ks[10], (inplanes,), f32),
        "v2": 1.0 + 0.1 * jnp.abs(jax.random.normal(ks[11], (inplanes,), f32)),
        # SE fc layers (stored already transposed for left-multiplication)
        "se_w1": 0.2 * jax.random.normal(jax.random.fold_in(key, 100),
                                         (inplanes, hidden), f32),
        "se_w2": 0.2 * jax.random.normal(jax.random.fold_in(key, 101),
                                         (hidden, inplanes), f32),
    }


if __name__ == "__main__":
    key = jax.random.PRNGKey(0)
    b, n, c, h, w = 2, 2, 16, 8, 8        # inplanes = c = 16
    planes, reduction = 32, 4             # SE hidden = 16 // 4 = 4

    kx, kp = jax.random.split(key)
    x = jax.random.normal(kx, (b, n, c, h, w), jnp.float32)
    params = init_params(kp, c, planes, reduction)

    out = jax.jit(conv_block_se_forward)(x, params)
    out = jax.block_until_ready(out)

    ref = _reference_forward(x, params)
    assert out.shape == (b, n, c, h, w), out.shape
    # bf16 MXU operands (f32 accumulation): expect ~1e-2 deviation from the f32 reference.
    assert jnp.allclose(out, ref, atol=3e-2, rtol=3e-2), float(jnp.abs(out - ref).max())

    print("KERNEL_OK")
</pallas_src>

<mosaic_0001>
module attributes {stable_mosaic.version = 11 : i64} {
  func.func @_se_block_kernel(%arg0: i32, %arg1: memref<256x16xf32, #tpu.memory_space<vmem>>, %arg2: memref<9x16x32xbf16, #tpu.memory_space<vmem>>, %arg3: memref<1x32xf32, #tpu.memory_space<vmem>>, %arg4: memref<1x32xf32, #tpu.memory_space<vmem>>, %arg5: memref<9x32x16xbf16, #tpu.memory_space<vmem>>, %arg6: memref<1x16xf32, #tpu.memory_space<vmem>>, %arg7: memref<1x16xf32, #tpu.memory_space<vmem>>, %arg8: memref<16x4xf32, #tpu.memory_space<vmem>>, %arg9: memref<4x16xf32, #tpu.memory_space<vmem>>, %arg10: memref<256x16xf32, #tpu.memory_space<vmem>>, %arg11: memref<288x16xf32, #tpu.memory_space<vmem>>, %arg12: memref<288x32xf32, #tpu.memory_space<vmem>>) attributes {dimension_semantics = [#tpu.dimension_semantics<parallel>], iteration_bounds = array<i64: 1>, scalar_prefetch = 0 : i64, scratch_operands = 2 : i64, tpu.core_type = #tpu.core_type<tc>, window_params = [{transform_indices = @transform_0, window_bounds = array<i64: 256, 16>}, {pipeline_mode = #tpu.pipeline_mode<synchronous>, transform_indices = @transform_1, window_bounds = array<i64: 9, 16, 32>}, {pipeline_mode = #tpu.pipeline_mode<synchronous>, transform_indices = @transform_2, window_bounds = array<i64: 1, 32>}, {pipeline_mode = #tpu.pipeline_mode<synchronous>, transform_indices = @transform_3, window_bounds = array<i64: 1, 32>}, {pipeline_mode = #tpu.pipeline_mode<synchronous>, transform_indices = @transform_4, window_bounds = array<i64: 9, 32, 16>}, {pipeline_mode = #tpu.pipeline_mode<synchronous>, transform_indices = @transform_5, window_bounds = array<i64: 1, 16>}, {pipeline_mode = #tpu.pipeline_mode<synchronous>, transform_indices = @transform_6, window_bounds = array<i64: 1, 16>}, {pipeline_mode = #tpu.pipeline_mode<synchronous>, transform_indices = @transform_7, window_bounds = array<i64: 16, 4>}, {pipeline_mode = #tpu.pipeline_mode<synchronous>, transform_indices = @transform_8, window_bounds = array<i64: 4, 16>}, {transform_indices = @transform_9, window_bounds = array<i64: 256, 16>}]} {
    %c0 = arith.constant 0 : index
    %c0_0 = arith.constant 0 : index
    %0 = vector.load %arg1[%c0, %c0_0] : memref<256x16xf32, #tpu.memory_space<vmem>>, vector<256x16xf32>
    %c16 = arith.constant 16 : index
    %c0_1 = arith.constant 0 : index
    %1 = vector.load %arg11[%c16, %c0_1] : memref<288x16xf32, #tpu.memory_space<vmem>>, vector<256x16xf32>
    tpu.vector_store %arg11[%c16, %c0_1], %0 {strides = array<i32>} : memref<288x16xf32, #tpu.memory_space<vmem>>, vector<256x16xf32>,
    %2 = tpu.iota {dimensions = array<i32: 0>} : vector<256x1xi32>
    %c63_i32 = arith.constant 63 : i32
    %3 = vector.broadcast %c63_i32 : i32 to vector<256x1xi32>
    %4 = arith.andi %2, %3 : vector<256x1xi32>
    %c7_i32 = arith.constant 7 : i32
    %5 = vector.broadcast %c7_i32 : i32 to vector<256x1xi32>
    %6 = arith.andi %2, %5 : vector<256x1xi32>
    %c8_i32 = arith.constant 8 : i32
    %7 = vector.broadcast %c8_i32 : i32 to vector<256x1xi32>
    %8 = arith.cmpi sge, %4, %7 : vector<256x1xi32>
    %c56_i32 = arith.constant 56 : i32
    %9 = vector.broadcast %c56_i32 : i32 to vector<256x1xi32>
    %10 = arith.cmpi slt, %4, %9 : vector<256x1xi32>
    %c1_i32 = arith.constant 1 : i32
    %11 = vector.broadcast %c1_i32 : i32 to vector<256x1xi32>
    %12 = arith.cmpi sge, %6, %11 : vector<256x1xi32>
    %c7_i32_2 = arith.constant 7 : i32
    %13 = vector.broadcast %c7_i32_2 : i32 to vector<256x1xi32>
    %14 = arith.cmpi slt, %6, %13 : vector<256x1xi32>
    %c7 = arith.constant 7 : index
    %c0_3 = arith.constant 0 : index
    %15 = vector.load %arg11[%c7, %c0_3] : memref<288x16xf32, #tpu.memory_space<vmem>>, vector<256x16xf32>
    %16 = arith.andi %8, %12 : vector<256x1xi1>
    %cst = arith.constant 0.000000e+00 : f32
    %17 = vector.shape_cast %16 : vector<256x1xi1> to vector<256x1xi1>
    %18 = vector.broadcast %17 : vector<256x1xi1> to vector<256x16xi1>
    %19 = vector.broadcast %cst : f32 to vector<256x16xf32>
    %20 = arith.select %18, %15, %19 : vector<256x16xi1>, vector<256x16xf32>
    %21 = arith.truncf %20 : vector<256x16xf32> to vector<256x16xbf16>
    %c0_4 = arith.constant 0 : index
    %c0_5 = arith.constant 0 : index
    %c0_6 = arith.constant 0 : index
    %22 = vector.load %arg2[%c0_4, %c0_5, %c0_6] : memref<9x16x32xbf16, #tpu.memory_space<vmem>>, vector<1x16x32xbf16>
    %23 = vector.shape_cast %22 : vector<1x16x32xbf16> to vector<16x32xbf16>
    %cst_7 = arith.constant dense<0.000000e+00> : vector<256x32xf32>
    %24 = tpu.matmul %21, %23, %cst_7 {dimension_numbers = #tpu.dot_dimension_numbers<[1], [0], [0], [1], [0, 0, 1, 1], [], []>} : vector<256x16xbf16>, vector<16x32xbf16>, vector<256x32xf32> -> vector<256x32xf32>
    %c8 = arith.constant 8 : index
    %c0_8 = arith.constant 0 : index
    %25 = vector.load %arg11[%c8, %c0_8] : memref<288x16xf32, #tpu.memory_space<vmem>>, vector<256x16xf32>
    %cst_9 = arith.constant 0.000000e+00 : f32
    %26 = vector.shape_cast %8 : vector<256x1xi1> to vector<256x1xi1>
    %27 = vector.broadcast %26 : vector<256x1xi1> to vector<256x16xi1>
    %28 = vector.broadcast %cst_9 : f32 to vector<256x16xf32>
    %29 = arith.select %27, %25, %28 : vector<256x16xi1>, vector<256x16xf32>
    %30 = arith.truncf %29 : vector<256x16xf32> to vector<256x16xbf16>
    %c1 = arith.constant 1 : index
    %c0_10 = arith.constant 0 : index
    %c0_11 = arith.constant 0 : index
    %31 = vector.load %arg2[%c1, %c0_10, %c0_11] : memref<9x16x32xbf16, #tpu.memory_space<vmem>>, vector<1x16x32xbf16>
    %32 = vector.shape_cast %31 : vector<1x16x32xbf16> to vector<16x32xbf16>
    %cst_12 = arith.constant dense<0.000000e+00> : vector<256x32xf32>
    %33 = tpu.matmul %30, %32, %cst_12 {dimension_numbers = #tpu.dot_dimension_numbers<[1], [0], [0], [1], [0, 0, 1, 1], [], []>} : vector<256x16xbf16>, vector<16x32xbf16>, vector<256x32xf32> -> vector<256x32xf32>
    %34 = arith.addf %24, %33 : vector<256x32xf32>
    %c9 = arith.constant 9 : index
    %c0_13 = arith.constant 0 : index
    %35 = vector.load %arg11[%c9, %c0_13] : memref<288x16xf32, #tpu.memory_space<vmem>>, vector<256x16xf32>
    %36 = arith.andi %8, %14 : vector<256x1xi1>
    %cst_14 = arith.constant 0.000000e+00 : f32
    %37 = vector.shape_cast %36 : vector<256x1xi1> to vector<256x1xi1>
    %38 = vector.broadcast %37 : vector<256x1xi1> to vector<256x16xi1>
    %39 = vector.broadcast %cst_14 : f32 to vector<256x16xf32>
    %40 = arith.select %38, %35, %39 : vector<256x16xi1>, vector<256x16xf32>
    %41 = arith.truncf %40 : vector<256x16xf32> to vector<256x16xbf16>
    %c2 = arith.constant 2 : index
    %c0_15 = arith.constant 0 : index
    %c0_16 = arith.constant 0 : index
    %42 = vector.load %arg2[%c2, %c0_15, %c0_16] : memref<9x16x32xbf16, #tpu.memory_space<vmem>>, vector<1x16x32xbf16>
    %43 = vector.shape_cast %42 : vector<1x16x32xbf16> to vector<16x32xbf16>
    %cst_17 = arith.constant dense<0.000000e+00> : vector<256x32xf32>
    %44 = tpu.matmul %41, %43, %cst_17 {dimension_numbers = #tpu.dot_dimension_numbers<[1], [0], [0], [1], [0, 0, 1, 1], [], []>} : vector<256x16xbf16>, vector<16x32xbf16>, vector<256x32xf32> -> vector<256x32xf32>
    %45 = arith.addf %34, %44 : vector<256x32xf32>
    %c15 = arith.constant 15 : index
    %c0_18 = arith.constant 0 : index
    %46 = vector.load %arg11[%c15, %c0_18] : memref<288x16xf32, #tpu.memory_space<vmem>>, vector<256x16xf32>
    %cst_19 = arith.constant 0.000000e+00 : f32
    %47 = vector.shape_cast %12 : vector<256x1xi1> to vector<256x1xi1>
    %48 = vector.broadcast %47 : vector<256x1xi1> to vector<256x16xi1>
    %49 = vector.broadcast %cst_19 : f32 to vector<256x16xf32>
    %50 = arith.select %48, %46, %49 : vector<256x16xi1>, vector<256x16xf32>
    %51 = arith.truncf %50 : vector<256x16xf32> to vector<256x16xbf16>
    %c3 = arith.constant 3 : index
    %c0_20 = arith.constant 0 : index
    %c0_21 = arith.constant 0 : index
    %52 = vector.load %arg2[%c3, %c0_20, %c0_21] : memref<9x16x32xbf16, #tpu.memory_space<vmem>>, vector<1x16x32xbf16>
    %53 = vector.shape_cast %52 : vector<1x16x32xbf16> to vector<16x32xbf16>
    %cst_22 = arith.constant dense<0.000000e+00> : vector<256x32xf32>
    %54 = tpu.matmul %51, %53, %cst_22 {dimension_numbers = #tpu.dot_dimension_numbers<[1], [0], [0], [1], [0, 0, 1, 1], [], []>} : vector<256x16xbf16>, vector<16x32xbf16>, vector<256x32xf32> -> vector<256x32xf32>
    %55 = arith.addf %45, %54 : vector<256x32xf32>
    %56 = arith.truncf %0 : vector<256x16xf32> to vector<256x16xbf16>
    %c4 = arith.constant 4 : index
    %c0_23 = arith.constant 0 : index
    %c0_24 = arith.constant 0 : index
    %57 = vector.load %arg2[%c4, %c0_23, %c0_24] : memref<9x16x32xbf16, #tpu.memory_space<vmem>>, vector<1x16x32xbf16>
    %58 = vector.shape_cast %57 : vector<1x16x32xbf16> to vector<16x32xbf16>
    %cst_25 = arith.constant dense<0.000000e+00> : vector<256x32xf32>
    %59 = tpu.matmul %56, %58, %cst_25 {dimension_numbers = #tpu.dot_dimension_numbers<[1], [0], [0], [1], [0, 0, 1, 1], [], []>} : vector<256x16xbf16>, vector<16x32xbf16>, vector<256x32xf32> -> vector<256x32xf32>
    %60 = arith.addf %55, %59 : vector<256x32xf32>
    %c17 = arith.constant 17 : index
    %c0_26 = arith.constant 0 : index
    %61 = vector.load %arg11[%c17, %c0_26] : memref<288x16xf32, #tpu.memory_space<vmem>>, vector<256x16xf32>
    %cst_27 = arith.constant 0.000000e+00 : f32
    %62 = vector.shape_cast %14 : vector<256x1xi1> to vector<256x1xi1>
    %63 = vector.broadcast %62 : vector<256x1xi1> to vector<256x16xi1>
    %64 = vector.broadcast %cst_27 : f32 to vector<256x16xf32>
    %65 = arith.select %63, %61, %64 : vector<256x16xi1>, vector<256x16xf32>
    %66 = arith.truncf %65 : vector<256x16xf32> to vector<256x16xbf16>
    %c5 = arith.constant 5 : index
    %c0_28 = arith.constant 0 : index
    %c0_29 = arith.constant 0 : index
    %67 = vector.load %arg2[%c5, %c0_28, %c0_29] : memref<9x16x32xbf16, #tpu.memory_space<vmem>>, vector<1x16x32xbf16>
    %68 = vector.shape_cast %67 : vector<1x16x32xbf16> to vector<16x32xbf16>
    %cst_30 = arith.constant dense<0.000000e+00> : vector<256x32xf32>
    %69 = tpu.matmul %66, %68, %cst_30 {dimension_numbers = #tpu.dot_dimension_numbers<[1], [0], [0], [1], [0, 0, 1, 1], [], []>} : vector<256x16xbf16>, vector<16x32xbf16>, vector<256x32xf32> -> vector<256x32xf32>
    %70 = arith.addf %60, %69 : vector<256x32xf32>
    %c23 = arith.constant 23 : index
    %c0_31 = arith.constant 0 : index
    %71 = vector.load %arg11[%c23, %c0_31] : memref<288x16xf32, #tpu.memory_space<vmem>>, vector<256x16xf32>
    %72 = arith.andi %10, %12 : vector<256x1xi1>
    %cst_32 = arith.constant 0.000000e+00 : f32
    %73 = vector.shape_cast %72 : vector<256x1xi1> to vector<256x1xi1>
    %74 = vector.broadcast %73 : vector<256x1xi1> to vector<256x16xi1>
    %75 = vector.broadcast %cst_32 : f32 to vector<256x16xf32>
    %76 = arith.select %74, %71, %75 : vector<256x16xi1>, vector<256x16xf32>
    %77 = arith.truncf %76 : vector<256x16xf32> to vector<256x16xbf16>
    %c6 = arith.constant 6 : index
    %c0_33 = arith.constant 0 : index
    %c0_34 = arith.constant 0 : index
    %78 = vector.load %arg2[%c6, %c0_33, %c0_34] : memref<9x16x32xbf16, #tpu.memory_space<vmem>>, vector<1x16x32xbf16>
    %79 = vector.shape_cast %78 : vector<1x16x32xbf16> to vector<16x32xbf16>
    %cst_35 = arith.constant dense<0.000000e+00> : vector<256x32xf32>
    %80 = tpu.matmul %77, %79, %cst_35 {dimension_numbers = #tpu.dot_dimension_numbers<[1], [0], [0], [1], [0, 0, 1, 1], [], []>} : vector<256x16xbf16>, vector<16x32xbf16>, vector<256x32xf32> -> vector<256x32xf32>
    %81 = arith.addf %70, %80 : vector<256x32xf32>
    %c24 = arith.constant 24 : index
    %c0_36 = arith.constant 0 : index
    %82 = vector.load %arg11[%c24, %c0_36] : memref<288x16xf32, #tpu.memory_space<vmem>>, vector<256x16xf32>
    %cst_37 = arith.constant 0.000000e+00 : f32
    %83 = vector.shape_cast %10 : vector<256x1xi1> to vector<256x1xi1>
    %84 = vector.broadcast %83 : vector<256x1xi1> to vector<256x16xi1>
    %85 = vector.broadcast %cst_37 : f32 to vector<256x16xf32>
    %86 = arith.select %84, %82, %85 : vector<256x16xi1>, vector<256x16xf32>
    %87 = arith.truncf %86 : vector<256x16xf32> to vector<256x16xbf16>
    %c7_38 = arith.constant 7 : index
    %c0_39 = arith.constant 0 : index
    %c0_40 = arith.constant 0 : index
    %88 = vector.load %arg2[%c7_38, %c0_39, %c0_40] : memref<9x16x32xbf16, #tpu.memory_space<vmem>>, vector<1x16x32xbf16>
    %89 = vector.shape_cast %88 : vector<1x16x32xbf16> to vector<16x32xbf16>
    %cst_41 = arith.constant dense<0.000000e+00> : vector<256x32xf32>
    %90 = tpu.matmul %87, %89, %cst_41 {dimension_numbers = #tpu.dot_dimension_numbers<[1], [0], [0], [1], [0, 0, 1, 1], [], []>} : vector<256x16xbf16>, vector<16x32xbf16>, vector<256x32xf32> -> vector<256x32xf32>
    %91 = arith.addf %81, %90 : vector<256x32xf32>
    %c25 = arith.constant 25 : index
    %c0_42 = arith.constant 0 : index
    %92 = vector.load %arg11[%c25, %c0_42] : memref<288x16xf32, #tpu.memory_space<vmem>>, vector<256x16xf32>
    %93 = arith.andi %10, %14 : vector<256x1xi1>
    %cst_43 = arith.constant 0.000000e+00 : f32
    %94 = vector.shape_cast %93 : vector<256x1xi1> to vector<256x1xi1>
    %95 = vector.broadcast %94 : vector<256x1xi1> to vector<256x16xi1>
    %96 = vector.broadcast %cst_43 : f32 to vector<256x16xf32>
    %97 = arith.select %95, %92, %96 : vector<256x16xi1>, vector<256x16xf32>
    %98 = arith.truncf %97 : vector<256x16xf32> to vector<256x16xbf16>
    %c8_44 = arith.constant 8 : index
    %c0_45 = arith.constant 0 : index
    %c0_46 = arith.constant 0 : index
    %99 = vector.load %arg2[%c8_44, %c0_45, %c0_46] : memref<9x16x32xbf16, #tpu.memory_space<vmem>>, vector<1x16x32xbf16>
    %100 = vector.shape_cast %99 : vector<1x16x32xbf16> to vector<16x32xbf16>
    %cst_47 = arith.constant dense<0.000000e+00> : vector<256x32xf32>
    %101 = tpu.matmul %98, %100, %cst_47 {dimension_numbers = #tpu.dot_dimension_numbers<[1], [0], [0], [1], [0, 0, 1, 1], [], []>} : vector<256x16xbf16>, vector<16x32xbf16>, vector<256x32xf32> -> vector<256x32xf32>
    %102 = arith.addf %91, %101 : vector<256x32xf32>
    %c0_48 = arith.constant 0 : index
    %c0_49 = arith.constant 0 : index
    %103 = vector.load %arg3[%c0_48, %c0_49] : memref<1x32xf32, #tpu.memory_space<vmem>>, vector<1x32xf32>
    %104 = vector.broadcast %103 : vector<1x32xf32> to vector<256x32xf32>
    %105 = arith.mulf %102, %104 : vector<256x32xf32>
    %c0_50 = arith.constant 0 : index
    %c0_51 = arith.constant 0 : index
    %106 = vector.load %arg4[%c0_50, %c0_51] : memref<1x32xf32, #tpu.memory_space<vmem>>, vector<1x32xf32>
    %107 = vector.broadcast %106 : vector<1x32xf32> to vector<256x32xf32>
    %108 = arith.addf %105, %107 : vector<256x32xf32>
    %cst_52 = arith.constant 0.000000e+00 : f32
    %109 = vector.broadcast %cst_52 : f32 to vector<256x32xf32>
    %110 = arith.maximumf %108, %109 : vector<256x32xf32>
    %c16_53 = arith.constant 16 : index
    %c0_54 = arith.constant 0 : index
    %111 = vector.load %arg12[%c16_53, %c0_54] : memref<288x32xf32, #tpu.memory_space<vmem>>, vector<256x32xf32>
    tpu.vector_store %arg12[%c16_53, %c0_54], %110 {strides = array<i32>} : memref<288x32xf32, #tpu.memory_space<vmem>>, vector<256x32xf32>,
    %c7_55 = arith.constant 7 : index
    %c0_56 = arith.constant 0 : index
    %112 = vector.load %arg12[%c7_55, %c0_56] : memref<288x32xf32, #tpu.memory_space<vmem>>, vector<256x32xf32>
    %113 = arith.andi %8, %12 : vector<256x1xi1>
    %cst_57 = arith.constant 0.000000e+00 : f32
    %114 = vector.shape_cast %113 : vector<256x1xi1> to vector<256x1xi1>
    %115 = vector.broadcast %114 : vector<256x1xi1> to vector<256x32xi1>
    %116 = vector.broadcast %cst_57 : f32 to vector<256x32xf32>
    %117 = arith.select %115, %112, %116 : vector<256x32xi1>, vector<256x32xf32>
    %118 = arith.truncf %117 : vector<256x32xf32> to vector<256x32xbf16>
    %c0_58 = arith.constant 0 : index
    %c0_59 = arith.constant 0 : index
    %c0_60 = arith.constant 0 : index
    %119 = vector.load %arg5[%c0_58, %c0_59, %c0_60] : memref<9x32x16xbf16, #tpu.memory_space<vmem>>, vector<1x32x16xbf16>
    %120 = vector.shape_cast %119 : vector<1x32x16xbf16> to vector<32x16xbf16>
    %cst_61 = arith.constant dense<0.000000e+00> : vector<256x16xf32>
    %121 = tpu.matmul %118, %120, %cst_61 {dimension_numbers = #tpu.dot_dimension_numbers<[1], [0], [0], [1], [0, 0, 1, 1], [], []>} : vector<256x32xbf16>, vector<32x16xbf16>, vector<256x16xf32> -> vector<256x16xf32>
    %c8_62 = arith.constant 8 : index
    %c0_63 = arith.constant 0 : index
    %122 = vector.load %arg12[%c8_62, %c0_63] : memref<288x32xf32, #tpu.memory_space<vmem>>, vector<256x32xf32>
    %cst_64 = arith.constant 0.000000e+00 : f32
    %123 = vector.shape_cast %8 : vector<256x1xi1> to vector<256x1xi1>
    %124 = vector.broadcast %123 : vector<256x1xi1> to vector<256x32xi1>
    %125 = vector.broadcast %cst_64 : f32 to vector<256x32xf32>
    %126 = arith.select %124, %122, %125 : vector<256x32xi1>, vector<256x32xf32>
    %127 = arith.truncf %126 : vector<256x32xf32> to vector<256x32xbf16>
    %c1_65 = arith.constant 1 : index
    %c0_66 = arith.constant 0 : index
    %c0_67 = arith.constant 0 : index
    %128 = vector.load %arg5[%c1_65, %c0_66, %c0_67] : memref<9x32x16xbf16, #tpu.memory_space<vmem>>, vector<1x32x16xbf16>
    %129 = vector.shape_cast %128 : vector<1x32x16xbf16> to vector<32x16xbf16>
    %cst_68 = arith.constant dense<0.000000e+00> : vector<256x16xf32>
    %130 = tpu.matmul %127, %129, %cst_68 {dimension_numbers = #tpu.dot_dimension_numbers<[1], [0], [0], [1], [0, 0, 1, 1], [], []>} : vector<256x32xbf16>, vector<32x16xbf16>, vector<256x16xf32> -> vector<256x16xf32>
    %131 = arith.addf %121, %130 : vector<256x16xf32>
    %c9_69 = arith.constant 9 : index
    %c0_70 = arith.constant 0 : index
    %132 = vector.load %arg12[%c9_69, %c0_70] : memref<288x32xf32, #tpu.memory_space<vmem>>, vector<256x32xf32>
    %133 = arith.andi %8, %14 : vector<256x1xi1>
    %cst_71 = arith.constant 0.000000e+00 : f32
    %134 = vector.shape_cast %133 : vector<256x1xi1> to vector<256x1xi1>
    %135 = vector.broadcast %134 : vector<256x1xi1> to vector<256x32xi1>
    %136 = vector.broadcast %cst_71 : f32 to vector<256x32xf32>
    %137 = arith.select %135, %132, %136 : vector<256x32xi1>, vector<256x32xf32>
    %138 = arith.truncf %137 : vector<256x32xf32> to vector<256x32xbf16>
    %c2_72 = arith.constant 2 : index
    %c0_73 = arith.constant 0 : index
    %c0_74 = arith.constant 0 : index
    %139 = vector.load %arg5[%c2_72, %c0_73, %c0_74] : memref<9x32x16xbf16, #tpu.memory_space<vmem>>, vector<1x32x16xbf16>
    %140 = vector.shape_cast %139 : vector<1x32x16xbf16> to vector<32x16xbf16>
    %cst_75 = arith.constant dense<0.000000e+00> : vector<256x16xf32>
    %141 = tpu.matmul %138, %140, %cst_75 {dimension_numbers = #tpu.dot_dimension_numbers<[1], [0], [0], [1], [0, 0, 1, 1], [], []>} : vector<256x32xbf16>, vector<32x16xbf16>, vector<256x16xf32> -> vector<256x16xf32>
    %142 = arith.addf %131, %141 : vector<256x16xf32>
    %c15_76 = arith.constant 15 : index
    %c0_77 = arith.constant 0 : index
    %143 = vector.load %arg12[%c15_76, %c0_77] : memref<288x32xf32, #tpu.memory_space<vmem>>, vector<256x32xf32>
    %cst_78 = arith.constant 0.000000e+00 : f32
    %144 = vector.shape_cast %12 : vector<256x1xi1> to vector<256x1xi1>
    %145 = vector.broadcast %144 : vector<256x1xi1> to vector<256x32xi1>
    %146 = vector.broadcast %cst_78 : f32 to vector<256x32xf32>
    %147 = arith.select %145, %143, %146 : vector<256x32xi1>, vector<256x32xf32>
    %148 = arith.truncf %147 : vector<256x32xf32> to vector<256x32xbf16>
    %c3_79 = arith.constant 3 : index
    %c0_80 = arith.constant 0 : index
    %c0_81 = arith.constant 0 : index
    %149 = vector.load %arg5[%c3_79, %c0_80, %c0_81] : memref<9x32x16xbf16, #tpu.memory_space<vmem>>, vector<1x32x16xbf16>
    %150 = vector.shape_cast %149 : vector<1x32x16xbf16> to vector<32x16xbf16>
    %cst_82 = arith.constant dense<0.000000e+00> : vector<256x16xf32>
    %151 = tpu.matmul %148, %150, %cst_82 {dimension_numbers = #tpu.dot_dimension_numbers<[1], [0], [0], [1], [0, 0, 1, 1], [], []>} : vector<256x32xbf16>, vector<32x16xbf16>, vector<256x16xf32> -> vector<256x16xf32>
    %152 = arith.addf %142, %151 : vector<256x16xf32>
    %153 = arith.truncf %110 : vector<256x32xf32> to vector<256x32xbf16>
    %c4_83 = arith.constant 4 : index
    %c0_84 = arith.constant 0 : index
    %c0_85 = arith.constant 0 : index
    %154 = vector.load %arg5[%c4_83, %c0_84, %c0_85] : memref<9x32x16xbf16, #tpu.memory_space<vmem>>, vector<1x32x16xbf16>
    %155 = vector.shape_cast %154 : vector<1x32x16xbf16> to vector<32x16xbf16>
    %cst_86 = arith.constant dense<0.000000e+00> : vector<256x16xf32>
    %156 = tpu.matmul %153, %155, %cst_86 {dimension_numbers = #tpu.dot_dimension_numbers<[1], [0], [0], [1], [0, 0, 1, 1], [], []>} : vector<256x32xbf16>, vector<32x16xbf16>, vector<256x16xf32> -> vector<256x16xf32>
    %157 = arith.addf %152, %156 : vector<256x16xf32>
    %c17_87 = arith.constant 17 : index
    %c0_88 = arith.constant 0 : index
    %158 = vector.load %arg12[%c17_87, %c0_88] : memref<288x32xf32, #tpu.memory_space<vmem>>, vector<256x32xf32>
    %cst_89 = arith.constant 0.000000e+00 : f32
    %159 = vector.shape_cast %14 : vector<256x1xi1> to vector<256x1xi1>
    %160 = vector.broadcast %159 : vector<256x1xi1> to vector<256x32xi1>
    %161 = vector.broadcast %cst_89 : f32 to vector<256x32xf32>
    %162 = arith.select %160, %158, %161 : vector<256x32xi1>, vector<256x32xf32>
    %163 = arith.truncf %162 : vector<256x32xf32> to vector<256x32xbf16>
    %c5_90 = arith.constant 5 : index
    %c0_91 = arith.constant 0 : index
    %c0_92 = arith.constant 0 : index
    %164 = vector.load %arg5[%c5_90, %c0_91, %c0_92] : memref<9x32x16xbf16, #tpu.memory_space<vmem>>, vector<1x32x16xbf16>
    %165 = vector.shape_cast %164 : vector<1x32x16xbf16> to vector<32x16xbf16>
    %cst_93 = arith.constant dense<0.000000e+00> : vector<256x16xf32>
    %166 = tpu.matmul %163, %165, %cst_93 {dimension_numbers = #tpu.dot_dimension_numbers<[1], [0], [0], [1], [0, 0, 1, 1], [], []>} : vector<256x32xbf16>, vector<32x16xbf16>, vector<256x16xf32> -> vector<256x16xf32>
    %167 = arith.addf %157, %166 : vector<256x16xf32>
    %c23_94 = arith.constant 23 : index
    %c0_95 = arith.constant 0 : index
    %168 = vector.load %arg12[%c23_94, %c0_95] : memref<288x32xf32, #tpu.memory_space<vmem>>, vector<256x32xf32>
    %169 = arith.andi %10, %12 : vector<256x1xi1>
    %cst_96 = arith.constant 0.000000e+00 : f32
    %170 = vector.shape_cast %169 : vector<256x1xi1> to vector<256x1xi1>
    %171 = vector.broadcast %170 : vector<256x1xi1> to vector<256x32xi1>
    %172 = vector.broadcast %cst_96 : f32 to vector<256x32xf32>
    %173 = arith.select %171, %168, %172 : vector<256x32xi1>, vector<256x32xf32>
    %174 = arith.truncf %173 : vector<256x32xf32> to vector<256x32xbf16>
    %c6_97 = arith.constant 6 : index
    %c0_98 = arith.constant 0 : index
    %c0_99 = arith.constant 0 : index
    %175 = vector.load %arg5[%c6_97, %c0_98, %c0_99] : memref<9x32x16xbf16, #tpu.memory_space<vmem>>, vector<1x32x16xbf16>
    %176 = vector.shape_cast %175 : vector<1x32x16xbf16> to vector<32x16xbf16>
    %cst_100 = arith.constant dense<0.000000e+00> : vector<256x16xf32>
    %177 = tpu.matmul %174, %176, %cst_100 {dimension_numbers = #tpu.dot_dimension_numbers<[1], [0], [0], [1], [0, 0, 1, 1], [], []>} : vector<256x32xbf16>, vector<32x16xbf16>, vector<256x16xf32> -> vector<256x16xf32>
    %178 = arith.addf %167, %177 : vector<256x16xf32>
    %c24_101 = arith.constant 24 : index
    %c0_102 = arith.constant 0 : index
    %179 = vector.load %arg12[%c24_101, %c0_102] : memref<288x32xf32, #tpu.memory_space<vmem>>, vector<256x32xf32>
    %cst_103 = arith.constant 0.000000e+00 : f32
    %180 = vector.shape_cast %10 : vector<256x1xi1> to vector<256x1xi1>
    %181 = vector.broadcast %180 : vector<256x1xi1> to vector<256x32xi1>
    %182 = vector.broadcast %cst_103 : f32 to vector<256x32xf32>
    %183 = arith.select %181, %179, %182 : vector<256x32xi1>, vector<256x32xf32>
    %184 = arith.truncf %183 : vector<256x32xf32> to vector<256x32xbf16>
    %c7_104 = arith.constant 7 : index
    %c0_105 = arith.constant 0 : index
    %c0_106 = arith.constant 0 : index
    %185 = vector.load %arg5[%c7_104, %c0_105, %c0_106] : memref<9x32x16xbf16, #tpu.memory_space<vmem>>, vector<1x32x16xbf16>
    %186 = vector.shape_cast %185 : vector<1x32x16xbf16> to vector<32x16xbf16>
    %cst_107 = arith.constant dense<0.000000e+00> : vector<256x16xf32>
    %187 = tpu.matmul %184, %186, %cst_107 {dimension_numbers = #tpu.dot_dimension_numbers<[1], [0], [0], [1], [0, 0, 1, 1], [], []>} : vector<256x32xbf16>, vector<32x16xbf16>, vector<256x16xf32> -> vector<256x16xf32>
    %188 = arith.addf %178, %187 : vector<256x16xf32>
    %c25_108 = arith.constant 25 : index
    %c0_109 = arith.constant 0 : index
    %189 = vector.load %arg12[%c25_108, %c0_109] : memref<288x32xf32, #tpu.memory_space<vmem>>, vector<256x32xf32>
    %190 = arith.andi %10, %14 : vector<256x1xi1>
    %cst_110 = arith.constant 0.000000e+00 : f32
    %191 = vector.shape_cast %190 : vector<256x1xi1> to vector<256x1xi1>
    %192 = vector.broadcast %191 : vector<256x1xi1> to vector<256x32xi1>
    %193 = vector.broadcast %cst_110 : f32 to vector<256x32xf32>
    %194 = arith.select %192, %189, %193 : vector<256x32xi1>, vector<256x32xf32>
    %195 = arith.truncf %194 : vector<256x32xf32> to vector<256x32xbf16>
    %c8_111 = arith.constant 8 : index
    %c0_112 = arith.constant 0 : index
    %c0_113 = arith.constant 0 : index
    %196 = vector.load %arg5[%c8_111, %c0_112, %c0_113] : memref<9x32x16xbf16, #tpu.memory_space<vmem>>, vector<1x32x16xbf16>
    %197 = vector.shape_cast %196 : vector<1x32x16xbf16> to vector<32x16xbf16>
    %cst_114 = arith.constant dense<0.000000e+00> : vector<256x16xf32>
    %198 = tpu.matmul %195, %197, %cst_114 {dimension_numbers = #tpu.dot_dimension_numbers<[1], [0], [0], [1], [0, 0, 1, 1], [], []>} : vector<256x32xbf16>, vector<32x16xbf16>, vector<256x16xf32> -> vector<256x16xf32>
    %199 = arith.addf %188, %198 : vector<256x16xf32>
    %c0_115 = arith.constant 0 : index
    %c0_116 = arith.constant 0 : index
    %200 = vector.load %arg6[%c0_115, %c0_116] : memref<1x16xf32, #tpu.memory_space<vmem>>, vector<1x16xf32>
    %201 = vector.broadcast %200 : vector<1x16xf32> to vector<256x16xf32>
    %202 = arith.mulf %199, %201 : vector<256x16xf32>
    %c0_117 = arith.constant 0 : index
    %c0_118 = arith.constant 0 : index
    %203 = vector.load %arg7[%c0_117, %c0_118] : memref<1x16xf32, #tpu.memory_space<vmem>>, vector<1x16xf32>
    %204 = vector.broadcast %203 : vector<1x16xf32> to vector<256x16xf32>
    %205 = arith.addf %202, %204 : vector<256x16xf32>
    %206 = vector.shape_cast %205 : vector<256x16xf32> to vector<4x64x16xf32>
    %cst_119 = arith.constant dense<0.000000e+00> : vector<4x16xf32>
    %207 = vector.multi_reduction <add>, %206, %cst_119 [1] : vector<4x64x16xf32> to vector<4x16xf32>
    %cst_120 = arith.constant 1.562500e-02 : f32
    %208 = vector.broadcast %cst_120 : f32 to vector<4x16xf32>
    %209 = arith.mulf %207, %208 : vector<4x16xf32>
    %c0_121 = arith.constant 0 : index
    %c0_122 = arith.constant 0 : index
    %210 = vector.load %arg8[%c0_121, %c0_122] : memref<16x4xf32, #tpu.memory_space<vmem>>, vector<16x4xf32>
    %cst_123 = arith.constant dense<0.000000e+00> : vector<4x4xf32>
    %211 = tpu.matmul %209, %210, %cst_123 {dimension_numbers = #tpu.dot_dimension_numbers<[1], [0], [0], [1], [0, 0, 1, 1], [], []>} : vector<4x16xf32>, vector<16x4xf32>, vector<4x4xf32> -> vector<4x4xf32>
    %cst_124 = arith.constant 0.000000e+00 : f32
    %212 = vector.broadcast %cst_124 : f32 to vector<4x4xf32>
    %213 = arith.maximumf %211, %212 : vector<4x4xf32>
    %c0_125 = arith.constant 0 : index
    %c0_126 = arith.constant 0 : index
    %214 = vector.load %arg9[%c0_125, %c0_126] : memref<4x16xf32, #tpu.memory_space<vmem>>, vector<4x16xf32>
    %cst_127 = arith.constant dense<0.000000e+00> : vector<4x16xf32>
    %215 = tpu.matmul %213, %214, %cst_127 {dimension_numbers = #tpu.dot_dimension_numbers<[1], [0], [0], [1], [0, 0, 1, 1], [], []>} : vector<4x4xf32>, vector<4x16xf32>, vector<4x16xf32> -> vector<4x16xf32>
    %cst_128 = arith.constant 0.000000e+00 : f32
    %216 = vector.broadcast %cst_128 : f32 to vector<4x16xf32>
    %217 = arith.subf %216, %215 : vector<4x16xf32>
    %218 = math.exp %217 : vector<4x16xf32>
    %cst_129 = arith.constant 1.000000e+00 : f32
    %219 = vector.broadcast %cst_129 : f32 to vector<4x16xf32>
    %220 = arith.addf %219, %218 : vector<4x16xf32>
    %221 = tpu.reciprocal %220 : vector<4x16xf32> -> vector<4x16xf32>
    %222 = vector.shape_cast %221 : vector<4x16xf32> to vector<4x1x16xf32>
    %223 = vector.broadcast %222 : vector<4x1x16xf32> to vector<4x64x16xf32>
    %224 = arith.mulf %206, %223 : vector<4x64x16xf32>
    %225 = vector.shape_cast %0 : vector<256x16xf32> to vector<4x64x16xf32>
    %226 = arith.addf %224, %225 : vector<4x64x16xf32>
    %cst_130 = arith.constant 0.000000e+00 : f32
    %227 = vector.broadcast %cst_130 : f32 to vector<4x64x16xf32>
    %228 = arith.maximumf %226, %227 : vector<4x64x16xf32>
    %229 = vector.shape_cast %228 : vector<4x64x16xf32> to vector<256x16xf32>
    %c0_131 = arith.constant 0 : index
    %c0_132 = arith.constant 0 : index
    %230 = vector.load %arg10[%c0_131, %c0_132] : memref<256x16xf32, #tpu.memory_space<vmem>>, vector<256x16xf32>
    tpu.vector_store %arg10[%c0_131, %c0_132], %229 {strides = array<i32>} : memref<256x16xf32, #tpu.memory_space<vmem>>, vector<256x16xf32>,
    return
  }
  func.func @transform_0(%arg0: i32) -> (i32, i32) {
    %c0_i32 = arith.constant 0 : i32
    %c0_i32_0 = arith.constant 0 : i32
    return %arg0, %c0_i32 : i32, i32
  }
  func.func @transform_1(%arg0: i32) -> (i32, i32, i32) {
    %c0_i32 = arith.constant 0 : i32
    %c0_i32_0 = arith.constant 0 : i32
    %c0_i32_1 = arith.constant 0 : i32
    %c0_i32_2 = arith.constant 0 : i32
    return %c0_i32, %c0_i32_0, %c0_i32_1 : i32, i32, i32
  }
  func.func @transform_2(%arg0: i32) -> (i32, i32) {
    %c0_i32 = arith.constant 0 : i32
    %c0_i32_0 = arith.constant 0 : i32
    %c0_i32_1 = arith.constant 0 : i32
    return %c0_i32, %c0_i32_0 : i32, i32
  }
  func.func @transform_3(%arg0: i32) -> (i32, i32) {
    %c0_i32 = arith.constant 0 : i32
    %c0_i32_0 = arith.constant 0 : i32
    %c0_i32_1 = arith.constant 0 : i32
    return %c0_i32, %c0_i32_0 : i32, i32
  }
  func.func @transform_4(%arg0: i32) -> (i32, i32, i32) {
    %c0_i32 = arith.constant 0 : i32
    %c0_i32_0 = arith.constant 0 : i32
    %c0_i32_1 = arith.constant 0 : i32
    %c0_i32_2 = arith.constant 0 : i32
    return %c0_i32, %c0_i32_0, %c0_i32_1 : i32, i32, i32
  }
  func.func @transform_5(%arg0: i32) -> (i32, i32) {
    %c0_i32 = arith.constant 0 : i32
    %c0_i32_0 = arith.constant 0 : i32
    %c0_i32_1 = arith.constant 0 : i32
    return %c0_i32, %c0_i32_0 : i32, i32
  }
  func.func @transform_6(%arg0: i32) -> (i32, i32) {
    %c0_i32 = arith.constant 0 : i32
    %c0_i32_0 = arith.constant 0 : i32
    %c0_i32_1 = arith.constant 0 : i32
    return %c0_i32, %c0_i32_0 : i32, i32
  }
  func.func @transform_7(%arg0: i32) -> (i32, i32) {
    %c0_i32 = arith.constant 0 : i32
    %c0_i32_0 = arith.constant 0 : i32
    %c0_i32_1 = arith.constant 0 : i32
    return %c0_i32, %c0_i32_0 : i32, i32
  }
  func.func @transform_8(%arg0: i32) -> (i32, i32) {
    %c0_i32 = arith.constant 0 : i32
    %c0_i32_0 = arith.constant 0 : i32
    %c0_i32_1 = arith.constant 0 : i32
    return %c0_i32, %c0_i32_0 : i32, i32
  }
  func.func @transform_9(%arg0: i32) -> (i32, i32) {
    %c0_i32 = arith.constant 0 : i32
    %c0_i32_0 = arith.constant 0 : i32
    return %arg0, %c0_i32 : i32, i32
  }
}

</mosaic_0001>

<llo_original>
// kernel: conv_block_se_forward.1
$region0: #{conv_block_se_forward.1}
  #allocation0 [shape = 'u32[]', space=smem, size = 0x4, offset = 0x4, fixed_abs, tag = 'smem constant byte address 0x4 - core index']
  #allocation1 [shape = 'u32[144,128]{1,0:T(1,128)}', space=vmem, size = 0x12000, scoped, tag = 'internal scratch']
  #allocation2 [shape = 'f32[288,16]{1,0:T(8,128)}', space=vmem, size = 0x24000, scoped, tag = 'scratch operand']
  #allocation3 [shape = 'f32[288,32]{1,0:T(8,128)}', space=vmem, size = 0x24000, scoped, tag = 'scratch operand']
  %s0 = inlined_call_operand.vmem [shape: f32[256,16], index: 0, kind: input, shape index: {}]
  %s1 = inlined_call_operand.vmem [shape: bf16[9,16,32], index: 1, kind: input, shape index: {}]
  %s2 = inlined_call_operand.vmem [shape: f32[1,32], index: 2, kind: input, shape index: {}]
  %s3 = inlined_call_operand.vmem [shape: f32[1,32], index: 3, kind: input, shape index: {}]
  %s4 = inlined_call_operand.vmem [shape: bf16[9,32,16], index: 4, kind: input, shape index: {}]
  %s5 = inlined_call_operand.vmem [shape: f32[1,16], index: 5, kind: input, shape index: {}]
  %s6 = inlined_call_operand.vmem [shape: f32[1,16], index: 6, kind: input, shape index: {}]
  %s7 = inlined_call_operand.vmem [shape: f32[16,4], index: 7, kind: input, shape index: {}]
  %s8 = inlined_call_operand.vmem [shape: f32[4,16], index: 8, kind: input, shape index: {}]
  %s9 = inlined_call_operand.hbm [shape: f32[256,16], index: 9, kind: output, shape index: {}]
  %s10 = sld [smem:[#allocation0]]
  $region46: #{conv_block_se_forward.1} parent=0
    _
  %s12 = ssub.s32 1, %s10
  %s13 = scalar_select 0, %s12, %s10
  $region1: #{conv_block_se_forward.1} parent=0
    #allocation4 [shape = 'u8[131072]{0}', space=vmem, size = 0x20000, scoped, tag = 'output window, operand 0, single buffered']
    #allocation5 [shape = 's32[1]{0}', space=sflag, size = 0x4, scoped, tag = 'scoped memory for conv_block_se_forward.1']
    %14 = vsyncpa [#allocation5], 0
    // Predicated region
    $region2: #{conv_block_se_forward.1} parent=1 // pred_check
      _
    $region3: #{conv_block_se_forward.1} parent=1 // pred_check_branch
      %16 = sbr.rel (0) target = $region5
    $region4: #{conv_block_se_forward.1} parent=1 // pred_region
      _
    $region5: #{conv_block_se_forward.1} parent=1 // pred_fallthru
      _
    // Predicated region
    $region6: #{conv_block_se_forward.1} parent=1 // pred_check
      _
    $region7: #{conv_block_se_forward.1} parent=1 // pred_check_branch
      %18 = sbr.rel (0) target = $region9
    $region8: #{conv_block_se_forward.1} parent=1 // pred_region
      _
    $region9: #{conv_block_se_forward.1} parent=1 // pred_fallthru
      _
    // Predicated region
    $region10: #{conv_block_se_forward.1} parent=1 // pred_check
      _
    $region11: #{conv_block_se_forward.1} parent=1 // pred_check_branch
      %20 = sbr.rel (0) target = $region13
    $region12: #{conv_block_se_forward.1} parent=1 // pred_region
      _
    $region13: #{conv_block_se_forward.1} parent=1 // pred_fallthru
      _
    // Predicated region
    $region14: #{conv_block_se_forward.1} parent=1 // pred_check
      _
    $region15: #{conv_block_se_forward.1} parent=1 // pred_check_branch
      %22 = sbr.rel (0) target = $region17
    $region16: #{conv_block_se_forward.1} parent=1 // pred_region
      _
    $region17: #{conv_block_se_forward.1} parent=1 // pred_fallthru
      _
    // Predicated region
    $region18: #{conv_block_se_forward.1} parent=1 // pred_check
      _
    $region19: #{conv_block_se_forward.1} parent=1 // pred_check_branch
      %24 = sbr.rel (0) target = $region21
    $region20: #{conv_block_se_forward.1} parent=1 // pred_region
      _
    $region21: #{conv_block_se_forward.1} parent=1 // pred_fallthru
      _
    // Predicated region
    $region22: #{conv_block_se_forward.1} parent=1 // pred_check
      _
    $region23: #{conv_block_se_forward.1} parent=1 // pred_check_branch
      %26 = sbr.rel (0) target = $region25
    $region24: #{conv_block_se_forward.1} parent=1 // pred_region
      _
    $region25: #{conv_block_se_forward.1} parent=1 // pred_fallthru
      _
    // Predicated region
    $region26: #{conv_block_se_forward.1} parent=1 // pred_check
      _
    $region27: #{conv_block_se_forward.1} parent=1 // pred_check_branch
      %28 = sbr.rel (0) target = $region29
    $region28: #{conv_block_se_forward.1} parent=1 // pred_region
      _
    $region29: #{conv_block_se_forward.1} parent=1 // pred_fallthru
      _
    // Predicated region
    $region30: #{conv_block_se_forward.1} parent=1 // pred_check
      _
    $region31: #{conv_block_se_forward.1} parent=1 // pred_check_branch
      %30 = sbr.rel (0) target = $region33
    $region32: #{conv_block_se_forward.1} parent=1 // pred_region
      _
    $region33: #{conv_block_se_forward.1} parent=1 // pred_fallthru
      _
    // Predicated region
    $region34: #{conv_block_se_forward.1} parent=1 // pred_check
      _
    $region35: #{conv_block_se_forward.1} parent=1 // pred_check_branch
      %32 = sbr.rel (0) target = $region37
    $region36: #{conv_block_se_forward.1} parent=1 // pred_region
      _
    $region37: #{conv_block_se_forward.1} parent=1 // pred_fallthru
      _
    %v34 = vld [vmem:[%s0] sm:$0xff]
    %v35 = vld [vmem:[%s0 + $0x8] sm:$0xff]
    %v36 = vld [vmem:[%s0 + $0x10] sm:$0xff]
    %v37 = vld [vmem:[%s0 + $0x18] sm:$0xff]
    %v38 = vld [vmem:[%s0 + $0x20] sm:$0xff]
    %v39 = vld [vmem:[%s0 + $0x28] sm:$0xff]
    %v40 = vld [vmem:[%s0 + $0x30] sm:$0xff]
    %v41 = vld [vmem:[%s0 + $0x38] sm:$0xff]
    %v42 = vld [vmem:[%s0 + $0x40] sm:$0xff]
    %v43 = vld [vmem:[%s0 + $0x48] sm:$0xff]
    %v44 = vld [vmem:[%s0 + $0x50] sm:$0xff]
    %v45 = vld [vmem:[%s0 + $0x58] sm:$0xff]
    %v46 = vld [vmem:[%s0 + $0x60] sm:$0xff]
    %v47 = vld [vmem:[%s0 + $0x68] sm:$0xff]
    %v48 = vld [vmem:[%s0 + $0x70] sm:$0xff]
    %v49 = vld [vmem:[%s0 + $0x78] sm:$0xff]
    %v50 = vld [vmem:[%s0 + $0x80] sm:$0xff]
    %v51 = vld [vmem:[%s0 + $0x88] sm:$0xff]
    %v52 = vld [vmem:[%s0 + $0x90] sm:$0xff]
    %v53 = vld [vmem:[%s0 + $0x98] sm:$0xff]
    %v54 = vld [vmem:[%s0 + $0xa0] sm:$0xff]
    %v55 = vld [vmem:[%s0 + $0xa8] sm:$0xff]
    %v56 = vld [vmem:[%s0 + $0xb0] sm:$0xff]
    %v57 = vld [vmem:[%s0 + $0xb8] sm:$0xff]
    %v58 = vld [vmem:[%s0 + $0xc0] sm:$0xff]
    %v59 = vld [vmem:[%s0 + $0xc8] sm:$0xff]
    %v60 = vld [vmem:[%s0 + $0xd0] sm:$0xff]
    %v61 = vld [vmem:[%s0 + $0xd8] sm:$0xff]
    %v62 = vld [vmem:[%s0 + $0xe0] sm:$0xff]
    %v63 = vld [vmem:[%s0 + $0xe8] sm:$0xff]
    %v64 = vld [vmem:[%s0 + $0xf0] sm:$0xff]
    %v65 = vld [vmem:[%s0 + $0xf8] sm:$0xff]
    %vm66 = vcmask 130048
    %67 = vst.msk [vmem:[#allocation2 + $0x10] sm:$0xff] %vm66, %v34
    %68 = vst.msk [vmem:[#allocation2 + $0x18] sm:$0xff] %vm66, %v35
    %69 = vst.msk [vmem:[#allocation2 + $0x20] sm:$0xff] %vm66, %v36
    %70 = vst.msk [vmem:[#allocation2 + $0x28] sm:$0xff] %vm66, %v37
    %71 = vst.msk [vmem:[#allocation2 + $0x30] sm:$0xff] %vm66, %v38
    %72 = vst.msk [vmem:[#allocation2 + $0x38] sm:$0xff] %vm66, %v39
    %73 = vst.msk [vmem:[#allocation2 + $0x40] sm:$0xff] %vm66, %v40
    %74 = vst.msk [vmem:[#allocation2 + $0x48] sm:$0xff] %vm66, %v41
    %75 = vst.msk [vmem:[#allocation2 + $0x50] sm:$0xff] %vm66, %v42
    %76 = vst.msk [vmem:[#allocation2 + $0x58] sm:$0xff] %vm66, %v43
    %77 = vst.msk [vmem:[#allocation2 + $0x60] sm:$0xff] %vm66, %v44
    %78 = vst.msk [vmem:[#allocation2 + $0x68] sm:$0xff] %vm66, %v45
    %79 = vst.msk [vmem:[#allocation2 + $0x70] sm:$0xff] %vm66, %v46
    %80 = vst.msk [vmem:[#allocation2 + $0x78] sm:$0xff] %vm66, %v47
    %81 = vst.msk [vmem:[#allocation2 + $0x80] sm:$0xff] %vm66, %v48
    %82 = vst.msk [vmem:[#allocation2 + $0x88] sm:$0xff] %vm66, %v49
    %83 = vst.msk [vmem:[#allocation2 + $0x90] sm:$0xff] %vm66, %v50
    %84 = vst.msk [vmem:[#allocation2 + $0x98] sm:$0xff] %vm66, %v51
    %85 = vst.msk [vmem:[#allocation2 + $0xa0] sm:$0xff] %vm66, %v52
    %86 = vst.msk [vmem:[#allocation2 + $0xa8] sm:$0xff] %vm66, %v53
    %87 = vst.msk [vmem:[#allocation2 + $0xb0] sm:$0xff] %vm66, %v54
    %88 = vst.msk [vmem:[#allocation2 + $0xb8] sm:$0xff] %vm66, %v55
    %89 = vst.msk [vmem:[#allocation2 + $0xc0] sm:$0xff] %vm66, %v56
    %90 = vst.msk [vmem:[#allocation2 + $0xc8] sm:$0xff] %vm66, %v57
    %91 = vst.msk [vmem:[#allocation2 + $0xd0] sm:$0xff] %vm66, %v58
    %92 = vst.msk [vmem:[#allocation2 + $0xd8] sm:$0xff] %vm66, %v59
    %93 = vst.msk [vmem:[#allocation2 + $0xe0] sm:$0xff] %vm66, %v60
    %94 = vst.msk [vmem:[#allocation2 + $0xe8] sm:$0xff] %vm66, %v61
    %95 = vst.msk [vmem:[#allocation2 + $0xf0] sm:$0xff] %vm66, %v62
    %96 = vst.msk [vmem:[#allocation2 + $0xf8] sm:$0xff] %vm66, %v63
    %97 = vst.msk [vmem:[#allocation2 + $0x100] sm:$0xff] %vm66, %v64
    %98 = vst.msk [vmem:[#allocation2 + $0x108] sm:$0xff] %vm66, %v65
    %v99 = vlaneseq
    %v100 = vshrl.u32 %v99, 7
    %v101 = vadd.s32 %v100, 8
    %v102 = vadd.s32 %v100, 16
    %v103 = vadd.s32 %v100, 24
    %v104 = vadd.s32 %v100, 32
    %v105 = vadd.s32 %v100, 40
    %v106 = vadd.s32 %v100, 48
    %v107 = vadd.s32 %v100, 56
    %v108 = vadd.s32 %v100, 64
    %v109 = vadd.s32 %v100, 72
    %v110 = vadd.s32 %v100, 80
    %v111 = vadd.s32 %v100, 88
    %v112 = vadd.s32 %v100, 96
    %v113 = vadd.s32 %v100, 104
    %v114 = vadd.s32 %v100, 112
    %v115 = vadd.s32 %v100, 120
    %v116 = vadd.s32 %v100, 128
    %v117 = vadd.s32 %v100, 136
    %v118 = vadd.s32 %v100, 144
    %v119 = vadd.s32 %v100, 152
    %v120 = vadd.s32 %v100, 160
    %v121 = vadd.s32 %v100, 168
    %v122 = vadd.s32 %v100, 176
    %v123 = vadd.s32 %v100, 184
    %v124 = vadd.s32 %v100, 192
    %v125 = vadd.s32 %v100, 200
    %v126 = vadd.s32 %v100, 208
    %v127 = vadd.s32 %v100, 216
    %v128 = vadd.s32 %v100, 224
    %v129 = vadd.s32 %v100, 232
    %v130 = vadd.s32 %v100, 240
    %v131 = vadd.s32 %v100, 248
    %v132 = vand.u32 %v100, 63
    %v133 = vand.u32 %v101, 63
    %v134 = vand.u32 %v102, 63
    %v135 = vand.u32 %v103, 63
    %v136 = vand.u32 %v104, 63
    %v137 = vand.u32 %v105, 63
    %v138 = vand.u32 %v106, 63
    %v139 = vand.u32 %v107, 63
    %v140 = vand.u32 %v108, 63
    %v141 = vand.u32 %v109, 63
    %v142 = vand.u32 %v110, 63
    %v143 = vand.u32 %v111, 63
    %v144 = vand.u32 %v112, 63
    %v145 = vand.u32 %v113, 63
    %v146 = vand.u32 %v114, 63
    %v147 = vand.u32 %v115, 63
    %v148 = vand.u32 %v116, 63
    %v149 = vand.u32 %v117, 63
    %v150 = vand.u32 %v118, 63
    %v151 = vand.u32 %v119, 63
    %v152 = vand.u32 %v120, 63
    %v153 = vand.u32 %v121, 63
    %v154 = vand.u32 %v122, 63
    %v155 = vand.u32 %v123, 63
    %v156 = vand.u32 %v124, 63
    %v157 = vand.u32 %v125, 63
    %v158 = vand.u32 %v126, 63
    %v159 = vand.u32 %v127, 63
    %v160 = vand.u32 %v128, 63
    %v161 = vand.u32 %v129, 63
    %v162 = vand.u32 %v130, 63
    %v163 = vand.u32 %v131, 63
    %v164 = vand.u32 %v100, 7
    %v165 = vand.u32 %v101, 7
    %v166 = vand.u32 %v102, 7
    %v167 = vand.u32 %v103, 7
    %v168 = vand.u32 %v104, 7
    %v169 = vand.u32 %v105, 7
    %v170 = vand.u32 %v106, 7
    %v171 = vand.u32 %v107, 7
    %v172 = vand.u32 %v108, 7
    %v173 = vand.u32 %v109, 7
    %v174 = vand.u32 %v110, 7
    %v175 = vand.u32 %v111, 7
    %v176 = vand.u32 %v112, 7
    %v177 = vand.u32 %v113, 7
    %v178 = vand.u32 %v114, 7
    %v179 = vand.u32 %v115, 7
    %v180 = vand.u32 %v116, 7
    %v181 = vand.u32 %v117, 7
    %v182 = vand.u32 %v118, 7
    %v183 = vand.u32 %v119, 7
    %v184 = vand.u32 %v120, 7
    %v185 = vand.u32 %v121, 7
    %v186 = vand.u32 %v122, 7
    %v187 = vand.u32 %v123, 7
    %v188 = vand.u32 %v124, 7
    %v189 = vand.u32 %v125, 7
    %v190 = vand.u32 %v126, 7
    %v191 = vand.u32 %v127, 7
    %v192 = vand.u32 %v128, 7
    %v193 = vand.u32 %v129, 7
    %v194 = vand.u32 %v130, 7
    %v195 = vand.u32 %v131, 7
    %vm196 = vcmp.ge.s32.totalorder %v132, 8
    %vm197 = vcmp.ge.s32.totalorder %v133, 8
    %vm198 = vcmp.ge.s32.totalorder %v134, 8
    %vm199 = vcmp.ge.s32.totalorder %v135, 8
    %vm200 = vcmp.ge.s32.totalorder %v136, 8
    %vm201 = vcmp.ge.s32.totalorder %v137, 8
    %vm202 = vcmp.ge.s32.totalorder %v138, 8
    %vm203 = vcmp.ge.s32.totalorder %v139, 8
    %vm204 = vcmp.ge.s32.totalorder %v140, 8
    %vm205 = vcmp.ge.s32.totalorder %v141, 8
    %vm206 = vcmp.ge.s32.totalorder %v142, 8
    %vm207 = vcmp.ge.s32.totalorder %v143, 8
    %vm208 = vcmp.ge.s32.totalorder %v144, 8
    %vm209 = vcmp.ge.s32.totalorder %v145, 8
    %vm210 = vcmp.ge.s32.totalorder %v146, 8
    %vm211 = vcmp.ge.s32.totalorder %v147, 8
    %vm212 = vcmp.ge.s32.totalorder %v148, 8
    %vm213 = vcmp.ge.s32.totalorder %v149, 8
    %vm214 = vcmp.ge.s32.totalorder %v150, 8
    %vm215 = vcmp.ge.s32.totalorder %v151, 8
    %vm216 = vcmp.ge.s32.totalorder %v152, 8
    %vm217 = vcmp.ge.s32.totalorder %v153, 8
    %vm218 = vcmp.ge.s32.totalorder %v154, 8
    %vm219 = vcmp.ge.s32.totalorder %v155, 8
    %vm220 = vcmp.ge.s32.totalorder %v156, 8
    %vm221 = vcmp.ge.s32.totalorder %v157, 8
    %vm222 = vcmp.ge.s32.totalorder %v158, 8
    %vm223 = vcmp.ge.s32.totalorder %v159, 8
    %vm224 = vcmp.ge.s32.totalorder %v160, 8
    %vm225 = vcmp.ge.s32.totalorder %v161, 8
    %vm226 = vcmp.ge.s32.totalorder %v162, 8
    %vm227 = vcmp.ge.s32.totalorder %v163, 8
    %vm228 = vcmp.lt.s32.totalorder %v132, 56
    %vm229 = vcmp.lt.s32.totalorder %v133, 56
    %vm230 = vcmp.lt.s32.totalorder %v134, 56
    %vm231 = vcmp.lt.s32.totalorder %v135, 56
    %vm232 = vcmp.lt.s32.totalorder %v136, 56
    %vm233 = vcmp.lt.s32.totalorder %v137, 56
    %vm234 = vcmp.lt.s32.totalorder %v138, 56
    %vm235 = vcmp.lt.s32.totalorder %v139, 56
    %vm236 = vcmp.lt.s32.totalorder %v140, 56
    %vm237 = vcmp.lt.s32.totalorder %v141, 56
    %vm238 = vcmp.lt.s32.totalorder %v142, 56
    %vm239 = vcmp.lt.s32.totalorder %v143, 56
    %vm240 = vcmp.lt.s32.totalorder %v144, 56
    %vm241 = vcmp.lt.s32.totalorder %v145, 56
    %vm242 = vcmp.lt.s32.totalorder %v146, 56
    %vm243 = vcmp.lt.s32.totalorder %v147, 56
    %vm244 = vcmp.lt.s32.totalorder %v148, 56
    %vm245 = vcmp.lt.s32.totalorder %v149, 56
    %vm246 = vcmp.lt.s32.totalorder %v150, 56
    %vm247 = vcmp.lt.s32.totalorder %v151, 56
    %vm248 = vcmp.lt.s32.totalorder %v152, 56
    %vm249 = vcmp.lt.s32.totalorder %v153, 56
    %vm250 = vcmp.lt.s32.totalorder %v154, 56
    %vm251 = vcmp.lt.s32.totalorder %v155, 56
    %vm252 = vcmp.lt.s32.totalorder %v156, 56
    %vm253 = vcmp.lt.s32.totalorder %v157, 56
    %vm254 = vcmp.lt.s32.totalorder %v158, 56
    %vm255 = vcmp.lt.s32.totalorder %v159, 56
    %vm256 = vcmp.lt.s32.totalorder %v160, 56
    %vm257 = vcmp.lt.s32.totalorder %v161, 56
    %vm258 = vcmp.lt.s32.totalorder %v162, 56
    %vm259 = vcmp.lt.s32.totalorder %v163, 56
    %vm260 = vcmp.ge.s32.totalorder %v164, 1
    %vm261 = vcmp.ge.s32.totalorder %v165, 1
    %vm262 = vcmp.ge.s32.totalorder %v166, 1
    %vm263 = vcmp.ge.s32.totalorder %v167, 1
    %vm264 = vcmp.ge.s32.totalorder %v168, 1
    %vm265 = vcmp.ge.s32.totalorder %v169, 1
    %vm266 = vcmp.ge.s32.totalorder %v170, 1
    %vm267 = vcmp.ge.s32.totalorder %v171, 1
    %vm268 = vcmp.ge.s32.totalorder %v172, 1
    %vm269 = vcmp.ge.s32.totalorder %v173, 1
    %vm270 = vcmp.ge.s32.totalorder %v174, 1
    %vm271 = vcmp.ge.s32.totalorder %v175, 1
    %vm272 = vcmp.ge.s32.totalorder %v176, 1
    %vm273 = vcmp.ge.s32.totalorder %v177, 1
    %vm274 = vcmp.ge.s32.totalorder %v178, 1
    %vm275 = vcmp.ge.s32.totalorder %v179, 1
    %vm276 = vcmp.ge.s32.totalorder %v180, 1
    %vm277 = vcmp.ge.s32.totalorder %v181, 1
    %vm278 = vcmp.ge.s32.totalorder %v182, 1
    %vm279 = vcmp.ge.s32.totalorder %v183, 1
    %vm280 = vcmp.ge.s32.totalorder %v184, 1
    %vm281 = vcmp.ge.s32.totalorder %v185, 1
    %vm282 = vcmp.ge.s32.totalorder %v186, 1
    %vm283 = vcmp.ge.s32.totalorder %v187, 1
    %vm284 = vcmp.ge.s32.totalorder %v188, 1
    %vm285 = vcmp.ge.s32.totalorder %v189, 1
    %vm286 = vcmp.ge.s32.totalorder %v190, 1
    %vm287 = vcmp.ge.s32.totalorder %v191, 1
    %vm288 = vcmp.ge.s32.totalorder %v192, 1
    %vm289 = vcmp.ge.s32.totalorder %v193, 1
    %vm290 = vcmp.ge.s32.totalorder %v194, 1
    %vm291 = vcmp.ge.s32.totalorder %v195, 1
    %vm292 = vcmp.lt.s32.totalorder %v164, 7
    %vm293 = vcmp.lt.s32.totalorder %v165, 7
    %vm294 = vcmp.lt.s32.totalorder %v166, 7
    %vm295 = vcmp.lt.s32.totalorder %v167, 7
    %vm296 = vcmp.lt.s32.totalorder %v168, 7
    %vm297 = vcmp.lt.s32.totalorder %v169, 7
    %vm298 = vcmp.lt.s32.totalorder %v170, 7
    %vm299 = vcmp.lt.s32.totalorder %v171, 7
    %vm300 = vcmp.lt.s32.totalorder %v172, 7
    %vm301 = vcmp.lt.s32.totalorder %v173, 7
    %vm302 = vcmp.lt.s32.totalorder %v174, 7
    %vm303 = vcmp.lt.s32.totalorder %v175, 7
    %vm304 = vcmp.lt.s32.totalorder %v176, 7
    %vm305 = vcmp.lt.s32.totalorder %v177, 7
    %vm306 = vcmp.lt.s32.totalorder %v178, 7
    %vm307 = vcmp.lt.s32.totalorder %v179, 7
    %vm308 = vcmp.lt.s32.totalorder %v180, 7
    %vm309 = vcmp.lt.s32.totalorder %v181, 7
    %vm310 = vcmp.lt.s32.totalorder %v182, 7
    %vm311 = vcmp.lt.s32.totalorder %v183, 7
    %vm312 = vcmp.lt.s32.totalorder %v184, 7
    %vm313 = vcmp.lt.s32.totalorder %v185, 7
    %vm314 = vcmp.lt.s32.totalorder %v186, 7
    %vm315 = vcmp.lt.s32.totalorder %v187, 7
    %vm316 = vcmp.lt.s32.totalorder %v188, 7
    %vm317 = vcmp.lt.s32.totalorder %v189, 7
    %vm318 = vcmp.lt.s32.totalorder %v190, 7
    %vm319 = vcmp.lt.s32.totalorder %v191, 7
    %vm320 = vcmp.lt.s32.totalorder %v192, 7
    %vm321 = vcmp.lt.s32.totalorder %v193, 7
    %vm322 = vcmp.lt.s32.totalorder %v194, 7
    %vm323 = vcmp.lt.s32.totalorder %v195, 7
    %v324 = vld [vmem:[#allocation2 + $0x7] sm:$0xff]
    %v325 = vld [vmem:[#allocation2 + $0xf] sm:$0xff]
    %v326 = vld [vmem:[#allocation2 + $0x17] sm:$0xff]
    %v327 = vld [vmem:[#allocation2 + $0x1f] sm:$0xff]
    %v328 = vld [vmem:[#allocation2 + $0x27] sm:$0xff]
    %v329 = vld [vmem:[#allocation2 + $0x2f] sm:$0xff]
    %v330 = vld [vmem:[#allocation2 + $0x37] sm:$0xff]
    %v331 = vld [vmem:[#allocation2 + $0x3f] sm:$0xff]
    %v332 = vld [vmem:[#allocation2 + $0x47] sm:$0xff]
    %v333 = vld [vmem:[#allocation2 + $0x4f] sm:$0xff]
    %v334 = vld [vmem:[#allocation2 + $0x57] sm:$0xff]
    %v335 = vld [vmem:[#allocation2 + $0x5f] sm:$0xff]
    %v336 = vld [vmem:[#allocation2 + $0x67] sm:$0xff]
    %v337 = vld [vmem:[#allocation2 + $0x6f] sm:$0xff]
    %v338 = vld [vmem:[#allocation2 + $0x77] sm:$0xff]
    %v339 = vld [vmem:[#allocation2 + $0x7f] sm:$0xff]
    %v340 = vld [vmem:[#allocation2 + $0x87] sm:$0xff]
    %v341 = vld [vmem:[#allocation2 + $0x8f] sm:$0xff]
    %v342 = vld [vmem:[#allocation2 + $0x97] sm:$0xff]
    %v343 = vld [vmem:[#allocation2 + $0x9f] sm:$0xff]
    %v344 = vld [vmem:[#allocation2 + $0xa7] sm:$0xff]
    %v345 = vld [vmem:[#allocation2 + $0xaf] sm:$0xff]
    %v346 = vld [vmem:[#allocation2 + $0xb7] sm:$0xff]
    %v347 = vld [vmem:[#allocation2 + $0xbf] sm:$0xff]
    %v348 = vld [vmem:[#allocation2 + $0xc7] sm:$0xff]
    %v349 = vld [vmem:[#allocation2 + $0xcf] sm:$0xff]
    %v350 = vld [vmem:[#allocation2 + $0xd7] sm:$0xff]
    %v351 = vld [vmem:[#allocation2 + $0xdf] sm:$0xff]
    %v352 = vld [vmem:[#allocation2 + $0xe7] sm:$0xff]
    %v353 = vld [vmem:[#allocation2 + $0xef] sm:$0xff]
    %v354 = vld [vmem:[#allocation2 + $0xf7] sm:$0xff]
    %v355 = vld [vmem:[#allocation2 + $0xff] sm:$0xff]
    %vm356 = vmand %vm196, %vm260
    %vm357 = vmand %vm197, %vm261
    %vm358 = vmand %vm198, %vm262
    %vm359 = vmand %vm199, %vm263
    %vm360 = vmand %vm200, %vm264
    %vm361 = vmand %vm201, %vm265
    %vm362 = vmand %vm202, %vm266
    %vm363 = vmand %vm203, %vm267
    %vm364 = vmand %vm204, %vm268
    %vm365 = vmand %vm205, %vm269
    %vm366 = vmand %vm206, %vm270
    %vm367 = vmand %vm207, %vm271
    %vm368 = vmand %vm208, %vm272
    %vm369 = vmand %vm209, %vm273
    %vm370 = vmand %vm210, %vm274
    %vm371 = vmand %vm211, %vm275
    %vm372 = vmand %vm212, %vm276
    %vm373 = vmand %vm213, %vm277
    %vm374 = vmand %vm214, %vm278
    %vm375 = vmand %vm215, %vm279
    %vm376 = vmand %vm216, %vm280
    %vm377 = vmand %vm217, %vm281
    %vm378 = vmand %vm218, %vm282
    %vm379 = vmand %vm219, %vm283
    %vm380 = vmand %vm220, %vm284
    %vm381 = vmand %vm221, %vm285
    %vm382 = vmand %vm222, %vm286
    %vm383 = vmand %vm223, %vm287
    %vm384 = vmand %vm224, %vm288
    %vm385 = vmand %vm225, %vm289
    %vm386 = vmand %vm226, %vm290
    %vm387 = vmand %vm227, %vm291
    %v388 = vsel %vm356, 1, 0
    %v389 = vsel %vm357, 1, 0
    %v390 = vsel %vm358, 1, 0
    %v391 = vsel %vm359, 1, 0
    %v392 = vsel %vm360, 1, 0
    %v393 = vsel %vm361, 1, 0
    %v394 = vsel %vm362, 1, 0
    %v395 = vsel %vm363, 1, 0
    %v396 = vsel %vm364, 1, 0
    %v397 = vsel %vm365, 1, 0
    %v398 = vsel %vm366, 1, 0
    %v399 = vsel %vm367, 1, 0
    %v400 = vsel %vm368, 1, 0
    %v401 = vsel %vm369, 1, 0
    %v402 = vsel %vm370, 1, 0
    %v403 = vsel %vm371, 1, 0
    %v404 = vsel %vm372, 1, 0
    %v405 = vsel %vm373, 1, 0
    %v406 = vsel %vm374, 1, 0
    %v407 = vsel %vm375, 1, 0
    %v408 = vsel %vm376, 1, 0
    %v409 = vsel %vm377, 1, 0
    %v410 = vsel %vm378, 1, 0
    %v411 = vsel %vm379, 1, 0
    %v412 = vsel %vm380, 1, 0
    %v413 = vsel %vm381, 1, 0
    %v414 = vsel %vm382, 1, 0
    %v415 = vsel %vm383, 1, 0
    %v416 = vsel %vm384, 1, 0
    %v417 = vsel %vm385, 1, 0
    %v418 = vsel %vm386, 1, 0
    %v419 = vsel %vm387, 1, 0
    %vm420 = vcmp.eq.s32.totalorder %v388, 1
    %vm421 = vcmp.eq.s32.totalorder %v389, 1
    %vm422 = vcmp.eq.s32.totalorder %v390, 1
    %vm423 = vcmp.eq.s32.totalorder %v391, 1
    %vm424 = vcmp.eq.s32.totalorder %v392, 1
    %vm425 = vcmp.eq.s32.totalorder %v393, 1
    %vm426 = vcmp.eq.s32.totalorder %v394, 1
    %vm427 = vcmp.eq.s32.totalorder %v395, 1
    %vm428 = vcmp.eq.s32.totalorder %v396, 1
    %vm429 = vcmp.eq.s32.totalorder %v397, 1
    %vm430 = vcmp.eq.s32.totalorder %v398, 1
    %vm431 = vcmp.eq.s32.totalorder %v399, 1
    %vm432 = vcmp.eq.s32.totalorder %v400, 1
    %vm433 = vcmp.eq.s32.totalorder %v401, 1
    %vm434 = vcmp.eq.s32.totalorder %v402, 1
    %vm435 = vcmp.eq.s32.totalorder %v403, 1
    %vm436 = vcmp.eq.s32.totalorder %v404, 1
    %vm437 = vcmp.eq.s32.totalorder %v405, 1
    %vm438 = vcmp.eq.s32.totalorder %v406, 1
    %vm439 = vcmp.eq.s32.totalorder %v407, 1
    %vm440 = vcmp.eq.s32.totalorder %v408, 1
    %vm441 = vcmp.eq.s32.totalorder %v409, 1
    %vm442 = vcmp.eq.s32.totalorder %v410, 1
    %vm443 = vcmp.eq.s32.totalorder %v411, 1
    %vm444 = vcmp.eq.s32.totalorder %v412, 1
    %vm445 = vcmp.eq.s32.totalorder %v413, 1
    %vm446 = vcmp.eq.s32.totalorder %v414, 1
    %vm447 = vcmp.eq.s32.totalorder %v415, 1
    %vm448 = vcmp.eq.s32.totalorder %v416, 1
    %vm449 = vcmp.eq.s32.totalorder %v417, 1
    %vm450 = vcmp.eq.s32.totalorder %v418, 1
    %vm451 = vcmp.eq.s32.totalorder %v419, 1
    %v452 = vsel %vm420, %v324, 0.0
    %v453 = vsel %vm421, %v325, 0.0
    %v454 = vsel %vm422, %v326, 0.0
    %v455 = vsel %vm423, %v327, 0.0
    %v456 = vsel %vm424, %v328, 0.0
    %v457 = vsel %vm425, %v329, 0.0
    %v458 = vsel %vm426, %v330, 0.0
    %v459 = vsel %vm427, %v331, 0.0
    %v460 = vsel %vm428, %v332, 0.0
    %v461 = vsel %vm429, %v333, 0.0
    %v462 = vsel %vm430, %v334, 0.0
    %v463 = vsel %vm431, %v335, 0.0
    %v464 = vsel %vm432, %v336, 0.0
    %v465 = vsel %vm433, %v337, 0.0
    %v466 = vsel %vm434, %v338, 0.0
    %v467 = vsel %vm435, %v339, 0.0
    %v468 = vsel %vm436, %v340, 0.0
    %v469 = vsel %vm437, %v341, 0.0
    %v470 = vsel %vm438, %v342, 0.0
    %v471 = vsel %vm439, %v343, 0.0
    %v472 = vsel %vm440, %v344, 0.0
    %v473 = vsel %vm441, %v345, 0.0
    %v474 = vsel %vm442, %v346, 0.0
    %v475 = vsel %vm443, %v347, 0.0
    %v476 = vsel %vm444, %v348, 0.0
    %v477 = vsel %vm445, %v349, 0.0
    %v478 = vsel %vm446, %v350, 0.0
    %v479 = vsel %vm447, %v351, 0.0
    %v480 = vsel %vm448, %v352, 0.0
    %v481 = vsel %vm449, %v353, 0.0
    %v482 = vsel %vm450, %v354, 0.0
    %v483 = vsel %vm451, %v355, 0.0
    %v484 = vpack.c.bf16 %v453, %v452
    %v485 = vpack.c.bf16 %v455, %v454
    %v486 = vpack.c.bf16 %v457, %v456
    %v487 = vpack.c.bf16 %v459, %v458
    %v488 = vpack.c.bf16 %v461, %v460
    %v489 = vpack.c.bf16 %v463, %v462
    %v490 = vpack.c.bf16 %v465, %v464
    %v491 = vpack.c.bf16 %v467, %v466
    %v492 = vpack.c.bf16 %v469, %v468
    %v493 = vpack.c.bf16 %v471, %v470
    %v494 = vpack.c.bf16 %v473, %v472
    %v495 = vpack.c.bf16 %v475, %v474
    %v496 = vpack.c.bf16 %v477, %v476
    %v497 = vpack.c.bf16 %v479, %v478
    %v498 = vpack.c.bf16 %v481, %v480
    %v499 = vpack.c.bf16 %v483, %v482
    %v500 = vld [vmem:[%s1] sm:$0xf]
    %v501 = vld [vmem:[%s1 + $0x4] sm:$0xf]
    %v502 = vld [vmem:[#allocation2 + $0x8] sm:$0xff]
    %v503 = vld [vmem:[#allocation2 + $0x10] sm:$0xff]
    %v504 = vld [vmem:[#allocation2 + $0x18] sm:$0xff]
    %v505 = vld [vmem:[#allocation2 + $0x20] sm:$0xff]
    %v506 = vld [vmem:[#allocation2 + $0x28] sm:$0xff]
    %v507 = vld [vmem:[#allocation2 + $0x30] sm:$0xff]
    %v508 = vld [vmem:[#allocation2 + $0x38] sm:$0xff]
    %v509 = vld [vmem:[#allocation2 + $0x40] sm:$0xff]
    %v510 = vld [vmem:[#allocation2 + $0x48] sm:$0xff]
    %v511 = vld [vmem:[#allocation2 + $0x50] sm:$0xff]
    %v512 = vld [vmem:[#allocation2 + $0x58] sm:$0xff]
    %v513 = vld [vmem:[#allocation2 + $0x60] sm:$0xff]
    %v514 = vld [vmem:[#allocation2 + $0x68] sm:$0xff]
    %v515 = vld [vmem:[#allocation2 + $0x70] sm:$0xff]
    %v516 = vld [vmem:[#allocation2 + $0x78] sm:$0xff]
    %v517 = vld [vmem:[#allocation2 + $0x80] sm:$0xff]
    %v518 = vld [vmem:[#allocation2 + $0x88] sm:$0xff]
    %v519 = vld [vmem:[#allocation2 + $0x90] sm:$0xff]
    %v520 = vld [vmem:[#allocation2 + $0x98] sm:$0xff]
    %v521 = vld [vmem:[#allocation2 + $0xa0] sm:$0xff]
    %v522 = vld [vmem:[#allocation2 + $0xa8] sm:$0xff]
    %v523 = vld [vmem:[#allocation2 + $0xb0] sm:$0xff]
    %v524 = vld [vmem:[#allocation2 + $0xb8] sm:$0xff]
    %v525 = vld [vmem:[#allocation2 + $0xc0] sm:$0xff]
    %v526 = vld [vmem:[#allocation2 + $0xc8] sm:$0xff]
    %v527 = vld [vmem:[#allocation2 + $0xd0] sm:$0xff]
    %v528 = vld [vmem:[#allocation2 + $0xd8] sm:$0xff]
    %v529 = vld [vmem:[#allocation2 + $0xe0] sm:$0xff]
    %v530 = vld [vmem:[#allocation2 + $0xe8] sm:$0xff]
    %v531 = vld [vmem:[#allocation2 + $0xf0] sm:$0xff]
    %v532 = vld [vmem:[#allocation2 + $0xf8] sm:$0xff]
    %v533 = vld [vmem:[#allocation2 + $0x100] sm:$0xff]
    %v534 = vsel %vm196, 1, 0
    %v535 = vsel %vm197, 1, 0
    %v536 = vsel %vm198, 1, 0
    %v537 = vsel %vm199, 1, 0
    %v538 = vsel %vm200, 1, 0
    %v539 = vsel %vm201, 1, 0
    %v540 = vsel %vm202, 1, 0
    %v541 = vsel %vm203, 1, 0
    %v542 = vsel %vm204, 1, 0
    %v543 = vsel %vm205, 1, 0
    %v544 = vsel %vm206, 1, 0
    %v545 = vsel %vm207, 1, 0
    %v546 = vsel %vm208, 1, 0
    %v547 = vsel %vm209, 1, 0
    %v548 = vsel %vm210, 1, 0
    %v549 = vsel %vm211, 1, 0
    %v550 = vsel %vm212, 1, 0
    %v551 = vsel %vm213, 1, 0
    %v552 = vsel %vm214, 1, 0
    %v553 = vsel %vm215, 1, 0
    %v554 = vsel %vm216, 1, 0
    %v555 = vsel %vm217, 1, 0
    %v556 = vsel %vm218, 1, 0
    %v557 = vsel %vm219, 1, 0
    %v558 = vsel %vm220, 1, 0
    %v559 = vsel %vm221, 1, 0
    %v560 = vsel %vm222, 1, 0
    %v561 = vsel %vm223, 1, 0
    %v562 = vsel %vm224, 1, 0
    %v563 = vsel %vm225, 1, 0
    %v564 = vsel %vm226, 1, 0
    %v565 = vsel %vm227, 1, 0
    %vm566 = vcmp.eq.s32.totalorder %v534, 1
    %vm567 = vcmp.eq.s32.totalorder %v535, 1
    %vm568 = vcmp.eq.s32.totalorder %v536, 1
    %vm569 = vcmp.eq.s32.totalorder %v537, 1
    %vm570 = vcmp.eq.s32.totalorder %v538, 1
    %vm571 = vcmp.eq.s32.totalorder %v539, 1
    %vm572 = vcmp.eq.s32.totalorder %v540, 1
    %vm573 = vcmp.eq.s32.totalorder %v541, 1
    %vm574 = vcmp.eq.s32.totalorder %v542, 1
    %vm575 = vcmp.eq.s32.totalorder %v543, 1
    %vm576 = vcmp.eq.s32.totalorder %v544, 1
    %vm577 = vcmp.eq.s32.totalorder %v545, 1
    %vm578 = vcmp.eq.s32.totalorder %v546, 1
    %vm579 = vcmp.eq.s32.totalorder %v547, 1
    %vm580 = vcmp.eq.s32.totalorder %v548, 1
    %vm581 = vcmp.eq.s32.totalorder %v549, 1
    %vm582 = vcmp.eq.s32.totalorder %v550, 1
    %vm583 = vcmp.eq.s32.totalorder %v551, 1
    %vm584 = vcmp.eq.s32.totalorder %v552, 1
    %vm585 = vcmp.eq.s32.totalorder %v553, 1
    %vm586 = vcmp.eq.s32.totalorder %v554, 1
    %vm587 = vcmp.eq.s32.totalorder %v555, 1
    %vm588 = vcmp.eq.s32.totalorder %v556, 1
    %vm589 = vcmp.eq.s32.totalorder %v557, 1
    %vm590 = vcmp.eq.s32.totalorder %v558, 1
    %vm591 = vcmp.eq.s32.totalorder %v559, 1
    %vm592 = vcmp.eq.s32.totalorder %v560, 1
    %vm593 = vcmp.eq.s32.totalorder %v561, 1
    %vm594 = vcmp.eq.s32.totalorder %v562, 1
    %vm595 = vcmp.eq.s32.totalorder %v563, 1
    %vm596 = vcmp.eq.s32.totalorder %v564, 1
    %vm597 = vcmp.eq.s32.totalorder %v565, 1
    %v598 = vsel %vm566, %v502, 0.0
    %v599 = vsel %vm567, %v503, 0.0
    %v600 = vsel %vm568, %v504, 0.0
    %v601 = vsel %vm569, %v505, 0.0
    %v602 = vsel %vm570, %v506, 0.0
    %v603 = vsel %vm571, %v507, 0.0
    %v604 = vsel %vm572, %v508, 0.0
    %v605 = vsel %vm573, %v509, 0.0
    %v606 = vsel %vm574, %v510, 0.0
    %v607 = vsel %vm575, %v511, 0.0
    %v608 = vsel %vm576, %v512, 0.0
    %v609 = vsel %vm577, %v513, 0.0
    %v610 = vsel %vm578, %v514, 0.0
    %v611 = vsel %vm579, %v515, 0.0
    %v612 = vsel %vm580, %v516, 0.0
    %v613 = vsel %vm581, %v517, 0.0
    %v614 = vsel %vm582, %v518, 0.0
    %v615 = vsel %vm583, %v519, 0.0
    %v616 = vsel %vm584, %v520, 0.0
    %v617 = vsel %vm585, %v521, 0.0
    %v618 = vsel %vm586, %v522, 0.0
    %v619 = vsel %vm587, %v523, 0.0
    %v620 = vsel %vm588, %v524, 0.0
    %v621 = vsel %vm589, %v525, 0.0
    %v622 = vsel %vm590, %v526, 0.0
    %v623 = vsel %vm591, %v527, 0.0
    %v624 = vsel %vm592, %v528, 0.0
    %v625 = vsel %vm593, %v529, 0.0
    %v626 = vsel %vm594, %v530, 0.0
    %v627 = vsel %vm595, %v531, 0.0
    %v628 = vsel %vm596, %v532, 0.0
    %v629 = vsel %vm597, %v533, 0.0
    %v630 = vpack.c.bf16 %v599, %v598
    %v631 = vpack.c.bf16 %v601, %v600
    %v632 = vpack.c.bf16 %v603, %v602
    %v633 = vpack.c.bf16 %v605, %v604
    %v634 = vpack.c.bf16 %v607, %v606
    %v635 = vpack.c.bf16 %v609, %v608
    %v636 = vpack.c.bf16 %v611, %v610
    %v637 = vpack.c.bf16 %v613, %v612
    %v638 = vpack.c.bf16 %v615, %v614
    %v639 = vpack.c.bf16 %v617, %v616
    %v640 = vpack.c.bf16 %v619, %v618
    %v641 = vpack.c.bf16 %v621, %v620
    %v642 = vpack.c.bf16 %v623, %v622
    %v643 = vpack.c.bf16 %v625, %v624
    %v644 = vpack.c.bf16 %v627, %v626
    %v645 = vpack.c.bf16 %v629, %v628
    %s646 = scalar_lea.vmem %s1, 8
    %v647 = vld [vmem:[%s646] sm:$0xf]
    %v648 = vld [vmem:[%s646 + $0x4] sm:$0xf]
    %v651 = vunpack.c.l.b16 %v647
    %v652 = vunpack.c.l.b16 %v648
    %v653 = vpack.c.b16 %v652, %v651
    %v656 = vsel %vm66, %v630, 0
    %v659 = vsel %vm66, %v631, 0
    %v662 = vsel %vm66, %v632, 0
    %v665 = vsel %vm66, %v633, 0
    %v668 = vsel %vm66, %v634, 0
    %v671 = vsel %vm66, %v635, 0
    %v674 = vsel %vm66, %v636, 0
    %v677 = vsel %vm66, %v637, 0
    %v680 = vsel %vm66, %v638, 0
    %v683 = vsel %vm66, %v639, 0
    %v686 = vsel %vm66, %v640, 0
    %v689 = vsel %vm66, %v641, 0
    %v692 = vsel %vm66, %v642, 0
    %v695 = vsel %vm66, %v643, 0
    %v698 = vsel %vm66, %v644, 0
    %v701 = vsel %vm66, %v645, 0
    %703 = vmatprep.subr.bf16.mxu0 0
    %704 = vmatpush1.bf16.msra.mxu0 %v653
    %705 = vmatprep.subr.bf16.mxu0 0
    %706 = vmatpush1.bf16.msra.mxu0 0
    %707 = vmatprep.subr.bf16.mxu0 0
    %708 = vmatpush1.bf16.msra.mxu0 0
    %709 = vmatprep.subr.bf16.mxu0 0
    %710 = vmatpush1.bf16.msra.mxu0 0
    %711 = vmatprep.subr.bf16.mxu0 0
    %712 = vmatpush1.bf16.msra.mxu0 0
    %713 = vmatprep.subr.bf16.mxu0 0
    %714 = vmatpush1.bf16.msra.mxu0 0
    %715 = vmatprep.subr.bf16.mxu0 0
    %716 = vmatpush1.bf16.msra.mxu0 0
    %717 = vmatprep.subr.bf16.mxu0 0
    %718 = vmatpush1.bf16.msra.mxu0 0
    %719 = vmatprep.subr.bf16.mxu0 0
    %720 = vmatpush1.bf16.msra.mxu0 0
    %721 = vmatprep.subr.bf16.mxu0 0
    %722 = vmatpush1.bf16.msra.mxu0 0
    %723 = vmatprep.subr.bf16.mxu0 0
    %724 = vmatpush1.bf16.msra.mxu0 0
    %725 = vmatprep.subr.bf16.mxu0 0
    %726 = vmatpush1.bf16.msra.mxu0 0
    %727 = vmatprep.subr.bf16.mxu0 0
    %728 = vmatpush1.bf16.msra.mxu0 0
    %729 = vmatprep.subr.bf16.mxu0 0
    %730 = vmatpush1.bf16.msra.mxu0 0
    %731 = vmatprep.subr.bf16.mxu0 0
    %732 = vmatpush1.bf16.msra.mxu0 0
    %733 = vmatprep.subr.bf16.mxu0 0
    %734 = vmatpush1.bf16.msra.mxu0 0
    %735 = vmatprep.mubr.bf16.mxu0 0
    %736 = vmatmul.mubr.bf16.gmra.mrb[0].mxu0 %v656
    %v737 = vpop.f32.mrb[0].mxu0
    %v738 = vadd.f32 0.0, %v737
    %v739 = vpop.f32.mrb[0].mxu0
    %v740 = vpop.f32.mrb[0].mxu0
    %v741 = vadd.f32 0.0, %v740
    %v742 = vpop.f32.mrb[0].mxu0
    %743 = vmatprep.mubr.bf16.mxu0 0
    %744 = vmatmul.mubr.bf16.gmra.mrb[0].mxu0 %v659
    %v745 = vpop.f32.mrb[0].mxu0
    %v746 = vadd.f32 0.0, %v745
    %v747 = vpop.f32.mrb[0].mxu0
    %v748 = vpop.f32.mrb[0].mxu0
    %v749 = vadd.f32 0.0, %v748
    %v750 = vpop.f32.mrb[0].mxu0
    %751 = vmatprep.mubr.bf16.mxu0 0
    %752 = vmatmul.mubr.bf16.gmra.mrb[0].mxu0 %v662
    %v753 = vpop.f32.mrb[0].mxu0
    %v754 = vadd.f32 0.0, %v753
    %v755 = vpop.f32.mrb[0].mxu0
    %v756 = vpop.f32.mrb[0].mxu0
    %v757 = vadd.f32 0.0, %v756
    %v758 = vpop.f32.mrb[0].mxu0
    %759 = vmatprep.mubr.bf16.mxu0 0
    %760 = vmatmul.mubr.bf16.gmra.mrb[0].mxu0 %v665
    %v761 = vpop.f32.mrb[0].mxu0
    %v762 = vadd.f32 0.0, %v761
    %v763 = vpop.f32.mrb[0].mxu0
    %v764 = vpop.f32.mrb[0].mxu0
    %v765 = vadd.f32 0.0, %v764
    %v766 = vpop.f32.mrb[0].mxu0
    %767 = vmatprep.mubr.bf16.mxu0 0
    %768 = vmatmul.mubr.bf16.gmra.mrb[0].mxu0 %v668
    %v769 = vpop.f32.mrb[0].mxu0
    %v770 = vadd.f32 0.0, %v769
    %v771 = vpop.f32.mrb[0].mxu0
    %v772 = vpop.f32.mrb[0].mxu0
    %v773 = vadd.f32 0.0, %v772
    %v774 = vpop.f32.mrb[0].mxu0
    %775 = vmatprep.mubr.bf16.mxu0 0
    %776 = vmatmul.mubr.bf16.gmra.mrb[0].mxu0 %v671
    %v777 = vpop.f32.mrb[0].mxu0
    %v778 = vadd.f32 0.0, %v777
    %v779 = vpop.f32.mrb[0].mxu0
    %v780 = vpop.f32.mrb[0].mxu0
    %v781 = vadd.f32 0.0, %v780
    %v782 = vpop.f32.mrb[0].mxu0
    %783 = vmatprep.mubr.bf16.mxu0 0
    %784 = vmatmul.mubr.bf16.gmra.mrb[0].mxu0 %v674
    %v785 = vpop.f32.mrb[0].mxu0
    %v786 = vadd.f32 0.0, %v785
    %v787 = vpop.f32.mrb[0].mxu0
    %v788 = vpop.f32.mrb[0].mxu0
    %v789 = vadd.f32 0.0, %v788
    %v790 = vpop.f32.mrb[0].mxu0
    %791 = vmatprep.mubr.bf16.mxu0 0
    %792 = vmatmul.mubr.bf16.gmra.mrb[0].mxu0 %v677
    %v793 = vpop.f32.mrb[0].mxu0
    %v794 = vadd.f32 0.0, %v793
    %v795 = vpop.f32.mrb[0].mxu0
    %v796 = vpop.f32.mrb[0].mxu0
    %v797 = vadd.f32 0.0, %v796
    %v798 = vpop.f32.mrb[0].mxu0
    %799 = vmatprep.mubr.bf16.mxu0 0
    %800 = vmatmul.mubr.bf16.gmra.mrb[0].mxu0 %v680
    %v801 = vpop.f32.mrb[0].mxu0
    %v802 = vadd.f32 0.0, %v801
    %v803 = vpop.f32.mrb[0].mxu0
    %v804 = vpop.f32.mrb[0].mxu0
    %v805 = vadd.f32 0.0, %v804
    %v806 = vpop.f32.mrb[0].mxu0
    %807 = vmatprep.mubr.bf16.mxu0 0
    %808 = vmatmul.mubr.bf16.gmra.mrb[0].mxu0 %v683
    %v809 = vpop.f32.mrb[0].mxu0
    %v810 = vadd.f32 0.0, %v809
    %v811 = vpop.f32.mrb[0].mxu0
    %v812 = vpop.f32.mrb[0].mxu0
    %v813 = vadd.f32 0.0, %v812
    %v814 = vpop.f32.mrb[0].mxu0
    %815 = vmatprep.mubr.bf16.mxu0 0
    %816 = vmatmul.mubr.bf16.gmra.mrb[0].mxu0 %v686
    %v817 = vpop.f32.mrb[0].mxu0
    %v818 = vadd.f32 0.0, %v817
    %v819 = vpop.f32.mrb[0].mxu0
    %v820 = vpop.f32.mrb[0].mxu0
    %v821 = vadd.f32 0.0, %v820
    %v822 = vpop.f32.mrb[0].mxu0
    %823 = vmatprep.mubr.bf16.mxu0 0
    %824 = vmatmul.mubr.bf16.gmra.mrb[0].mxu0 %v689
    %v825 = vpop.f32.mrb[0].mxu0
    %v826 = vadd.f32 0.0, %v825
    %v827 = vpop.f32.mrb[0].mxu0
    %v828 = vpop.f32.mrb[0].mxu0
    %v829 = vadd.f32 0.0, %v828
    %v830 = vpop.f32.mrb[0].mxu0
    %831 = vmatprep.mubr.bf16.mxu0 0
    %832 = vmatmul.mubr.bf16.gmra.mrb[0].mxu0 %v692
    %v833 = vpop.f32.mrb[0].mxu0
    %v834 = vadd.f32 0.0, %v833
    %v835 = vpop.f32.mrb[0].mxu0
    %v836 = vpop.f32.mrb[0].mxu0
    %v837 = vadd.f32 0.0, %v836
    %v838 = vpop.f32.mrb[0].mxu0
    %839 = vmatprep.mubr.bf16.mxu0 0
    %840 = vmatmul.mubr.bf16.gmra.mrb[0].mxu0 %v695
    %v841 = vpop.f32.mrb[0].mxu0
    %v842 = vadd.f32 0.0, %v841
    %v843 = vpop.f32.mrb[0].mxu0
    %v844 = vpop.f32.mrb[0].mxu0
    %v845 = vadd.f32 0.0, %v844
    %v846 = vpop.f32.mrb[0].mxu0
    %847 = vmatprep.mubr.bf16.mxu0 0
    %848 = vmatmul.mubr.bf16.gmra.mrb[0].mxu0 %v698
    %v849 = vpop.f32.mrb[0].mxu0
    %v850 = vadd.f32 0.0, %v849
    %v851 = vpop.f32.mrb[0].mxu0
    %v852 = vpop.f32.mrb[0].mxu0
    %v853 = vadd.f32 0.0, %v852
    %v854 = vpop.f32.mrb[0].mxu0
    %855 = vmatprep.mubr.bf16.mxu0 0
    %856 = vmatmul.mubr.bf16.gmra.mrb[0].mxu0 %v701
    %v857 = vpop.f32.mrb[0].mxu0
    %v858 = vadd.f32 0.0, %v857
    %v859 = vpop.f32.mrb[0].mxu0
    %v860 = vpop.f32.mrb[0].mxu0
    %v861 = vadd.f32 0.0, %v860
    %v862 = vpop.f32.mrb[0].mxu0
    %863 = vdwg.mxu0
    %v866 = vunpack.c.l.b16 %v500
    %v867 = vunpack.c.l.b16 %v501
    %v868 = vpack.c.b16 %v867, %v866
    %v871 = vsel %vm66, %v484, 0
    %v874 = vsel %vm66, %v485, 0
    %v877 = vsel %vm66, %v486, 0
    %v880 = vsel %vm66, %v487, 0
    %v883 = vsel %vm66, %v488, 0
    %v886 = vsel %vm66, %v489, 0
    %v889 = vsel %vm66, %v490, 0
    %v892 = vsel %vm66, %v491, 0
    %v895 = vsel %vm66, %v492, 0
    %v898 = vsel %vm66, %v493, 0
    %v901 = vsel %vm66, %v494, 0
    %v904 = vsel %vm66, %v495, 0
    %v907 = vsel %vm66, %v496, 0
    %v910 = vsel %vm66, %v497, 0
    %v913 = vsel %vm66, %v498, 0
    %v916 = vsel %vm66, %v499, 0
    %918 = vmatprep.subr.bf16.mxu0 0
    %919 = vmatpush1.bf16.msra.mxu0 %v868
    %920 = vmatprep.subr.bf16.mxu0 0
    %921 = vmatpush1.bf16.msra.mxu0 0
    %922 = vmatprep.subr.bf16.mxu0 0
    %923 = vmatpush1.bf16.msra.mxu0 0
    %924 = vmatprep.subr.bf16.mxu0 0
    %925 = vmatpush1.bf16.msra.mxu0 0
    %926 = vmatprep.subr.bf16.mxu0 0
    %927 = vmatpush1.bf16.msra.mxu0 0
    %928 = vmatprep.subr.bf16.mxu0 0
    %929 = vmatpush1.bf16.msra.mxu0 0
    %930 = vmatprep.subr.bf16.mxu0 0
    %931 = vmatpush1.bf16.msra.mxu0 0
    %932 = vmatprep.subr.bf16.mxu0 0
    %933 = vmatpush1.bf16.msra.mxu0 0
    %934 = vmatprep.subr.bf16.mxu0 0
    %935 = vmatpush1.bf16.msra.mxu0 0
    %936 = vmatprep.subr.bf16.mxu0 0
    %937 = vmatpush1.bf16.msra.mxu0 0
    %938 = vmatprep.subr.bf16.mxu0 0
    %939 = vmatpush1.bf16.msra.mxu0 0
    %940 = vmatprep.subr.bf16.mxu0 0
    %941 = vmatpush1.bf16.msra.mxu0 0
    %942 = vmatprep.subr.bf16.mxu0 0
    %943 = vmatpush1.bf16.msra.mxu0 0
    %944 = vmatprep.subr.bf16.mxu0 0
    %945 = vmatpush1.bf16.msra.mxu0 0
    %946 = vmatprep.subr.bf16.mxu0 0
    %947 = vmatpush1.bf16.msra.mxu0 0
    %948 = vmatprep.subr.bf16.mxu0 0
    %949 = vmatpush1.bf16.msra.mxu0 0
    %950 = vmatprep.mubr.bf16.mxu0 0
    %951 = vmatmul.mubr.bf16.gmra.mrb[0].mxu0 %v871
    %v952 = vpop.f32.mrb[0].mxu0
    %v953 = vadd.f32 %v738, %v952
    %v954 = vpop.f32.mrb[0].mxu0
    %v955 = vpop.f32.mrb[0].mxu0
    %v956 = vadd.f32 %v741, %v955
    %v957 = vpop.f32.mrb[0].mxu0
    %958 = vmatprep.mubr.bf16.mxu0 0
    %959 = vmatmul.mubr.bf16.gmra.mrb[0].mxu0 %v874
    %v960 = vpop.f32.mrb[0].mxu0
    %v961 = vadd.f32 %v746, %v960
    %v962 = vpop.f32.mrb[0].mxu0
    %v963 = vpop.f32.mrb[0].mxu0
    %v964 = vadd.f32 %v749, %v963
    %v965 = vpop.f32.mrb[0].mxu0
    %966 = vmatprep.mubr.bf16.mxu0 0
    %967 = vmatmul.mubr.bf16.gmra.mrb[0].mxu0 %v877
    %v968 = vpop.f32.mrb[0].mxu0
    %v969 = vadd.f32 %v754, %v968
    %v970 = vpop.f32.mrb[0].mxu0
    %v971 = vpop.f32.mrb[0].mxu0
    %v972 = vadd.f32 %v757, %v971
    %v973 = vpop.f32.mrb[0].mxu0
    %974 = vmatprep.mubr.bf16.mxu0 0
    %975 = vmatmul.mubr.bf16.gmra.mrb[0].mxu0 %v880
    %v976 = vpop.f32.mrb[0].mxu0
    %v977 = vadd.f32 %v762, %v976
    %v978 = vpop.f32.mrb[0].mxu0
    %v979 = vpop.f32.mrb[0].mxu0
    %v980 = vadd.f32 %v765, %v979
    %v981 = vpop.f32.mrb[0].mxu0
    %982 = vmatprep.mubr.bf16.mxu0 0
    %983 = vmatmul.mubr.bf16.gmra.mrb[0].mxu0 %v883
    %v984 = vpop.f32.mrb[0].mxu0
    %v985 = vadd.f32 %v770, %v984
    %v986 = vpop.f32.mrb[0].mxu0
    %v987 = vpop.f32.mrb[0].mxu0
    %v988 = vadd.f32 %v773, %v987
    %v989 = vpop.f32.mrb[0].mxu0
    %990 = vmatprep.mubr.bf16.mxu0 0
    %991 = vmatmul.mubr.bf16.gmra.mrb[0].mxu0 %v886
    %v992 = vpop.f32.mrb[0].mxu0
    %v993 = vadd.f32 %v778, %v992
    %v994 = vpop.f32.mrb[0].mxu0
    %v995 = vpop.f32.mrb[0].mxu0
    %v996 = vadd.f32 %v781, %v995
    %v997 = vpop.f32.mrb[0].mxu0
    %998 = vmatprep.mubr.bf16.mxu0 0
    %999 = vmatmul.mubr.bf16.gmra.mrb[0].mxu0 %v889
    %v1000 = vpop.f32.mrb[0].mxu0
    %v1001 = vadd.f32 %v786, %v1000
    %v1002 = vpop.f32.mrb[0].mxu0
    %v1003 = vpop.f32.mrb[0].mxu0
    %v1004 = vadd.f32 %v789, %v1003
    %v1005 = vpop.f32.mrb[0].mxu0
    %1006 = vmatprep.mubr.bf16.mxu0 0
    %1007 = vmatmul.mubr.bf16.gmra.mrb[0].mxu0 %v892
    %v1008 = vpop.f32.mrb[0].mxu0
    %v1009 = vadd.f32 %v794, %v1008
    %v1010 = vpop.f32.mrb[0].mxu0
    %v1011 = vpop.f32.mrb[0].mxu0
    %v1012 = vadd.f32 %v797, %v1011
    %v1013 = vpop.f32.mrb[0].mxu0
    %1014 = vmatprep.mubr.bf16.mxu0 0
    %1015 = vmatmul.mubr.bf16.gmra.mrb[0].mxu0 %v895
    %v1016 = vpop.f32.mrb[0].mxu0
    %v1017 = vadd.f32 %v802, %v1016
    %v1018 = vpop.f32.mrb[0].mxu0
    %v1019 = vpop.f32.mrb[0].mxu0
    %v1020 = vadd.f32 %v805, %v1019
    %v1021 = vpop.f32.mrb[0].mxu0
    %1022 = vmatprep.mubr.bf16.mxu0 0
    %1023 = vmatmul.mubr.bf16.gmra.mrb[0].mxu0 %v898
    %v1024 = vpop.f32.mrb[0].mxu0
    %v1025 = vadd.f32 %v810, %v1024
    %v1026 = vpop.f32.mrb[0].mxu0
    %v1027 = vpop.f32.mrb[0].mxu0
    %v1028 = vadd.f32 %v813, %v1027
    %v1029 = vpop.f32.mrb[0].mxu0
    %1030 = vmatprep.mubr.bf16.mxu0 0
    %1031 = vmatmul.mubr.bf16.gmra.mrb[0].mxu0 %v901
    %v1032 = vpop.f32.mrb[0].mxu0
    %v1033 = vadd.f32 %v818, %v1032
    %v1034 = vpop.f32.mrb[0].mxu0
    %v1035 = vpop.f32.mrb[0].mxu0
    %v1036 = vadd.f32 %v821, %v1035
    %v1037 = vpop.f32.mrb[0].mxu0
    %1038 = vmatprep.mubr.bf16.mxu0 0
    %1039 = vmatmul.mubr.bf16.gmra.mrb[0].mxu0 %v904
    %v1040 = vpop.f32.mrb[0].mxu0
    %v1041 = vadd.f32 %v826, %v1040
    %v1042 = vpop.f32.mrb[0].mxu0
    %v1043 = vpop.f32.mrb[0].mxu0
    %v1044 = vadd.f32 %v829, %v1043
    %v1045 = vpop.f32.mrb[0].mxu0
    %1046 = vmatprep.mubr.bf16.mxu0 0
    %1047 = vmatmul.mubr.bf16.gmra.mrb[0].mxu0 %v907
    %v1048 = vpop.f32.mrb[0].mxu0
    %v1049 = vadd.f32 %v834, %v1048
    %v1050 = vpop.f32.mrb[0].mxu0
    %v1051 = vpop.f32.mrb[0].mxu0
    %v1052 = vadd.f32 %v837, %v1051
    %v1053 = vpop.f32.mrb[0].mxu0
    %1054 = vmatprep.mubr.bf16.mxu0 0
    %1055 = vmatmul.mubr.bf16.gmra.mrb[0].mxu0 %v910
    %v1056 = vpop.f32.mrb[0].mxu0
    %v1057 = vadd.f32 %v842, %v1056
    %v1058 = vpop.f32.mrb[0].mxu0
    %v1059 = vpop.f32.mrb[0].mxu0
    %v1060 = vadd.f32 %v845, %v1059
    %v1061 = vpop.f32.mrb[0].mxu0
    %1062 = vmatprep.mubr.bf16.mxu0 0
    %1063 = vmatmul.mubr.bf16.gmra.mrb[0].mxu0 %v913
    %v1064 = vpop.f32.mrb[0].mxu0
    %v1065 = vadd.f32 %v850, %v1064
    %v1066 = vpop.f32.mrb[0].mxu0
    %v1067 = vpop.f32.mrb[0].mxu0
    %v1068 = vadd.f32 %v853, %v1067
    %v1069 = vpop.f32.mrb[0].mxu0
    %1070 = vmatprep.mubr.bf16.mxu0 0
    %1071 = vmatmul.mubr.bf16.gmra.mrb[0].mxu0 %v916
    %v1072 = vpop.f32.mrb[0].mxu0
    %v1073 = vadd.f32 %v858, %v1072
    %v1074 = vpop.f32.mrb[0].mxu0
    %v1075 = vpop.f32.mrb[0].mxu0
    %v1076 = vadd.f32 %v861, %v1075
    %v1077 = vpop.f32.mrb[0].mxu0
    %1078 = vdwg.mxu0
    %v1079 = vld [vmem:[#allocation2 + $0x9] sm:$0xff]
    %v1080 = vld [vmem:[#allocation2 + $0x11] sm:$0xff]
    %v1081 = vld [vmem:[#allocation2 + $0x19] sm:$0xff]
    %v1082 = vld [vmem:[#allocation2 + $0x21] sm:$0xff]
    %v1083 = vld [vmem:[#allocation2 + $0x29] sm:$0xff]
    %v1084 = vld [vmem:[#allocation2 + $0x31] sm:$0xff]
    %v1085 = vld [vmem:[#allocation2 + $0x39] sm:$0xff]
    %v1086 = vld [vmem:[#allocation2 + $0x41] sm:$0xff]
    %v1087 = vld [vmem:[#allocation2 + $0x49] sm:$0xff]
    %v1088 = vld [vmem:[#allocation2 + $0x51] sm:$0xff]
    %v1089 = vld [vmem:[#allocation2 + $0x59] sm:$0xff]
    %v1090 = vld [vmem:[#allocation2 + $0x61] sm:$0xff]
    %v1091 = vld [vmem:[#allocation2 + $0x69] sm:$0xff]
    %v1092 = vld [vmem:[#allocation2 + $0x71] sm:$0xff]
    %v1093 = vld [vmem:[#allocation2 + $0x79] sm:$0xff]
    %v1094 = vld [vmem:[#allocation2 + $0x81] sm:$0xff]
    %v1095 = vld [vmem:[#allocation2 + $0x89] sm:$0xff]
    %v1096 = vld [vmem:[#allocation2 + $0x91] sm:$0xff]
    %v1097 = vld [vmem:[#allocation2 + $0x99] sm:$0xff]
    %v1098 = vld [vmem:[#allocation2 + $0xa1] sm:$0xff]
    %v1099 = vld [vmem:[#allocation2 + $0xa9] sm:$0xff]
    %v1100 = vld [vmem:[#allocation2 + $0xb1] sm:$0xff]
    %v1101 = vld [vmem:[#allocation2 + $0xb9] sm:$0xff]
    %v1102 = vld [vmem:[#allocation2 + $0xc1] sm:$0xff]
    %v1103 = vld [vmem:[#allocation2 + $0xc9] sm:$0xff]
    %v1104 = vld [vmem:[#allocation2 + $0xd1] sm:$0xff]
    %v1105 = vld [vmem:[#allocation2 + $0xd9] sm:$0xff]
    %v1106 = vld [vmem:[#allocation2 + $0xe1] sm:$0xff]
    %v1107 = vld [vmem:[#allocation2 + $0xe9] sm:$0xff]
    %v1108 = vld [vmem:[#allocation2 + $0xf1] sm:$0xff]
    %v1109 = vld [vmem:[#allocation2 + $0xf9] sm:$0xff]
    %v1110 = vld [vmem:[#allocation2 + $0x101] sm:$0xff]
    %vm1111 = vmand %vm196, %vm292
    %vm1112 = vmand %vm197, %vm293
    %vm1113 = vmand %vm198, %vm294
    %vm1114 = vmand %vm199, %vm295
    %vm1115 = vmand %vm200, %vm296
    %vm1116 = vmand %vm201, %vm297
    %vm1117 = vmand %vm202, %vm298
    %vm1118 = vmand %vm203, %vm299
    %vm1119 = vmand %vm204, %vm300
    %vm1120 = vmand %vm205, %vm301
    %vm1121 = vmand %vm206, %vm302
    %vm1122 = vmand %vm207, %vm303
    %vm1123 = vmand %vm208, %vm304
    %vm1124 = vmand %vm209, %vm305
    %vm1125 = vmand %vm210, %vm306
    %vm1126 = vmand %vm211, %vm307
    %vm1127 = vmand %vm212, %vm308
    %vm1128 = vmand %vm213, %vm309
    %vm1129 = vmand %vm214, %vm310
    %vm1130 = vmand %vm215, %vm311
    %vm1131 = vmand %vm216, %vm312
    %vm1132 = vmand %vm217, %vm313
    %vm1133 = vmand %vm218, %vm314
    %vm1134 = vmand %vm219, %vm315
    %vm1135 = vmand %vm220, %vm316
    %vm1136 = vmand %vm221, %vm317
    %vm1137 = vmand %vm222, %vm318
    %vm1138 = vmand %vm223, %vm319
    %vm1139 = vmand %vm224, %vm320
    %vm1140 = vmand %vm225, %vm321
    %vm1141 = vmand %vm226, %vm322
    %vm1142 = vmand %vm227, %vm323
    %v1143 = vsel %vm1111, 1, 0
    %v1144 = vsel %vm1112, 1, 0
    %v1145 = vsel %vm1113, 1, 0
    %v1146 = vsel %vm1114, 1, 0
    %v1147 = vsel %vm1115, 1, 0
    %v1148 = vsel %vm1116, 1, 0
    %v1149 = vsel %vm1117, 1, 0
    %v1150 = vsel %vm1118, 1, 0
    %v1151 = vsel %vm1119, 1, 0
    %v1152 = vsel %vm1120, 1, 0
    %v1153 = vsel %vm1121, 1, 0
    %v1154 = vsel %vm1122, 1, 0
    %v1155 = vsel %vm1123, 1, 0
    %v1156 = vsel %vm1124, 1, 0
    %v1157 = vsel %vm1125, 1, 0
    %v1158 = vsel %vm1126, 1, 0
    %v1159 = vsel %vm1127, 1, 0
    %v1160 = vsel %vm1128, 1, 0
    %v1161 = vsel %vm1129, 1, 0
    %v1162 = vsel %vm1130, 1, 0
    %v1163 = vsel %vm1131, 1, 0
    %v1164 = vsel %vm1132, 1, 0
    %v1165 = vsel %vm1133, 1, 0
    %v1166 = vsel %vm1134, 1, 0
    %v1167 = vsel %vm1135, 1, 0
    %v1168 = vsel %vm1136, 1, 0
    %v1169 = vsel %vm1137, 1, 0
    %v1170 = vsel %vm1138, 1, 0
    %v1171 = vsel %vm1139, 1, 0
    %v1172 = vsel %vm1140, 1, 0
    %v1173 = vsel %vm1141, 1, 0
    %v1174 = vsel %vm1142, 1, 0
    %vm1175 = vcmp.eq.s32.totalorder %v1143, 1
    %vm1176 = vcmp.eq.s32.totalorder %v1144, 1
    %vm1177 = vcmp.eq.s32.totalorder %v1145, 1
    %vm1178 = vcmp.eq.s32.totalorder %v1146, 1
    %vm1179 = vcmp.eq.s32.totalorder %v1147, 1
    %vm1180 = vcmp.eq.s32.totalorder %v1148, 1
    %vm1181 = vcmp.eq.s32.totalorder %v1149, 1
    %vm1182 = vcmp.eq.s32.totalorder %v1150, 1
    %vm1183 = vcmp.eq.s32.totalorder %v1151, 1
    %vm1184 = vcmp.eq.s32.totalorder %v1152, 1
    %vm1185 = vcmp.eq.s32.totalorder %v1153, 1
    %vm1186 = vcmp.eq.s32.totalorder %v1154, 1
    %vm1187 = vcmp.eq.s32.totalorder %v1155, 1
    %vm1188 = vcmp.eq.s32.totalorder %v1156, 1
    %vm1189 = vcmp.eq.s32.totalorder %v1157, 1
    %vm1190 = vcmp.eq.s32.totalorder %v1158, 1
    %vm1191 = vcmp.eq.s32.totalorder %v1159, 1
    %vm1192 = vcmp.eq.s32.totalorder %v1160, 1
    %vm1193 = vcmp.eq.s32.totalorder %v1161, 1
    %vm1194 = vcmp.eq.s32.totalorder %v1162, 1
    %vm1195 = vcmp.eq.s32.totalorder %v1163, 1
    %vm1196 = vcmp.eq.s32.totalorder %v1164, 1
    %vm1197 = vcmp.eq.s32.totalorder %v1165, 1
    %vm1198 = vcmp.eq.s32.totalorder %v1166, 1
    %vm1199 = vcmp.eq.s32.totalorder %v1167, 1
    %vm1200 = vcmp.eq.s32.totalorder %v1168, 1
    %vm1201 = vcmp.eq.s32.totalorder %v1169, 1
    %vm1202 = vcmp.eq.s32.totalorder %v1170, 1
    %vm1203 = vcmp.eq.s32.totalorder %v1171, 1
    %vm1204 = vcmp.eq.s32.totalorder %v1172, 1
    %vm1205 = vcmp.eq.s32.totalorder %v1173, 1
    %vm1206 = vcmp.eq.s32.totalorder %v1174, 1
    %v1207 = vsel %vm1175, %v1079, 0.0
    %v1208 = vsel %vm1176, %v1080, 0.0
    %v1209 = vsel %vm1177, %v1081, 0.0
    %v1210 = vsel %vm1178, %v1082, 0.0
    %v1211 = vsel %vm1179, %v1083, 0.0
    %v1212 = vsel %vm1180, %v1084, 0.0
    %v1213 = vsel %vm1181, %v1085, 0.0
    %v1214 = vsel %vm1182, %v1086, 0.0
    %v1215 = vsel %vm1183, %v1087, 0.0
    %v1216 = vsel %vm1184, %v1088, 0.0
    %v1217 = vsel %vm1185, %v1089, 0.0
    %v1218 = vsel %vm1186, %v1090, 0.0
    %v1219 = vsel %vm1187, %v1091, 0.0
    %v1220 = vsel %vm1188, %v1092, 0.0
    %v1221 = vsel %vm1189, %v1093, 0.0
    %v1222 = vsel %vm1190, %v1094, 0.0
    %v1223 = vsel %vm1191, %v1095, 0.0
    %v1224 = vsel %vm1192, %v1096, 0.0
    %v1225 = vsel %vm1193, %v1097, 0.0
    %v1226 = vsel %vm1194, %v1098, 0.0
    %v1227 = vsel %vm1195, %v1099, 0.0
    %v1228 = vsel %vm1196, %v1100, 0.0
    %v1229 = vsel %vm1197, %v1101, 0.0
    %v1230 = vsel %vm1198, %v1102, 0.0
    %v1231 = vsel %vm1199, %v1103, 0.0
    %v1232 = vsel %vm1200, %v1104, 0.0
    %v1233 = vsel %vm1201, %v1105, 0.0
    %v1234 = vsel %vm1202, %v1106, 0.0
    %v1235 = vsel %vm1203, %v1107, 0.0
    %v1236 = vsel %vm1204, %v1108, 0.0
    %v1237 = vsel %vm1205, %v1109, 0.0
    %v1238 = vsel %vm1206, %v1110, 0.0
    %v1239 = vpack.c.bf16 %v1208, %v1207
    %v1240 = vpack.c.bf16 %v1210, %v1209
    %v1241 = vpack.c.bf16 %v1212, %v1211
    %v1242 = vpack.c.bf16 %v1214, %v1213
    %v1243 = vpack.c.bf16 %v1216, %v1215
    %v1244 = vpack.c.bf16 %v1218, %v1217
    %v1245 = vpack.c.bf16 %v1220, %v1219
    %v1246 = vpack.c.bf16 %v1222, %v1221
    %v1247 = vpack.c.bf16 %v1224, %v1223
    %v1248 = vpack.c.bf16 %v1226, %v1225
    %v1249 = vpack.c.bf16 %v1228, %v1227
    %v1250 = vpack.c.bf16 %v1230, %v1229
    %v1251 = vpack.c.bf16 %v1232, %v1231
    %v1252 = vpack.c.bf16 %v1234, %v1233
    %v1253 = vpack.c.bf16 %v1236, %v1235
    %v1254 = vpack.c.bf16 %v1238, %v1237
    %s1255 = scalar_lea.vmem %s1, 16
    %v1256 = vld [vmem:[%s1255] sm:$0xf]
    %v1257 = vld [vmem:[%s1255 + $0x4] sm:$0xf]
    %v1260 = vunpack.c.l.b16 %v1256
    %v1261 = vunpack.c.l.b16 %v1257
    %v1262 = vpack.c.b16 %v1261, %v1260
    %v1265 = vsel %vm66, %v1239, 0
    %v1268 = vsel %vm66, %v1240, 0
    %v1271 = vsel %vm66, %v1241, 0
    %v1274 = vsel %vm66, %v1242, 0
    %v1277 = vsel %vm66, %v1243, 0
    %v1280 = vsel %vm66, %v1244, 0
    %v1283 = vsel %vm66, %v1245, 0
    %v1286 = vsel %vm66, %v1246, 0
    %v1289 = vsel %vm66, %v1247, 0
    %v1292 = vsel %vm66, %v1248, 0
    %v1295 = vsel %vm66, %v1249, 0
    %v1298 = vsel %vm66, %v1250, 0
    %v1301 = vsel %vm66, %v1251, 0
    %v1304 = vsel %vm66, %v1252, 0
    %v1307 = vsel %vm66, %v1253, 0
    %v1310 = vsel %vm66, %v1254, 0
    %1312 = vmatprep.subr.bf16.mxu0 0
    %1313 = vmatpush1.bf16.msra.mxu0 %v1262
    %1314 = vmatprep.subr.bf16.mxu0 0
    %1315 = vmatpush1.bf16.msra.mxu0 0
    %1316 = vmatprep.subr.bf16.mxu0 0
    %1317 = vmatpush1.bf16.msra.mxu0 0
    %1318 = vmatprep.subr.bf16.mxu0 0
    %1319 = vmatpush1.bf16.msra.mxu0 0
    %1320 = vmatprep.subr.bf16.mxu0 0
    %1321 = vmatpush1.bf16.msra.mxu0 0
    %1322 = vmatprep.subr.bf16.mxu0 0
    %1323 = vmatpush1.bf16.msra.mxu0 0
    %1324 = vmatprep.subr.bf16.mxu0 0
    %1325 = vmatpush1.bf16.msra.mxu0 0
    %1326 = vmatprep.subr.bf16.mxu0 0
    %1327 = vmatpush1.bf16.msra.mxu0 0
    %1328 = vmatprep.subr.bf16.mxu0 0
    %1329 = vmatpush1.bf16.msra.mxu0 0
    %1330 = vmatprep.subr.bf16.mxu0 0
    %1331 = vmatpush1.bf16.msra.mxu0 0
    %1332 = vmatprep.subr.bf16.mxu0 0
    %1333 = vmatpush1.bf16.msra.mxu0 0
    %1334 = vmatprep.subr.bf16.mxu0 0
    %1335 = vmatpush1.bf16.msra.mxu0 0
    %1336 = vmatprep.subr.bf16.mxu0 0
    %1337 = vmatpush1.bf16.msra.mxu0 0
    %1338 = vmatprep.subr.bf16.mxu0 0
    %1339 = vmatpush1.bf16.msra.mxu0 0
    %1340 = vmatprep.subr.bf16.mxu0 0
    %1341 = vmatpush1.bf16.msra.mxu0 0
    %1342 = vmatprep.subr.bf16.mxu0 0
    %1343 = vmatpush1.bf16.msra.mxu0 0
    %1344 = vmatprep.mubr.bf16.mxu0 0
    %1345 = vmatmul.mubr.bf16.gmra.mrb[0].mxu0 %v1265
    %v1346 = vpop.f32.mrb[0].mxu0
    %v1347 = vadd.f32 0.0, %v1346
    %v1348 = vpop.f32.mrb[0].mxu0
    %v1349 = vpop.f32.mrb[0].mxu0
    %v1350 = vadd.f32 0.0, %v1349
    %v1351 = vpop.f32.mrb[0].mxu0
    %1352 = vmatprep.mubr.bf16.mxu0 0
    %1353 = vmatmul.mubr.bf16.gmra.mrb[0].mxu0 %v1268
    %v1354 = vpop.f32.mrb[0].mxu0
    %v1355 = vadd.f32 0.0, %v1354
    %v1356 = vpop.f32.mrb[0].mxu0
    %v1357 = vpop.f32.mrb[0].mxu0
    %v1358 = vadd.f32 0.0, %v1357
    %v1359 = vpop.f32.mrb[0].mxu0
    %1360 = vmatprep.mubr.bf16.mxu0 0
    %1361 = vmatmul.mubr.bf16.gmra.mrb[0].mxu0 %v1271
    %v1362 = vpop.f32.mrb[0].mxu0
    %v1363 = vadd.f32 0.0, %v1362
    %v1364 = vpop.f32.mrb[0].mxu0
    %v1365 = vpop.f32.mrb[0].mxu0
    %v1366 = vadd.f32 0.0, %v1365
    %v1367 = vpop.f32.mrb[0].mxu0
    %1368 = vmatprep.mubr.bf16.mxu0 0
    %1369 = vmatmul.mubr.bf16.gmra.mrb[0].mxu0 %v1274
    %v1370 = vpop.f32.mrb[0].mxu0
    %v1371 = vadd.f32 0.0, %v1370
    %v1372 = vpop.f32.mrb[0].mxu0
    %v1373 = vpop.f32.mrb[0].mxu0
    %v1374 = vadd.f32 0.0, %v1373
    %v1375 = vpop.f32.mrb[0].mxu0
    %1376 = vmatprep.mubr.bf16.mxu0 0
    %1377 = vmatmul.mubr.bf16.gmra.mrb[0].mxu0 %v1277
    %v1378 = vpop.f32.mrb[0].mxu0
    %v1379 = vadd.f32 0.0, %v1378
    %v1380 = vpop.f32.mrb[0].mxu0
    %v1381 = vpop.f32.mrb[0].mxu0
    %v1382 = vadd.f32 0.0, %v1381
    %v1383 = vpop.f32.mrb[0].mxu0
    %1384 = vmatprep.mubr.bf16.mxu0 0
    %1385 = vmatmul.mubr.bf16.gmra.mrb[0].mxu0 %v1280
    %v1386 = vpop.f32.mrb[0].mxu0
    %v1387 = vadd.f32 0.0, %v1386
    %v1388 = vpop.f32.mrb[0].mxu0
    %v1389 = vpop.f32.mrb[0].mxu0
    %v1390 = vadd.f32 0.0, %v1389
    %v1391 = vpop.f32.mrb[0].mxu0
    %1392 = vmatprep.mubr.bf16.mxu0 0
    %1393 = vmatmul.mubr.bf16.gmra.mrb[0].mxu0 %v1283
    %v1394 = vpop.f32.mrb[0].mxu0
    %v1395 = vadd.f32 0.0, %v1394
    %v1396 = vpop.f32.mrb[0].mxu0
    %v1397 = vpop.f32.mrb[0].mxu0
    %v1398 = vadd.f32 0.0, %v1397
    %v1399 = vpop.f32.mrb[0].mxu0
    %1400 = vmatprep.mubr.bf16.mxu0 0
    %1401 = vmatmul.mubr.bf16.gmra.mrb[0].mxu0 %v1286
    %v1402 = vpop.f32.mrb[0].mxu0
    %v1403 = vadd.f32 0.0, %v1402
    %v1404 = vpop.f32.mrb[0].mxu0
    %v1405 = vpop.f32.mrb[0].mxu0
    %v1406 = vadd.f32 0.0, %v1405
    %v1407 = vpop.f32.mrb[0].mxu0
    %1408 = vmatprep.mubr.bf16.mxu0 0
    %1409 = vmatmul.mubr.bf16.gmra.mrb[0].mxu0 %v1289
    %v1410 = vpop.f32.mrb[0].mxu0
    %v1411 = vadd.f32 0.0, %v1410
    %v1412 = vpop.f32.mrb[0].mxu0
    %v1413 = vpop.f32.mrb[0].mxu0
    %v1414 = vadd.f32 0.0, %v1413
    %v1415 = vpop.f32.mrb[0].mxu0
    %1416 = vmatprep.mubr.bf16.mxu0 0
    %1417 = vmatmul.mubr.bf16.gmra.mrb[0].mxu0 %v1292
    %v1418 = vpop.f32.mrb[0].mxu0
    %v1419 = vadd.f32 0.0, %v1418
    %v1420 = vpop.f32.mrb[0].mxu0
    %v1421 = vpop.f32.mrb[0].mxu0
    %v1422 = vadd.f32 0.0, %v1421
    %v1423 = vpop.f32.mrb[0].mxu0
    %1424 = vmatprep.mubr.bf16.mxu0 0
    %1425 = vmatmul.mubr.bf16.gmra.mrb[0].mxu0 %v1295
    %v1426 = vpop.f32.mrb[0].mxu0
    %v1427 = vadd.f32 0.0, %v1426
    %v1428 = vpop.f32.mrb[0].mxu0
    %v1429 = vpop.f32.mrb[0].mxu0
    %v1430 = vadd.f32 0.0, %v1429
    %v1431 = vpop.f32.mrb[0].mxu0
    %1432 = vmatprep.mubr.bf16.mxu0 0
    %1433 = vmatmul.mubr.bf16.gmra.mrb[0].mxu0 %v1298
    %v1434 = vpop.f32.mrb[0].mxu0
    %v1435 = vadd.f32 0.0, %v1434
    %v1436 = vpop.f32.mrb[0].mxu0
    %v1437 = vpop.f32.mrb[0].mxu0
    %v1438 = vadd.f32 0.0, %v1437
    %v1439 = vpop.f32.mrb[0].mxu0
    %1440 = vmatprep.mubr.bf16.mxu0 0
    %1441 = vmatmul.mubr.bf16.gmra.mrb[0].mxu0 %v1301
    %v1442 = vpop.f32.mrb[0].mxu0
    %v1443 = vadd.f32 0.0, %v1442
    %v1444 = vpop.f32.mrb[0].mxu0
    %v1445 = vpop.f32.mrb[0].mxu0
    %v1446 = vadd.f32 0.0, %v1445
    %v1447 = vpop.f32.mrb[0].mxu0
    %1448 = vmatprep.mubr.bf16.mxu0 0
    %1449 = vmatmul.mubr.bf16.gmra.mrb[0].mxu0 %v1304
    %v1450 = vpop.f32.mrb[0].mxu0
    %v1451 = vadd.f32 0.0, %v1450
    %v1452 = vpop.f32.mrb[0].mxu0
    %v1453 = vpop.f32.mrb[0].mxu0
    %v1454 = vadd.f32 0.0, %v1453
    %v1455 = vpop.f32.mrb[0].mxu0
    %1456 = vmatprep.mubr.bf16.mxu0 0
    %1457 = vmatmul.mubr.bf16.gmra.mrb[0].mxu0 %v1307
    %v1458 = vpop.f32.mrb[0].mxu0
    %v1459 = vadd.f32 0.0, %v1458
    %v1460 = vpop.f32.mrb[0].mxu0
    %v1461 = vpop.f32.mrb[0].mxu0
    %v1462 = vadd.f32 0.0, %v1461
    %v1463 = vpop.f32.mrb[0].mxu0
    %1464 = vmatprep.mubr.bf16.mxu0 0
    %1465 = vmatmul.mubr.bf16.gmra.mrb[0].mxu0 %v1310
    %v1466 = vpop.f32.mrb[0].mxu0
    %v1467 = vadd.f32 0.0, %v1466
    %v1468 = vpop.f32.mrb[0].mxu0
    %v1469 = vpop.f32.mrb[0].mxu0
    %v1470 = vadd.f32 0.0, %v1469
    %v1471 = vpop.f32.mrb[0].mxu0
    %1472 = vdwg.mxu0
    %v1473 = vadd.f32 %v953, %v1347
    %v1474 = vadd.f32 %v956, %v1350
    %v1475 = vadd.f32 %v961, %v1355
    %v1476 = vadd.f32 %v964, %v1358
    %v1477 = vadd.f32 %v969, %v1363
    %v1478 = vadd.f32 %v972, %v1366
    %v1479 = vadd.f32 %v977, %v1371
    %v1480 = vadd.f32 %v980, %v1374
    %v1481 = vadd.f32 %v985, %v1379
    %v1482 = vadd.f32 %v988, %v1382
    %v1483 = vadd.f32 %v993, %v1387
    %v1484 = vadd.f32 %v996, %v1390
    %v1485 = vadd.f32 %v1001, %v1395
    %v1486 = vadd.f32 %v1004, %v1398
    %v1487 = vadd.f32 %v1009, %v1403
    %v1488 = vadd.f32 %v1012, %v1406
    %v1489 = vadd.f32 %v1017, %v1411
    %v1490 = vadd.f32 %v1020, %v1414
    %v1491 = vadd.f32 %v1025, %v1419
    %v1492 = vadd.f32 %v1028, %v1422
    %v1493 = vadd.f32 %v1033, %v1427
    %v1494 = vadd.f32 %v1036, %v1430
    %v1495 = vadd.f32 %v1041, %v1435
    %v1496 = vadd.f32 %v1044, %v1438
    %v1497 = vadd.f32 %v1049, %v1443
    %v1498 = vadd.f32 %v1052, %v1446
    %v1499 = vadd.f32 %v1057, %v1451
    %v1500 = vadd.f32 %v1060, %v1454
    %v1501 = vadd.f32 %v1065, %v1459
    %v1502 = vadd.f32 %v1068, %v1462
    %v1503 = vadd.f32 %v1073, %v1467
    %v1504 = vadd.f32 %v1076, %v1470
    %v1505 = vld [vmem:[#allocation2 + $0xf] sm:$0xff]
    %v1506 = vld [vmem:[#allocation2 + $0x17] sm:$0xff]
    %v1507 = vld [vmem:[#allocation2 + $0x1f] sm:$0xff]
    %v1508 = vld [vmem:[#allocation2 + $0x27] sm:$0xff]
    %v1509 = vld [vmem:[#allocation2 + $0x2f] sm:$0xff]
    %v1510 = vld [vmem:[#allocation2 + $0x37] sm:$0xff]
    %v1511 = vld [vmem:[#allocation2 + $0x3f] sm:$0xff]
    %v1512 = vld [vmem:[#allocation2 + $0x47] sm:$0xff]
    %v1513 = vld [vmem:[#allocation2 + $0x4f] sm:$0xff]
    %v1514 = vld [vmem:[#allocation2 + $0x57] sm:$0xff]
    %v1515 = vld [vmem:[#allocation2 + $0x5f] sm:$0xff]
    %v1516 = vld [vmem:[#allocation2 + $0x67] sm:$0xff]
    %v1517 = vld [vmem:[#allocation2 + $0x6f] sm:$0xff]
    %v1518 = vld [vmem:[#allocation2 + $0x77] sm:$0xff]
    %v1519 = vld [vmem:[#allocation2 + $0x7f] sm:$0xff]
    %v1520 = vld [vmem:[#allocation2 + $0x87] sm:$0xff]
    %v1521 = vld [vmem:[#allocation2 + $0x8f] sm:$0xff]
    %v1522 = vld [vmem:[#allocation2 + $0x97] sm:$0xff]
    %v1523 = vld [vmem:[#allocation2 + $0x9f] sm:$0xff]
    %v1524 = vld [vmem:[#allocation2 + $0xa7] sm:$0xff]
    %v1525 = vld [vmem:[#allocation2 + $0xaf] sm:$0xff]
    %v1526 = vld [vmem:[#allocation2 + $0xb7] sm:$0xff]
    %v1527 = vld [vmem:[#allocation2 + $0xbf] sm:$0xff]
    %v1528 = vld [vmem:[#allocation2 + $0xc7] sm:$0xff]
    %v1529 = vld [vmem:[#allocation2 + $0xcf] sm:$0xff]
    %v1530 = vld [vmem:[#allocation2 + $0xd7] sm:$0xff]
    %v1531 = vld [vmem:[#allocation2 + $0xdf] sm:$0xff]
    %v1532 = vld [vmem:[#allocation2 + $0xe7] sm:$0xff]
    %v1533 = vld [vmem:[#allocation2 + $0xef] sm:$0xff]
    %v1534 = vld [vmem:[#allocation2 + $0xf7] sm:$0xff]
    %v1535 = vld [vmem:[#allocation2 + $0xff] sm:$0xff]
    %v1536 = vld [vmem:[#allocation2 + $0x107] sm:$0xff]
    %v1537 = vsel %vm260, 1, 0
    %v1538 = vsel %vm261, 1, 0
    %v1539 = vsel %vm262, 1, 0
    %v1540 = vsel %vm263, 1, 0
    %v1541 = vsel %vm264, 1, 0
    %v1542 = vsel %vm265, 1, 0
    %v1543 = vsel %vm266, 1, 0
    %v1544 = vsel %vm267, 1, 0
    %v1545 = vsel %vm268, 1, 0
    %v1546 = vsel %vm269, 1, 0
    %v1547 = vsel %vm270, 1, 0
    %v1548 = vsel %vm271, 1, 0
    %v1549 = vsel %vm272, 1, 0
    %v1550 = vsel %vm273, 1, 0
    %v1551 = vsel %vm274, 1, 0
    %v1552 = vsel %vm275, 1, 0
    %v1553 = vsel %vm276, 1, 0
    %v1554 = vsel %vm277, 1, 0
    %v1555 = vsel %vm278, 1, 0
    %v1556 = vsel %vm279, 1, 0
    %v1557 = vsel %vm280, 1, 0
    %v1558 = vsel %vm281, 1, 0
    %v1559 = vsel %vm282, 1, 0
    %v1560 = vsel %vm283, 1, 0
    %v1561 = vsel %vm284, 1, 0
    %v1562 = vsel %vm285, 1, 0
    %v1563 = vsel %vm286, 1, 0
    %v1564 = vsel %vm287, 1, 0
    %v1565 = vsel %vm288, 1, 0
    %v1566 = vsel %vm289, 1, 0
    %v1567 = vsel %vm290, 1, 0
    %v1568 = vsel %vm291, 1, 0
    %vm1569 = vcmp.eq.s32.totalorder %v1537, 1
    %vm1570 = vcmp.eq.s32.totalorder %v1538, 1
    %vm1571 = vcmp.eq.s32.totalorder %v1539, 1
    %vm1572 = vcmp.eq.s32.totalorder %v1540, 1
    %vm1573 = vcmp.eq.s32.totalorder %v1541, 1
    %vm1574 = vcmp.eq.s32.totalorder %v1542, 1
    %vm1575 = vcmp.eq.s32.totalorder %v1543, 1
    %vm1576 = vcmp.eq.s32.totalorder %v1544, 1
    %vm1577 = vcmp.eq.s32.totalorder %v1545, 1
    %vm1578 = vcmp.eq.s32.totalorder %v1546, 1
    %vm1579 = vcmp.eq.s32.totalorder %v1547, 1
    %vm1580 = vcmp.eq.s32.totalorder %v1548, 1
    %vm1581 = vcmp.eq.s32.totalorder %v1549, 1
    %vm1582 = vcmp.eq.s32.totalorder %v1550, 1
    %vm1583 = vcmp.eq.s32.totalorder %v1551, 1
    %vm1584 = vcmp.eq.s32.totalorder %v1552, 1
    %vm1585 = vcmp.eq.s32.totalorder %v1553, 1
    %vm1586 = vcmp.eq.s32.totalorder %v1554, 1
    %vm1587 = vcmp.eq.s32.totalorder %v1555, 1
    %vm1588 = vcmp.eq.s32.totalorder %v1556, 1
    %vm1589 = vcmp.eq.s32.totalorder %v1557, 1
    %vm1590 = vcmp.eq.s32.totalorder %v1558, 1
    %vm1591 = vcmp.eq.s32.totalorder %v1559, 1
    %vm1592 = vcmp.eq.s32.totalorder %v1560, 1
    %vm1593 = vcmp.eq.s32.totalorder %v1561, 1
    %vm1594 = vcmp.eq.s32.totalorder %v1562, 1
    %vm1595 = vcmp.eq.s32.totalorder %v1563, 1
    %vm1596 = vcmp.eq.s32.totalorder %v1564, 1
    %vm1597 = vcmp.eq.s32.totalorder %v1565, 1
    %vm1598 = vcmp.eq.s32.totalorder %v1566, 1
    %vm1599 = vcmp.eq.s32.totalorder %v1567, 1
    %vm1600 = vcmp.eq.s32.totalorder %v1568, 1
    %v1601 = vsel %vm1569, %v1505, 0.0
    %v1602 = vsel %vm1570, %v1506, 0.0
    %v1603 = vsel %vm1571, %v1507, 0.0
    %v1604 = vsel %vm1572, %v1508, 0.0
    %v1605 = vsel %vm1573, %v1509, 0.0
    %v1606 = vsel %vm1574, %v1510, 0.0
    %v1607 = vsel %vm1575, %v1511, 0.0
    %v1608 = vsel %vm1576, %v1512, 0.0
    %v1609 = vsel %vm1577, %v1513, 0.0
    %v1610 = vsel %vm1578, %v1514, 0.0
    %v1611 = vsel %vm1579, %v1515, 0.0
    %v1612 = vsel %vm1580, %v1516, 0.0
    %v1613 = vsel %vm1581, %v1517, 0.0
    %v1614 = vsel %vm1582, %v1518, 0.0
    %v1615 = vsel %vm1583, %v1519, 0.0
    %v1616 = vsel %vm1584, %v1520, 0.0
    %v1617 = vsel %vm1585, %v1521, 0.0
    %v1618 = vsel %vm1586, %v1522, 0.0
    %v1619 = vsel %vm1587, %v1523, 0.0
    %v1620 = vsel %vm1588, %v1524, 0.0
    %v1621 = vsel %vm1589, %v1525, 0.0
    %v1622 = vsel %vm1590, %v1526, 0.0
    %v1623 = vsel %vm1591, %v1527, 0.0
    %v1624 = vsel %vm1592, %v1528, 0.0
    %v1625 = vsel %vm1593, %v1529, 0.0
    %v1626 = vsel %vm1594, %v1530, 0.0
    %v1627 = vsel %vm1595, %v1531, 0.0
    %v1628 = vsel %vm1596, %v1532, 0.0
    %v1629 = vsel %vm1597, %v1533, 0.0
    %v1630 = vsel %vm1598, %v1534, 0.0
    %v1631 = vsel %vm1599, %v1535, 0.0
    %v1632 = vsel %vm1600, %v1536, 0.0
    %v1633 = vpack.c.bf16 %v1602, %v1601
    %v1634 = vpack.c.bf16 %v1604, %v1603
    %v1635 = vpack.c.bf16 %v1606, %v1605
    %v1636 = vpack.c.bf16 %v1608, %v1607
    %v1637 = vpack.c.bf16 %v1610, %v1609
    %v1638 = vpack.c.bf16 %v1612, %v1611
    %v1639 = vpack.c.bf16 %v1614, %v1613
    %v1640 = vpack.c.bf16 %v1616, %v1615
    %v1641 = vpack.c.bf16 %v1618, %v1617
    %v1642 = vpack.c.bf16 %v1620, %v1619
    %v1643 = vpack.c.bf16 %v1622, %v1621
    %v1644 = vpack.c.bf16 %v1624, %v1623
    %v1645 = vpack.c.bf16 %v1626, %v1625
    %v1646 = vpack.c.bf16 %v1628, %v1627
    %v1647 = vpack.c.bf16 %v1630, %v1629
    %v1648 = vpack.c.bf16 %v1632, %v1631
    %s1649 = scalar_lea.vmem %s1, 24
    %v1650 = vld [vmem:[%s1649] sm:$0xf]
    %v1651 = vld [vmem:[%s1649 + $0x4] sm:$0xf]
    %v1654 = vunpack.c.l.b16 %v1650
    %v1655 = vunpack.c.l.b16 %v1651
    %v1656 = vpack.c.b16 %v1655, %v1654
    %v1659 = vsel %vm66, %v1633, 0
    %v1662 = vsel %vm66, %v1634, 0
    %v1665 = vsel %vm66, %v1635, 0
    %v1668 = vsel %vm66, %v1636, 0
    %v1671 = vsel %vm66, %v1637, 0
    %v1674 = vsel %vm66, %v1638, 0
    %v1677 = vsel %vm66, %v1639, 0
    %v1680 = vsel %vm66, %v1640, 0
    %v1683 = vsel %vm66, %v1641, 0
    %v1686 = vsel %vm66, %v1642, 0
    %v1689 = vsel %vm66, %v1643, 0
    %v1692 = vsel %vm66, %v1644, 0
    %v1695 = vsel %vm66, %v1645, 0
    %v1698 = vsel %vm66, %v1646, 0
    %v1701 = vsel %vm66, %v1647, 0
    %v1704 = vsel %vm66, %v1648, 0
    %1706 = vmatprep.subr.bf16.mxu0 0
    %1707 = vmatpush1.bf16.msra.mxu0 %v1656
    %1708 = vmatprep.subr.bf16.mxu0 0
    %1709 = vmatpush1.bf16.msra.mxu0 0
    %1710 = vmatprep.subr.bf16.mxu0 0
    %1711 = vmatpush1.bf16.msra.mxu0 0
    %1712 = vmatprep.subr.bf16.mxu0 0
    %1713 = vmatpush1.bf16.msra.mxu0 0
    %1714 = vmatprep.subr.bf16.mxu0 0
    %1715 = vmatpush1.bf16.msra.mxu0 0
    %1716 = vmatprep.subr.bf16.mxu0 0
    %1717 = vmatpush1.bf16.msra.mxu0 0
    %1718 = vmatprep.subr.bf16.mxu0 0
    %1719 = vmatpush1.bf16.msra.mxu0 0
    %1720 = vmatprep.subr.bf16.mxu0 0
    %1721 = vmatpush1.bf16.msra.mxu0 0
    %1722 = vmatprep.subr.bf16.mxu0 0
    %1723 = vmatpush1.bf16.msra.mxu0 0
    %1724 = vmatprep.subr.bf16.mxu0 0
    %1725 = vmatpush1.bf16.msra.mxu0 0
    %1726 = vmatprep.subr.bf16.mxu0 0
    %1727 = vmatpush1.bf16.msra.mxu0 0
    %1728 = vmatprep.subr.bf16.mxu0 0
    %1729 = vmatpush1.bf16.msra.mxu0 0
    %1730 = vmatprep.subr.bf16.mxu0 0
    %1731 = vmatpush1.bf16.msra.mxu0 0
    %1732 = vmatprep.subr.bf16.mxu0 0
    %1733 = vmatpush1.bf16.msra.mxu0 0
    %1734 = vmatprep.subr.bf16.mxu0 0
    %1735 = vmatpush1.bf16.msra.mxu0 0
    %1736 = vmatprep.subr.bf16.mxu0 0
    %1737 = vmatpush1.bf16.msra.mxu0 0
    %1738 = vmatprep.mubr.bf16.mxu0 0
    %1739 = vmatmul.mubr.bf16.gmra.mrb[0].mxu0 %v1659
    %v1740 = vpop.f32.mrb[0].mxu0
    %v1741 = vadd.f32 0.0, %v1740
    %v1742 = vpop.f32.mrb[0].mxu0
    %v1743 = vpop.f32.mrb[0].mxu0
    %v1744 = vadd.f32 0.0, %v1743
    %v1745 = vpop.f32.mrb[0].mxu0
    %1746 = vmatprep.mubr.bf16.mxu0 0
    %1747 = vmatmul.mubr.bf16.gmra.mrb[0].mxu0 %v1662
    %v1748 = vpop.f32.mrb[0].mxu0
    %v1749 = vadd.f32 0.0, %v1748
    %v1750 = vpop.f32.mrb[0].mxu0
    %v1751 = vpop.f32.mrb[0].mxu0
    %v1752 = vadd.f32 0.0, %v1751
    %v1753 = vpop.f32.mrb[0].mxu0
    %1754 = vmatprep.mubr.bf16.mxu0 0
    %1755 = vmatmul.mubr.bf16.gmra.mrb[0].mxu0 %v1665
    %v1756 = vpop.f32.mrb[0].mxu0
    %v1757 = vadd.f32 0.0, %v1756
    %v1758 = vpop.f32.mrb[0].mxu0
    %v1759 = vpop.f32.mrb[0].mxu0
    %v1760 = vadd.f32 0.0, %v1759
    %v1761 = vpop.f32.mrb[0].mxu0
    %1762 = vmatprep.mubr.bf16.mxu0 0
    %1763 = vmatmul.mubr.bf16.gmra.mrb[0].mxu0 %v1668
    %v1764 = vpop.f32.mrb[0].mxu0
    %v1765 = vadd.f32 0.0, %v1764
    %v1766 = vpop.f32.mrb[0].mxu0
    %v1767 = vpop.f32.mrb[0].mxu0
    %v1768 = vadd.f32 0.0, %v1767
    %v1769 = vpop.f32.mrb[0].mxu0
    %1770 = vmatprep.mubr.bf16.mxu0 0
    %1771 = vmatmul.mubr.bf16.gmra.mrb[0].mxu0 %v1671
    %v1772 = vpop.f32.mrb[0].mxu0
    %v1773 = vadd.f32 0.0, %v1772
    %v1774 = vpop.f32.mrb[0].mxu0
    %v1775 = vpop.f32.mrb[0].mxu0
    %v1776 = vadd.f32 0.0, %v1775
    %v1777 = vpop.f32.mrb[0].mxu0
    %1778 = vmatprep.mubr.bf16.mxu0 0
    %1779 = vmatmul.mubr.bf16.gmra.mrb[0].mxu0 %v1674
    %v1780 = vpop.f32.mrb[0].mxu0
    %v1781 = vadd.f32 0.0, %v1780
    %v1782 = vpop.f32.mrb[0].mxu0
    %v1783 = vpop.f32.mrb[0].mxu0
    %v1784 = vadd.f32 0.0, %v1783
    %v1785 = vpop.f32.mrb[0].mxu0
    %1786 = vmatprep.mubr.bf16.mxu0 0
    %1787 = vmatmul.mubr.bf16.gmra.mrb[0].mxu0 %v1677
    %v1788 = vpop.f32.mrb[0].mxu0
    %v1789 = vadd.f32 0.0, %v1788
    %v1790 = vpop.f32.mrb[0].mxu0
    %v1791 = vpop.f32.mrb[0].mxu0
    %v1792 = vadd.f32 0.0, %v1791
    %v1793 = vpop.f32.mrb[0].mxu0
    %1794 = vmatprep.mubr.bf16.mxu0 0
    %1795 = vmatmul.mubr.bf16.gmra.mrb[0].mxu0 %v1680
    %v1796 = vpop.f32.mrb[0].mxu0
    %v1797 = vadd.f32 0.0, %v1796
    %v1798 = vpop.f32.mrb[0].mxu0
    %v1799 = vpop.f32.mrb[0].mxu0
    %v1800 = vadd.f32 0.0, %v1799
    %v1801 = vpop.f32.mrb[0].mxu0
    %1802 = vmatprep.mubr.bf16.mxu0 0
    %1803 = vmatmul.mubr.bf16.gmra.mrb[0].mxu0 %v1683
    %v1804 = vpop.f32.mrb[0].mxu0
    %v1805 = vadd.f32 0.0, %v1804
    %v1806 = vpop.f32.mrb[0].mxu0
    %v1807 = vpop.f32.mrb[0].mxu0
    %v1808 = vadd.f32 0.0, %v1807
    %v1809 = vpop.f32.mrb[0].mxu0
    %1810 = vmatprep.mubr.bf16.mxu0 0
    %1811 = vmatmul.mubr.bf16.gmra.mrb[0].mxu0 %v1686
    %v1812 = vpop.f32.mrb[0].mxu0
    %v1813 = vadd.f32 0.0, %v1812
    %v1814 = vpop.f32.mrb[0].mxu0
    %v1815 = vpop.f32.mrb[0].mxu0
    %v1816 = vadd.f32 0.0, %v1815
    %v1817 = vpop.f32.mrb[0].mxu0
    %1818 = vmatprep.mubr.bf16.mxu0 0
    %1819 = vmatmul.mubr.bf16.gmra.mrb[0].mxu0 %v1689
    %v1820 = vpop.f32.mrb[0].mxu0
    %v1821 = vadd.f32 0.0, %v1820
    %v1822 = vpop.f32.mrb[0].mxu0
    %v1823 = vpop.f32.mrb[0].mxu0
    %v1824 = vadd.f32 0.0, %v1823
    %v1825 = vpop.f32.mrb[0].mxu0
    %1826 = vmatprep.mubr.bf16.mxu0 0
    %1827 = vmatmul.mubr.bf16.gmra.mrb[0].mxu0 %v1692
    %v1828 = vpop.f32.mrb[0].mxu0
    %v1829 = vadd.f32 0.0, %v1828
    %v1830 = vpop.f32.mrb[0].mxu0
    %v1831 = vpop.f32.mrb[0].mxu0
    %v1832 = vadd.f32 0.0, %v1831
    %v1833 = vpop.f32.mrb[0].mxu0
    %1834 = vmatprep.mubr.bf16.mxu0 0
    %1835 = vmatmul.mubr.bf16.gmra.mrb[0].mxu0 %v1695
    %v1836 = vpop.f32.mrb[0].mxu0
    %v1837 = vadd.f32 0.0, %v1836
    %v1838 = vpop.f32.mrb[0].mxu0
    %v1839 = vpop.f32.mrb[0].mxu0
    %v1840 = vadd.f32 0.0, %v1839
    %v1841 = vpop.f32.mrb[0].mxu0
    %1842 = vmatprep.mubr.bf16.mxu0 0
    %1843 = vmatmul.mubr.bf16.gmra.mrb[0].mxu0 %v1698
    %v1844 = vpop.f32.mrb[0].mxu0
    %v1845 = vadd.f32 0.0, %v1844
    %v1846 = vpop.f32.mrb[0].mxu0
    %v1847 = vpop.f32.mrb[0].mxu0
    %v1848 = vadd.f32 0.0, %v1847
    %v1849 = vpop.f32.mrb[0].mxu0
    %1850 = vmatprep.mubr.bf16.mxu0 0
    %1851 = vmatmul.mubr.bf16.gmra.mrb[0].mxu0 %v1701
    %v1852 = vpop.f32.mrb[0].mxu0
    %v1853 = vadd.f32 0.0, %v1852
    %v1854 = vpop.f32.mrb[0].mxu0
    %v1855 = vpop.f32.mrb[0].mxu0
    %v1856 = vadd.f32 0.0, %v1855
    %v1857 = vpop.f32.mrb[0].mxu0
    %1858 = vmatprep.mubr.bf16.mxu0 0
    %1859 = vmatmul.mubr.bf16.gmra.mrb[0].mxu0 %v1704
    %v1860 = vpop.f32.mrb[0].mxu0
    %v1861 = vadd.f32 0.0, %v1860
    %v1862 = vpop.f32.mrb[0].mxu0
    %v1863 = vpop.f32.mrb[0].mxu0
    %v1864 = vadd.f32 0.0, %v1863
    %v1865 = vpop.f32.mrb[0].mxu0
    %1866 = vdwg.mxu0
    %v1867 = vadd.f32 %v1473, %v1741
    %v1868 = vadd.f32 %v1474, %v1744
    %v1869 = vadd.f32 %v1475, %v1749
    %v1870 = vadd.f32 %v1476, %v1752
    %v1871 = vadd.f32 %v1477, %v1757
    %v1872 = vadd.f32 %v1478, %v1760
    %v1873 = vadd.f32 %v1479, %v1765
    %v1874 = vadd.f32 %v1480, %v1768
    %v1875 = vadd.f32 %v1481, %v1773
    %v1876 = vadd.f32 %v1482, %v1776
    %v1877 = vadd.f32 %v1483, %v1781
    %v1878 = vadd.f32 %v1484, %v1784
    %v1879 = vadd.f32 %v1485, %v1789
    %v1880 = vadd.f32 %v1486, %v1792
    %v1881 = vadd.f32 %v1487, %v1797
    %v1882 = vadd.f32 %v1488, %v1800
    %v1883 = vadd.f32 %v1489, %v1805
    %v1884 = vadd.f32 %v1490, %v1808
    %v1885 = vadd.f32 %v1491, %v1813
    %v1886 = vadd.f32 %v1492, %v1816
    %v1887 = vadd.f32 %v1493, %v1821
    %v1888 = vadd.f32 %v1494, %v1824
    %v1889 = vadd.f32 %v1495, %v1829
    %v1890 = vadd.f32 %v1496, %v1832
    %v1891 = vadd.f32 %v1497, %v1837
    %v1892 = vadd.f32 %v1498, %v1840
    %v1893 = vadd.f32 %v1499, %v1845
    %v1894 = vadd.f32 %v1500, %v1848
    %v1895 = vadd.f32 %v1501, %v1853
    %v1896 = vadd.f32 %v1502, %v1856
    %v1897 = vadd.f32 %v1503, %v1861
    %v1898 = vadd.f32 %v1504, %v1864
    %v1899 = vpack.c.bf16 %v35, %v34
    %v1900 = vpack.c.bf16 %v37, %v36
    %v1901 = vpack.c.bf16 %v39, %v38
    %v1902 = vpack.c.bf16 %v41, %v40
    %v1903 = vpack.c.bf16 %v43, %v42
    %v1904 = vpack.c.bf16 %v45, %v44
    %v1905 = vpack.c.bf16 %v47, %v46
    %v1906 = vpack.c.bf16 %v49, %v48
    %v1907 = vpack.c.bf16 %v51, %v50
    %v1908 = vpack.c.bf16 %v53, %v52
    %v1909 = vpack.c.bf16 %v55, %v54
    %v1910 = vpack.c.bf16 %v57, %v56
    %v1911 = vpack.c.bf16 %v59, %v58
    %v1912 = vpack.c.bf16 %v61, %v60
    %v1913 = vpack.c.bf16 %v63, %v62
    %v1914 = vpack.c.bf16 %v65, %v64
    %s1915 = scalar_lea.vmem %s1, 32
    %v1916 = vld [vmem:[%s1915] sm:$0xf]
    %v1917 = vld [vmem:[%s1915 + $0x4] sm:$0xf]
    %v1920 = vunpack.c.l.b16 %v1916
    %v1921 = vunpack.c.l.b16 %v1917
    %v1922 = vpack.c.b16 %v1921, %v1920
    %v1925 = vsel %vm66, %v1899, 0
    %v1928 = vsel %vm66, %v1900, 0
    %v1931 = vsel %vm66, %v1901, 0
    %v1934 = vsel %vm66, %v1902, 0
    %v1937 = vsel %vm66, %v1903, 0
    %v1940 = vsel %vm66, %v1904, 0
    %v1943 = vsel %vm66, %v1905, 0
    %v1946 = vsel %vm66, %v1906, 0
    %v1949 = vsel %vm66, %v1907, 0
    %v1952 = vsel %vm66, %v1908, 0
    %v1955 = vsel %vm66, %v1909, 0
    %v1958 = vsel %vm66, %v1910, 0
    %v1961 = vsel %vm66, %v1911, 0
    %v1964 = vsel %vm66, %v1912, 0
    %v1967 = vsel %vm66, %v1913, 0
    %v1970 = vsel %vm66, %v1914, 0
    %1972 = vmatprep.subr.bf16.mxu0 0
    %1973 = vmatpush1.bf16.msra.mxu0 %v1922
    %1974 = vmatprep.subr.bf16.mxu0 0
    %1975 = vmatpush1.bf16.msra.mxu0 0
    %1976 = vmatprep.subr.bf16.mxu0 0
    %1977 = vmatpush1.bf16.msra.mxu0 0
    %1978 = vmatprep.subr.bf16.mxu0 0
    %1979 = vmatpush1.bf16.msra.mxu0 0
    %1980 = vmatprep.subr.bf16.mxu0 0
    %1981 = vmatpush1.bf16.msra.mxu0 0
    %1982 = vmatprep.subr.bf16.mxu0 0
    %1983 = vmatpush1.bf16.msra.mxu0 0
    %1984 = vmatprep.subr.bf16.mxu0 0
    %1985 = vmatpush1.bf16.msra.mxu0 0
    %1986 = vmatprep.subr.bf16.mxu0 0
    %1987 = vmatpush1.bf16.msra.mxu0 0
    %1988 = vmatprep.subr.bf16.mxu0 0
    %1989 = vmatpush1.bf16.msra.mxu0 0
    %1990 = vmatprep.subr.bf16.mxu0 0
    %1991 = vmatpush1.bf16.msra.mxu0 0
    %1992 = vmatprep.subr.bf16.mxu0 0
    %1993 = vmatpush1.bf16.msra.mxu0 0
    %1994 = vmatprep.subr.bf16.mxu0 0
    %1995 = vmatpush1.bf16.msra.mxu0 0
    %1996 = vmatprep.subr.bf16.mxu0 0
    %1997 = vmatpush1.bf16.msra.mxu0 0
    %1998 = vmatprep.subr.bf16.mxu0 0
    %1999 = vmatpush1.bf16.msra.mxu0 0
    %2000 = vmatprep.subr.bf16.mxu0 0
    %2001 = vmatpush1.bf16.msra.mxu0 0
    %2002 = vmatprep.subr.bf16.mxu0 0
    %2003 = vmatpush1.bf16.msra.mxu0 0
    %2004 = vmatprep.mubr.bf16.mxu0 0
    %2005 = vmatmul.mubr.bf16.gmra.mrb[0].mxu0 %v1925
    %v2006 = vpop.f32.mrb[0].mxu0
    %v2007 = vadd.f32 0.0, %v2006
    %v2008 = vpop.f32.mrb[0].mxu0
    %v2009 = vpop.f32.mrb[0].mxu0
    %v2010 = vadd.f32 0.0, %v2009
    %v2011 = vpop.f32.mrb[0].mxu0
    %2012 = vmatprep.mubr.bf16.mxu0 0
    %2013 = vmatmul.mubr.bf16.gmra.mrb[0].mxu0 %v1928
    %v2014 = vpop.f32.mrb[0].mxu0
    %v2015 = vadd.f32 0.0, %v2014
    %v2016 = vpop.f32.mrb[0].mxu0
    %v2017 = vpop.f32.mrb[0].mxu0
    %v2018 = vadd.f32 0.0, %v2017
    %v2019 = vpop.f32.mrb[0].mxu0
    %2020 = vmatprep.mubr.bf16.mxu0 0
    %2021 = vmatmul.mubr.bf16.gmra.mrb[0].mxu0 %v1931
    %v2022 = vpop.f32.mrb[0].mxu0
    %v2023 = vadd.f32 0.0, %v2022
    %v2024 = vpop.f32.mrb[0].mxu0
    %v2025 = vpop.f32.mrb[0].mxu0
    %v2026 = vadd.f32 0.0, %v2025
    %v2027 = vpop.f32.mrb[0].mxu0
    %2028 = vmatprep.mubr.bf16.mxu0 0
    %2029 = vmatmul.mubr.bf16.gmra.mrb[0].mxu0 %v1934
    %v2030 = vpop.f32.mrb[0].mxu0
    %v2031 = vadd.f32 0.0, %v2030
    %v2032 = vpop.f32.mrb[0].mxu0
    %v2033 = vpop.f32.mrb[0].mxu0
    %v2034 = vadd.f32 0.0, %v2033
    %v2035 = vpop.f32.mrb[0].mxu0
    %2036 = vmatprep.mubr.bf16.mxu0 0
    %2037 = vmatmul.mubr.bf16.gmra.mrb[0].mxu0 %v1937
    %v2038 = vpop.f32.mrb[0].mxu0
    %v2039 = vadd.f32 0.0, %v2038
    %v2040 = vpop.f32.mrb[0].mxu0
    %v2041 = vpop.f32.mrb[0].mxu0
    %v2042 = vadd.f32 0.0, %v2041
    %v2043 = vpop.f32.mrb[0].mxu0
    %2044 = vmatprep.mubr.bf16.mxu0 0
    %2045 = vmatmul.mubr.bf16.gmra.mrb[0].mxu0 %v1940
    %v2046 = vpop.f32.mrb[0].mxu0
    %v2047 = vadd.f32 0.0, %v2046
    %v2048 = vpop.f32.mrb[0].mxu0
    %v2049 = vpop.f32.mrb[0].mxu0
    %v2050 = vadd.f32 0.0, %v2049
    %v2051 = vpop.f32.mrb[0].mxu0
    %2052 = vmatprep.mubr.bf16.mxu0 0
    %2053 = vmatmul.mubr.bf16.gmra.mrb[0].mxu0 %v1943
    %v2054 = vpop.f32.mrb[0].mxu0
    %v2055 = vadd.f32 0.0, %v2054
    %v2056 = vpop.f32.mrb[0].mxu0
    %v2057 = vpop.f32.mrb[0].mxu0
    %v2058 = vadd.f32 0.0, %v2057
    %v2059 = vpop.f32.mrb[0].mxu0
    %2060 = vmatprep.mubr.bf16.mxu0 0
    %2061 = vmatmul.mubr.bf16.gmra.mrb[0].mxu0 %v1946
    %v2062 = vpop.f32.mrb[0].mxu0
    %v2063 = vadd.f32 0.0, %v2062
    %v2064 = vpop.f32.mrb[0].mxu0
    %v2065 = vpop.f32.mrb[0].mxu0
    %v2066 = vadd.f32 0.0, %v2065
    %v2067 = vpop.f32.mrb[0].mxu0
    %2068 = vmatprep.mubr.bf16.mxu0 0
    %2069 = vmatmul.mubr.bf16.gmra.mrb[0].mxu0 %v1949
    %v2070 = vpop.f32.mrb[0].mxu0
    %v2071 = vadd.f32 0.0, %v2070
    %v2072 = vpop.f32.mrb[0].mxu0
    %v2073 = vpop.f32.mrb[0].mxu0
    %v2074 = vadd.f32 0.0, %v2073
    %v2075 = vpop.f32.mrb[0].mxu0
    %2076 = vmatprep.mubr.bf16.mxu0 0
    %2077 = vmatmul.mubr.bf16.gmra.mrb[0].mxu0 %v1952
    %v2078 = vpop.f32.mrb[0].mxu0
    %v2079 = vadd.f32 0.0, %v2078
    %v2080 = vpop.f32.mrb[0].mxu0
    %v2081 = vpop.f32.mrb[0].mxu0
    %v2082 = vadd.f32 0.0, %v2081
    %v2083 = vpop.f32.mrb[0].mxu0
    %2084 = vmatprep.mubr.bf16.mxu0 0
    %2085 = vmatmul.mubr.bf16.gmra.mrb[0].mxu0 %v1955
    %v2086 = vpop.f32.mrb[0].mxu0
    %v2087 = vadd.f32 0.0, %v2086
    %v2088 = vpop.f32.mrb[0].mxu0
    %v2089 = vpop.f32.mrb[0].mxu0
    %v2090 = vadd.f32 0.0, %v2089
    %v2091 = vpop.f32.mrb[0].mxu0
    %2092 = vmatprep.mubr.bf16.mxu0 0
    %2093 = vmatmul.mubr.bf16.gmra.mrb[0].mxu0 %v1958
    %v2094 = vpop.f32.mrb[0].mxu0
    %v2095 = vadd.f32 0.0, %v2094
    %v2096 = vpop.f32.mrb[0].mxu0
    %v2097 = vpop.f32.mrb[0].mxu0
    %v2098 = vadd.f32 0.0, %v2097
    %v2099 = vpop.f32.mrb[0].mxu0
    %2100 = vmatprep.mubr.bf16.mxu0 0
    %2101 = vmatmul.mubr.bf16.gmra.mrb[0].mxu0 %v1961
    %v2102 = vpop.f32.mrb[0].mxu0
    %v2103 = vadd.f32 0.0, %v2102
    %v2104 = vpop.f32.mrb[0].mxu0
    %v2105 = vpop.f32.mrb[0].mxu0
    %v2106 = vadd.f32 0.0, %v2105
    %v2107 = vpop.f32.mrb[0].mxu0
    %2108 = vmatprep.mubr.bf16.mxu0 0
    %2109 = vmatmul.mubr.bf16.gmra.mrb[0].mxu0 %v1964
    %v2110 = vpop.f32.mrb[0].mxu0
    %v2111 = vadd.f32 0.0, %v2110
    %v2112 = vpop.f32.mrb[0].mxu0
    %v2113 = vpop.f32.mrb[0].mxu0
    %v2114 = vadd.f32 0.0, %v2113
    %v2115 = vpop.f32.mrb[0].mxu0
    %2116 = vmatprep.mubr.bf16.mxu0 0
    %2117 = vmatmul.mubr.bf16.gmra.mrb[0].mxu0 %v1967
    %v2118 = vpop.f32.mrb[0].mxu0
    %v2119 = vadd.f32 0.0, %v2118
    %v2120 = vpop.f32.mrb[0].mxu0
    %v2121 = vpop.f32.mrb[0].mxu0
    %v2122 = vadd.f32 0.0, %v2121
    %v2123 = vpop.f32.mrb[0].mxu0
    %2124 = vmatprep.mubr.bf16.mxu0 0
    %2125 = vmatmul.mubr.bf16.gmra.mrb[0].mxu0 %v1970
    %v2126 = vpop.f32.mrb[0].mxu0
    %v2127 = vadd.f32 0.0, %v2126
    %v2128 = vpop.f32.mrb[0].mxu0
    %v2129 = vpop.f32.mrb[0].mxu0
    %v2130 = vadd.f32 0.0, %v2129
    %v2131 = vpop.f32.mrb[0].mxu0
    %2132 = vdwg.mxu0
    %v2133 = vadd.f32 %v1867, %v2007
    %v2134 = vadd.f32 %v1868, %v2010
    %v2135 = vadd.f32 %v1869, %v2015
    %v2136 = vadd.f32 %v1870, %v2018
    %v2137 = vadd.f32 %v1871, %v2023
    %v2138 = vadd.f32 %v1872, %v2026
    %v2139 = vadd.f32 %v1873, %v2031
    %v2140 = vadd.f32 %v1874, %v2034
    %v2141 = vadd.f32 %v1875, %v2039
    %v2142 = vadd.f32 %v1876, %v2042
    %v2143 = vadd.f32 %v1877, %v2047
    %v2144 = vadd.f32 %v1878, %v2050
    %v2145 = vadd.f32 %v1879, %v2055
    %v2146 = vadd.f32 %v1880, %v2058
    %v2147 = vadd.f32 %v1881, %v2063
    %v2148 = vadd.f32 %v1882, %v2066
    %v2149 = vadd.f32 %v1883, %v2071
    %v2150 = vadd.f32 %v1884, %v2074
    %v2151 = vadd.f32 %v1885, %v2079
    %v2152 = vadd.f32 %v1886, %v2082
    %v2153 = vadd.f32 %v1887, %v2087
    %v2154 = vadd.f32 %v1888, %v2090
    %v2155 = vadd.f32 %v1889, %v2095
    %v2156 = vadd.f32 %v1890, %v2098
    %v2157 = vadd.f32 %v1891, %v2103
    %v2158 = vadd.f32 %v1892, %v2106
    %v2159 = vadd.f32 %v1893, %v2111
    %v2160 = vadd.f32 %v1894, %v2114
    %v2161 = vadd.f32 %v1895, %v2119
    %v2162 = vadd.f32 %v1896, %v2122
    %v2163 = vadd.f32 %v1897, %v2127
    %v2164 = vadd.f32 %v1898, %v2130
    %v2165 = vld [vmem:[#allocation2 + $0x11] sm:$0xff]
    %v2166 = vld [vmem:[#allocation2 + $0x19] sm:$0xff]
    %v2167 = vld [vmem:[#allocation2 + $0x21] sm:$0xff]
    %v2168 = vld [vmem:[#allocation2 + $0x29] sm:$0xff]
    %v2169 = vld [vmem:[#allocation2 + $0x31] sm:$0xff]
    %v2170 = vld [vmem:[#allocation2 + $0x39] sm:$0xff]
    %v2171 = vld [vmem:[#allocation2 + $0x41] sm:$0xff]
    %v2172 = vld [vmem:[#allocation2 + $0x49] sm:$0xff]
    %v2173 = vld [vmem:[#allocation2 + $0x51] sm:$0xff]
    %v2174 = vld [vmem:[#allocation2 + $0x59] sm:$0xff]
    %v2175 = vld [vmem:[#allocation2 + $0x61] sm:$0xff]
    %v2176 = vld [vmem:[#allocation2 + $0x69] sm:$0xff]
    %v2177 = vld [vmem:[#allocation2 + $0x71] sm:$0xff]
    %v2178 = vld [vmem:[#allocation2 + $0x79] sm:$0xff]
    %v2179 = vld [vmem:[#allocation2 + $0x81] sm:$0xff]
    %v2180 = vld [vmem:[#allocation2 + $0x89] sm:$0xff]
    %v2181 = vld [vmem:[#allocation2 + $0x91] sm:$0xff]
    %v2182 = vld [vmem:[#allocation2 + $0x99] sm:$0xff]
    %v2183 = vld [vmem:[#allocation2 + $0xa1] sm:$0xff]
    %v2184 = vld [vmem:[#allocation2 + $0xa9] sm:$0xff]
    %v2185 = vld [vmem:[#allocation2 + $0xb1] sm:$0xff]
    %v2186 = vld [vmem:[#allocation2 + $0xb9] sm:$0xff]
    %v2187 = vld [vmem:[#allocation2 + $0xc1] sm:$0xff]
    %v2188 = vld [vmem:[#allocation2 + $0xc9] sm:$0xff]
    %v2189 = vld [vmem:[#allocation2 + $0xd1] sm:$0xff]
    %v2190 = vld [vmem:[#allocation2 + $0xd9] sm:$0xff]
    %v2191 = vld [vmem:[#allocation2 + $0xe1] sm:$0xff]
    %v2192 = vld [vmem:[#allocation2 + $0xe9] sm:$0xff]
    %v2193 = vld [vmem:[#allocation2 + $0xf1] sm:$0xff]
    %v2194 = vld [vmem:[#allocation2 + $0xf9] sm:$0xff]
    %v2195 = vld [vmem:[#allocation2 + $0x101] sm:$0xff]
    %v2196 = vld [vmem:[#allocation2 + $0x109] sm:$0xff]
    %v2197 = vsel %vm292, 1, 0
    %v2198 = vsel %vm293, 1, 0
    %v2199 = vsel %vm294, 1, 0
    %v2200 = vsel %vm295, 1, 0
    %v2201 = vsel %vm296, 1, 0
    %v2202 = vsel %vm297, 1, 0
    %v2203 = vsel %vm298, 1, 0
    %v2204 = vsel %vm299, 1, 0
    %v2205 = vsel %vm300, 1, 0
    %v2206 = vsel %vm301, 1, 0
    %v2207 = vsel %vm302, 1, 0
    %v2208 = vsel %vm303, 1, 0
    %v2209 = vsel %vm304, 1, 0
    %v2210 = vsel %vm305, 1, 0
    %v2211 = vsel %vm306, 1, 0
    %v2212 = vsel %vm307, 1, 0
    %v2213 = vsel %vm308, 1, 0
    %v2214 = vsel %vm309, 1, 0
    %v2215 = vsel %vm310, 1, 0
    %v2216 = vsel %vm311, 1, 0
    %v2217 = vsel %vm312, 1, 0
    %v2218 = vsel %vm313, 1, 0
    %v2219 = vsel %vm314, 1, 0
    %v2220 = vsel %vm315, 1, 0
    %v2221 = vsel %vm316, 1, 0
    %v2222 = vsel %vm317, 1, 0
    %v2223 = vsel %vm318, 1, 0
    %v2224 = vsel %vm319, 1, 0
    %v2225 = vsel %vm320, 1, 0
    %v2226 = vsel %vm321, 1, 0
    %v2227 = vsel %vm322, 1, 0
    %v2228 = vsel %vm323, 1, 0
    %vm2229 = vcmp.eq.s32.totalorder %v2197, 1
    %vm2230 = vcmp.eq.s32.totalorder %v2198, 1
    %vm2231 = vcmp.eq.s32.totalorder %v2199, 1
    %vm2232 = vcmp.eq.s32.totalorder %v2200, 1
    %vm2233 = vcmp.eq.s32.totalorder %v2201, 1
    %vm2234 = vcmp.eq.s32.totalorder %v2202, 1
    %vm2235 = vcmp.eq.s32.totalorder %v2203, 1
    %vm2236 = vcmp.eq.s32.totalorder %v2204, 1
    %vm2237 = vcmp.eq.s32.totalorder %v2205, 1
    %vm2238 = vcmp.eq.s32.totalorder %v2206, 1
    %vm2239 = vcmp.eq.s32.totalorder %v2207, 1
    %vm2240 = vcmp.eq.s32.totalorder %v2208, 1
    %vm2241 = vcmp.eq.s32.totalorder %v2209, 1
    %vm2242 = vcmp.eq.s32.totalorder %v2210, 1
    %vm2243 = vcmp.eq.s32.totalorder %v2211, 1
    %vm2244 = vcmp.eq.s32.totalorder %v2212, 1
    %vm2245 = vcmp.eq.s32.totalorder %v2213, 1
    %vm2246 = vcmp.eq.s32.totalorder %v2214, 1
    %vm2247 = vcmp.eq.s32.totalorder %v2215, 1
    %vm2248 = vcmp.eq.s32.totalorder %v2216, 1
    %vm2249 = vcmp.eq.s32.totalorder %v2217, 1
    %vm2250 = vcmp.eq.s32.totalorder %v2218, 1
    %vm2251 = vcmp.eq.s32.totalorder %v2219, 1
    %vm2252 = vcmp.eq.s32.totalorder %v2220, 1
    %vm2253 = vcmp.eq.s32.totalorder %v2221, 1
    %vm2254 = vcmp.eq.s32.totalorder %v2222, 1
    %vm2255 = vcmp.eq.s32.totalorder %v2223, 1
    %vm2256 = vcmp.eq.s32.totalorder %v2224, 1
    %vm2257 = vcmp.eq.s32.totalorder %v2225, 1
    %vm2258 = vcmp.eq.s32.totalorder %v2226, 1
    %vm2259 = vcmp.eq.s32.totalorder %v2227, 1
    %vm2260 = vcmp.eq.s32.totalorder %v2228, 1
    %v2261 = vsel %vm2229, %v2165, 0.0
    %v2262 = vsel %vm2230, %v2166, 0.0
    %v2263 = vsel %vm2231, %v2167, 0.0
    %v2264 = vsel %vm2232, %v2168, 0.0
    %v2265 = vsel %vm2233, %v2169, 0.0
    %v2266 = vsel %vm2234, %v2170, 0.0
    %v2267 = vsel %vm2235, %v2171, 0.0
    %v2268 = vsel %vm2236, %v2172, 0.0
    %v2269 = vsel %vm2237, %v2173, 0.0
    %v2270 = vsel %vm2238, %v2174, 0.0
    %v2271 = vsel %vm2239, %v2175, 0.0
    %v2272 = vsel %vm2240, %v2176, 0.0
    %v2273 = vsel %vm2241, %v2177, 0.0
    %v2274 = vsel %vm2242, %v2178, 0.0
    %v2275 = vsel %vm2243, %v2179, 0.0
    %v2276 = vsel %vm2244, %v2180, 0.0
    %v2277 = vsel %vm2245, %v2181, 0.0
    %v2278 = vsel %vm2246, %v2182, 0.0
    %v2279 = vsel %vm2247, %v2183, 0.0
    %v2280 = vsel %vm2248, %v2184, 0.0
    %v2281 = vsel %vm2249, %v2185, 0.0
    %v2282 = vsel %vm2250, %v2186, 0.0
    %v2283 = vsel %vm2251, %v2187, 0.0
    %v2284 = vsel %vm2252, %v2188, 0.0
    %v2285 = vsel %vm2253, %v2189, 0.0
    %v2286 = vsel %vm2254, %v2190, 0.0
    %v2287 = vsel %vm2255, %v2191, 0.0
    %v2288 = vsel %vm2256, %v2192, 0.0
    %v2289 = vsel %vm2257, %v2193, 0.0
    %v2290 = vsel %vm2258, %v2194, 0.0
    %v2291 = vsel %vm2259, %v2195, 0.0
    %v2292 = vsel %vm2260, %v2196, 0.0
    %v2293 = vpack.c.bf16 %v2262, %v2261
    %v2294 = vpack.c.bf16 %v2264, %v2263
    %v2295 = vpack.c.bf16 %v2266, %v2265
    %v2296 = vpack.c.bf16 %v2268, %v2267
    %v2297 = vpack.c.bf16 %v2270, %v2269
    %v2298 = vpack.c.bf16 %v2272, %v2271
    %v2299 = vpack.c.bf16 %v2274, %v2273
    %v2300 = vpack.c.bf16 %v2276, %v2275
    %v2301 = vpack.c.bf16 %v2278, %v2277
    %v2302 = vpack.c.bf16 %v2280, %v2279
    %v2303 = vpack.c.bf16 %v2282, %v2281
    %v2304 = vpack.c.bf16 %v2284, %v2283
    %v2305 = vpack.c.bf16 %v2286, %v2285
    %v2306 = vpack.c.bf16 %v2288, %v2287
    %v2307 = vpack.c.bf16 %v2290, %v2289
    %v2308 = vpack.c.bf16 %v2292, %v2291
    %s2309 = scalar_lea.vmem %s1, 40
    %v2310 = vld [vmem:[%s2309] sm:$0xf]
    %v2311 = vld [vmem:[%s2309 + $0x4] sm:$0xf]
    %v2314 = vunpack.c.l.b16 %v2310
    %v2315 = vunpack.c.l.b16 %v2311
    %v2316 = vpack.c.b16 %v2315, %v2314
    %v2319 = vsel %vm66, %v2293, 0
    %v2322 = vsel %vm66, %v2294, 0
    %v2325 = vsel %vm66, %v2295, 0
    %v2328 = vsel %vm66, %v2296, 0
    %v2331 = vsel %vm66, %v2297, 0
    %v2334 = vsel %vm66, %v2298, 0
    %v2337 = vsel %vm66, %v2299, 0
    %v2340 = vsel %vm66, %v2300, 0
    %v2343 = vsel %vm66, %v2301, 0
    %v2346 = vsel %vm66, %v2302, 0
    %v2349 = vsel %vm66, %v2303, 0
    %v2352 = vsel %vm66, %v2304, 0
    %v2355 = vsel %vm66, %v2305, 0
    %v2358 = vsel %vm66, %v2306, 0
    %v2361 = vsel %vm66, %v2307, 0
    %v2364 = vsel %vm66, %v2308, 0
    %2366 = vmatprep.subr.bf16.mxu0 0
    %2367 = vmatpush1.bf16.msra.mxu0 %v2316
    %2368 = vmatprep.subr.bf16.mxu0 0
    %2369 = vmatpush1.bf16.msra.mxu0 0
    %2370 = vmatprep.subr.bf16.mxu0 0
    %2371 = vmatpush1.bf16.msra.mxu0 0
    %2372 = vmatprep.subr.bf16.mxu0 0
    %2373 = vmatpush1.bf16.msra.mxu0 0
    %2374 = vmatprep.subr.bf16.mxu0 0
    %2375 = vmatpush1.bf16.msra.mxu0 0
    %2376 = vmatprep.subr.bf16.mxu0 0
    %2377 = vmatpush1.bf16.msra.mxu0 0
    %2378 = vmatprep.subr.bf16.mxu0 0
    %2379 = vmatpush1.bf16.msra.mxu0 0
    %2380 = vmatprep.subr.bf16.mxu0 0
    %2381 = vmatpush1.bf16.msra.mxu0 0
    %2382 = vmatprep.subr.bf16.mxu0 0
    %2383 = vmatpush1.bf16.msra.mxu0 0
    %2384 = vmatprep.subr.bf16.mxu0 0
    %2385 = vmatpush1.bf16.msra.mxu0 0
    %2386 = vmatprep.subr.bf16.mxu0 0
    %2387 = vmatpush1.bf16.msra.mxu0 0
    %2388 = vmatprep.subr.bf16.mxu0 0
    %2389 = vmatpush1.bf16.msra.mxu0 0
    %2390 = vmatprep.subr.bf16.mxu0 0
    %2391 = vmatpush1.bf16.msra.mxu0 0
    %2392 = vmatprep.subr.bf16.mxu0 0
    %2393 = vmatpush1.bf16.msra.mxu0 0
    %2394 = vmatprep.subr.bf16.mxu0 0
    %2395 = vmatpush1.bf16.msra.mxu0 0
    %2396 = vmatprep.subr.bf16.mxu0 0
    %2397 = vmatpush1.bf16.msra.mxu0 0
    %2398 = vmatprep.mubr.bf16.mxu0 0
    %2399 = vmatmul.mubr.bf16.gmra.mrb[0].mxu0 %v2319
    %v2400 = vpop.f32.mrb[0].mxu0
    %v2401 = vadd.f32 0.0, %v2400
    %v2402 = vpop.f32.mrb[0].mxu0
    %v2403 = vpop.f32.mrb[0].mxu0
    %v2404 = vadd.f32 0.0, %v2403
    %v2405 = vpop.f32.mrb[0].mxu0
    %2406 = vmatprep.mubr.bf16.mxu0 0
    %2407 = vmatmul.mubr.bf16.gmra.mrb[0].mxu0 %v2322
    %v2408 = vpop.f32.mrb[0].mxu0
    %v2409 = vadd.f32 0.0, %v2408
    %v2410 = vpop.f32.mrb[0].mxu0
    %v2411 = vpop.f32.mrb[0].mxu0
    %v2412 = vadd.f32 0.0, %v2411
    %v2413 = vpop.f32.mrb[0].mxu0
    %2414 = vmatprep.mubr.bf16.mxu0 0
    %2415 = vmatmul.mubr.bf16.gmra.mrb[0].mxu0 %v2325
    %v2416 = vpop.f32.mrb[0].mxu0
    %v2417 = vadd.f32 0.0, %v2416
    %v2418 = vpop.f32.mrb[0].mxu0
    %v2419 = vpop.f32.mrb[0].mxu0
    %v2420 = vadd.f32 0.0, %v2419
    %v2421 = vpop.f32.mrb[0].mxu0
    %2422 = vmatprep.mubr.bf16.mxu0 0
    %2423 = vmatmul.mubr.bf16.gmra.mrb[0].mxu0 %v2328
    %v2424 = vpop.f32.mrb[0].mxu0
    %v2425 = vadd.f32 0.0, %v2424
    %v2426 = vpop.f32.mrb[0].mxu0
    %v2427 = vpop.f32.mrb[0].mxu0
    %v2428 = vadd.f32 0.0, %v2427
    %v2429 = vpop.f32.mrb[0].mxu0
    %2430 = vmatprep.mubr.bf16.mxu0 0
    %2431 = vmatmul.mubr.bf16.gmra.mrb[0].mxu0 %v2331
    %v2432 = vpop.f32.mrb[0].mxu0
    %v2433 = vadd.f32 0.0, %v2432
    %v2434 = vpop.f32.mrb[0].mxu0
    %v2435 = vpop.f32.mrb[0].mxu0
    %v2436 = vadd.f32 0.0, %v2435
    %v2437 = vpop.f32.mrb[0].mxu0
    %2438 = vmatprep.mubr.bf16.mxu0 0
    %2439 = vmatmul.mubr.bf16.gmra.mrb[0].mxu0 %v2334
    %v2440 = vpop.f32.mrb[0].mxu0
    %v2441 = vadd.f32 0.0, %v2440
    %v2442 = vpop.f32.mrb[0].mxu0
    %v2443 = vpop.f32.mrb[0].mxu0
    %v2444 = vadd.f32 0.0, %v2443
    %v2445 = vpop.f32.mrb[0].mxu0
    %2446 = vmatprep.mubr.bf16.mxu0 0
    %2447 = vmatmul.mubr.bf16.gmra.mrb[0].mxu0 %v2337
    %v2448 = vpop.f32.mrb[0].mxu0
    %v2449 = vadd.f32 0.0, %v2448
    %v2450 = vpop.f32.mrb[0].mxu0
    %v2451 = vpop.f32.mrb[0].mxu0
    %v2452 = vadd.f32 0.0, %v2451
    %v2453 = vpop.f32.mrb[0].mxu0
    %2454 = vmatprep.mubr.bf16.mxu0 0
    %2455 = vmatmul.mubr.bf16.gmra.mrb[0].mxu0 %v2340
    %v2456 = vpop.f32.mrb[0].mxu0
    %v2457 = vadd.f32 0.0, %v2456
    %v2458 = vpop.f32.mrb[0].mxu0
    %v2459 = vpop.f32.mrb[0].mxu0
    %v2460 = vadd.f32 0.0, %v2459
    %v2461 = vpop.f32.mrb[0].mxu0
    %2462 = vmatprep.mubr.bf16.mxu0 0
    %2463 = vmatmul.mubr.bf16.gmra.mrb[0].mxu0 %v2343
    %v2464 = vpop.f32.mrb[0].mxu0
    %v2465 = vadd.f32 0.0, %v2464
    %v2466 = vpop.f32.mrb[0].mxu0
    %v2467 = vpop.f32.mrb[0].mxu0
    %v2468 = vadd.f32 0.0, %v2467
    %v2469 = vpop.f32.mrb[0].mxu0
    %2470 = vmatprep.mubr.bf16.mxu0 0
    %2471 = vmatmul.mubr.bf16.gmra.mrb[0].mxu0 %v2346
    %v2472 = vpop.f32.mrb[0].mxu0
    %v2473 = vadd.f32 0.0, %v2472
    %v2474 = vpop.f32.mrb[0].mxu0
    %v2475 = vpop.f32.mrb[0].mxu0
    %v2476 = vadd.f32 0.0, %v2475
    %v2477 = vpop.f32.mrb[0].mxu0
    %2478 = vmatprep.mubr.bf16.mxu0 0
    %2479 = vmatmul.mubr.bf16.gmra.mrb[0].mxu0 %v2349
    %v2480 = vpop.f32.mrb[0].mxu0
    %v2481 = vadd.f32 0.0, %v2480
    %v2482 = vpop.f32.mrb[0].mxu0
    %v2483 = vpop.f32.mrb[0].mxu0
    %v2484 = vadd.f32 0.0, %v2483
    %v2485 = vpop.f32.mrb[0].mxu0
    %2486 = vmatprep.mubr.bf16.mxu0 0
    %2487 = vmatmul.mubr.bf16.gmra.mrb[0].mxu0 %v2352
    %v2488 = vpop.f32.mrb[0].mxu0
    %v2489 = vadd.f32 0.0, %v2488
    %v2490 = vpop.f32.mrb[0].mxu0
    %v2491 = vpop.f32.mrb[0].mxu0
    %v2492 = vadd.f32 0.0, %v2491
    %v2493 = vpop.f32.mrb[0].mxu0
    %2494 = vmatprep.mubr.bf16.mxu0 0
    %2495 = vmatmul.mubr.bf16.gmra.mrb[0].mxu0 %v2355
    %v2496 = vpop.f32.mrb[0].mxu0
    %v2497 = vadd.f32 0.0, %v2496
    %v2498 = vpop.f32.mrb[0].mxu0
    %v2499 = vpop.f32.mrb[0].mxu0
    %v2500 = vadd.f32 0.0, %v2499
    %v2501 = vpop.f32.mrb[0].mxu0
    %2502 = vmatprep.mubr.bf16.mxu0 0
    %2503 = vmatmul.mubr.bf16.gmra.mrb[0].mxu0 %v2358
    %v2504 = vpop.f32.mrb[0].mxu0
    %v2505 = vadd.f32 0.0, %v2504
    %v2506 = vpop.f32.mrb[0].mxu0
    %v2507 = vpop.f32.mrb[0].mxu0
    %v2508 = vadd.f32 0.0, %v2507
    %v2509 = vpop.f32.mrb[0].mxu0
    %2510 = vmatprep.mubr.bf16.mxu0 0
    %2511 = vmatmul.mubr.bf16.gmra.mrb[0].mxu0 %v2361
    %v2512 = vpop.f32.mrb[0].mxu0
    %v2513 = vadd.f32 0.0, %v2512
    %v2514 = vpop.f32.mrb[0].mxu0
    %v2515 = vpop.f32.mrb[0].mxu0
    %v2516 = vadd.f32 0.0, %v2515
    %v2517 = vpop.f32.mrb[0].mxu0
    %2518 = vmatprep.mubr.bf16.mxu0 0
    %2519 = vmatmul.mubr.bf16.gmra.mrb[0].mxu0 %v2364
    %v2520 = vpop.f32.mrb[0].mxu0
    %v2521 = vadd.f32 0.0, %v2520
    %v2522 = vpop.f32.mrb[0].mxu0
    %v2523 = vpop.f32.mrb[0].mxu0
    %v2524 = vadd.f32 0.0, %v2523
    %v2525 = vpop.f32.mrb[0].mxu0
    %2526 = vdwg.mxu0
    %v2527 = vadd.f32 %v2133, %v2401
    %v2528 = vadd.f32 %v2134, %v2404
    %v2529 = vadd.f32 %v2135, %v2409
    %v2530 = vadd.f32 %v2136, %v2412
    %v2531 = vadd.f32 %v2137, %v2417
    %v2532 = vadd.f32 %v2138, %v2420
    %v2533 = vadd.f32 %v2139, %v2425
    %v2534 = vadd.f32 %v2140, %v2428
    %v2535 = vadd.f32 %v2141, %v2433
    %v2536 = vadd.f32 %v2142, %v2436
    %v2537 = vadd.f32 %v2143, %v2441
    %v2538 = vadd.f32 %v2144, %v2444
    %v2539 = vadd.f32 %v2145, %v2449
    %v2540 = vadd.f32 %v2146, %v2452
    %v2541 = vadd.f32 %v2147, %v2457
    %v2542 = vadd.f32 %v2148, %v2460
    %v2543 = vadd.f32 %v2149, %v2465
    %v2544 = vadd.f32 %v2150, %v2468
    %v2545 = vadd.f32 %v2151, %v2473
    %v2546 = vadd.f32 %v2152, %v2476
    %v2547 = vadd.f32 %v2153, %v2481
    %v2548 = vadd.f32 %v2154, %v2484
    %v2549 = vadd.f32 %v2155, %v2489
    %v2550 = vadd.f32 %v2156, %v2492
    %v2551 = vadd.f32 %v2157, %v2497
    %v2552 = vadd.f32 %v2158, %v2500
    %v2553 = vadd.f32 %v2159, %v2505
    %v2554 = vadd.f32 %v2160, %v2508
    %v2555 = vadd.f32 %v2161, %v2513
    %v2556 = vadd.f32 %v2162, %v2516
    %v2557 = vadd.f32 %v2163, %v2521
    %v2558 = vadd.f32 %v2164, %v2524
    %v2559 = vld [vmem:[#allocation2 + $0x17] sm:$0xff]
    %v2560 = vld [vmem:[#allocation2 + $0x1f] sm:$0xff]
    %v2561 = vld [vmem:[#allocation2 + $0x27] sm:$0xff]
    %v2562 = vld [vmem:[#allocation2 + $0x2f] sm:$0xff]
    %v2563 = vld [vmem:[#allocation2 + $0x37] sm:$0xff]
    %v2564 = vld [vmem:[#allocation2 + $0x3f] sm:$0xff]
    %v2565 = vld [vmem:[#allocation2 + $0x47] sm:$0xff]
    %v2566 = vld [vmem:[#allocation2 + $0x4f] sm:$0xff]
    %v2567 = vld [vmem:[#allocation2 + $0x57] sm:$0xff]
    %v2568 = vld [vmem:[#allocation2 + $0x5f] sm:$0xff]
    %v2569 = vld [vmem:[#allocation2 + $0x67] sm:$0xff]
    %v2570 = vld [vmem:[#allocation2 + $0x6f] sm:$0xff]
    %v2571 = vld [vmem:[#allocation2 + $0x77] sm:$0xff]
    %v2572 = vld [vmem:[#allocation2 + $0x7f] sm:$0xff]
    %v2573 = vld [vmem:[#allocation2 + $0x87] sm:$0xff]
    %v2574 = vld [vmem:[#allocation2 + $0x8f] sm:$0xff]
    %v2575 = vld [vmem:[#allocation2 + $0x97] sm:$0xff]
    %v2576 = vld [vmem:[#allocation2 + $0x9f] sm:$0xff]
    %v2577 = vld [vmem:[#allocation2 + $0xa7] sm:$0xff]
    %v2578 = vld [vmem:[#allocation2 + $0xaf] sm:$0xff]
    %v2579 = vld [vmem:[#allocation2 + $0xb7] sm:$0xff]
    %v2580 = vld [vmem:[#allocation2 + $0xbf] sm:$0xff]
    %v2581 = vld [vmem:[#allocation2 + $0xc7] sm:$0xff]
    %v2582 = vld [vmem:[#allocation2 + $0xcf] sm:$0xff]
    %v2583 = vld [vmem:[#allocation2 + $0xd7] sm:$0xff]
    %v2584 = vld [vmem:[#allocation2 + $0xdf] sm:$0xff]
    %v2585 = vld [vmem:[#allocation2 + $0xe7] sm:$0xff]
    %v2586 = vld [vmem:[#allocation2 + $0xef] sm:$0xff]
    %v2587 = vld [vmem:[#allocation2 + $0xf7] sm:$0xff]
    %v2588 = vld [vmem:[#allocation2 + $0xff] sm:$0xff]
    %v2589 = vld [vmem:[#allocation2 + $0x107] sm:$0xff]
    %v2590 = vld [vmem:[#allocation2 + $0x10f] sm:$0xff]
    %vm2591 = vmand %vm228, %vm260
    %vm2592 = vmand %vm229, %vm261
    %vm2593 = vmand %vm230, %vm262
    %vm2594 = vmand %vm231, %vm263
    %vm2595 = vmand %vm232, %vm264
    %vm2596 = vmand %vm233, %vm265
    %vm2597 = vmand %vm234, %vm266
    %vm2598 = vmand %vm235, %vm267
    %vm2599 = vmand %vm236, %vm268
    %vm2600 = vmand %vm237, %vm269
    %vm2601 = vmand %vm238, %vm270
    %vm2602 = vmand %vm239, %vm271
    %vm2603 = vmand %vm240, %vm272
    %vm2604 = vmand %vm241, %vm273
    %vm2605 = vmand %vm242, %vm274
    %vm2606 = vmand %vm243, %vm275
    %vm2607 = vmand %vm244, %vm276
    %vm2608 = vmand %vm245, %vm277
    %vm2609 = vmand %vm246, %vm278
    %vm2610 = vmand %vm247, %vm279
    %vm2611 = vmand %vm248, %vm280
    %vm2612 = vmand %vm249, %vm281
    %vm2613 = vmand %vm250, %vm282
    %vm2614 = vmand %vm251, %vm283
    %vm2615 = vmand %vm252, %vm284
    %vm2616 = vmand %vm253, %vm285
    %vm2617 = vmand %vm254, %vm286
    %vm2618 = vmand %vm255, %vm287
    %vm2619 = vmand %vm256, %vm288
    %vm2620 = vmand %vm257, %vm289
    %vm2621 = vmand %vm258, %vm290
    %vm2622 = vmand %vm259, %vm291
    %v2623 = vsel %vm2591, 1, 0
    %v2624 = vsel %vm2592, 1, 0
    %v2625 = vsel %vm2593, 1, 0
    %v2626 = vsel %vm2594, 1, 0
    %v2627 = vsel %vm2595, 1, 0
    %v2628 = vsel %vm2596, 1, 0
    %v2629 = vsel %vm2597, 1, 0
    %v2630 = vsel %vm2598, 1, 0
    %v2631 = vsel %vm2599, 1, 0
    %v2632 = vsel %vm2600, 1, 0
    %v2633 = vsel %vm2601, 1, 0
    %v2634 = vsel %vm2602, 1, 0
    %v2635 = vsel %vm2603, 1, 0
    %v2636 = vsel %vm2604, 1, 0
    %v2637 = vsel %vm2605, 1, 0
    %v2638 = vsel %vm2606, 1, 0
    %v2639 = vsel %vm2607, 1, 0
    %v2640 = vsel %vm2608, 1, 0
    %v2641 = vsel %vm2609, 1, 0
    %v2642 = vsel %vm2610, 1, 0
    %v2643 = vsel %vm2611, 1, 0
    %v2644 = vsel %vm2612, 1, 0
    %v2645 = vsel %vm2613, 1, 0
    %v2646 = vsel %vm2614, 1, 0
    %v2647 = vsel %vm2615, 1, 0
    %v2648 = vsel %vm2616, 1, 0
    %v2649 = vsel %vm2617, 1, 0
    %v2650 = vsel %vm2618, 1, 0
    %v2651 = vsel %vm2619, 1, 0
    %v2652 = vsel %vm2620, 1, 0
    %v2653 = vsel %vm2621, 1, 0
    %v2654 = vsel %vm2622, 1, 0
    %vm2655 = vcmp.eq.s32.totalorder %v2623, 1
    %vm2656 = vcmp.eq.s32.totalorder %v2624, 1
    %vm2657 = vcmp.eq.s32.totalorder %v2625, 1
    %vm2658 = vcmp.eq.s32.totalorder %v2626, 1
    %vm2659 = vcmp.eq.s32.totalorder %v2627, 1
    %vm2660 = vcmp.eq.s32.totalorder %v2628, 1
    %vm2661 = vcmp.eq.s32.totalorder %v2629, 1
    %vm2662 = vcmp.eq.s32.totalorder %v2630, 1
    %vm2663 = vcmp.eq.s32.totalorder %v2631, 1
    %vm2664 = vcmp.eq.s32.totalorder %v2632, 1
    %vm2665 = vcmp.eq.s32.totalorder %v2633, 1
    %vm2666 = vcmp.eq.s32.totalorder %v2634, 1
    %vm2667 = vcmp.eq.s32.totalorder %v2635, 1
    %vm2668 = vcmp.eq.s32.totalorder %v2636, 1
    %vm2669 = vcmp.eq.s32.totalorder %v2637, 1
    %vm2670 = vcmp.eq.s32.totalorder %v2638, 1
    %vm2671 = vcmp.eq.s32.totalorder %v2639, 1
    %vm2672 = vcmp.eq.s32.totalorder %v2640, 1
    %vm2673 = vcmp.eq.s32.totalorder %v2641, 1
    %vm2674 = vcmp.eq.s32.totalorder %v2642, 1
    %vm2675 = vcmp.eq.s32.totalorder %v2643, 1
    %vm2676 = vcmp.eq.s32.totalorder %v2644, 1
    %vm2677 = vcmp.eq.s32.totalorder %v2645, 1
    %vm2678 = vcmp.eq.s32.totalorder %v2646, 1
    %vm2679 = vcmp.eq.s32.totalorder %v2647, 1
    %vm2680 = vcmp.eq.s32.totalorder %v2648, 1
    %vm2681 = vcmp.eq.s32.totalorder %v2649, 1
    %vm2682 = vcmp.eq.s32.totalorder %v2650, 1
    %vm2683 = vcmp.eq.s32.totalorder %v2651, 1
    %vm2684 = vcmp.eq.s32.totalorder %v2652, 1
    %vm2685 = vcmp.eq.s32.totalorder %v2653, 1
    %vm2686 = vcmp.eq.s32.totalorder %v2654, 1
    %v2687 = vsel %vm2655, %v2559, 0.0
    %v2688 = vsel %vm2656, %v2560, 0.0
    %v2689 = vsel %vm2657, %v2561, 0.0
    %v2690 = vsel %vm2658, %v2562, 0.0
    %v2691 = vsel %vm2659, %v2563, 0.0
    %v2692 = vsel %vm2660, %v2564, 0.0
    %v2693 = vsel %vm2661, %v2565, 0.0
    %v2694 = vsel %vm2662, %v2566, 0.0
    %v2695 = vsel %vm2663, %v2567, 0.0
    %v2696 = vsel %vm2664, %v2568, 0.0
    %v2697 = vsel %vm2665, %v2569, 0.0
    %v2698 = vsel %vm2666, %v2570, 0.0
    %v2699 = vsel %vm2667, %v2571, 0.0
    %v2700 = vsel %vm2668, %v2572, 0.0
    %v2701 = vsel %vm2669, %v2573, 0.0
    %v2702 = vsel %vm2670, %v2574, 0.0
    %v2703 = vsel %vm2671, %v2575, 0.0
    %v2704 = vsel %vm2672, %v2576, 0.0
    %v2705 = vsel %vm2673, %v2577, 0.0
    %v2706 = vsel %vm2674, %v2578, 0.0
    %v2707 = vsel %vm2675, %v2579, 0.0
    %v2708 = vsel %vm2676, %v2580, 0.0
    %v2709 = vsel %vm2677, %v2581, 0.0
    %v2710 = vsel %vm2678, %v2582, 0.0
    %v2711 = vsel %vm2679, %v2583, 0.0
    %v2712 = vsel %vm2680, %v2584, 0.0
    %v2713 = vsel %vm2681, %v2585, 0.0
    %v2714 = vsel %vm2682, %v2586, 0.0
    %v2715 = vsel %vm2683, %v2587, 0.0
    %v2716 = vsel %vm2684, %v2588, 0.0
    %v2717 = vsel %vm2685, %v2589, 0.0
    %v2718 = vsel %vm2686, %v2590, 0.0
    %v2719 = vpack.c.bf16 %v2688, %v2687
    %v2720 = vpack.c.bf16 %v2690, %v2689
    %v2721 = vpack.c.bf16 %v2692, %v2691
    %v2722 = vpack.c.bf16 %v2694, %v2693
    %v2723 = vpack.c.bf16 %v2696, %v2695
    %v2724 = vpack.c.bf16 %v2698, %v2697
    %v2725 = vpack.c.bf16 %v2700, %v2699
    %v2726 = vpack.c.bf16 %v2702, %v2701
    %v2727 = vpack.c.bf16 %v2704, %v2703
    %v2728 = vpack.c.bf16 %v2706, %v2705
    %v2729 = vpack.c.bf16 %v2708, %v2707
    %v2730 = vpack.c.bf16 %v2710, %v2709
    %v2731 = vpack.c.bf16 %v2712, %v2711
    %v2732 = vpack.c.bf16 %v2714, %v2713
    %v2733 = vpack.c.bf16 %v2716, %v2715
    %v2734 = vpack.c.bf16 %v2718, %v2717
    %s2735 = scalar_lea.vmem %s1, 48
    %v2736 = vld [vmem:[%s2735] sm:$0xf]
    %v2737 = vld [vmem:[%s2735 + $0x4] sm:$0xf]
    %v2740 = vunpack.c.l.b16 %v2736
    %v2741 = vunpack.c.l.b16 %v2737
    %v2742 = vpack.c.b16 %v2741, %v2740
    %v2745 = vsel %vm66, %v2719, 0
    %v2748 = vsel %vm66, %v2720, 0
    %v2751 = vsel %vm66, %v2721, 0
    %v2754 = vsel %vm66, %v2722, 0
    %v2757 = vsel %vm66, %v2723, 0
    %v2760 = vsel %vm66, %v2724, 0
    %v2763 = vsel %vm66, %v2725, 0
    %v2766 = vsel %vm66, %v2726, 0
    %v2769 = vsel %vm66, %v2727, 0
    %v2772 = vsel %vm66, %v2728, 0
    %v2775 = vsel %vm66, %v2729, 0
    %v2778 = vsel %vm66, %v2730, 0
    %v2781 = vsel %vm66, %v2731, 0
    %v2784 = vsel %vm66, %v2732, 0
    %v2787 = vsel %vm66, %v2733, 0
    %v2790 = vsel %vm66, %v2734, 0
    %2792 = vmatprep.subr.bf16.mxu0 0
    %2793 = vmatpush1.bf16.msra.mxu0 %v2742
    %2794 = vmatprep.subr.bf16.mxu0 0
    %2795 = vmatpush1.bf16.msra.mxu0 0
    %2796 = vmatprep.subr.bf16.mxu0 0
    %2797 = vmatpush1.bf16.msra.mxu0 0
    %2798 = vmatprep.subr.bf16.mxu0 0
    %2799 = vmatpush1.bf16.msra.mxu0 0
    %2800 = vmatprep.subr.bf16.mxu0 0
    %2801 = vmatpush1.bf16.msra.mxu0 0
    %2802 = vmatprep.subr.bf16.mxu0 0
    %2803 = vmatpush1.bf16.msra.mxu0 0
    %2804 = vmatprep.subr.bf16.mxu0 0
    %2805 = vmatpush1.bf16.msra.mxu0 0
    %2806 = vmatprep.subr.bf16.mxu0 0
    %2807 = vmatpush1.bf16.msra.mxu0 0
    %2808 = vmatprep.subr.bf16.mxu0 0
    %2809 = vmatpush1.bf16.msra.mxu0 0
    %2810 = vmatprep.subr.bf16.mxu0 0
    %2811 = vmatpush1.bf16.msra.mxu0 0
    %2812 = vmatprep.subr.bf16.mxu0 0
    %2813 = vmatpush1.bf16.msra.mxu0 0
    %2814 = vmatprep.subr.bf16.mxu0 0
    %2815 = vmatpush1.bf16.msra.mxu0 0
    %2816 = vmatprep.subr.bf16.mxu0 0
    %2817 = vmatpush1.bf16.msra.mxu0 0
    %2818 = vmatprep.subr.bf16.mxu0 0
    %2819 = vmatpush1.bf16.msra.mxu0 0
    %2820 = vmatprep.subr.bf16.mxu0 0
    %2821 = vmatpush1.bf16.msra.mxu0 0
    %2822 = vmatprep.subr.bf16.mxu0 0
    %2823 = vmatpush1.bf16.msra.mxu0 0
    %2824 = vmatprep.mubr.bf16.mxu0 0
    %2825 = vmatmul.mubr.bf16.gmra.mrb[0].mxu0 %v2745
    %v2826 = vpop.f32.mrb[0].mxu0
    %v2827 = vadd.f32 0.0, %v2826
    %v2828 = vpop.f32.mrb[0].mxu0
    %v2829 = vpop.f32.mrb[0].mxu0
    %v2830 = vadd.f32 0.0, %v2829
    %v2831 = vpop.f32.mrb[0].mxu0
    %2832 = vmatprep.mubr.bf16.mxu0 0
    %2833 = vmatmul.mubr.bf16.gmra.mrb[0].mxu0 %v2748
    %v2834 = vpop.f32.mrb[0].mxu0
    %v2835 = vadd.f32 0.0, %v2834
    %v2836 = vpop.f32.mrb[0].mxu0
    %v2837 = vpop.f32.mrb[0].mxu0
    %v2838 = vadd.f32 0.0, %v2837
    %v2839 = vpop.f32.mrb[0].mxu0
    %2840 = vmatprep.mubr.bf16.mxu0 0
    %2841 = vmatmul.mubr.bf16.gmra.mrb[0].mxu0 %v2751
    %v2842 = vpop.f32.mrb[0].mxu0
    %v2843 = vadd.f32 0.0, %v2842
    %v2844 = vpop.f32.mrb[0].mxu0
    %v2845 = vpop.f32.mrb[0].mxu0
    %v2846 = vadd.f32 0.0, %v2845
    %v2847 = vpop.f32.mrb[0].mxu0
    %2848 = vmatprep.mubr.bf16.mxu0 0
    %2849 = vmatmul.mubr.bf16.gmra.mrb[0].mxu0 %v2754
    %v2850 = vpop.f32.mrb[0].mxu0
    %v2851 = vadd.f32 0.0, %v2850
    %v2852 = vpop.f32.mrb[0].mxu0
    %v2853 = vpop.f32.mrb[0].mxu0
    %v2854 = vadd.f32 0.0, %v2853
    %v2855 = vpop.f32.mrb[0].mxu0
    %2856 = vmatprep.mubr.bf16.mxu0 0
    %2857 = vmatmul.mubr.bf16.gmra.mrb[0].mxu0 %v2757
    %v2858 = vpop.f32.mrb[0].mxu0
    %v2859 = vadd.f32 0.0, %v2858
    %v2860 = vpop.f32.mrb[0].mxu0
    %v2861 = vpop.f32.mrb[0].mxu0
    %v2862 = vadd.f32 0.0, %v2861
    %v2863 = vpop.f32.mrb[0].mxu0
    %2864 = vmatprep.mubr.bf16.mxu0 0
    %2865 = vmatmul.mubr.bf16.gmra.mrb[0].mxu0 %v2760
    %v2866 = vpop.f32.mrb[0].mxu0
    %v2867 = vadd.f32 0.0, %v2866
    %v2868 = vpop.f32.mrb[0].mxu0
    %v2869 = vpop.f32.mrb[0].mxu0
    %v2870 = vadd.f32 0.0, %v2869
    %v2871 = vpop.f32.mrb[0].mxu0
    %2872 = vmatprep.mubr.bf16.mxu0 0
    %2873 = vmatmul.mubr.bf16.gmra.mrb[0].mxu0 %v2763
    %v2874 = vpop.f32.mrb[0].mxu0
    %v2875 = vadd.f32 0.0, %v2874
    %v2876 = vpop.f32.mrb[0].mxu0
    %v2877 = vpop.f32.mrb[0].mxu0
    %v2878 = vadd.f32 0.0, %v2877
    %v2879 = vpop.f32.mrb[0].mxu0
    %2880 = vmatprep.mubr.bf16.mxu0 0
    %2881 = vmatmul.mubr.bf16.gmra.mrb[0].mxu0 %v2766
    %v2882 = vpop.f32.mrb[0].mxu0
    %v2883 = vadd.f32 0.0, %v2882
    %v2884 = vpop.f32.mrb[0].mxu0
    %v2885 = vpop.f32.mrb[0].mxu0
    %v2886 = vadd.f32 0.0, %v2885
    %v2887 = vpop.f32.mrb[0].mxu0
    %2888 = vmatprep.mubr.bf16.mxu0 0
    %2889 = vmatmul.mubr.bf16.gmra.mrb[0].mxu0 %v2769
    %v2890 = vpop.f32.mrb[0].mxu0
    %v2891 = vadd.f32 0.0, %v2890
    %v2892 = vpop.f32.mrb[0].mxu0
    %v2893 = vpop.f32.mrb[0].mxu0
    %v2894 = vadd.f32 0.0, %v2893
    %v2895 = vpop.f32.mrb[0].mxu0
    %2896 = vmatprep.mubr.bf16.mxu0 0
    %2897 = vmatmul.mubr.bf16.gmra.mrb[0].mxu0 %v2772
    %v2898 = vpop.f32.mrb[0].mxu0
    %v2899 = vadd.f32 0.0, %v2898
    %v2900 = vpop.f32.mrb[0].mxu0
    %v2901 = vpop.f32.mrb[0].mxu0
    %v2902 = vadd.f32 0.0, %v2901
    %v2903 = vpop.f32.mrb[0].mxu0
    %2904 = vmatprep.mubr.bf16.mxu0 0
    %2905 = vmatmul.mubr.bf16.gmra.mrb[0].mxu0 %v2775
    %v2906 = vpop.f32.mrb[0].mxu0
    %v2907 = vadd.f32 0.0, %v2906
    %v2908 = vpop.f32.mrb[0].mxu0
    %v2909 = vpop.f32.mrb[0].mxu0
    %v2910 = vadd.f32 0.0, %v2909
    %v2911 = vpop.f32.mrb[0].mxu0
    %2912 = vmatprep.mubr.bf16.mxu0 0
    %2913 = vmatmul.mubr.bf16.gmra.mrb[0].mxu0 %v2778
    %v2914 = vpop.f32.mrb[0].mxu0
    %v2915 = vadd.f32 0.0, %v2914
    %v2916 = vpop.f32.mrb[0].mxu0
    %v2917 = vpop.f32.mrb[0].mxu0
    %v2918 = vadd.f32 0.0, %v2917
    %v2919 = vpop.f32.mrb[0].mxu0
    %2920 = vmatprep.mubr.bf16.mxu0 0
    %2921 = vmatmul.mubr.bf16.gmra.mrb[0].mxu0 %v2781
    %v2922 = vpop.f32.mrb[0].mxu0
    %v2923 = vadd.f32 0.0, %v2922
    %v2924 = vpop.f32.mrb[0].mxu0
    %v2925 = vpop.f32.mrb[0].mxu0
    %v2926 = vadd.f32 0.0, %v2925
    %v2927 = vpop.f32.mrb[0].mxu0
    %2928 = vmatprep.mubr.bf16.mxu0 0
    %2929 = vmatmul.mubr.bf16.gmra.mrb[0].mxu0 %v2784
    %v2930 = vpop.f32.mrb[0].mxu0
    %v2931 = vadd.f32 0.0, %v2930
    %v2932 = vpop.f32.mrb[0].mxu0
    %v2933 = vpop.f32.mrb[0].mxu0
    %v2934 = vadd.f32 0.0, %v2933
    %v2935 = vpop.f32.mrb[0].mxu0
    %2936 = vmatprep.mubr.bf16.mxu0 0
    %2937 = vmatmul.mubr.bf16.gmra.mrb[0].mxu0 %v2787
    %v2938 = vpop.f32.mrb[0].mxu0
    %v2939 = vadd.f32 0.0, %v2938
    %v2940 = vpop.f32.mrb[0].mxu0
    %v2941 = vpop.f32.mrb[0].mxu0
    %v2942 = vadd.f32 0.0, %v2941
    %v2943 = vpop.f32.mrb[0].mxu0
    %2944 = vmatprep.mubr.bf16.mxu0 0
    %2945 = vmatmul.mubr.bf16.gmra.mrb[0].mxu0 %v2790
    %v2946 = vpop.f32.mrb[0].mxu0
    %v2947 = vadd.f32 0.0, %v2946
    %v2948 = vpop.f32.mrb[0].mxu0
    %v2949 = vpop.f32.mrb[0].mxu0
    %v2950 = vadd.f32 0.0, %v2949
    %v2951 = vpop.f32.mrb[0].mxu0
    %2952 = vdwg.mxu0
    %v2953 = vadd.f32 %v2527, %v2827
    %v2954 = vadd.f32 %v2528, %v2830
    %v2955 = vadd.f32 %v2529, %v2835
    %v2956 = vadd.f32 %v2530, %v2838
    %v2957 = vadd.f32 %v2531, %v2843
    %v2958 = vadd.f32 %v2532, %v2846
    %v2959 = vadd.f32 %v2533, %v2851
    %v2960 = vadd.f32 %v2534, %v2854
    %v2961 = vadd.f32 %v2535, %v2859
    %v2962 = vadd.f32 %v2536, %v2862
    %v2963 = vadd.f32 %v2537, %v2867
    %v2964 = vadd.f32 %v2538, %v2870
    %v2965 = vadd.f32 %v2539, %v2875
    %v2966 = vadd.f32 %v2540, %v2878
    %v2967 = vadd.f32 %v2541, %v2883
    %v2968 = vadd.f32 %v2542, %v2886
    %v2969 = vadd.f32 %v2543, %v2891
    %v2970 = vadd.f32 %v2544, %v2894
    %v2971 = vadd.f32 %v2545, %v2899
    %v2972 = vadd.f32 %v2546, %v2902
    %v2973 = vadd.f32 %v2547, %v2907
    %v2974 = vadd.f32 %v2548, %v2910
    %v2975 = vadd.f32 %v2549, %v2915
    %v2976 = vadd.f32 %v2550, %v2918
    %v2977 = vadd.f32 %v2551, %v2923
    %v2978 = vadd.f32 %v2552, %v2926
    %v2979 = vadd.f32 %v2553, %v2931
    %v2980 = vadd.f32 %v2554, %v2934
    %v2981 = vadd.f32 %v2555, %v2939
    %v2982 = vadd.f32 %v2556, %v2942
    %v2983 = vadd.f32 %v2557, %v2947
    %v2984 = vadd.f32 %v2558, %v2950
    %v2985 = vld [vmem:[#allocation2 + $0x18] sm:$0xff]
    %v2986 = vld [vmem:[#allocation2 + $0x20] sm:$0xff]
    %v2987 = vld [vmem:[#allocation2 + $0x28] sm:$0xff]
    %v2988 = vld [vmem:[#allocation2 + $0x30] sm:$0xff]
    %v2989 = vld [vmem:[#allocation2 + $0x38] sm:$0xff]
    %v2990 = vld [vmem:[#allocation2 + $0x40] sm:$0xff]
    %v2991 = vld [vmem:[#allocation2 + $0x48] sm:$0xff]
    %v2992 = vld [vmem:[#allocation2 + $0x50] sm:$0xff]
    %v2993 = vld [vmem:[#allocation2 + $0x58] sm:$0xff]
    %v2994 = vld [vmem:[#allocation2 + $0x60] sm:$0xff]
    %v2995 = vld [vmem:[#allocation2 + $0x68] sm:$0xff]
    %v2996 = vld [vmem:[#allocation2 + $0x70] sm:$0xff]
    %v2997 = vld [vmem:[#allocation2 + $0x78] sm:$0xff]
    %v2998 = vld [vmem:[#allocation2 + $0x80] sm:$0xff]
    %v2999 = vld [vmem:[#allocation2 + $0x88] sm:$0xff]
    %v3000 = vld [vmem:[#allocation2 + $0x90] sm:$0xff]
    %v3001 = vld [vmem:[#allocation2 + $0x98] sm:$0xff]
    %v3002 = vld [vmem:[#allocation2 + $0xa0] sm:$0xff]
    %v3003 = vld [vmem:[#allocation2 + $0xa8] sm:$0xff]
    %v3004 = vld [vmem:[#allocation2 + $0xb0] sm:$0xff]
    %v3005 = vld [vmem:[#allocation2 + $0xb8] sm:$0xff]
    %v3006 = vld [vmem:[#allocation2 + $0xc0] sm:$0xff]
    %v3007 = vld [vmem:[#allocation2 + $0xc8] sm:$0xff]
    %v3008 = vld [vmem:[#allocation2 + $0xd0] sm:$0xff]
    %v3009 = vld [vmem:[#allocation2 + $0xd8] sm:$0xff]
    %v3010 = vld [vmem:[#allocation2 + $0xe0] sm:$0xff]
    %v3011 = vld [vmem:[#allocation2 + $0xe8] sm:$0xff]
    %v3012 = vld [vmem:[#allocation2 + $0xf0] sm:$0xff]
    %v3013 = vld [vmem:[#allocation2 + $0xf8] sm:$0xff]
    %v3014 = vld [vmem:[#allocation2 + $0x100] sm:$0xff]
    %v3015 = vld [vmem:[#allocation2 + $0x108] sm:$0xff]
    %v3016 = vld [vmem:[#allocation2 + $0x110] sm:$0xff]
    %v3017 = vsel %vm228, 1, 0
    %v3018 = vsel %vm229, 1, 0
    %v3019 = vsel %vm230, 1, 0
    %v3020 = vsel %vm231, 1, 0
    %v3021 = vsel %vm232, 1, 0
    %v3022 = vsel %vm233, 1, 0
    %v3023 = vsel %vm234, 1, 0
    %v3024 = vsel %vm235, 1, 0
    %v3025 = vsel %vm236, 1, 0
    %v3026 = vsel %vm237, 1, 0
    %v3027 = vsel %vm238, 1, 0
    %v3028 = vsel %vm239, 1, 0
    %v3029 = vsel %vm240, 1, 0
    %v3030 = vsel %vm241, 1, 0
    %v3031 = vsel %vm242, 1, 0
    %v3032 = vsel %vm243, 1, 0
    %v3033 = vsel %vm244, 1, 0
    %v3034 = vsel %vm245, 1, 0
    %v3035 = vsel %vm246, 1, 0
    %v3036 = vsel %vm247, 1, 0
    %v3037 = vsel %vm248, 1, 0
    %v3038 = vsel %vm249, 1, 0
    %v3039 = vsel %vm250, 1, 0
    %v3040 = vsel %vm251, 1, 0
    %v3041 = vsel %vm252, 1, 0
    %v3042 = vsel %vm253, 1, 0
    %v3043 = vsel %vm254, 1, 0
    %v3044 = vsel %vm255, 1, 0
    %v3045 = vsel %vm256, 1, 0
    %v3046 = vsel %vm257, 1, 0
    %v3047 = vsel %vm258, 1, 0
    %v3048 = vsel %vm259, 1, 0
    %vm3049 = vcmp.eq.s32.totalorder %v3017, 1
    %vm3050 = vcmp.eq.s32.totalorder %v3018, 1
    %vm3051 = vcmp.eq.s32.totalorder %v3019, 1
    %vm3052 = vcmp.eq.s32.totalorder %v3020, 1
    %vm3053 = vcmp.eq.s32.totalorder %v3021, 1
    %vm3054 = vcmp.eq.s32.totalorder %v3022, 1
    %vm3055 = vcmp.eq.s32.totalorder %v3023, 1
    %vm3056 = vcmp.eq.s32.totalorder %v3024, 1
    %vm3057 = vcmp.eq.s32.totalorder %v3025, 1
    %vm3058 = vcmp.eq.s32.totalorder %v3026, 1
    %vm3059 = vcmp.eq.s32.totalorder %v3027, 1
    %vm3060 = vcmp.eq.s32.totalorder %v3028, 1
    %vm3061 = vcmp.eq.s32.totalorder %v3029, 1
    %vm3062 = vcmp.eq.s32.totalorder %v3030, 1
    %vm3063 = vcmp.eq.s32.totalorder %v3031, 1
    %vm3064 = vcmp.eq.s32.totalorder %v3032, 1
    %vm3065 = vcmp.eq.s32.totalorder %v3033, 1
    %vm3066 = vcmp.eq.s32.totalorder %v3034, 1
    %vm3067 = vcmp.eq.s32.totalorder %v3035, 1
    %vm3068 = vcmp.eq.s32.totalorder %v3036, 1
    %vm3069 = vcmp.eq.s32.totalorder %v3037, 1
    %vm3070 = vcmp.eq.s32.totalorder %v3038, 1
    %vm3071 = vcmp.eq.s32.totalorder %v3039, 1
    %vm3072 = vcmp.eq.s32.totalorder %v3040, 1
    %vm3073 = vcmp.eq.s32.totalorder %v3041, 1
    %vm3074 = vcmp.eq.s32.totalorder %v3042, 1
    %vm3075 = vcmp.eq.s32.totalorder %v3043, 1
    %vm3076 = vcmp.eq.s32.totalorder %v3044, 1
    %vm3077 = vcmp.eq.s32.totalorder %v3045, 1
    %vm3078 = vcmp.eq.s32.totalorder %v3046, 1
    %vm3079 = vcmp.eq.s32.totalorder %v3047, 1
    %vm3080 = vcmp.eq.s32.totalorder %v3048, 1
    %v3081 = vsel %vm3049, %v2985, 0.0
    %v3082 = vsel %vm3050, %v2986, 0.0
    %v3083 = vsel %vm3051, %v2987, 0.0
    %v3084 = vsel %vm3052, %v2988, 0.0
    %v3085 = vsel %vm3053, %v2989, 0.0
    %v3086 = vsel %vm3054, %v2990, 0.0
    %v3087 = vsel %vm3055, %v2991, 0.0
    %v3088 = vsel %vm3056, %v2992, 0.0
    %v3089 = vsel %vm3057, %v2993, 0.0
    %v3090 = vsel %vm3058, %v2994, 0.0
    %v3091 = vsel %vm3059, %v2995, 0.0
    %v3092 = vsel %vm3060, %v2996, 0.0
    %v3093 = vsel %vm3061, %v2997, 0.0
    %v3094 = vsel %vm3062, %v2998, 0.0
    %v3095 = vsel %vm3063, %v2999, 0.0
    %v3096 = vsel %vm3064, %v3000, 0.0
    %v3097 = vsel %vm3065, %v3001, 0.0
    %v3098 = vsel %vm3066, %v3002, 0.0
    %v3099 = vsel %vm3067, %v3003, 0.0
    %v3100 = vsel %vm3068, %v3004, 0.0
    %v3101 = vsel %vm3069, %v3005, 0.0
    %v3102 = vsel %vm3070, %v3006, 0.0
    %v3103 = vsel %vm3071, %v3007, 0.0
    %v3104 = vsel %vm3072, %v3008, 0.0
    %v3105 = vsel %vm3073, %v3009, 0.0
    %v3106 = vsel %vm3074, %v3010, 0.0
    %v3107 = vsel %vm3075, %v3011, 0.0
    %v3108 = vsel %vm3076, %v3012, 0.0
    %v3109 = vsel %vm3077, %v3013, 0.0
    %v3110 = vsel %vm3078, %v3014, 0.0
    %v3111 = vsel %vm3079, %v3015, 0.0
    %v3112 = vsel %vm3080, %v3016, 0.0
    %v3113 = vpack.c.bf16 %v3082, %v3081
    %v3114 = vpack.c.bf16 %v3084, %v3083
    %v3115 = vpack.c.bf16 %v3086, %v3085
    %v3116 = vpack.c.bf16 %v3088, %v3087
    %v3117 = vpack.c.bf16 %v3090, %v3089
    %v3118 = vpack.c.bf16 %v3092, %v3091
    %v3119 = vpack.c.bf16 %v3094, %v3093
    %v3120 = vpack.c.bf16 %v3096, %v3095
    %v3121 = vpack.c.bf16 %v3098, %v3097
    %v3122 = vpack.c.bf16 %v3100, %v3099
    %v3123 = vpack.c.bf16 %v3102, %v3101
    %v3124 = vpack.c.bf16 %v3104, %v3103
    %v3125 = vpack.c.bf16 %v3106, %v3105
    %v3126 = vpack.c.bf16 %v3108, %v3107
    %v3127 = vpack.c.bf16 %v3110, %v3109
    %v3128 = vpack.c.bf16 %v3112, %v3111
    %s3129 = scalar_lea.vmem %s1, 56
    %v3130 = vld [vmem:[%s3129] sm:$0xf]
    %v3131 = vld [vmem:[%s3129 + $0x4] sm:$0xf]
    %v3134 = vunpack.c.l.b16 %v3130
    %v3135 = vunpack.c.l.b16 %v3131
    %v3136 = vpack.c.b16 %v3135, %v3134
    %v3139 = vsel %vm66, %v3113, 0
    %v3142 = vsel %vm66, %v3114, 0
    %v3145 = vsel %vm66, %v3115, 0
    %v3148 = vsel %vm66, %v3116, 0
    %v3151 = vsel %vm66, %v3117, 0
    %v3154 = vsel %vm66, %v3118, 0
    %v3157 = vsel %vm66, %v3119, 0
    %v3160 = vsel %vm66, %v3120, 0
    %v3163 = vsel %vm66, %v3121, 0
    %v3166 = vsel %vm66, %v3122, 0
    %v3169 = vsel %vm66, %v3123, 0
    %v3172 = vsel %vm66, %v3124, 0
    %v3175 = vsel %vm66, %v3125, 0
    %v3178 = vsel %vm66, %v3126, 0
    %v3181 = vsel %vm66, %v3127, 0
    %v3184 = vsel %vm66, %v3128, 0
    %3186 = vmatprep.subr.bf16.mxu0 0
    %3187 = vmatpush1.bf16.msra.mxu0 %v3136
    %3188 = vmatprep.subr.bf16.mxu0 0
    %3189 = vmatpush1.bf16.msra.mxu0 0
    %3190 = vmatprep.subr.bf16.mxu0 0
    %3191 = vmatpush1.bf16.msra.mxu0 0
    %3192 = vmatprep.subr.bf16.mxu0 0
    %3193 = vmatpush1.bf16.msra.mxu0 0
    %3194 = vmatprep.subr.bf16.mxu0 0
    %3195 = vmatpush1.bf16.msra.mxu0 0
    %3196 = vmatprep.subr.bf16.mxu0 0
    %3197 = vmatpush1.bf16.msra.mxu0 0
    %3198 = vmatprep.subr.bf16.mxu0 0
    %3199 = vmatpush1.bf16.msra.mxu0 0
    %3200 = vmatprep.subr.bf16.mxu0 0
    %3201 = vmatpush1.bf16.msra.mxu0 0
    %3202 = vmatprep.subr.bf16.mxu0 0
    %3203 = vmatpush1.bf16.msra.mxu0 0
    %3204 = vmatprep.subr.bf16.mxu0 0
    %3205 = vmatpush1.bf16.msra.mxu0 0
    %3206 = vmatprep.subr.bf16.mxu0 0
    %3207 = vmatpush1.bf16.msra.mxu0 0
    %3208 = vmatprep.subr.bf16.mxu0 0
    %3209 = vmatpush1.bf16.msra.mxu0 0
    %3210 = vmatprep.subr.bf16.mxu0 0
    %3211 = vmatpush1.bf16.msra.mxu0 0
    %3212 = vmatprep.subr.bf16.mxu0 0
    %3213 = vmatpush1.bf16.msra.mxu0 0
    %3214 = vmatprep.subr.bf16.mxu0 0
    %3215 = vmatpush1.bf16.msra.mxu0 0
    %3216 = vmatprep.subr.bf16.mxu0 0
    %3217 = vmatpush1.bf16.msra.mxu0 0
    %3218 = vmatprep.mubr.bf16.mxu0 0
    %3219 = vmatmul.mubr.bf16.gmra.mrb[0].mxu0 %v3139
    %v3220 = vpop.f32.mrb[0].mxu0
    %v3221 = vadd.f32 0.0, %v3220
    %v3222 = vpop.f32.mrb[0].mxu0
    %v3223 = vpop.f32.mrb[0].mxu0
    %v3224 = vadd.f32 0.0, %v3223
    %v3225 = vpop.f32.mrb[0].mxu0
    %3226 = vmatprep.mubr.bf16.mxu0 0
    %3227 = vmatmul.mubr.bf16.gmra.mrb[0].mxu0 %v3142
    %v3228 = vpop.f32.mrb[0].mxu0
    %v3229 = vadd.f32 0.0, %v3228
    %v3230 = vpop.f32.mrb[0].mxu0
    %v3231 = vpop.f32.mrb[0].mxu0
    %v3232 = vadd.f32 0.0, %v3231
    %v3233 = vpop.f32.mrb[0].mxu0
    %3234 = vmatprep.mubr.bf16.mxu0 0
    %3235 = vmatmul.mubr.bf16.gmra.mrb[0].mxu0 %v3145
    %v3236 = vpop.f32.mrb[0].mxu0
    %v3237 = vadd.f32 0.0, %v3236
    %v3238 = vpop.f32.mrb[0].mxu0
    %v3239 = vpop.f32.mrb[0].mxu0
    %v3240 = vadd.f32 0.0, %v3239
    %v3241 = vpop.f32.mrb[0].mxu0
    %3242 = vmatprep.mubr.bf16.mxu0 0
    %3243 = vmatmul.mubr.bf16.gmra.mrb[0].mxu0 %v3148
    %v3244 = vpop.f32.mrb[0].mxu0
    %v3245 = vadd.f32 0.0, %v3244
    %v3246 = vpop.f32.mrb[0].mxu0
    %v3247 = vpop.f32.mrb[0].mxu0
    %v3248 = vadd.f32 0.0, %v3247
    %v3249 = vpop.f32.mrb[0].mxu0
    %3250 = vmatprep.mubr.bf16.mxu0 0
    %3251 = vmatmul.mubr.bf16.gmra.mrb[0].mxu0 %v3151
    %v3252 = vpop.f32.mrb[0].mxu0
    %v3253 = vadd.f32 0.0, %v3252
    %v3254 = vpop.f32.mrb[0].mxu0
    %v3255 = vpop.f32.mrb[0].mxu0
    %v3256 = vadd.f32 0.0, %v3255
    %v3257 = vpop.f32.mrb[0].mxu0
    %3258 = vmatprep.mubr.bf16.mxu0 0
    %3259 = vmatmul.mubr.bf16.gmra.mrb[0].mxu0 %v3154
    %v3260 = vpop.f32.mrb[0].mxu0
    %v3261 = vadd.f32 0.0, %v3260
    %v3262 = vpop.f32.mrb[0].mxu0
    %v3263 = vpop.f32.mrb[0].mxu0
    %v3264 = vadd.f32 0.0, %v3263
    %v3265 = vpop.f32.mrb[0].mxu0
    %3266 = vmatprep.mubr.bf16.mxu0 0
    %3267 = vmatmul.mubr.bf16.gmra.mrb[0].mxu0 %v3157
    %v3268 = vpop.f32.mrb[0].mxu0
    %v3269 = vadd.f32 0.0, %v3268
    %v3270 = vpop.f32.mrb[0].mxu0
    %v3271 = vpop.f32.mrb[0].mxu0
    %v3272 = vadd.f32 0.0, %v3271
    %v3273 = vpop.f32.mrb[0].mxu0
    %3274 = vmatprep.mubr.bf16.mxu0 0
    %3275 = vmatmul.mubr.bf16.gmra.mrb[0].mxu0 %v3160
    %v3276 = vpop.f32.mrb[0].mxu0
    %v3277 = vadd.f32 0.0, %v3276
    %v3278 = vpop.f32.mrb[0].mxu0
    %v3279 = vpop.f32.mrb[0].mxu0
    %v3280 = vadd.f32 0.0, %v3279
    %v3281 = vpop.f32.mrb[0].mxu0
    %3282 = vmatprep.mubr.bf16.mxu0 0
    %3283 = vmatmul.mubr.bf16.gmra.mrb[0].mxu0 %v3163
    %v3284 = vpop.f32.mrb[0].mxu0
    %v3285 = vadd.f32 0.0, %v3284
    %v3286 = vpop.f32.mrb[0].mxu0
    %v3287 = vpop.f32.mrb[0].mxu0
    %v3288 = vadd.f32 0.0, %v3287
    %v3289 = vpop.f32.mrb[0].mxu0
    %3290 = vmatprep.mubr.bf16.mxu0 0
    %3291 = vmatmul.mubr.bf16.gmra.mrb[0].mxu0 %v3166
    %v3292 = vpop.f32.mrb[0].mxu0
    %v3293 = vadd.f32 0.0, %v3292
    %v3294 = vpop.f32.mrb[0].mxu0
    %v3295 = vpop.f32.mrb[0].mxu0
    %v3296 = vadd.f32 0.0, %v3295
    %v3297 = vpop.f32.mrb[0].mxu0
    %3298 = vmatprep.mubr.bf16.mxu0 0
    %3299 = vmatmul.mubr.bf16.gmra.mrb[0].mxu0 %v3169
    %v3300 = vpop.f32.mrb[0].mxu0
    %v3301 = vadd.f32 0.0, %v3300
    %v3302 = vpop.f32.mrb[0].mxu0
    %v3303 = vpop.f32.mrb[0].mxu0
    %v3304 = vadd.f32 0.0, %v3303
    %v3305 = vpop.f32.mrb[0].mxu0
    %3306 = vmatprep.mubr.bf16.mxu0 0
    %3307 = vmatmul.mubr.bf16.gmra.mrb[0].mxu0 %v3172
    %v3308 = vpop.f32.mrb[0].mxu0
    %v3309 = vadd.f32 0.0, %v3308
    %v3310 = vpop.f32.mrb[0].mxu0
    %v3311 = vpop.f32.mrb[0].mxu0
    %v3312 = vadd.f32 0.0, %v3311
    %v3313 = vpop.f32.mrb[0].mxu0
    %3314 = vmatprep.mubr.bf16.mxu0 0
    %3315 = vmatmul.mubr.bf16.gmra.mrb[0].mxu0 %v3175
    %v3316 = vpop.f32.mrb[0].mxu0
    %v3317 = vadd.f32 0.0, %v3316
    %v3318 = vpop.f32.mrb[0].mxu0
    %v3319 = vpop.f32.mrb[0].mxu0
    %v3320 = vadd.f32 0.0, %v3319
    %v3321 = vpop.f32.mrb[0].mxu0
    %3322 = vmatprep.mubr.bf16.mxu0 0
    %3323 = vmatmul.mubr.bf16.gmra.mrb[0].mxu0 %v3178
    %v3324 = vpop.f32.mrb[0].mxu0
    %v3325 = vadd.f32 0.0, %v3324
    %v3326 = vpop.f32.mrb[0].mxu0
    %v3327 = vpop.f32.mrb[0].mxu0
    %v3328 = vadd.f32 0.0, %v3327
    %v3329 = vpop.f32.mrb[0].mxu0
    %3330 = vmatprep.mubr.bf16.mxu0 0
    %3331 = vmatmul.mubr.bf16.gmra.mrb[0].mxu0 %v3181
    %v3332 = vpop.f32.mrb[0].mxu0
    %v3333 = vadd.f32 0.0, %v3332
    %v3334 = vpop.f32.mrb[0].mxu0
    %v3335 = vpop.f32.mrb[0].mxu0
    %v3336 = vadd.f32 0.0, %v3335
    %v3337 = vpop.f32.mrb[0].mxu0
    %3338 = vmatprep.mubr.bf16.mxu0 0
    %3339 = vmatmul.mubr.bf16.gmra.mrb[0].mxu0 %v3184
    %v3340 = vpop.f32.mrb[0].mxu0
    %v3341 = vadd.f32 0.0, %v3340
    %v3342 = vpop.f32.mrb[0].mxu0
    %v3343 = vpop.f32.mrb[0].mxu0
    %v3344 = vadd.f32 0.0, %v3343
    %v3345 = vpop.f32.mrb[0].mxu0
    %3346 = vdwg.mxu0
    %v3347 = vadd.f32 %v2953, %v3221
    %v3348 = vadd.f32 %v2954, %v3224
    %v3349 = vadd.f32 %v2955, %v3229
    %v3350 = vadd.f32 %v2956, %v3232
    %v3351 = vadd.f32 %v2957, %v3237
    %v3352 = vadd.f32 %v2958, %v3240
    %v3353 = vadd.f32 %v2959, %v3245
    %v3354 = vadd.f32 %v2960, %v3248
    %v3355 = vadd.f32 %v2961, %v3253
    %v3356 = vadd.f32 %v2962, %v3256
    %v3357 = vadd.f32 %v2963, %v3261
    %v3358 = vadd.f32 %v2964, %v3264
    %v3359 = vadd.f32 %v2965, %v3269
    %v3360 = vadd.f32 %v2966, %v3272
    %v3361 = vadd.f32 %v2967, %v3277
    %v3362 = vadd.f32 %v2968, %v3280
    %v3363 = vadd.f32 %v2969, %v3285
    %v3364 = vadd.f32 %v2970, %v3288
    %v3365 = vadd.f32 %v2971, %v3293
    %v3366 = vadd.f32 %v2972, %v3296
    %v3367 = vadd.f32 %v2973, %v3301
    %v3368 = vadd.f32 %v2974, %v3304
    %v3369 = vadd.f32 %v2975, %v3309
    %v3370 = vadd.f32 %v2976, %v3312
    %v3371 = vadd.f32 %v2977, %v3317
    %v3372 = vadd.f32 %v2978, %v3320
    %v3373 = vadd.f32 %v2979, %v3325
    %v3374 = vadd.f32 %v2980, %v3328
    %v3375 = vadd.f32 %v2981, %v3333
    %v3376 = vadd.f32 %v2982, %v3336
    %v3377 = vadd.f32 %v2983, %v3341
    %v3378 = vadd.f32 %v2984, %v3344
    %v3379 = vld [vmem:[#allocation2 + $0x19] sm:$0xff]
    %v3380 = vld [vmem:[#allocation2 + $0x21] sm:$0xff]
    %v3381 = vld [vmem:[#allocation2 + $0x29] sm:$0xff]
    %v3382 = vld [vmem:[#allocation2 + $0x31] sm:$0xff]
    %v3383 = vld [vmem:[#allocation2 + $0x39] sm:$0xff]
    %v3384 = vld [vmem:[#allocation2 + $0x41] sm:$0xff]
    %v3385 = vld [vmem:[#allocation2 + $0x49] sm:$0xff]
    %v3386 = vld [vmem:[#allocation2 + $0x51] sm:$0xff]
    %v3387 = vld [vmem:[#allocation2 + $0x59] sm:$0xff]
    %v3388 = vld [vmem:[#allocation2 + $0x61] sm:$0xff]
    %v3389 = vld [vmem:[#allocation2 + $0x69] sm:$0xff]
    %v3390 = vld [vmem:[#allocation2 + $0x71] sm:$0xff]
    %v3391 = vld [vmem:[#allocation2 + $0x79] sm:$0xff]
    %v3392 = vld [vmem:[#allocation2 + $0x81] sm:$0xff]
    %v3393 = vld [vmem:[#allocation2 + $0x89] sm:$0xff]
    %v3394 = vld [vmem:[#allocation2 + $0x91] sm:$0xff]
    %v3395 = vld [vmem:[#allocation2 + $0x99] sm:$0xff]
    %v3396 = vld [vmem:[#allocation2 + $0xa1] sm:$0xff]
    %v3397 = vld [vmem:[#allocation2 + $0xa9] sm:$0xff]
    %v3398 = vld [vmem:[#allocation2 + $0xb1] sm:$0xff]
    %v3399 = vld [vmem:[#allocation2 + $0xb9] sm:$0xff]
    %v3400 = vld [vmem:[#allocation2 + $0xc1] sm:$0xff]
    %v3401 = vld [vmem:[#allocation2 + $0xc9] sm:$0xff]
    %v3402 = vld [vmem:[#allocation2 + $0xd1] sm:$0xff]
    %v3403 = vld [vmem:[#allocation2 + $0xd9] sm:$0xff]
    %v3404 = vld [vmem:[#allocation2 + $0xe1] sm:$0xff]
    %v3405 = vld [vmem:[#allocation2 + $0xe9] sm:$0xff]
    %v3406 = vld [vmem:[#allocation2 + $0xf1] sm:$0xff]
    %v3407 = vld [vmem:[#allocation2 + $0xf9] sm:$0xff]
    %v3408 = vld [vmem:[#allocation2 + $0x101] sm:$0xff]
    %v3409 = vld [vmem:[#allocation2 + $0x109] sm:$0xff]
    %v3410 = vld [vmem:[#allocation2 + $0x111] sm:$0xff]
    %vm3411 = vmand %vm228, %vm292
    %vm3412 = vmand %vm229, %vm293
    %vm3413 = vmand %vm230, %vm294
    %vm3414 = vmand %vm231, %vm295
    %vm3415 = vmand %vm232, %vm296
    %vm3416 = vmand %vm233, %vm297
    %vm3417 = vmand %vm234, %vm298
    %vm3418 = vmand %vm235, %vm299
    %vm3419 = vmand %vm236, %vm300
    %vm3420 = vmand %vm237, %vm301
    %vm3421 = vmand %vm238, %vm302
    %vm3422 = vmand %vm239, %vm303
    %vm3423 = vmand %vm240, %vm304
    %vm3424 = vmand %vm241, %vm305
    %vm3425 = vmand %vm242, %vm306
    %vm3426 = vmand %vm243, %vm307
    %vm3427 = vmand %vm244, %vm308
    %vm3428 = vmand %vm245, %vm309
    %vm3429 = vmand %vm246, %vm310
    %vm3430 = vmand %vm247, %vm311
    %vm3431 = vmand %vm248, %vm312
    %vm3432 = vmand %vm249, %vm313
    %vm3433 = vmand %vm250, %vm314
    %vm3434 = vmand %vm251, %vm315
    %vm3435 = vmand %vm252, %vm316
    %vm3436 = vmand %vm253, %vm317
    %vm3437 = vmand %vm254, %vm318
    %vm3438 = vmand %vm255, %vm319
    %vm3439 = vmand %vm256, %vm320
    %vm3440 = vmand %vm257, %vm321
    %vm3441 = vmand %vm258, %vm322
    %vm3442 = vmand %vm259, %vm323
    %v3443 = vsel %vm3411, 1, 0
    %v3444 = vsel %vm3412, 1, 0
    %v3445 = vsel %vm3413, 1, 0
    %v3446 = vsel %vm3414, 1, 0
    %v3447 = vsel %vm3415, 1, 0
    %v3448 = vsel %vm3416, 1, 0
    %v3449 = vsel %vm3417, 1, 0
    %v3450 = vsel %vm3418, 1, 0
    %v3451 = vsel %vm3419, 1, 0
    %v3452 = vsel %vm3420, 1, 0
    %v3453 = vsel %vm3421, 1, 0
    %v3454 = vsel %vm3422, 1, 0
    %v3455 = vsel %vm3423, 1, 0
    %v3456 = vsel %vm3424, 1, 0
    %v3457 = vsel %vm3425, 1, 0
    %v3458 = vsel %vm3426, 1, 0
    %v3459 = vsel %vm3427, 1, 0
    %v3460 = vsel %vm3428, 1, 0
    %v3461 = vsel %vm3429, 1, 0
    %v3462 = vsel %vm3430, 1, 0
    %v3463 = vsel %vm3431, 1, 0
    %v3464 = vsel %vm3432, 1, 0
    %v3465 = vsel %vm3433, 1, 0
    %v3466 = vsel %vm3434, 1, 0
    %v3467 = vsel %vm3435, 1, 0
    %v3468 = vsel %vm3436, 1, 0
    %v3469 = vsel %vm3437, 1, 0
    %v3470 = vsel %vm3438, 1, 0
    %v3471 = vsel %vm3439, 1, 0
    %v3472 = vsel %vm3440, 1, 0
    %v3473 = vsel %vm3441, 1, 0
    %v3474 = vsel %vm3442, 1, 0
    %vm3475 = vcmp.eq.s32.totalorder %v3443, 1
    %vm3476 = vcmp.eq.s32.totalorder %v3444, 1
    %vm3477 = vcmp.eq.s32.totalorder %v3445, 1
    %vm3478 = vcmp.eq.s32.totalorder %v3446, 1
    %vm3479 = vcmp.eq.s32.totalorder %v3447, 1
    %vm3480 = vcmp.eq.s32.totalorder %v3448, 1
    %vm3481 = vcmp.eq.s32.totalorder %v3449, 1
    %vm3482 = vcmp.eq.s32.totalorder %v3450, 1
    %vm3483 = vcmp.eq.s32.totalorder %v3451, 1
    %vm3484 = vcmp.eq.s32.totalorder %v3452, 1
    %vm3485 = vcmp.eq.s32.totalorder %v3453, 1
    %vm3486 = vcmp.eq.s32.totalorder %v3454, 1
    %vm3487 = vcmp.eq.s32.totalorder %v3455, 1
    %vm3488 = vcmp.eq.s32.totalorder %v3456, 1
    %vm3489 = vcmp.eq.s32.totalorder %v3457, 1
    %vm3490 = vcmp.eq.s32.totalorder %v3458, 1
    %vm3491 = vcmp.eq.s32.totalorder %v3459, 1
    %vm3492 = vcmp.eq.s32.totalorder %v3460, 1
    %vm3493 = vcmp.eq.s32.totalorder %v3461, 1
    %vm3494 = vcmp.eq.s32.totalorder %v3462, 1
    %vm3495 = vcmp.eq.s32.totalorder %v3463, 1
    %vm3496 = vcmp.eq.s32.totalorder %v3464, 1
    %vm3497 = vcmp.eq.s32.totalorder %v3465, 1
    %vm3498 = vcmp.eq.s32.totalorder %v3466, 1
    %vm3499 = vcmp.eq.s32.totalorder %v3467, 1
    %vm3500 = vcmp.eq.s32.totalorder %v3468, 1
    %vm3501 = vcmp.eq.s32.totalorder %v3469, 1
    %vm3502 = vcmp.eq.s32.totalorder %v3470, 1
    %vm3503 = vcmp.eq.s32.totalorder %v3471, 1
    %vm3504 = vcmp.eq.s32.totalorder %v3472, 1
    %vm3505 = vcmp.eq.s32.totalorder %v3473, 1
    %vm3506 = vcmp.eq.s32.totalorder %v3474, 1
    %v3507 = vsel %vm3475, %v3379, 0.0
    %v3508 = vsel %vm3476, %v3380, 0.0
    %v3509 = vsel %vm3477, %v3381, 0.0
    %v3510 = vsel %vm3478, %v3382, 0.0
    %v3511 = vsel %vm3479, %v3383, 0.0
    %v3512 = vsel %vm3480, %v3384, 0.0
    %v3513 = vsel %vm3481, %v3385, 0.0
    %v3514 = vsel %vm3482, %v3386, 0.0
    %v3515 = vsel %vm3483, %v3387, 0.0
    %v3516 = vsel %vm3484, %v3388, 0.0
    %v3517 = vsel %vm3485, %v3389, 0.0
    %v3518 = vsel %vm3486, %v3390, 0.0
    %v3519 = vsel %vm3487, %v3391, 0.0
    %v3520 = vsel %vm3488, %v3392, 0.0
    %v3521 = vsel %vm3489, %v3393, 0.0
    %v3522 = vsel %vm3490, %v3394, 0.0
    %v3523 = vsel %vm3491, %v3395, 0.0
    %v3524 = vsel %vm3492, %v3396, 0.0
    %v3525 = vsel %vm3493, %v3397, 0.0
    %v3526 = vsel %vm3494, %v3398, 0.0
    %v3527 = vsel %vm3495, %v3399, 0.0
    %v3528 = vsel %vm3496, %v3400, 0.0
    %v3529 = vsel %vm3497, %v3401, 0.0
    %v3530 = vsel %vm3498, %v3402, 0.0
    %v3531 = vsel %vm3499, %v3403, 0.0
    %v3532 = vsel %vm3500, %v3404, 0.0
    %v3533 = vsel %vm3501, %v3405, 0.0
    %v3534 = vsel %vm3502, %v3406, 0.0
    %v3535 = vsel %vm3503, %v3407, 0.0
    %v3536 = vsel %vm3504, %v3408, 0.0
    %v3537 = vsel %vm3505, %v3409, 0.0
    %v3538 = vsel %vm3506, %v3410, 0.0
    %v3539 = vpack.c.bf16 %v3508, %v3507
    %v3540 = vpack.c.bf16 %v3510, %v3509
    %v3541 = vpack.c.bf16 %v3512, %v3511
    %v3542 = vpack.c.bf16 %v3514, %v3513
    %v3543 = vpack.c.bf16 %v3516, %v3515
    %v3544 = vpack.c.bf16 %v3518, %v3517
    %v3545 = vpack.c.bf16 %v3520, %v3519
    %v3546 = vpack.c.bf16 %v3522, %v3521
    %v3547 = vpack.c.bf16 %v3524, %v3523
    %v3548 = vpack.c.bf16 %v3526, %v3525
    %v3549 = vpack.c.bf16 %v3528, %v3527
    %v3550 = vpack.c.bf16 %v3530, %v3529
    %v3551 = vpack.c.bf16 %v3532, %v3531
    %v3552 = vpack.c.bf16 %v3534, %v3533
    %v3553 = vpack.c.bf16 %v3536, %v3535
    %v3554 = vpack.c.bf16 %v3538, %v3537
    %s3555 = scalar_lea.vmem %s1, 64
    %v3556 = vld [vmem:[%s3555] sm:$0xf]
    %v3557 = vld [vmem:[%s3555 + $0x4] sm:$0xf]
    %v3560 = vunpack.c.l.b16 %v3556
    %v3561 = vunpack.c.l.b16 %v3557
    %v3562 = vpack.c.b16 %v3561, %v3560
    %v3565 = vsel %vm66, %v3539, 0
    %v3568 = vsel %vm66, %v3540, 0
    %v3571 = vsel %vm66, %v3541, 0
    %v3574 = vsel %vm66, %v3542, 0
    %v3577 = vsel %vm66, %v3543, 0
    %v3580 = vsel %vm66, %v3544, 0
    %v3583 = vsel %vm66, %v3545, 0
    %v3586 = vsel %vm66, %v3546, 0
    %v3589 = vsel %vm66, %v3547, 0
    %v3592 = vsel %vm66, %v3548, 0
    %v3595 = vsel %vm66, %v3549, 0
    %v3598 = vsel %vm66, %v3550, 0
    %v3601 = vsel %vm66, %v3551, 0
    %v3604 = vsel %vm66, %v3552, 0
    %v3607 = vsel %vm66, %v3553, 0
    %v3610 = vsel %vm66, %v3554, 0
    %3612 = vmatprep.subr.bf16.mxu0 0
    %3613 = vmatpush1.bf16.msra.mxu0 %v3562
    %3614 = vmatprep.subr.bf16.mxu0 0
    %3615 = vmatpush1.bf16.msra.mxu0 0
    %3616 = vmatprep.subr.bf16.mxu0 0
    %3617 = vmatpush1.bf16.msra.mxu0 0
    %3618 = vmatprep.subr.bf16.mxu0 0
    %3619 = vmatpush1.bf16.msra.mxu0 0
    %3620 = vmatprep.subr.bf16.mxu0 0
    %3621 = vmatpush1.bf16.msra.mxu0 0
    %3622 = vmatprep.subr.bf16.mxu0 0
    %3623 = vmatpush1.bf16.msra.mxu0 0
    %3624 = vmatprep.subr.bf16.mxu0 0
    %3625 = vmatpush1.bf16.msra.mxu0 0
    %3626 = vmatprep.subr.bf16.mxu0 0
    %3627 = vmatpush1.bf16.msra.mxu0 0
    %3628 = vmatprep.subr.bf16.mxu0 0
    %3629 = vmatpush1.bf16.msra.mxu0 0
    %3630 = vmatprep.subr.bf16.mxu0 0
    %3631 = vmatpush1.bf16.msra.mxu0 0
    %3632 = vmatprep.subr.bf16.mxu0 0
    %3633 = vmatpush1.bf16.msra.mxu0 0
    %3634 = vmatprep.subr.bf16.mxu0 0
    %3635 = vmatpush1.bf16.msra.mxu0 0
    %3636 = vmatprep.subr.bf16.mxu0 0
    %3637 = vmatpush1.bf16.msra.mxu0 0
    %3638 = vmatprep.subr.bf16.mxu0 0
    %3639 = vmatpush1.bf16.msra.mxu0 0
    %3640 = vmatprep.subr.bf16.mxu0 0
    %3641 = vmatpush1.bf16.msra.mxu0 0
    %3642 = vmatprep.subr.bf16.mxu0 0
    %3643 = vmatpush1.bf16.msra.mxu0 0
    %3644 = vmatprep.mubr.bf16.mxu0 0
    %3645 = vmatmul.mubr.bf16.gmra.mrb[0].mxu0 %v3565
    %v3646 = vpop.f32.mrb[0].mxu0
    %v3647 = vadd.f32 0.0, %v3646
    %v3648 = vpop.f32.mrb[0].mxu0
    %v3649 = vpop.f32.mrb[0].mxu0
    %v3650 = vadd.f32 0.0, %v3649
    %v3651 = vpop.f32.mrb[0].mxu0
    %3652 = vmatprep.mubr.bf16.mxu0 0
    %3653 = vmatmul.mubr.bf16.gmra.mrb[0].mxu0 %v3568
    %v3654 = vpop.f32.mrb[0].mxu0
    %v3655 = vadd.f32 0.0, %v3654
    %v3656 = vpop.f32.mrb[0].mxu0
    %v3657 = vpop.f32.mrb[0].mxu0
    %v3658 = vadd.f32 0.0, %v3657
    %v3659 = vpop.f32.mrb[0].mxu0
    %3660 = vmatprep.mubr.bf16.mxu0 0
    %3661 = vmatmul.mubr.bf16.gmra.mrb[0].mxu0 %v3571
    %v3662 = vpop.f32.mrb[0].mxu0
    %v3663 = vadd.f32 0.0, %v3662
    %v3664 = vpop.f32.mrb[0].mxu0
    %v3665 = vpop.f32.mrb[0].mxu0
    %v3666 = vadd.f32 0.0, %v3665
    %v3667 = vpop.f32.mrb[0].mxu0
    %3668 = vmatprep.mubr.bf16.mxu0 0
    %3669 = vmatmul.mubr.bf16.gmra.mrb[0].mxu0 %v3574
    %v3670 = vpop.f32.mrb[0].mxu0
    %v3671 = vadd.f32 0.0, %v3670
    %v3672 = vpop.f32.mrb[0].mxu0
    %v3673 = vpop.f32.mrb[0].mxu0
    %v3674 = vadd.f32 0.0, %v3673
    %v3675 = vpop.f32.mrb[0].mxu0
    %3676 = vmatprep.mubr.bf16.mxu0 0
    %3677 = vmatmul.mubr.bf16.gmra.mrb[0].mxu0 %v3577
    %v3678 = vpop.f32.mrb[0].mxu0
    %v3679 = vadd.f32 0.0, %v3678
    %v3680 = vpop.f32.mrb[0].mxu0
    %v3681 = vpop.f32.mrb[0].mxu0
    %v3682 = vadd.f32 0.0, %v3681
    %v3683 = vpop.f32.mrb[0].mxu0
    %3684 = vmatprep.mubr.bf16.mxu0 0
    %3685 = vmatmul.mubr.bf16.gmra.mrb[0].mxu0 %v3580
    %v3686 = vpop.f32.mrb[0].mxu0
    %v3687 = vadd.f32 0.0, %v3686
    %v3688 = vpop.f32.mrb[0].mxu0
    %v3689 = vpop.f32.mrb[0].mxu0
    %v3690 = vadd.f32 0.0, %v3689
    %v3691 = vpop.f32.mrb[0].mxu0
    %3692 = vmatprep.mubr.bf16.mxu0 0
    %3693 = vmatmul.mubr.bf16.gmra.mrb[0].mxu0 %v3583
    %v3694 = vpop.f32.mrb[0].mxu0
    %v3695 = vadd.f32 0.0, %v3694
    %v3696 = vpop.f32.mrb[0].mxu0
    %v3697 = vpop.f32.mrb[0].mxu0
    %v3698 = vadd.f32 0.0, %v3697
    %v3699 = vpop.f32.mrb[0].mxu0
    %3700 = vmatprep.mubr.bf16.mxu0 0
    %3701 = vmatmul.mubr.bf16.gmra.mrb[0].mxu0 %v3586
    %v3702 = vpop.f32.mrb[0].mxu0
    %v3703 = vadd.f32 0.0, %v3702
    %v3704 = vpop.f32.mrb[0].mxu0
    %v3705 = vpop.f32.mrb[0].mxu0
    %v3706 = vadd.f32 0.0, %v3705
    %v3707 = vpop.f32.mrb[0].mxu0
    %3708 = vmatprep.mubr.bf16.mxu0 0
    %3709 = vmatmul.mubr.bf16.gmra.mrb[0].mxu0 %v3589
    %v3710 = vpop.f32.mrb[0].mxu0
    %v3711 = vadd.f32 0.0, %v3710
    %v3712 = vpop.f32.mrb[0].mxu0
    %v3713 = vpop.f32.mrb[0].mxu0
    %v3714 = vadd.f32 0.0, %v3713
    %v3715 = vpop.f32.mrb[0].mxu0
    %3716 = vmatprep.mubr.bf16.mxu0 0
    %3717 = vmatmul.mubr.bf16.gmra.mrb[0].mxu0 %v3592
    %v3718 = vpop.f32.mrb[0].mxu0
    %v3719 = vadd.f32 0.0, %v3718
    %v3720 = vpop.f32.mrb[0].mxu0
    %v3721 = vpop.f32.mrb[0].mxu0
    %v3722 = vadd.f32 0.0, %v3721
    %v3723 = vpop.f32.mrb[0].mxu0
    %3724 = vmatprep.mubr.bf16.mxu0 0
    %3725 = vmatmul.mubr.bf16.gmra.mrb[0].mxu0 %v3595
    %v3726 = vpop.f32.mrb[0].mxu0
    %v3727 = vadd.f32 0.0, %v3726
    %v3728 = vpop.f32.mrb[0].mxu0
    %v3729 = vpop.f32.mrb[0].mxu0
    %v3730 = vadd.f32 0.0, %v3729
    %v3731 = vpop.f32.mrb[0].mxu0
    %3732 = vmatprep.mubr.bf16.mxu0 0
    %3733 = vmatmul.mubr.bf16.gmra.mrb[0].mxu0 %v3598
    %v3734 = vpop.f32.mrb[0].mxu0
    %v3735 = vadd.f32 0.0, %v3734
    %v3736 = vpop.f32.mrb[0].mxu0
    %v3737 = vpop.f32.mrb[0].mxu0
    %v3738 = vadd.f32 0.0, %v3737
    %v3739 = vpop.f32.mrb[0].mxu0
    %3740 = vmatprep.mubr.bf16.mxu0 0
    %3741 = vmatmul.mubr.bf16.gmra.mrb[0].mxu0 %v3601
    %v3742 = vpop.f32.mrb[0].mxu0
    %v3743 = vadd.f32 0.0, %v3742
    %v3744 = vpop.f32.mrb[0].mxu0
    %v3745 = vpop.f32.mrb[0].mxu0
    %v3746 = vadd.f32 0.0, %v3745
    %v3747 = vpop.f32.mrb[0].mxu0
    %3748 = vmatprep.mubr.bf16.mxu0 0
    %3749 = vmatmul.mubr.bf16.gmra.mrb[0].mxu0 %v3604
    %v3750 = vpop.f32.mrb[0].mxu0
    %v3751 = vadd.f32 0.0, %v3750
    %v3752 = vpop.f32.mrb[0].mxu0
    %v3753 = vpop.f32.mrb[0].mxu0
    %v3754 = vadd.f32 0.0, %v3753
    %v3755 = vpop.f32.mrb[0].mxu0
    %3756 = vmatprep.mubr.bf16.mxu0 0
    %3757 = vmatmul.mubr.bf16.gmra.mrb[0].mxu0 %v3607
    %v3758 = vpop.f32.mrb[0].mxu0
    %v3759 = vadd.f32 0.0, %v3758
    %v3760 = vpop.f32.mrb[0].mxu0
    %v3761 = vpop.f32.mrb[0].mxu0
    %v3762 = vadd.f32 0.0, %v3761
    %v3763 = vpop.f32.mrb[0].mxu0
    %3764 = vmatprep.mubr.bf16.mxu0 0
    %3765 = vmatmul.mubr.bf16.gmra.mrb[0].mxu0 %v3610
    %v3766 = vpop.f32.mrb[0].mxu0
    %v3767 = vadd.f32 0.0, %v3766
    %v3768 = vpop.f32.mrb[0].mxu0
    %v3769 = vpop.f32.mrb[0].mxu0
    %v3770 = vadd.f32 0.0, %v3769
    %v3771 = vpop.f32.mrb[0].mxu0
    %3772 = vdwg.mxu0
    %v3773 = vadd.f32 %v3347, %v3647
    %v3774 = vadd.f32 %v3348, %v3650
    %v3775 = vadd.f32 %v3349, %v3655
    %v3776 = vadd.f32 %v3350, %v3658
    %v3777 = vadd.f32 %v3351, %v3663
    %v3778 = vadd.f32 %v3352, %v3666
    %v3779 = vadd.f32 %v3353, %v3671
    %v3780 = vadd.f32 %v3354, %v3674
    %v3781 = vadd.f32 %v3355, %v3679
    %v3782 = vadd.f32 %v3356, %v3682
    %v3783 = vadd.f32 %v3357, %v3687
    %v3784 = vadd.f32 %v3358, %v3690
    %v3785 = vadd.f32 %v3359, %v3695
    %v3786 = vadd.f32 %v3360, %v3698
    %v3787 = vadd.f32 %v3361, %v3703
    %v3788 = vadd.f32 %v3362, %v3706
    %v3789 = vadd.f32 %v3363, %v3711
    %v3790 = vadd.f32 %v3364, %v3714
    %v3791 = vadd.f32 %v3365, %v3719
    %v3792 = vadd.f32 %v3366, %v3722
    %v3793 = vadd.f32 %v3367, %v3727
    %v3794 = vadd.f32 %v3368, %v3730
    %v3795 = vadd.f32 %v3369, %v3735
    %v3796 = vadd.f32 %v3370, %v3738
    %v3797 = vadd.f32 %v3371, %v3743
    %v3798 = vadd.f32 %v3372, %v3746
    %v3799 = vadd.f32 %v3373, %v3751
    %v3800 = vadd.f32 %v3374, %v3754
    %v3801 = vadd.f32 %v3375, %v3759
    %v3802 = vadd.f32 %v3376, %v3762
    %v3803 = vadd.f32 %v3377, %v3767
    %v3804 = vadd.f32 %v3378, %v3770
    %v3805 = vld [vmem:[%s2] sm:$0x1]
    %v3807 = vlaneseq
    %v3808 = vshrl.u32 %v3807, 7
    %v3809 = vsub.s32 0, %v3808
    %v3810 = vrot.slane %v3805, %v3809
    %v3812 = vmul.f32 %v3773, %v3810
    %v3813 = vmul.f32 %v3774, %v3810
    %v3814 = vmul.f32 %v3775, %v3810
    %v3815 = vmul.f32 %v3776, %v3810
    %v3816 = vmul.f32 %v3777, %v3810
    %v3817 = vmul.f32 %v3778, %v3810
    %v3818 = vmul.f32 %v3779, %v3810
    %v3819 = vmul.f32 %v3780, %v3810
    %v3820 = vmul.f32 %v3781, %v3810
    %v3821 = vmul.f32 %v3782, %v3810
    %v3822 = vmul.f32 %v3783, %v3810
    %v3823 = vmul.f32 %v3784, %v3810
    %v3824 = vmul.f32 %v3785, %v3810
    %v3825 = vmul.f32 %v3786, %v3810
    %v3826 = vmul.f32 %v3787, %v3810
    %v3827 = vmul.f32 %v3788, %v3810
    %v3828 = vmul.f32 %v3789, %v3810
    %v3829 = vmul.f32 %v3790, %v3810
    %v3830 = vmul.f32 %v3791, %v3810
    %v3831 = vmul.f32 %v3792, %v3810
    %v3832 = vmul.f32 %v3793, %v3810
    %v3833 = vmul.f32 %v3794, %v3810
    %v3834 = vmul.f32 %v3795, %v3810
    %v3835 = vmul.f32 %v3796, %v3810
    %v3836 = vmul.f32 %v3797, %v3810
    %v3837 = vmul.f32 %v3798, %v3810
    %v3838 = vmul.f32 %v3799, %v3810
    %v3839 = vmul.f32 %v3800, %v3810
    %v3840 = vmul.f32 %v3801, %v3810
    %v3841 = vmul.f32 %v3802, %v3810
    %v3842 = vmul.f32 %v3803, %v3810
    %v3843 = vmul.f32 %v3804, %v3810
    %v3844 = vld [vmem:[%s3] sm:$0x1]
    %v3846 = vlaneseq
    %v3847 = vshrl.u32 %v3846, 7
    %v3848 = vsub.s32 0, %v3847
    %v3849 = vrot.slane %v3844, %v3848
    %v3851 = vadd.f32 %v3812, %v3849
    %v3852 = vadd.f32 %v3813, %v3849
    %v3853 = vadd.f32 %v3814, %v3849
    %v3854 = vadd.f32 %v3815, %v3849
    %v3855 = vadd.f32 %v3816, %v3849
    %v3856 = vadd.f32 %v3817, %v3849
    %v3857 = vadd.f32 %v3818, %v3849
    %v3858 = vadd.f32 %v3819, %v3849
    %v3859 = vadd.f32 %v3820, %v3849
    %v3860 = vadd.f32 %v3821, %v3849
    %v3861 = vadd.f32 %v3822, %v3849
    %v3862 = vadd.f32 %v3823, %v3849
    %v3863 = vadd.f32 %v3824, %v3849
    %v3864 = vadd.f32 %v3825, %v3849
    %v3865 = vadd.f32 %v3826, %v3849
    %v3866 = vadd.f32 %v3827, %v3849
    %v3867 = vadd.f32 %v3828, %v3849
    %v3868 = vadd.f32 %v3829, %v3849
    %v3869 = vadd.f32 %v3830, %v3849
    %v3870 = vadd.f32 %v3831, %v3849
    %v3871 = vadd.f32 %v3832, %v3849
    %v3872 = vadd.f32 %v3833, %v3849
    %v3873 = vadd.f32 %v3834, %v3849
    %v3874 = vadd.f32 %v3835, %v3849
    %v3875 = vadd.f32 %v3836, %v3849
    %v3876 = vadd.f32 %v3837, %v3849
    %v3877 = vadd.f32 %v3838, %v3849
    %v3878 = vadd.f32 %v3839, %v3849
    %v3879 = vadd.f32 %v3840, %v3849
    %v3880 = vadd.f32 %v3841, %v3849
    %v3881 = vadd.f32 %v3842, %v3849
    %v3882 = vadd.f32 %v3843, %v3849
    %v3883 = vmax.f32 %v3851, 0.0
    %v3884 = vmax.f32 %v3852, 0.0
    %v3885 = vmax.f32 %v3853, 0.0
    %v3886 = vmax.f32 %v3854, 0.0
    %v3887 = vmax.f32 %v3855, 0.0
    %v3888 = vmax.f32 %v3856, 0.0
    %v3889 = vmax.f32 %v3857, 0.0
    %v3890 = vmax.f32 %v3858, 0.0
    %v3891 = vmax.f32 %v3859, 0.0
    %v3892 = vmax.f32 %v3860, 0.0
    %v3893 = vmax.f32 %v3861, 0.0
    %v3894 = vmax.f32 %v3862, 0.0
    %v3895 = vmax.f32 %v3863, 0.0
    %v3896 = vmax.f32 %v3864, 0.0
    %v3897 = vmax.f32 %v3865, 0.0
    %v3898 = vmax.f32 %v3866, 0.0
    %v3899 = vmax.f32 %v3867, 0.0
    %v3900 = vmax.f32 %v3868, 0.0
    %v3901 = vmax.f32 %v3869, 0.0
    %v3902 = vmax.f32 %v3870, 0.0
    %v3903 = vmax.f32 %v3871, 0.0
    %v3904 = vmax.f32 %v3872, 0.0
    %v3905 = vmax.f32 %v3873, 0.0
    %v3906 = vmax.f32 %v3874, 0.0
    %v3907 = vmax.f32 %v3875, 0.0
    %v3908 = vmax.f32 %v3876, 0.0
    %v3909 = vmax.f32 %v3877, 0.0
    %v3910 = vmax.f32 %v3878, 0.0
    %v3911 = vmax.f32 %v3879, 0.0
    %v3912 = vmax.f32 %v3880, 0.0
    %v3913 = vmax.f32 %v3881, 0.0
    %v3914 = vmax.f32 %v3882, 0.0
    %vm3915 = vcmask 261120
    %3916 = vst.msk [vmem:[#allocation3 + $0x10] sm:$0xff] %vm3915, %v3883
    %3917 = vst.msk [vmem:[#allocation3 + $0x18] sm:$0xff] %vm3915, %v3884
    %3918 = vst.msk [vmem:[#allocation3 + $0x20] sm:$0xff] %vm3915, %v3885
    %3919 = vst.msk [vmem:[#allocation3 + $0x28] sm:$0xff] %vm3915, %v3886
    %3920 = vst.msk [vmem:[#allocation3 + $0x30] sm:$0xff] %vm3915, %v3887
    %3921 = vst.msk [vmem:[#allocation3 + $0x38] sm:$0xff] %vm3915, %v3888
    %3922 = vst.msk [vmem:[#allocation3 + $0x40] sm:$0xff] %vm3915, %v3889
    %3923 = vst.msk [vmem:[#allocation3 + $0x48] sm:$0xff] %vm3915, %v3890
    %3924 = vst.msk [vmem:[#allocation3 + $0x50] sm:$0xff] %vm3915, %v3891
    %3925 = vst.msk [vmem:[#allocation3 + $0x58] sm:$0xff] %vm3915, %v3892
    %3926 = vst.msk [vmem:[#allocation3 + $0x60] sm:$0xff] %vm3915, %v3893
    %3927 = vst.msk [vmem:[#allocation3 + $0x68] sm:$0xff] %vm3915, %v3894
    %3928 = vst.msk [vmem:[#allocation3 + $0x70] sm:$0xff] %vm3915, %v3895
    %3929 = vst.msk [vmem:[#allocation3 + $0x78] sm:$0xff] %vm3915, %v3896
    %3930 = vst.msk [vmem:[#allocation3 + $0x80] sm:$0xff] %vm3915, %v3897
    %3931 = vst.msk [vmem:[#allocation3 + $0x88] sm:$0xff] %vm3915, %v3898
    %3932 = vst.msk [vmem:[#allocation3 + $0x90] sm:$0xff] %vm3915, %v3899
    %3933 = vst.msk [vmem:[#allocation3 + $0x98] sm:$0xff] %vm3915, %v3900
    %3934 = vst.msk [vmem:[#allocation3 + $0xa0] sm:$0xff] %vm3915, %v3901
    %3935 = vst.msk [vmem:[#allocation3 + $0xa8] sm:$0xff] %vm3915, %v3902
    %3936 = vst.msk [vmem:[#allocation3 + $0xb0] sm:$0xff] %vm3915, %v3903
    %3937 = vst.msk [vmem:[#allocation3 + $0xb8] sm:$0xff] %vm3915, %v3904
    %3938 = vst.msk [vmem:[#allocation3 + $0xc0] sm:$0xff] %vm3915, %v3905
    %3939 = vst.msk [vmem:[#allocation3 + $0xc8] sm:$0xff] %vm3915, %v3906
    %3940 = vst.msk [vmem:[#allocation3 + $0xd0] sm:$0xff] %vm3915, %v3907
    %3941 = vst.msk [vmem:[#allocation3 + $0xd8] sm:$0xff] %vm3915, %v3908
    %3942 = vst.msk [vmem:[#allocation3 + $0xe0] sm:$0xff] %vm3915, %v3909
    %3943 = vst.msk [vmem:[#allocation3 + $0xe8] sm:$0xff] %vm3915, %v3910
    %3944 = vst.msk [vmem:[#allocation3 + $0xf0] sm:$0xff] %vm3915, %v3911
    %3945 = vst.msk [vmem:[#allocation3 + $0xf8] sm:$0xff] %vm3915, %v3912
    %3946 = vst.msk [vmem:[#allocation3 + $0x100] sm:$0xff] %vm3915, %v3913
    %3947 = vst.msk [vmem:[#allocation3 + $0x108] sm:$0xff] %vm3915, %v3914
    %v3948 = vld [vmem:[#allocation3 + $0x7] sm:$0xff]
    %v3949 = vld [vmem:[#allocation3 + $0xf] sm:$0xff]
    %v3950 = vld [vmem:[#allocation3 + $0x17] sm:$0xff]
    %v3951 = vld [vmem:[#allocation3 + $0x1f] sm:$0xff]
    %v3952 = vld [vmem:[#allocation3 + $0x27] sm:$0xff]
    %v3953 = vld [vmem:[#allocation3 + $0x2f] sm:$0xff]
    %v3954 = vld [vmem:[#allocation3 + $0x37] sm:$0xff]
    %v3955 = vld [vmem:[#allocation3 + $0x3f] sm:$0xff]
    %v3956 = vld [vmem:[#allocation3 + $0x47] sm:$0xff]
    %v3957 = vld [vmem:[#allocation3 + $0x4f] sm:$0xff]
    %v3958 = vld [vmem:[#allocation3 + $0x57] sm:$0xff]
    %v3959 = vld [vmem:[#allocation3 + $0x5f] sm:$0xff]
    %v3960 = vld [vmem:[#allocation3 + $0x67] sm:$0xff]
    %v3961 = vld [vmem:[#allocation3 + $0x6f] sm:$0xff]
    %v3962 = vld [vmem:[#allocation3 + $0x77] sm:$0xff]
    %v3963 = vld [vmem:[#allocation3 + $0x7f] sm:$0xff]
    %v3964 = vld [vmem:[#allocation3 + $0x87] sm:$0xff]
    %v3965 = vld [vmem:[#allocation3 + $0x8f] sm:$0xff]
    %v3966 = vld [vmem:[#allocation3 + $0x97] sm:$0xff]
    %v3967 = vld [vmem:[#allocation3 + $0x9f] sm:$0xff]
    %v3968 = vld [vmem:[#allocation3 + $0xa7] sm:$0xff]
    %v3969 = vld [vmem:[#allocation3 + $0xaf] sm:$0xff]
    %v3970 = vld [vmem:[#allocation3 + $0xb7] sm:$0xff]
    %v3971 = vld [vmem:[#allocation3 + $0xbf] sm:$0xff]
    %v3972 = vld [vmem:[#allocation3 + $0xc7] sm:$0xff]
    %v3973 = vld [vmem:[#allocation3 + $0xcf] sm:$0xff]
    %v3974 = vld [vmem:[#allocation3 + $0xd7] sm:$0xff]
    %v3975 = vld [vmem:[#allocation3 + $0xdf] sm:$0xff]
    %v3976 = vld [vmem:[#allocation3 + $0xe7] sm:$0xff]
    %v3977 = vld [vmem:[#allocation3 + $0xef] sm:$0xff]
    %v3978 = vld [vmem:[#allocation3 + $0xf7] sm:$0xff]
    %v3979 = vld [vmem:[#allocation3 + $0xff] sm:$0xff]
    %v3980 = vsel %vm420, %v3948, 0.0
    %v3981 = vsel %vm421, %v3949, 0.0
    %v3982 = vsel %vm422, %v3950, 0.0
    %v3983 = vsel %vm423, %v3951, 0.0
    %v3984 = vsel %vm424, %v3952, 0.0
    %v3985 = vsel %vm425, %v3953, 0.0
    %v3986 = vsel %vm426, %v3954, 0.0
    %v3987 = vsel %vm427, %v3955, 0.0
    %v3988 = vsel %vm428, %v3956, 0.0
    %v3989 = vsel %vm429, %v3957, 0.0
    %v3990 = vsel %vm430, %v3958, 0.0
    %v3991 = vsel %vm431, %v3959, 0.0
    %v3992 = vsel %vm432, %v3960, 0.0
    %v3993 = vsel %vm433, %v3961, 0.0
    %v3994 = vsel %vm434, %v3962, 0.0
    %v3995 = vsel %vm435, %v3963, 0.0
    %v3996 = vsel %vm436, %v3964, 0.0
    %v3997 = vsel %vm437, %v3965, 0.0
    %v3998 = vsel %vm438, %v3966, 0.0
    %v3999 = vsel %vm439, %v3967, 0.0
    %v4000 = vsel %vm440, %v3968, 0.0
    %v4001 = vsel %vm441, %v3969, 0.0
    %v4002 = vsel %vm442, %v3970, 0.0
    %v4003 = vsel %vm443, %v3971, 0.0
    %v4004 = vsel %vm444, %v3972, 0.0
    %v4005 = vsel %vm445, %v3973, 0.0
    %v4006 = vsel %vm446, %v3974, 0.0
    %v4007 = vsel %vm447, %v3975, 0.0
    %v4008 = vsel %vm448, %v3976, 0.0
    %v4009 = vsel %vm449, %v3977, 0.0
    %v4010 = vsel %vm450, %v3978, 0.0
    %v4011 = vsel %vm451, %v3979, 0.0
    %v4012 = vpack.c.bf16 %v3981, %v3980
    %v4013 = vpack.c.bf16 %v3983, %v3982
    %v4014 = vpack.c.bf16 %v3985, %v3984
    %v4015 = vpack.c.bf16 %v3987, %v3986
    %v4016 = vpack.c.bf16 %v3989, %v3988
    %v4017 = vpack.c.bf16 %v3991, %v3990
    %v4018 = vpack.c.bf16 %v3993, %v3992
    %v4019 = vpack.c.bf16 %v3995, %v3994
    %v4020 = vpack.c.bf16 %v3997, %v3996
    %v4021 = vpack.c.bf16 %v3999, %v3998
    %v4022 = vpack.c.bf16 %v4001, %v4000
    %v4023 = vpack.c.bf16 %v4003, %v4002
    %v4024 = vpack.c.bf16 %v4005, %v4004
    %v4025 = vpack.c.bf16 %v4007, %v4006
    %v4026 = vpack.c.bf16 %v4009, %v4008
    %v4027 = vpack.c.bf16 %v4011, %v4010
    %v4028 = vld [vmem:[%s4] sm:$0xf]
    %v4029 = vld [vmem:[%s4 + $0x4] sm:$0xf]
    %v4030 = vld [vmem:[%s4 + $0x8] sm:$0xf]
    %v4031 = vld [vmem:[%s4 + $0xc] sm:$0xf]
    %v4032 = vld [vmem:[#allocation3 + $0x8] sm:$0xff]
    %v4033 = vld [vmem:[#allocation3 + $0x10] sm:$0xff]
    %v4034 = vld [vmem:[#allocation3 + $0x18] sm:$0xff]
    %v4035 = vld [vmem:[#allocation3 + $0x20] sm:$0xff]
    %v4036 = vld [vmem:[#allocation3 + $0x28] sm:$0xff]
    %v4037 = vld [vmem:[#allocation3 + $0x30] sm:$0xff]
    %v4038 = vld [vmem:[#allocation3 + $0x38] sm:$0xff]
    %v4039 = vld [vmem:[#allocation3 + $0x40] sm:$0xff]
    %v4040 = vld [vmem:[#allocation3 + $0x48] sm:$0xff]
    %v4041 = vld [vmem:[#allocation3 + $0x50] sm:$0xff]
    %v4042 = vld [vmem:[#allocation3 + $0x58] sm:$0xff]
    %v4043 = vld [vmem:[#allocation3 + $0x60] sm:$0xff]
    %v4044 = vld [vmem:[#allocation3 + $0x68] sm:$0xff]
    %v4045 = vld [vmem:[#allocation3 + $0x70] sm:$0xff]
    %v4046 = vld [vmem:[#allocation3 + $0x78] sm:$0xff]
    %v4047 = vld [vmem:[#allocation3 + $0x80] sm:$0xff]
    %v4048 = vld [vmem:[#allocation3 + $0x88] sm:$0xff]
    %v4049 = vld [vmem:[#allocation3 + $0x90] sm:$0xff]
    %v4050 = vld [vmem:[#allocation3 + $0x98] sm:$0xff]
    %v4051 = vld [vmem:[#allocation3 + $0xa0] sm:$0xff]
    %v4052 = vld [vmem:[#allocation3 + $0xa8] sm:$0xff]
    %v4053 = vld [vmem:[#allocation3 + $0xb0] sm:$0xff]
    %v4054 = vld [vmem:[#allocation3 + $0xb8] sm:$0xff]
    %v4055 = vld [vmem:[#allocation3 + $0xc0] sm:$0xff]
    %v4056 = vld [vmem:[#allocation3 + $0xc8] sm:$0xff]
    %v4057 = vld [vmem:[#allocation3 + $0xd0] sm:$0xff]
    %v4058 = vld [vmem:[#allocation3 + $0xd8] sm:$0xff]
    %v4059 = vld [vmem:[#allocation3 + $0xe0] sm:$0xff]
    %v4060 = vld [vmem:[#allocation3 + $0xe8] sm:$0xff]
    %v4061 = vld [vmem:[#allocation3 + $0xf0] sm:$0xff]
    %v4062 = vld [vmem:[#allocation3 + $0xf8] sm:$0xff]
    %v4063 = vld [vmem:[#allocation3 + $0x100] sm:$0xff]
    %v4064 = vsel %vm566, %v4032, 0.0
    %v4065 = vsel %vm567, %v4033, 0.0
    %v4066 = vsel %vm568, %v4034, 0.0
    %v4067 = vsel %vm569, %v4035, 0.0
    %v4068 = vsel %vm570, %v4036, 0.0
    %v4069 = vsel %vm571, %v4037, 0.0
    %v4070 = vsel %vm572, %v4038, 0.0
    %v4071 = vsel %vm573, %v4039, 0.0
    %v4072 = vsel %vm574, %v4040, 0.0
    %v4073 = vsel %vm575, %v4041, 0.0
    %v4074 = vsel %vm576, %v4042, 0.0
    %v4075 = vsel %vm577, %v4043, 0.0
    %v4076 = vsel %vm578, %v4044, 0.0
    %v4077 = vsel %vm579, %v4045, 0.0
    %v4078 = vsel %vm580, %v4046, 0.0
    %v4079 = vsel %vm581, %v4047, 0.0
    %v4080 = vsel %vm582, %v4048, 0.0
    %v4081 = vsel %vm583, %v4049, 0.0
    %v4082 = vsel %vm584, %v4050, 0.0
    %v4083 = vsel %vm585, %v4051, 0.0
    %v4084 = vsel %vm586, %v4052, 0.0
    %v4085 = vsel %vm587, %v4053, 0.0
    %v4086 = vsel %vm588, %v4054, 0.0
    %v4087 = vsel %vm589, %v4055, 0.0
    %v4088 = vsel %vm590, %v4056, 0.0
    %v4089 = vsel %vm591, %v4057, 0.0
    %v4090 = vsel %vm592, %v4058, 0.0
    %v4091 = vsel %vm593, %v4059, 0.0
    %v4092 = vsel %vm594, %v4060, 0.0
    %v4093 = vsel %vm595, %v4061, 0.0
    %v4094 = vsel %vm596, %v4062, 0.0
    %v4095 = vsel %vm597, %v4063, 0.0
    %v4096 = vpack.c.bf16 %v4065, %v4064
    %v4097 = vpack.c.bf16 %v4067, %v4066
    %v4098 = vpack.c.bf16 %v4069, %v4068
    %v4099 = vpack.c.bf16 %v4071, %v4070
    %v4100 = vpack.c.bf16 %v4073, %v4072
    %v4101 = vpack.c.bf16 %v4075, %v4074
    %v4102 = vpack.c.bf16 %v4077, %v4076
    %v4103 = vpack.c.bf16 %v4079, %v4078
    %v4104 = vpack.c.bf16 %v4081, %v4080
    %v4105 = vpack.c.bf16 %v4083, %v4082
    %v4106 = vpack.c.bf16 %v4085, %v4084
    %v4107 = vpack.c.bf16 %v4087, %v4086
    %v4108 = vpack.c.bf16 %v4089, %v4088
    %v4109 = vpack.c.bf16 %v4091, %v4090
    %v4110 = vpack.c.bf16 %v4093, %v4092
    %v4111 = vpack.c.bf16 %v4095, %v4094
    %s4112 = scalar_lea.vmem %s4, 16
    %v4113 = vld [vmem:[%s4112] sm:$0xf]
    %v4114 = vld [vmem:[%s4112 + $0x4] sm:$0xf]
    %v4115 = vld [vmem:[%s4112 + $0x8] sm:$0xf]
    %v4116 = vld [vmem:[%s4112 + $0xc] sm:$0xf]
    %v4121 = vunpack.c.l.b16 %v4113
    %v4122 = vunpack.c.l.b16 %v4114
    %v4123 = vunpack.c.l.b16 %v4115
    %v4124 = vunpack.c.l.b16 %v4116
    %v4125 = vpack.c.b16 %v4122, %v4121
    %v4126 = vpack.c.b16 %v4124, %v4123
    %v4130 = vsel %vm3915, %v4096, 0
    %v4133 = vsel %vm3915, %v4097, 0
    %v4136 = vsel %vm3915, %v4098, 0
    %v4139 = vsel %vm3915, %v4099, 0
    %v4142 = vsel %vm3915, %v4100, 0
    %v4145 = vsel %vm3915, %v4101, 0
    %v4148 = vsel %vm3915, %v4102, 0
    %v4151 = vsel %vm3915, %v4103, 0
    %v4154 = vsel %vm3915, %v4104, 0
    %v4157 = vsel %vm3915, %v4105, 0
    %v4160 = vsel %vm3915, %v4106, 0
    %v4163 = vsel %vm3915, %v4107, 0
    %v4166 = vsel %vm3915, %v4108, 0
    %v4169 = vsel %vm3915, %v4109, 0
    %v4172 = vsel %vm3915, %v4110, 0
    %v4175 = vsel %vm3915, %v4111, 0
    %4177 = vmatprep.subr.bf16.mxu0 0
    %4178 = vmatpush1.bf16.msra.mxu0 %v4125
    %4179 = vmatprep.subr.bf16.mxu0 0
    %4180 = vmatpush1.bf16.msra.mxu0 %v4126
    %4181 = vmatprep.subr.bf16.mxu0 0
    %4182 = vmatpush1.bf16.msra.mxu0 0
    %4183 = vmatprep.subr.bf16.mxu0 0
    %4184 = vmatpush1.bf16.msra.mxu0 0
    %4185 = vmatprep.subr.bf16.mxu0 0
    %4186 = vmatpush1.bf16.msra.mxu0 0
    %4187 = vmatprep.subr.bf16.mxu0 0
    %4188 = vmatpush1.bf16.msra.mxu0 0
    %4189 = vmatprep.subr.bf16.mxu0 0
    %4190 = vmatpush1.bf16.msra.mxu0 0
    %4191 = vmatprep.subr.bf16.mxu0 0
    %4192 = vmatpush1.bf16.msra.mxu0 0
    %4193 = vmatprep.subr.bf16.mxu0 0
    %4194 = vmatpush1.bf16.msra.mxu0 0
    %4195 = vmatprep.subr.bf16.mxu0 0
    %4196 = vmatpush1.bf16.msra.mxu0 0
    %4197 = vmatprep.subr.bf16.mxu0 0
    %4198 = vmatpush1.bf16.msra.mxu0 0
    %4199 = vmatprep.subr.bf16.mxu0 0
    %4200 = vmatpush1.bf16.msra.mxu0 0
    %4201 = vmatprep.subr.bf16.mxu0 0
    %4202 = vmatpush1.bf16.msra.mxu0 0
    %4203 = vmatprep.subr.bf16.mxu0 0
    %4204 = vmatpush1.bf16.msra.mxu0 0
    %4205 = vmatprep.subr.bf16.mxu0 0
    %4206 = vmatpush1.bf16.msra.mxu0 0
    %4207 = vmatprep.subr.bf16.mxu0 0
    %4208 = vmatpush1.bf16.msra.mxu0 0
    %4209 = vmatprep.mubr.bf16.mxu0 0
    %4210 = vmatmul.mubr.bf16.gmra.mrb[0].mxu0 %v4130
    %v4211 = vpop.f32.mrb[0].mxu0
    %v4212 = vadd.f32 0.0, %v4211
    %v4213 = vpop.f32.mrb[0].mxu0
    %v4214 = vpop.f32.mrb[0].mxu0
    %v4215 = vadd.f32 0.0, %v4214
    %v4216 = vpop.f32.mrb[0].mxu0
    %4217 = vmatprep.mubr.bf16.mxu0 0
    %4218 = vmatmul.mubr.bf16.gmra.mrb[0].mxu0 %v4133
    %v4219 = vpop.f32.mrb[0].mxu0
    %v4220 = vadd.f32 0.0, %v4219
    %v4221 = vpop.f32.mrb[0].mxu0
    %v4222 = vpop.f32.mrb[0].mxu0
    %v4223 = vadd.f32 0.0, %v4222
    %v4224 = vpop.f32.mrb[0].mxu0
    %4225 = vmatprep.mubr.bf16.mxu0 0
    %4226 = vmatmul.mubr.bf16.gmra.mrb[0].mxu0 %v4136
    %v4227 = vpop.f32.mrb[0].mxu0
    %v4228 = vadd.f32 0.0, %v4227
    %v4229 = vpop.f32.mrb[0].mxu0
    %v4230 = vpop.f32.mrb[0].mxu0
    %v4231 = vadd.f32 0.0, %v4230
    %v4232 = vpop.f32.mrb[0].mxu0
    %4233 = vmatprep.mubr.bf16.mxu0 0
    %4234 = vmatmul.mubr.bf16.gmra.mrb[0].mxu0 %v4139
    %v4235 = vpop.f32.mrb[0].mxu0
    %v4236 = vadd.f32 0.0, %v4235
    %v4237 = vpop.f32.mrb[0].mxu0
    %v4238 = vpop.f32.mrb[0].mxu0
    %v4239 = vadd.f32 0.0, %v4238
    %v4240 = vpop.f32.mrb[0].mxu0
    %4241 = vmatprep.mubr.bf16.mxu0 0
    %4242 = vmatmul.mubr.bf16.gmra.mrb[0].mxu0 %v4142
    %v4243 = vpop.f32.mrb[0].mxu0
    %v4244 = vadd.f32 0.0, %v4243
    %v4245 = vpop.f32.mrb[0].mxu0
    %v4246 = vpop.f32.mrb[0].mxu0
    %v4247 = vadd.f32 0.0, %v4246
    %v4248 = vpop.f32.mrb[0].mxu0
    %4249 = vmatprep.mubr.bf16.mxu0 0
    %4250 = vmatmul.mubr.bf16.gmra.mrb[0].mxu0 %v4145
    %v4251 = vpop.f32.mrb[0].mxu0
    %v4252 = vadd.f32 0.0, %v4251
    %v4253 = vpop.f32.mrb[0].mxu0
    %v4254 = vpop.f32.mrb[0].mxu0
    %v4255 = vadd.f32 0.0, %v4254
    %v4256 = vpop.f32.mrb[0].mxu0
    %4257 = vmatprep.mubr.bf16.mxu0 0
    %4258 = vmatmul.mubr.bf16.gmra.mrb[0].mxu0 %v4148
    %v4259 = vpop.f32.mrb[0].mxu0
    %v4260 = vadd.f32 0.0, %v4259
    %v4261 = vpop.f32.mrb[0].mxu0
    %v4262 = vpop.f32.mrb[0].mxu0
    %v4263 = vadd.f32 0.0, %v4262
    %v4264 = vpop.f32.mrb[0].mxu0
    %4265 = vmatprep.mubr.bf16.mxu0 0
    %4266 = vmatmul.mubr.bf16.gmra.mrb[0].mxu0 %v4151
    %v4267 = vpop.f32.mrb[0].mxu0
    %v4268 = vadd.f32 0.0, %v4267
    %v4269 = vpop.f32.mrb[0].mxu0
    %v4270 = vpop.f32.mrb[0].mxu0
    %v4271 = vadd.f32 0.0, %v4270
    %v4272 = vpop.f32.mrb[0].mxu0
    %4273 = vmatprep.mubr.bf16.mxu0 0
    %4274 = vmatmul.mubr.bf16.gmra.mrb[0].mxu0 %v4154
    %v4275 = vpop.f32.mrb[0].mxu0
    %v4276 = vadd.f32 0.0, %v4275
    %v4277 = vpop.f32.mrb[0].mxu0
    %v4278 = vpop.f32.mrb[0].mxu0
    %v4279 = vadd.f32 0.0, %v4278
    %v4280 = vpop.f32.mrb[0].mxu0
    %4281 = vmatprep.mubr.bf16.mxu0 0
    %4282 = vmatmul.mubr.bf16.gmra.mrb[0].mxu0 %v4157
    %v4283 = vpop.f32.mrb[0].mxu0
    %v4284 = vadd.f32 0.0, %v4283
    %v4285 = vpop.f32.mrb[0].mxu0
    %v4286 = vpop.f32.mrb[0].mxu0
    %v4287 = vadd.f32 0.0, %v4286
    %v4288 = vpop.f32.mrb[0].mxu0
    %4289 = vmatprep.mubr.bf16.mxu0 0
    %4290 = vmatmul.mubr.bf16.gmra.mrb[0].mxu0 %v4160
    %v4291 = vpop.f32.mrb[0].mxu0
    %v4292 = vadd.f32 0.0, %v4291
    %v4293 = vpop.f32.mrb[0].mxu0
    %v4294 = vpop.f32.mrb[0].mxu0
    %v4295 = vadd.f32 0.0, %v4294
    %v4296 = vpop.f32.mrb[0].mxu0
    %4297 = vmatprep.mubr.bf16.mxu0 0
    %4298 = vmatmul.mubr.bf16.gmra.mrb[0].mxu0 %v4163
    %v4299 = vpop.f32.mrb[0].mxu0
    %v4300 = vadd.f32 0.0, %v4299
    %v4301 = vpop.f32.mrb[0].mxu0
    %v4302 = vpop.f32.mrb[0].mxu0
    %v4303 = vadd.f32 0.0, %v4302
    %v4304 = vpop.f32.mrb[0].mxu0
    %4305 = vmatprep.mubr.bf16.mxu0 0
    %4306 = vmatmul.mubr.bf16.gmra.mrb[0].mxu0 %v4166
    %v4307 = vpop.f32.mrb[0].mxu0
    %v4308 = vadd.f32 0.0, %v4307
    %v4309 = vpop.f32.mrb[0].mxu0
    %v4310 = vpop.f32.mrb[0].mxu0
    %v4311 = vadd.f32 0.0, %v4310
    %v4312 = vpop.f32.mrb[0].mxu0
    %4313 = vmatprep.mubr.bf16.mxu0 0
    %4314 = vmatmul.mubr.bf16.gmra.mrb[0].mxu0 %v4169
    %v4315 = vpop.f32.mrb[0].mxu0
    %v4316 = vadd.f32 0.0, %v4315
    %v4317 = vpop.f32.mrb[0].mxu0
    %v4318 = vpop.f32.mrb[0].mxu0
    %v4319 = vadd.f32 0.0, %v4318
    %v4320 = vpop.f32.mrb[0].mxu0
    %4321 = vmatprep.mubr.bf16.mxu0 0
    %4322 = vmatmul.mubr.bf16.gmra.mrb[0].mxu0 %v4172
    %v4323 = vpop.f32.mrb[0].mxu0
    %v4324 = vadd.f32 0.0, %v4323
    %v4325 = vpop.f32.mrb[0].mxu0
    %v4326 = vpop.f32.mrb[0].mxu0
    %v4327 = vadd.f32 0.0, %v4326
    %v4328 = vpop.f32.mrb[0].mxu0
    %4329 = vmatprep.mubr.bf16.mxu0 0
    %4330 = vmatmul.mubr.bf16.gmra.mrb[0].mxu0 %v4175
    %v4331 = vpop.f32.mrb[0].mxu0
    %v4332 = vadd.f32 0.0, %v4331
    %v4333 = vpop.f32.mrb[0].mxu0
    %v4334 = vpop.f32.mrb[0].mxu0
    %v4335 = vadd.f32 0.0, %v4334
    %v4336 = vpop.f32.mrb[0].mxu0
    %4337 = vdwg.mxu0
    %v4342 = vunpack.c.l.b16 %v4028
    %v4343 = vunpack.c.l.b16 %v4029
    %v4344 = vunpack.c.l.b16 %v4030
    %v4345 = vunpack.c.l.b16 %v4031
    %v4346 = vpack.c.b16 %v4343, %v4342
    %v4347 = vpack.c.b16 %v4345, %v4344
    %v4351 = vsel %vm3915, %v4012, 0
    %v4354 = vsel %vm3915, %v4013, 0
    %v4357 = vsel %vm3915, %v4014, 0
    %v4360 = vsel %vm3915, %v4015, 0
    %v4363 = vsel %vm3915, %v4016, 0
    %v4366 = vsel %vm3915, %v4017, 0
    %v4369 = vsel %vm3915, %v4018, 0
    %v4372 = vsel %vm3915, %v4019, 0
    %v4375 = vsel %vm3915, %v4020, 0
    %v4378 = vsel %vm3915, %v4021, 0
    %v4381 = vsel %vm3915, %v4022, 0
    %v4384 = vsel %vm3915, %v4023, 0
    %v4387 = vsel %vm3915, %v4024, 0
    %v4390 = vsel %vm3915, %v4025, 0
    %v4393 = vsel %vm3915, %v4026, 0
    %v4396 = vsel %vm3915, %v4027, 0
    %4398 = vmatprep.subr.bf16.mxu0 0
    %4399 = vmatpush1.bf16.msra.mxu0 %v4346
    %4400 = vmatprep.subr.bf16.mxu0 0
    %4401 = vmatpush1.bf16.msra.mxu0 %v4347
    %4402 = vmatprep.subr.bf16.mxu0 0
    %4403 = vmatpush1.bf16.msra.mxu0 0
    %4404 = vmatprep.subr.bf16.mxu0 0
    %4405 = vmatpush1.bf16.msra.mxu0 0
    %4406 = vmatprep.subr.bf16.mxu0 0
    %4407 = vmatpush1.bf16.msra.mxu0 0
    %4408 = vmatprep.subr.bf16.mxu0 0
    %4409 = vmatpush1.bf16.msra.mxu0 0
    %4410 = vmatprep.subr.bf16.mxu0 0
    %4411 = vmatpush1.bf16.msra.mxu0 0
    %4412 = vmatprep.subr.bf16.mxu0 0
    %4413 = vmatpush1.bf16.msra.mxu0 0
    %4414 = vmatprep.subr.bf16.mxu0 0
    %4415 = vmatpush1.bf16.msra.mxu0 0
    %4416 = vmatprep.subr.bf16.mxu0 0
    %4417 = vmatpush1.bf16.msra.mxu0 0
    %4418 = vmatprep.subr.bf16.mxu0 0
    %4419 = vmatpush1.bf16.msra.mxu0 0
    %4420 = vmatprep.subr.bf16.mxu0 0
    %4421 = vmatpush1.bf16.msra.mxu0 0
    %4422 = vmatprep.subr.bf16.mxu0 0
    %4423 = vmatpush1.bf16.msra.mxu0 0
    %4424 = vmatprep.subr.bf16.mxu0 0
    %4425 = vmatpush1.bf16.msra.mxu0 0
    %4426 = vmatprep.subr.bf16.mxu0 0
    %4427 = vmatpush1.bf16.msra.mxu0 0
    %4428 = vmatprep.subr.bf16.mxu0 0
    %4429 = vmatpush1.bf16.msra.mxu0 0
    %4430 = vmatprep.mubr.bf16.mxu0 0
    %4431 = vmatmul.mubr.bf16.gmra.mrb[0].mxu0 %v4351
    %v4432 = vpop.f32.mrb[0].mxu0
    %v4433 = vadd.f32 %v4212, %v4432
    %v4434 = vpop.f32.mrb[0].mxu0
    %v4435 = vpop.f32.mrb[0].mxu0
    %v4436 = vadd.f32 %v4215, %v4435
    %v4437 = vpop.f32.mrb[0].mxu0
    %4438 = vmatprep.mubr.bf16.mxu0 0
    %4439 = vmatmul.mubr.bf16.gmra.mrb[0].mxu0 %v4354
    %v4440 = vpop.f32.mrb[0].mxu0
    %v4441 = vadd.f32 %v4220, %v4440
    %v4442 = vpop.f32.mrb[0].mxu0
    %v4443 = vpop.f32.mrb[0].mxu0
    %v4444 = vadd.f32 %v4223, %v4443
    %v4445 = vpop.f32.mrb[0].mxu0
    %4446 = vmatprep.mubr.bf16.mxu0 0
    %4447 = vmatmul.mubr.bf16.gmra.mrb[0].mxu0 %v4357
    %v4448 = vpop.f32.mrb[0].mxu0
    %v4449 = vadd.f32 %v4228, %v4448
    %v4450 = vpop.f32.mrb[0].mxu0
    %v4451 = vpop.f32.mrb[0].mxu0
    %v4452 = vadd.f32 %v4231, %v4451
    %v4453 = vpop.f32.mrb[0].mxu0
    %4454 = vmatprep.mubr.bf16.mxu0 0
    %4455 = vmatmul.mubr.bf16.gmra.mrb[0].mxu0 %v4360
    %v4456 = vpop.f32.mrb[0].mxu0
    %v4457 = vadd.f32 %v4236, %v4456
    %v4458 = vpop.f32.mrb[0].mxu0
    %v4459 = vpop.f32.mrb[0].mxu0
    %v4460 = vadd.f32 %v4239, %v4459
    %v4461 = vpop.f32.mrb[0].mxu0
    %4462 = vmatprep.mubr.bf16.mxu0 0
    %4463 = vmatmul.mubr.bf16.gmra.mrb[0].mxu0 %v4363
    %v4464 = vpop.f32.mrb[0].mxu0
    %v4465 = vadd.f32 %v4244, %v4464
    %v4466 = vpop.f32.mrb[0].mxu0
    %v4467 = vpop.f32.mrb[0].mxu0
    %v4468 = vadd.f32 %v4247, %v4467
    %v4469 = vpop.f32.mrb[0].mxu0
    %4470 = vmatprep.mubr.bf16.mxu0 0
    %4471 = vmatmul.mubr.bf16.gmra.mrb[0].mxu0 %v4366
    %v4472 = vpop.f32.mrb[0].mxu0
    %v4473 = vadd.f32 %v4252, %v4472
    %v4474 = vpop.f32.mrb[0].mxu0
    %v4475 = vpop.f32.mrb[0].mxu0
    %v4476 = vadd.f32 %v4255, %v4475
    %v4477 = vpop.f32.mrb[0].mxu0
    %4478 = vmatprep.mubr.bf16.mxu0 0
    %4479 = vmatmul.mubr.bf16.gmra.mrb[0].mxu0 %v4369
    %v4480 = vpop.f32.mrb[0].mxu0
    %v4481 = vadd.f32 %v4260, %v4480
    %v4482 = vpop.f32.mrb[0].mxu0
    %v4483 = vpop.f32.mrb[0].mxu0
    %v4484 = vadd.f32 %v4263, %v4483
    %v4485 = vpop.f32.mrb[0].mxu0
    %4486 = vmatprep.mubr.bf16.mxu0 0
    %4487 = vmatmul.mubr.bf16.gmra.mrb[0].mxu0 %v4372
    %v4488 = vpop.f32.mrb[0].mxu0
    %v4489 = vadd.f32 %v4268, %v4488
    %v4490 = vpop.f32.mrb[0].mxu0
    %v4491 = vpop.f32.mrb[0].mxu0
    %v4492 = vadd.f32 %v4271, %v4491
    %v4493 = vpop.f32.mrb[0].mxu0
    %4494 = vmatprep.mubr.bf16.mxu0 0
    %4495 = vmatmul.mubr.bf16.gmra.mrb[0].mxu0 %v4375
    %v4496 = vpop.f32.mrb[0].mxu0
    %v4497 = vadd.f32 %v4276, %v4496
    %v4498 = vpop.f32.mrb[0].mxu0
    %v4499 = vpop.f32.mrb[0].mxu0
    %v4500 = vadd.f32 %v4279, %v4499
    %v4501 = vpop.f32.mrb[0].mxu0
    %4502 = vmatprep.mubr.bf16.mxu0 0
    %4503 = vmatmul.mubr.bf16.gmra.mrb[0].mxu0 %v4378
    %v4504 = vpop.f32.mrb[0].mxu0
    %v4505 = vadd.f32 %v4284, %v4504
    %v4506 = vpop.f32.mrb[0].mxu0
    %v4507 = vpop.f32.mrb[0].mxu0
    %v4508 = vadd.f32 %v4287, %v4507
    %v4509 = vpop.f32.mrb[0].mxu0
    %4510 = vmatprep.mubr.bf16.mxu0 0
    %4511 = vmatmul.mubr.bf16.gmra.mrb[0].mxu0 %v4381
    %v4512 = vpop.f32.mrb[0].mxu0
    %v4513 = vadd.f32 %v4292, %v4512
    %v4514 = vpop.f32.mrb[0].mxu0
    %v4515 = vpop.f32.mrb[0].mxu0
    %v4516 = vadd.f32 %v4295, %v4515
    %v4517 = vpop.f32.mrb[0].mxu0
    %4518 = vmatprep.mubr.bf16.mxu0 0
    %4519 = vmatmul.mubr.bf16.gmra.mrb[0].mxu0 %v4384
    %v4520 = vpop.f32.mrb[0].mxu0
    %v4521 = vadd.f32 %v4300, %v4520
    %v4522 = vpop.f32.mrb[0].mxu0
    %v4523 = vpop.f32.mrb[0].mxu0
    %v4524 = vadd.f32 %v4303, %v4523
    %v4525 = vpop.f32.mrb[0].mxu0
    %4526 = vmatprep.mubr.bf16.mxu0 0
    %4527 = vmatmul.mubr.bf16.gmra.mrb[0].mxu0 %v4387
    %v4528 = vpop.f32.mrb[0].mxu0
    %v4529 = vadd.f32 %v4308, %v4528
    %v4530 = vpop.f32.mrb[0].mxu0
    %v4531 = vpop.f32.mrb[0].mxu0
    %v4532 = vadd.f32 %v4311, %v4531
    %v4533 = vpop.f32.mrb[0].mxu0
    %4534 = vmatprep.mubr.bf16.mxu0 0
    %4535 = vmatmul.mubr.bf16.gmra.mrb[0].mxu0 %v4390
    %v4536 = vpop.f32.mrb[0].mxu0
    %v4537 = vadd.f32 %v4316, %v4536
    %v4538 = vpop.f32.mrb[0].mxu0
    %v4539 = vpop.f32.mrb[0].mxu0
    %v4540 = vadd.f32 %v4319, %v4539
    %v4541 = vpop.f32.mrb[0].mxu0
    %4542 = vmatprep.mubr.bf16.mxu0 0
    %4543 = vmatmul.mubr.bf16.gmra.mrb[0].mxu0 %v4393
    %v4544 = vpop.f32.mrb[0].mxu0
    %v4545 = vadd.f32 %v4324, %v4544
    %v4546 = vpop.f32.mrb[0].mxu0
    %v4547 = vpop.f32.mrb[0].mxu0
    %v4548 = vadd.f32 %v4327, %v4547
    %v4549 = vpop.f32.mrb[0].mxu0
    %4550 = vmatprep.mubr.bf16.mxu0 0
    %4551 = vmatmul.mubr.bf16.gmra.mrb[0].mxu0 %v4396
    %v4552 = vpop.f32.mrb[0].mxu0
    %v4553 = vadd.f32 %v4332, %v4552
    %v4554 = vpop.f32.mrb[0].mxu0
    %v4555 = vpop.f32.mrb[0].mxu0
    %v4556 = vadd.f32 %v4335, %v4555
    %v4557 = vpop.f32.mrb[0].mxu0
    %4558 = vdwg.mxu0
    %v4559 = vld [vmem:[#allocation3 + $0x9] sm:$0xff]
    %v4560 = vld [vmem:[#allocation3 + $0x11] sm:$0xff]
    %v4561 = vld [vmem:[#allocation3 + $0x19] sm:$0xff]
    %v4562 = vld [vmem:[#allocation3 + $0x21] sm:$0xff]
    %v4563 = vld [vmem:[#allocation3 + $0x29] sm:$0xff]
    %v4564 = vld [vmem:[#allocation3 + $0x31] sm:$0xff]
    %v4565 = vld [vmem:[#allocation3 + $0x39] sm:$0xff]
    %v4566 = vld [vmem:[#allocation3 + $0x41] sm:$0xff]
    %v4567 = vld [vmem:[#allocation3 + $0x49] sm:$0xff]
    %v4568 = vld [vmem:[#allocation3 + $0x51] sm:$0xff]
    %v4569 = vld [vmem:[#allocation3 + $0x59] sm:$0xff]
    %v4570 = vld [vmem:[#allocation3 + $0x61] sm:$0xff]
    %v4571 = vld [vmem:[#allocation3 + $0x69] sm:$0xff]
    %v4572 = vld [vmem:[#allocation3 + $0x71] sm:$0xff]
    %v4573 = vld [vmem:[#allocation3 + $0x79] sm:$0xff]
    %v4574 = vld [vmem:[#allocation3 + $0x81] sm:$0xff]
    %v4575 = vld [vmem:[#allocation3 + $0x89] sm:$0xff]
    %v4576 = vld [vmem:[#allocation3 + $0x91] sm:$0xff]
    %v4577 = vld [vmem:[#allocation3 + $0x99] sm:$0xff]
    %v4578 = vld [vmem:[#allocation3 + $0xa1] sm:$0xff]
    %v4579 = vld [vmem:[#allocation3 + $0xa9] sm:$0xff]
    %v4580 = vld [vmem:[#allocation3 + $0xb1] sm:$0xff]
    %v4581 = vld [vmem:[#allocation3 + $0xb9] sm:$0xff]
    %v4582 = vld [vmem:[#allocation3 + $0xc1] sm:$0xff]
    %v4583 = vld [vmem:[#allocation3 + $0xc9] sm:$0xff]
    %v4584 = vld [vmem:[#allocation3 + $0xd1] sm:$0xff]
    %v4585 = vld [vmem:[#allocation3 + $0xd9] sm:$0xff]
    %v4586 = vld [vmem:[#allocation3 + $0xe1] sm:$0xff]
    %v4587 = vld [vmem:[#allocation3 + $0xe9] sm:$0xff]
    %v4588 = vld [vmem:[#allocation3 + $0xf1] sm:$0xff]
    %v4589 = vld [vmem:[#allocation3 + $0xf9] sm:$0xff]
    %v4590 = vld [vmem:[#allocation3 + $0x101] sm:$0xff]
    %v4591 = vsel %vm1175, %v4559, 0.0
    %v4592 = vsel %vm1176, %v4560, 0.0
    %v4593 = vsel %vm1177, %v4561, 0.0
    %v4594 = vsel %vm1178, %v4562, 0.0
    %v4595 = vsel %vm1179, %v4563, 0.0
    %v4596 = vsel %vm1180, %v4564, 0.0
    %v4597 = vsel %vm1181, %v4565, 0.0
    %v4598 = vsel %vm1182, %v4566, 0.0
    %v4599 = vsel %vm1183, %v4567, 0.0
    %v4600 = vsel %vm1184, %v4568, 0.0
    %v4601 = vsel %vm1185, %v4569, 0.0
    %v4602 = vsel %vm1186, %v4570, 0.0
    %v4603 = vsel %vm1187, %v4571, 0.0
    %v4604 = vsel %vm1188, %v4572, 0.0
    %v4605 = vsel %vm1189, %v4573, 0.0
    %v4606 = vsel %vm1190, %v4574, 0.0
    %v4607 = vsel %vm1191, %v4575, 0.0
    %v4608 = vsel %vm1192, %v4576, 0.0
    %v4609 = vsel %vm1193, %v4577, 0.0
    %v4610 = vsel %vm1194, %v4578, 0.0
    %v4611 = vsel %vm1195, %v4579, 0.0
    %v4612 = vsel %vm1196, %v4580, 0.0
    %v4613 = vsel %vm1197, %v4581, 0.0
    %v4614 = vsel %vm1198, %v4582, 0.0
    %v4615 = vsel %vm1199, %v4583, 0.0
    %v4616 = vsel %vm1200, %v4584, 0.0
    %v4617 = vsel %vm1201, %v4585, 0.0
    %v4618 = vsel %vm1202, %v4586, 0.0
    %v4619 = vsel %vm1203, %v4587, 0.0
    %v4620 = vsel %vm1204, %v4588, 0.0
    %v4621 = vsel %vm1205, %v4589, 0.0
    %v4622 = vsel %vm1206, %v4590, 0.0
    %v4623 = vpack.c.bf16 %v4592, %v4591
    %v4624 = vpack.c.bf16 %v4594, %v4593
    %v4625 = vpack.c.bf16 %v4596, %v4595
    %v4626 = vpack.c.bf16 %v4598, %v4597
    %v4627 = vpack.c.bf16 %v4600, %v4599
    %v4628 = vpack.c.bf16 %v4602, %v4601
    %v4629 = vpack.c.bf16 %v4604, %v4603
    %v4630 = vpack.c.bf16 %v4606, %v4605
    %v4631 = vpack.c.bf16 %v4608, %v4607
    %v4632 = vpack.c.bf16 %v4610, %v4609
    %v4633 = vpack.c.bf16 %v4612, %v4611
    %v4634 = vpack.c.bf16 %v4614, %v4613
    %v4635 = vpack.c.bf16 %v4616, %v4615
    %v4636 = vpack.c.bf16 %v4618, %v4617
    %v4637 = vpack.c.bf16 %v4620, %v4619
    %v4638 = vpack.c.bf16 %v4622, %v4621
    %s4639 = scalar_lea.vmem %s4, 32
    %v4640 = vld [vmem:[%s4639] sm:$0xf]
    %v4641 = vld [vmem:[%s4639 + $0x4] sm:$0xf]
    %v4642 = vld [vmem:[%s4639 + $0x8] sm:$0xf]
    %v4643 = vld [vmem:[%s4639 + $0xc] sm:$0xf]
    %v4648 = vunpack.c.l.b16 %v4640
    %v4649 = vunpack.c.l.b16 %v4641
    %v4650 = vunpack.c.l.b16 %v4642
    %v4651 = vunpack.c.l.b16 %v4643
    %v4652 = vpack.c.b16 %v4649, %v4648
    %v4653 = vpack.c.b16 %v4651, %v4650
    %v4657 = vsel %vm3915, %v4623, 0
    %v4660 = vsel %vm3915, %v4624, 0
    %v4663 = vsel %vm3915, %v4625, 0
    %v4666 = vsel %vm3915, %v4626, 0
    %v4669 = vsel %vm3915, %v4627, 0
    %v4672 = vsel %vm3915, %v4628, 0
    %v4675 = vsel %vm3915, %v4629, 0
    %v4678 = vsel %vm3915, %v4630, 0
    %v4681 = vsel %vm3915, %v4631, 0
    %v4684 = vsel %vm3915, %v4632, 0
    %v4687 = vsel %vm3915, %v4633, 0
    %v4690 = vsel %vm3915, %v4634, 0
    %v4693 = vsel %vm3915, %v4635, 0
    %v4696 = vsel %vm3915, %v4636, 0
    %v4699 = vsel %vm3915, %v4637, 0
    %v4702 = vsel %vm3915, %v4638, 0
    %4704 = vmatprep.subr.bf16.mxu0 0
    %4705 = vmatpush1.bf16.msra.mxu0 %v4652
    %4706 = vmatprep.subr.bf16.mxu0 0
    %4707 = vmatpush1.bf16.msra.mxu0 %v4653
    %4708 = vmatprep.subr.bf16.mxu0 0
    %4709 = vmatpush1.bf16.msra.mxu0 0
    %4710 = vmatprep.subr.bf16.mxu0 0
    %4711 = vmatpush1.bf16.msra.mxu0 0
    %4712 = vmatprep.subr.bf16.mxu0 0
    %4713 = vmatpush1.bf16.msra.mxu0 0
    %4714 = vmatprep.subr.bf16.mxu0 0
    %4715 = vmatpush1.bf16.msra.mxu0 0
    %4716 = vmatprep.subr.bf16.mxu0 0
    %4717 = vmatpush1.bf16.msra.mxu0 0
    %4718 = vmatprep.subr.bf16.mxu0 0
    %4719 = vmatpush1.bf16.msra.mxu0 0
    %4720 = vmatprep.subr.bf16.mxu0 0
    %4721 = vmatpush1.bf16.msra.mxu0 0
    %4722 = vmatprep.subr.bf16.mxu0 0
    %4723 = vmatpush1.bf16.msra.mxu0 0
    %4724 = vmatprep.subr.bf16.mxu0 0
    %4725 = vmatpush1.bf16.msra.mxu0 0
    %4726 = vmatprep.subr.bf16.mxu0 0
    %4727 = vmatpush1.bf16.msra.mxu0 0
    %4728 = vmatprep.subr.bf16.mxu0 0
    %4729 = vmatpush1.bf16.msra.mxu0 0
    %4730 = vmatprep.subr.bf16.mxu0 0
    %4731 = vmatpush1.bf16.msra.mxu0 0
    %4732 = vmatprep.subr.bf16.mxu0 0
    %4733 = vmatpush1.bf16.msra.mxu0 0
    %4734 = vmatprep.subr.bf16.mxu0 0
    %4735 = vmatpush1.bf16.msra.mxu0 0
    %4736 = vmatprep.mubr.bf16.mxu0 0
    %4737 = vmatmul.mubr.bf16.gmra.mrb[0].mxu0 %v4657
    %v4738 = vpop.f32.mrb[0].mxu0
    %v4739 = vadd.f32 0.0, %v4738
    %v4740 = vpop.f32.mrb[0].mxu0
    %v4741 = vpop.f32.mrb[0].mxu0
    %v4742 = vadd.f32 0.0, %v4741
    %v4743 = vpop.f32.mrb[0].mxu0
    %4744 = vmatprep.mubr.bf16.mxu0 0
    %4745 = vmatmul.mubr.bf16.gmra.mrb[0].mxu0 %v4660
    %v4746 = vpop.f32.mrb[0].mxu0
    %v4747 = vadd.f32 0.0, %v4746
    %v4748 = vpop.f32.mrb[0].mxu0
    %v4749 = vpop.f32.mrb[0].mxu0
    %v4750 = vadd.f32 0.0, %v4749
    %v4751 = vpop.f32.mrb[0].mxu0
    %4752 = vmatprep.mubr.bf16.mxu0 0
    %4753 = vmatmul.mubr.bf16.gmra.mrb[0].mxu0 %v4663
    %v4754 = vpop.f32.mrb[0].mxu0
    %v4755 = vadd.f32 0.0, %v4754
    %v4756 = vpop.f32.mrb[0].mxu0
    %v4757 = vpop.f32.mrb[0].mxu0
    %v4758 = vadd.f32 0.0, %v4757
    %v4759 = vpop.f32.mrb[0].mxu0
    %4760 = vmatprep.mubr.bf16.mxu0 0
    %4761 = vmatmul.mubr.bf16.gmra.mrb[0].mxu0 %v4666
    %v4762 = vpop.f32.mrb[0].mxu0
    %v4763 = vadd.f32 0.0, %v4762
    %v4764 = vpop.f32.mrb[0].mxu0
    %v4765 = vpop.f32.mrb[0].mxu0
    %v4766 = vadd.f32 0.0, %v4765
    %v4767 = vpop.f32.mrb[0].mxu0
    %4768 = vmatprep.mubr.bf16.mxu0 0
    %4769 = vmatmul.mubr.bf16.gmra.mrb[0].mxu0 %v4669
    %v4770 = vpop.f32.mrb[0].mxu0
    %v4771 = vadd.f32 0.0, %v4770
    %v4772 = vpop.f32.mrb[0].mxu0
    %v4773 = vpop.f32.mrb[0].mxu0
    %v4774 = vadd.f32 0.0, %v4773
    %v4775 = vpop.f32.mrb[0].mxu0
    %4776 = vmatprep.mubr.bf16.mxu0 0
    %4777 = vmatmul.mubr.bf16.gmra.mrb[0].mxu0 %v4672
    %v4778 = vpop.f32.mrb[0].mxu0
    %v4779 = vadd.f32 0.0, %v4778
    %v4780 = vpop.f32.mrb[0].mxu0
    %v4781 = vpop.f32.mrb[0].mxu0
    %v4782 = vadd.f32 0.0, %v4781
    %v4783 = vpop.f32.mrb[0].mxu0
    %4784 = vmatprep.mubr.bf16.mxu0 0
    %4785 = vmatmul.mubr.bf16.gmra.mrb[0].mxu0 %v4675
    %v4786 = vpop.f32.mrb[0].mxu0
    %v4787 = vadd.f32 0.0, %v4786
    %v4788 = vpop.f32.mrb[0].mxu0
    %v4789 = vpop.f32.mrb[0].mxu0
    %v4790 = vadd.f32 0.0, %v4789
    %v4791 = vpop.f32.mrb[0].mxu0
    %4792 = vmatprep.mubr.bf16.mxu0 0
    %4793 = vmatmul.mubr.bf16.gmra.mrb[0].mxu0 %v4678
    %v4794 = vpop.f32.mrb[0].mxu0
    %v4795 = vadd.f32 0.0, %v4794
    %v4796 = vpop.f32.mrb[0].mxu0
    %v4797 = vpop.f32.mrb[0].mxu0
    %v4798 = vadd.f32 0.0, %v4797
    %v4799 = vpop.f32.mrb[0].mxu0
    %4800 = vmatprep.mubr.bf16.mxu0 0
    %4801 = vmatmul.mubr.bf16.gmra.mrb[0].mxu0 %v4681
    %v4802 = vpop.f32.mrb[0].mxu0
    %v4803 = vadd.f32 0.0, %v4802
    %v4804 = vpop.f32.mrb[0].mxu0
    %v4805 = vpop.f32.mrb[0].mxu0
    %v4806 = vadd.f32 0.0, %v4805
    %v4807 = vpop.f32.mrb[0].mxu0
    %4808 = vmatprep.mubr.bf16.mxu0 0
    %4809 = vmatmul.mubr.bf16.gmra.mrb[0].mxu0 %v4684
    %v4810 = vpop.f32.mrb[0].mxu0
    %v4811 = vadd.f32 0.0, %v4810
    %v4812 = vpop.f32.mrb[0].mxu0
    %v4813 = vpop.f32.mrb[0].mxu0
    %v4814 = vadd.f32 0.0, %v4813
    %v4815 = vpop.f32.mrb[0].mxu0
    %4816 = vmatprep.mubr.bf16.mxu0 0
    %4817 = vmatmul.mubr.bf16.gmra.mrb[0].mxu0 %v4687
    %v4818 = vpop.f32.mrb[0].mxu0
    %v4819 = vadd.f32 0.0, %v4818
    %v4820 = vpop.f32.mrb[0].mxu0
    %v4821 = vpop.f32.mrb[0].mxu0
    %v4822 = vadd.f32 0.0, %v4821
    %v4823 = vpop.f32.mrb[0].mxu0
    %4824 = vmatprep.mubr.bf16.mxu0 0
    %4825 = vmatmul.mubr.bf16.gmra.mrb[0].mxu0 %v4690
    %v4826 = vpop.f32.mrb[0].mxu0
    %v4827 = vadd.f32 0.0, %v4826
    %v4828 = vpop.f32.mrb[0].mxu0
    %v4829 = vpop.f32.mrb[0].mxu0
    %v4830 = vadd.f32 0.0, %v4829
    %v4831 = vpop.f32.mrb[0].mxu0
    %4832 = vmatprep.mubr.bf16.mxu0 0
    %4833 = vmatmul.mubr.bf16.gmra.mrb[0].mxu0 %v4693
    %v4834 = vpop.f32.mrb[0].mxu0
    %v4835 = vadd.f32 0.0, %v4834
    %v4836 = vpop.f32.mrb[0].mxu0
    %v4837 = vpop.f32.mrb[0].mxu0
    %v4838 = vadd.f32 0.0, %v4837
    %v4839 = vpop.f32.mrb[0].mxu0
    %4840 = vmatprep.mubr.bf16.mxu0 0
    %4841 = vmatmul.mubr.bf16.gmra.mrb[0].mxu0 %v4696
    %v4842 = vpop.f32.mrb[0].mxu0
    %v4843 = vadd.f32 0.0, %v4842
    %v4844 = vpop.f32.mrb[0].mxu0
    %v4845 = vpop.f32.mrb[0].mxu0
    %v4846 = vadd.f32 0.0, %v4845
    %v4847 = vpop.f32.mrb[0].mxu0
    %4848 = vmatprep.mubr.bf16.mxu0 0
    %4849 = vmatmul.mubr.bf16.gmra.mrb[0].mxu0 %v4699
    %v4850 = vpop.f32.mrb[0].mxu0
    %v4851 = vadd.f32 0.0, %v4850
    %v4852 = vpop.f32.mrb[0].mxu0
    %v4853 = vpop.f32.mrb[0].mxu0
    %v4854 = vadd.f32 0.0, %v4853
    %v4855 = vpop.f32.mrb[0].mxu0
    %4856 = vmatprep.mubr.bf16.mxu0 0
    %4857 = vmatmul.mubr.bf16.gmra.mrb[0].mxu0 %v4702
    %v4858 = vpop.f32.mrb[0].mxu0
    %v4859 = vadd.f32 0.0, %v4858
    %v4860 = vpop.f32.mrb[0].mxu0
    %v4861 = vpop.f32.mrb[0].mxu0
    %v4862 = vadd.f32 0.0, %v4861
    %v4863 = vpop.f32.mrb[0].mxu0
    %4864 = vdwg.mxu0
    %v4865 = vadd.f32 %v4433, %v4739
    %v4866 = vadd.f32 %v4436, %v4742
    %v4867 = vadd.f32 %v4441, %v4747
    %v4868 = vadd.f32 %v4444, %v4750
    %v4869 = vadd.f32 %v4449, %v4755
    %v4870 = vadd.f32 %v4452, %v4758
    %v4871 = vadd.f32 %v4457, %v4763
    %v4872 = vadd.f32 %v4460, %v4766
    %v4873 = vadd.f32 %v4465, %v4771
    %v4874 = vadd.f32 %v4468, %v4774
    %v4875 = vadd.f32 %v4473, %v4779
    %v4876 = vadd.f32 %v4476, %v4782
    %v4877 = vadd.f32 %v4481, %v4787
    %v4878 = vadd.f32 %v4484, %v4790
    %v4879 = vadd.f32 %v4489, %v4795
    %v4880 = vadd.f32 %v4492, %v4798
    %v4881 = vadd.f32 %v4497, %v4803
    %v4882 = vadd.f32 %v4500, %v4806
    %v4883 = vadd.f32 %v4505, %v4811
    %v4884 = vadd.f32 %v4508, %v4814
    %v4885 = vadd.f32 %v4513, %v4819
    %v4886 = vadd.f32 %v4516, %v4822
    %v4887 = vadd.f32 %v4521, %v4827
    %v4888 = vadd.f32 %v4524, %v4830
    %v4889 = vadd.f32 %v4529, %v4835
    %v4890 = vadd.f32 %v4532, %v4838
    %v4891 = vadd.f32 %v4537, %v4843
    %v4892 = vadd.f32 %v4540, %v4846
    %v4893 = vadd.f32 %v4545, %v4851
    %v4894 = vadd.f32 %v4548, %v4854
    %v4895 = vadd.f32 %v4553, %v4859
    %v4896 = vadd.f32 %v4556, %v4862
    %v4897 = vld [vmem:[#allocation3 + $0xf] sm:$0xff]
    %v4898 = vld [vmem:[#allocation3 + $0x17] sm:$0xff]
    %v4899 = vld [vmem:[#allocation3 + $0x1f] sm:$0xff]
    %v4900 = vld [vmem:[#allocation3 + $0x27] sm:$0xff]
    %v4901 = vld [vmem:[#allocation3 + $0x2f] sm:$0xff]
    %v4902 = vld [vmem:[#allocation3 + $0x37] sm:$0xff]
    %v4903 = vld [vmem:[#allocation3 + $0x3f] sm:$0xff]
    %v4904 = vld [vmem:[#allocation3 + $0x47] sm:$0xff]
    %v4905 = vld [vmem:[#allocation3 + $0x4f] sm:$0xff]
    %v4906 = vld [vmem:[#allocation3 + $0x57] sm:$0xff]
    %v4907 = vld [vmem:[#allocation3 + $0x5f] sm:$0xff]
    %v4908 = vld [vmem:[#allocation3 + $0x67] sm:$0xff]
    %v4909 = vld [vmem:[#allocation3 + $0x6f] sm:$0xff]
    %v4910 = vld [vmem:[#allocation3 + $0x77] sm:$0xff]
    %v4911 = vld [vmem:[#allocation3 + $0x7f] sm:$0xff]
    %v4912 = vld [vmem:[#allocation3 + $0x87] sm:$0xff]
    %v4913 = vld [vmem:[#allocation3 + $0x8f] sm:$0xff]
    %v4914 = vld [vmem:[#allocation3 + $0x97] sm:$0xff]
    %v4915 = vld [vmem:[#allocation3 + $0x9f] sm:$0xff]
    %v4916 = vld [vmem:[#allocation3 + $0xa7] sm:$0xff]
    %v4917 = vld [vmem:[#allocation3 + $0xaf] sm:$0xff]
    %v4918 = vld [vmem:[#allocation3 + $0xb7] sm:$0xff]
    %v4919 = vld [vmem:[#allocation3 + $0xbf] sm:$0xff]
    %v4920 = vld [vmem:[#allocation3 + $0xc7] sm:$0xff]
    %v4921 = vld [vmem:[#allocation3 + $0xcf] sm:$0xff]
    %v4922 = vld [vmem:[#allocation3 + $0xd7] sm:$0xff]
    %v4923 = vld [vmem:[#allocation3 + $0xdf] sm:$0xff]
    %v4924 = vld [vmem:[#allocation3 + $0xe7] sm:$0xff]
    %v4925 = vld [vmem:[#allocation3 + $0xef] sm:$0xff]
    %v4926 = vld [vmem:[#allocation3 + $0xf7] sm:$0xff]
    %v4927 = vld [vmem:[#allocation3 + $0xff] sm:$0xff]
    %v4928 = vld [vmem:[#allocation3 + $0x107] sm:$0xff]
    %v4929 = vsel %vm1569, %v4897, 0.0
    %v4930 = vsel %vm1570, %v4898, 0.0
    %v4931 = vsel %vm1571, %v4899, 0.0
    %v4932 = vsel %vm1572, %v4900, 0.0
    %v4933 = vsel %vm1573, %v4901, 0.0
    %v4934 = vsel %vm1574, %v4902, 0.0
    %v4935 = vsel %vm1575, %v4903, 0.0
    %v4936 = vsel %vm1576, %v4904, 0.0
    %v4937 = vsel %vm1577, %v4905, 0.0
    %v4938 = vsel %vm1578, %v4906, 0.0
    %v4939 = vsel %vm1579, %v4907, 0.0
    %v4940 = vsel %vm1580, %v4908, 0.0
    %v4941 = vsel %vm1581, %v4909, 0.0
    %v4942 = vsel %vm1582, %v4910, 0.0
    %v4943 = vsel %vm1583, %v4911, 0.0
    %v4944 = vsel %vm1584, %v4912, 0.0
    %v4945 = vsel %vm1585, %v4913, 0.0
    %v4946 = vsel %vm1586, %v4914, 0.0
    %v4947 = vsel %vm1587, %v4915, 0.0
    %v4948 = vsel %vm1588, %v4916, 0.0
    %v4949 = vsel %vm1589, %v4917, 0.0
    %v4950 = vsel %vm1590, %v4918, 0.0
    %v4951 = vsel %vm1591, %v4919, 0.0
    %v4952 = vsel %vm1592, %v4920, 0.0
    %v4953 = vsel %vm1593, %v4921, 0.0
    %v4954 = vsel %vm1594, %v4922, 0.0
    %v4955 = vsel %vm1595, %v4923, 0.0
    %v4956 = vsel %vm1596, %v4924, 0.0
    %v4957 = vsel %vm1597, %v4925, 0.0
    %v4958 = vsel %vm1598, %v4926, 0.0
    %v4959 = vsel %vm1599, %v4927, 0.0
    %v4960 = vsel %vm1600, %v4928, 0.0
    %v4961 = vpack.c.bf16 %v4930, %v4929
    %v4962 = vpack.c.bf16 %v4932, %v4931
    %v4963 = vpack.c.bf16 %v4934, %v4933
    %v4964 = vpack.c.bf16 %v4936, %v4935
    %v4965 = vpack.c.bf16 %v4938, %v4937
    %v4966 = vpack.c.bf16 %v4940, %v4939
    %v4967 = vpack.c.bf16 %v4942, %v4941
    %v4968 = vpack.c.bf16 %v4944, %v4943
    %v4969 = vpack.c.bf16 %v4946, %v4945
    %v4970 = vpack.c.bf16 %v4948, %v4947
    %v4971 = vpack.c.bf16 %v4950, %v4949
    %v4972 = vpack.c.bf16 %v4952, %v4951
    %v4973 = vpack.c.bf16 %v4954, %v4953
    %v4974 = vpack.c.bf16 %v4956, %v4955
    %v4975 = vpack.c.bf16 %v4958, %v4957
    %v4976 = vpack.c.bf16 %v4960, %v4959
    %s4977 = scalar_lea.vmem %s4, 48
    %v4978 = vld [vmem:[%s4977] sm:$0xf]
    %v4979 = vld [vmem:[%s4977 + $0x4] sm:$0xf]
    %v4980 = vld [vmem:[%s4977 + $0x8] sm:$0xf]
    %v4981 = vld [vmem:[%s4977 + $0xc] sm:$0xf]
    %v4986 = vunpack.c.l.b16 %v4978
    %v4987 = vunpack.c.l.b16 %v4979
    %v4988 = vunpack.c.l.b16 %v4980
    %v4989 = vunpack.c.l.b16 %v4981
    %v4990 = vpack.c.b16 %v4987, %v4986
    %v4991 = vpack.c.b16 %v4989, %v4988
    %v4995 = vsel %vm3915, %v4961, 0
    %v4998 = vsel %vm3915, %v4962, 0
    %v5001 = vsel %vm3915, %v4963, 0
    %v5004 = vsel %vm3915, %v4964, 0
    %v5007 = vsel %vm3915, %v4965, 0
    %v5010 = vsel %vm3915, %v4966, 0
    %v5013 = vsel %vm3915, %v4967, 0
    %v5016 = vsel %vm3915, %v4968, 0
    %v5019 = vsel %vm3915, %v4969, 0
    %v5022 = vsel %vm3915, %v4970, 0
    %v5025 = vsel %vm3915, %v4971, 0
    %v5028 = vsel %vm3915, %v4972, 0
    %v5031 = vsel %vm3915, %v4973, 0
    %v5034 = vsel %vm3915, %v4974, 0
    %v5037 = vsel %vm3915, %v4975, 0
    %v5040 = vsel %vm3915, %v4976, 0
    %5042 = vmatprep.subr.bf16.mxu0 0
    %5043 = vmatpush1.bf16.msra.mxu0 %v4990
    %5044 = vmatprep.subr.bf16.mxu0 0
    %5045 = vmatpush1.bf16.msra.mxu0 %v4991
    %5046 = vmatprep.subr.bf16.mxu0 0
    %5047 = vmatpush1.bf16.msra.mxu0 0
    %5048 = vmatprep.subr.bf16.mxu0 0
    %5049 = vmatpush1.bf16.msra.mxu0 0
    %5050 = vmatprep.subr.bf16.mxu0 0
    %5051 = vmatpush1.bf16.msra.mxu0 0
    %5052 = vmatprep.subr.bf16.mxu0 0
    %5053 = vmatpush1.bf16.msra.mxu0 0
    %5054 = vmatprep.subr.bf16.mxu0 0
    %5055 = vmatpush1.bf16.msra.mxu0 0
    %5056 = vmatprep.subr.bf16.mxu0 0
    %5057 = vmatpush1.bf16.msra.mxu0 0
    %5058 = vmatprep.subr.bf16.mxu0 0
    %5059 = vmatpush1.bf16.msra.mxu0 0
    %5060 = vmatprep.subr.bf16.mxu0 0
    %5061 = vmatpush1.bf16.msra.mxu0 0
    %5062 = vmatprep.subr.bf16.mxu0 0
    %5063 = vmatpush1.bf16.msra.mxu0 0
    %5064 = vmatprep.subr.bf16.mxu0 0
    %5065 = vmatpush1.bf16.msra.mxu0 0
    %5066 = vmatprep.subr.bf16.mxu0 0
    %5067 = vmatpush1.bf16.msra.mxu0 0
    %5068 = vmatprep.subr.bf16.mxu0 0
    %5069 = vmatpush1.bf16.msra.mxu0 0
    %5070 = vmatprep.subr.bf16.mxu0 0
    %5071 = vmatpush1.bf16.msra.mxu0 0
    %5072 = vmatprep.subr.bf16.mxu0 0
    %5073 = vmatpush1.bf16.msra.mxu0 0
    %5074 = vmatprep.mubr.bf16.mxu0 0
    %5075 = vmatmul.mubr.bf16.gmra.mrb[0].mxu0 %v4995
    %v5076 = vpop.f32.mrb[0].mxu0
    %v5077 = vadd.f32 0.0, %v5076
    %v5078 = vpop.f32.mrb[0].mxu0
    %v5079 = vpop.f32.mrb[0].mxu0
    %v5080 = vadd.f32 0.0, %v5079
    %v5081 = vpop.f32.mrb[0].mxu0
    %5082 = vmatprep.mubr.bf16.mxu0 0
    %5083 = vmatmul.mubr.bf16.gmra.mrb[0].mxu0 %v4998
    %v5084 = vpop.f32.mrb[0].mxu0
    %v5085 = vadd.f32 0.0, %v5084
    %v5086 = vpop.f32.mrb[0].mxu0
    %v5087 = vpop.f32.mrb[0].mxu0
    %v5088 = vadd.f32 0.0, %v5087
    %v5089 = vpop.f32.mrb[0].mxu0
    %5090 = vmatprep.mubr.bf16.mxu0 0
    %5091 = vmatmul.mubr.bf16.gmra.mrb[0].mxu0 %v5001
    %v5092 = vpop.f32.mrb[0].mxu0
    %v5093 = vadd.f32 0.0, %v5092
    %v5094 = vpop.f32.mrb[0].mxu0
    %v5095 = vpop.f32.mrb[0].mxu0
    %v5096 = vadd.f32 0.0, %v5095
    %v5097 = vpop.f32.mrb[0].mxu0
    %5098 = vmatprep.mubr.bf16.mxu0 0
    %5099 = vmatmul.mubr.bf16.gmra.mrb[0].mxu0 %v5004
    %v5100 = vpop.f32.mrb[0].mxu0
    %v5101 = vadd.f32 0.0, %v5100
    %v5102 = vpop.f32.mrb[0].mxu0
    %v5103 = vpop.f32.mrb[0].mxu0
    %v5104 = vadd.f32 0.0, %v5103
    %v5105 = vpop.f32.mrb[0].mxu0
    %5106 = vmatprep.mubr.bf16.mxu0 0
    %5107 = vmatmul.mubr.bf16.gmra.mrb[0].mxu0 %v5007
    %v5108 = vpop.f32.mrb[0].mxu0
    %v5109 = vadd.f32 0.0, %v5108
    %v5110 = vpop.f32.mrb[0].mxu0
    %v5111 = vpop.f32.mrb[0].mxu0
    %v5112 = vadd.f32 0.0, %v5111
    %v5113 = vpop.f32.mrb[0].mxu0
    %5114 = vmatprep.mubr.bf16.mxu0 0
    %5115 = vmatmul.mubr.bf16.gmra.mrb[0].mxu0 %v5010
    %v5116 = vpop.f32.mrb[0].mxu0
    %v5117 = vadd.f32 0.0, %v5116
    %v5118 = vpop.f32.mrb[0].mxu0
    %v5119 = vpop.f32.mrb[0].mxu0
    %v5120 = vadd.f32 0.0, %v5119
    %v5121 = vpop.f32.mrb[0].mxu0
    %5122 = vmatprep.mubr.bf16.mxu0 0
    %5123 = vmatmul.mubr.bf16.gmra.mrb[0].mxu0 %v5013
    %v5124 = vpop.f32.mrb[0].mxu0
    %v5125 = vadd.f32 0.0, %v5124
    %v5126 = vpop.f32.mrb[0].mxu0
    %v5127 = vpop.f32.mrb[0].mxu0
    %v5128 = vadd.f32 0.0, %v5127
    %v5129 = vpop.f32.mrb[0].mxu0
    %5130 = vmatprep.mubr.bf16.mxu0 0
    %5131 = vmatmul.mubr.bf16.gmra.mrb[0].mxu0 %v5016
    %v5132 = vpop.f32.mrb[0].mxu0
    %v5133 = vadd.f32 0.0, %v5132
    %v5134 = vpop.f32.mrb[0].mxu0
    %v5135 = vpop.f32.mrb[0].mxu0
    %v5136 = vadd.f32 0.0, %v5135
    %v5137 = vpop.f32.mrb[0].mxu0
    %5138 = vmatprep.mubr.bf16.mxu0 0
    %5139 = vmatmul.mubr.bf16.gmra.mrb[0].mxu0 %v5019
    %v5140 = vpop.f32.mrb[0].mxu0
    %v5141 = vadd.f32 0.0, %v5140
    %v5142 = vpop.f32.mrb[0].mxu0
    %v5143 = vpop.f32.mrb[0].mxu0
    %v5144 = vadd.f32 0.0, %v5143
    %v5145 = vpop.f32.mrb[0].mxu0
    %5146 = vmatprep.mubr.bf16.mxu0 0
    %5147 = vmatmul.mubr.bf16.gmra.mrb[0].mxu0 %v5022
    %v5148 = vpop.f32.mrb[0].mxu0
    %v5149 = vadd.f32 0.0, %v5148
    %v5150 = vpop.f32.mrb[0].mxu0
    %v5151 = vpop.f32.mrb[0].mxu0
    %v5152 = vadd.f32 0.0, %v5151
    %v5153 = vpop.f32.mrb[0].mxu0
    %5154 = vmatprep.mubr.bf16.mxu0 0
    %5155 = vmatmul.mubr.bf16.gmra.mrb[0].mxu0 %v5025
    %v5156 = vpop.f32.mrb[0].mxu0
    %v5157 = vadd.f32 0.0, %v5156
    %v5158 = vpop.f32.mrb[0].mxu0
    %v5159 = vpop.f32.mrb[0].mxu0
    %v5160 = vadd.f32 0.0, %v5159
    %v5161 = vpop.f32.mrb[0].mxu0
    %5162 = vmatprep.mubr.bf16.mxu0 0
    %5163 = vmatmul.mubr.bf16.gmra.mrb[0].mxu0 %v5028
    %v5164 = vpop.f32.mrb[0].mxu0
    %v5165 = vadd.f32 0.0, %v5164
    %v5166 = vpop.f32.mrb[0].mxu0
    %v5167 = vpop.f32.mrb[0].mxu0
    %v5168 = vadd.f32 0.0, %v5167
    %v5169 = vpop.f32.mrb[0].mxu0
    %5170 = vmatprep.mubr.bf16.mxu0 0
    %5171 = vmatmul.mubr.bf16.gmra.mrb[0].mxu0 %v5031
    %v5172 = vpop.f32.mrb[0].mxu0
    %v5173 = vadd.f32 0.0, %v5172
    %v5174 = vpop.f32.mrb[0].mxu0
    %v5175 = vpop.f32.mrb[0].mxu0
    %v5176 = vadd.f32 0.0, %v5175
    %v5177 = vpop.f32.mrb[0].mxu0
    %5178 = vmatprep.mubr.bf16.mxu0 0
    %5179 = vmatmul.mubr.bf16.gmra.mrb[0].mxu0 %v5034
    %v5180 = vpop.f32.mrb[0].mxu0
    %v5181 = vadd.f32 0.0, %v5180
    %v5182 = vpop.f32.mrb[0].mxu0
    %v5183 = vpop.f32.mrb[0].mxu0
    %v5184 = vadd.f32 0.0, %v5183
    %v5185 = vpop.f32.mrb[0].mxu0
    %5186 = vmatprep.mubr.bf16.mxu0 0
    %5187 = vmatmul.mubr.bf16.gmra.mrb[0].mxu0 %v5037
    %v5188 = vpop.f32.mrb[0].mxu0
    %v5189 = vadd.f32 0.0, %v5188
    %v5190 = vpop.f32.mrb[0].mxu0
    %v5191 = vpop.f32.mrb[0].mxu0
    %v5192 = vadd.f32 0.0, %v5191
    %v5193 = vpop.f32.mrb[0].mxu0
    %5194 = vmatprep.mubr.bf16.mxu0 0
    %5195 = vmatmul.mubr.bf16.gmra.mrb[0].mxu0 %v5040
    %v5196 = vpop.f32.mrb[0].mxu0
    %v5197 = vadd.f32 0.0, %v5196
    %v5198 = vpop.f32.mrb[0].mxu0
    %v5199 = vpop.f32.mrb[0].mxu0
    %v5200 = vadd.f32 0.0, %v5199
    %v5201 = vpop.f32.mrb[0].mxu0
    %5202 = vdwg.mxu0
    %v5203 = vadd.f32 %v4865, %v5077
    %v5204 = vadd.f32 %v4866, %v5080
    %v5205 = vadd.f32 %v4867, %v5085
    %v5206 = vadd.f32 %v4868, %v5088
    %v5207 = vadd.f32 %v4869, %v5093
    %v5208 = vadd.f32 %v4870, %v5096
    %v5209 = vadd.f32 %v4871, %v5101
    %v5210 = vadd.f32 %v4872, %v5104
    %v5211 = vadd.f32 %v4873, %v5109
    %v5212 = vadd.f32 %v4874, %v5112
    %v5213 = vadd.f32 %v4875, %v5117
    %v5214 = vadd.f32 %v4876, %v5120
    %v5215 = vadd.f32 %v4877, %v5125
    %v5216 = vadd.f32 %v4878, %v5128
    %v5217 = vadd.f32 %v4879, %v5133
    %v5218 = vadd.f32 %v4880, %v5136
    %v5219 = vadd.f32 %v4881, %v5141
    %v5220 = vadd.f32 %v4882, %v5144
    %v5221 = vadd.f32 %v4883, %v5149
    %v5222 = vadd.f32 %v4884, %v5152
    %v5223 = vadd.f32 %v4885, %v5157
    %v5224 = vadd.f32 %v4886, %v5160
    %v5225 = vadd.f32 %v4887, %v5165
    %v5226 = vadd.f32 %v4888, %v5168
    %v5227 = vadd.f32 %v4889, %v5173
    %v5228 = vadd.f32 %v4890, %v5176
    %v5229 = vadd.f32 %v4891, %v5181
    %v5230 = vadd.f32 %v4892, %v5184
    %v5231 = vadd.f32 %v4893, %v5189
    %v5232 = vadd.f32 %v4894, %v5192
    %v5233 = vadd.f32 %v4895, %v5197
    %v5234 = vadd.f32 %v4896, %v5200
    %v5235 = vpack.c.bf16 %v3884, %v3883
    %v5236 = vpack.c.bf16 %v3886, %v3885
    %v5237 = vpack.c.bf16 %v3888, %v3887
    %v5238 = vpack.c.bf16 %v3890, %v3889
    %v5239 = vpack.c.bf16 %v3892, %v3891
    %v5240 = vpack.c.bf16 %v3894, %v3893
    %v5241 = vpack.c.bf16 %v3896, %v3895
    %v5242 = vpack.c.bf16 %v3898, %v3897
    %v5243 = vpack.c.bf16 %v3900, %v3899
    %v5244 = vpack.c.bf16 %v3902, %v3901
    %v5245 = vpack.c.bf16 %v3904, %v3903
    %v5246 = vpack.c.bf16 %v3906, %v3905
    %v5247 = vpack.c.bf16 %v3908, %v3907
    %v5248 = vpack.c.bf16 %v3910, %v3909
    %v5249 = vpack.c.bf16 %v3912, %v3911
    %v5250 = vpack.c.bf16 %v3914, %v3913
    %s5251 = scalar_lea.vmem %s4, 64
    %v5252 = vld [vmem:[%s5251] sm:$0xf]
    %v5253 = vld [vmem:[%s5251 + $0x4] sm:$0xf]
    %v5254 = vld [vmem:[%s5251 + $0x8] sm:$0xf]
    %v5255 = vld [vmem:[%s5251 + $0xc] sm:$0xf]
    %v5260 = vunpack.c.l.b16 %v5252
    %v5261 = vunpack.c.l.b16 %v5253
    %v5262 = vunpack.c.l.b16 %v5254
    %v5263 = vunpack.c.l.b16 %v5255
    %v5264 = vpack.c.b16 %v5261, %v5260
    %v5265 = vpack.c.b16 %v5263, %v5262
    %v5269 = vsel %vm3915, %v5235, 0
    %v5272 = vsel %vm3915, %v5236, 0
    %v5275 = vsel %vm3915, %v5237, 0
    %v5278 = vsel %vm3915, %v5238, 0
    %v5281 = vsel %vm3915, %v5239, 0
    %v5284 = vsel %vm3915, %v5240, 0
    %v5287 = vsel %vm3915, %v5241, 0
    %v5290 = vsel %vm3915, %v5242, 0
    %v5293 = vsel %vm3915, %v5243, 0
    %v5296 = vsel %vm3915, %v5244, 0
    %v5299 = vsel %vm3915, %v5245, 0
    %v5302 = vsel %vm3915, %v5246, 0
    %v5305 = vsel %vm3915, %v5247, 0
    %v5308 = vsel %vm3915, %v5248, 0
    %v5311 = vsel %vm3915, %v5249, 0
    %v5314 = vsel %vm3915, %v5250, 0
    %5316 = vmatprep.subr.bf16.mxu0 0
    %5317 = vmatpush1.bf16.msra.mxu0 %v5264
    %5318 = vmatprep.subr.bf16.mxu0 0
    %5319 = vmatpush1.bf16.msra.mxu0 %v5265
    %5320 = vmatprep.subr.bf16.mxu0 0
    %5321 = vmatpush1.bf16.msra.mxu0 0
    %5322 = vmatprep.subr.bf16.mxu0 0
    %5323 = vmatpush1.bf16.msra.mxu0 0
    %5324 = vmatprep.subr.bf16.mxu0 0
    %5325 = vmatpush1.bf16.msra.mxu0 0
    %5326 = vmatprep.subr.bf16.mxu0 0
    %5327 = vmatpush1.bf16.msra.mxu0 0
    %5328 = vmatprep.subr.bf16.mxu0 0
    %5329 = vmatpush1.bf16.msra.mxu0 0
    %5330 = vmatprep.subr.bf16.mxu0 0
    %5331 = vmatpush1.bf16.msra.mxu0 0
    %5332 = vmatprep.subr.bf16.mxu0 0
    %5333 = vmatpush1.bf16.msra.mxu0 0
    %5334 = vmatprep.subr.bf16.mxu0 0
    %5335 = vmatpush1.bf16.msra.mxu0 0
    %5336 = vmatprep.subr.bf16.mxu0 0
    %5337 = vmatpush1.bf16.msra.mxu0 0
    %5338 = vmatprep.subr.bf16.mxu0 0
    %5339 = vmatpush1.bf16.msra.mxu0 0
    %5340 = vmatprep.subr.bf16.mxu0 0
    %5341 = vmatpush1.bf16.msra.mxu0 0
    %5342 = vmatprep.subr.bf16.mxu0 0
    %5343 = vmatpush1.bf16.msra.mxu0 0
    %5344 = vmatprep.subr.bf16.mxu0 0
    %5345 = vmatpush1.bf16.msra.mxu0 0
    %5346 = vmatprep.subr.bf16.mxu0 0
    %5347 = vmatpush1.bf16.msra.mxu0 0
    %5348 = vmatprep.mubr.bf16.mxu0 0
    %5349 = vmatmul.mubr.bf16.gmra.mrb[0].mxu0 %v5269
    %v5350 = vpop.f32.mrb[0].mxu0
    %v5351 = vadd.f32 0.0, %v5350
    %v5352 = vpop.f32.mrb[0].mxu0
    %v5353 = vpop.f32.mrb[0].mxu0
    %v5354 = vadd.f32 0.0, %v5353
    %v5355 = vpop.f32.mrb[0].mxu0
    %5356 = vmatprep.mubr.bf16.mxu0 0
    %5357 = vmatmul.mubr.bf16.gmra.mrb[0].mxu0 %v5272
    %v5358 = vpop.f32.mrb[0].mxu0
    %v5359 = vadd.f32 0.0, %v5358
    %v5360 = vpop.f32.mrb[0].mxu0
    %v5361 = vpop.f32.mrb[0].mxu0
    %v5362 = vadd.f32 0.0, %v5361
    %v5363 = vpop.f32.mrb[0].mxu0
    %5364 = vmatprep.mubr.bf16.mxu0 0
    %5365 = vmatmul.mubr.bf16.gmra.mrb[0].mxu0 %v5275
    %v5366 = vpop.f32.mrb[0].mxu0
    %v5367 = vadd.f32 0.0, %v5366
    %v5368 = vpop.f32.mrb[0].mxu0
    %v5369 = vpop.f32.mrb[0].mxu0
    %v5370 = vadd.f32 0.0, %v5369
    %v5371 = vpop.f32.mrb[0].mxu0
    %5372 = vmatprep.mubr.bf16.mxu0 0
    %5373 = vmatmul.mubr.bf16.gmra.mrb[0].mxu0 %v5278
    %v5374 = vpop.f32.mrb[0].mxu0
    %v5375 = vadd.f32 0.0, %v5374
    %v5376 = vpop.f32.mrb[0].mxu0
    %v5377 = vpop.f32.mrb[0].mxu0
    %v5378 = vadd.f32 0.0, %v5377
    %v5379 = vpop.f32.mrb[0].mxu0
    %5380 = vmatprep.mubr.bf16.mxu0 0
    %5381 = vmatmul.mubr.bf16.gmra.mrb[0].mxu0 %v5281
    %v5382 = vpop.f32.mrb[0].mxu0
    %v5383 = vadd.f32 0.0, %v5382
    %v5384 = vpop.f32.mrb[0].mxu0
    %v5385 = vpop.f32.mrb[0].mxu0
    %v5386 = vadd.f32 0.0, %v5385
    %v5387 = vpop.f32.mrb[0].mxu0
    %5388 = vmatprep.mubr.bf16.mxu0 0
    %5389 = vmatmul.mubr.bf16.gmra.mrb[0].mxu0 %v5284
    %v5390 = vpop.f32.mrb[0].mxu0
    %v5391 = vadd.f32 0.0, %v5390
    %v5392 = vpop.f32.mrb[0].mxu0
    %v5393 = vpop.f32.mrb[0].mxu0
    %v5394 = vadd.f32 0.0, %v5393
    %v5395 = vpop.f32.mrb[0].mxu0
    %5396 = vmatprep.mubr.bf16.mxu0 0
    %5397 = vmatmul.mubr.bf16.gmra.mrb[0].mxu0 %v5287
    %v5398 = vpop.f32.mrb[0].mxu0
    %v5399 = vadd.f32 0.0, %v5398
    %v5400 = vpop.f32.mrb[0].mxu0
    %v5401 = vpop.f32.mrb[0].mxu0
    %v5402 = vadd.f32 0.0, %v5401
    %v5403 = vpop.f32.mrb[0].mxu0
    %5404 = vmatprep.mubr.bf16.mxu0 0
    %5405 = vmatmul.mubr.bf16.gmra.mrb[0].mxu0 %v5290
    %v5406 = vpop.f32.mrb[0].mxu0
    %v5407 = vadd.f32 0.0, %v5406
    %v5408 = vpop.f32.mrb[0].mxu0
    %v5409 = vpop.f32.mrb[0].mxu0
    %v5410 = vadd.f32 0.0, %v5409
    %v5411 = vpop.f32.mrb[0].mxu0
    %5412 = vmatprep.mubr.bf16.mxu0 0
    %5413 = vmatmul.mubr.bf16.gmra.mrb[0].mxu0 %v5293
    %v5414 = vpop.f32.mrb[0].mxu0
    %v5415 = vadd.f32 0.0, %v5414
    %v5416 = vpop.f32.mrb[0].mxu0
    %v5417 = vpop.f32.mrb[0].mxu0
    %v5418 = vadd.f32 0.0, %v5417
    %v5419 = vpop.f32.mrb[0].mxu0
    %5420 = vmatprep.mubr.bf16.mxu0 0
    %5421 = vmatmul.mubr.bf16.gmra.mrb[0].mxu0 %v5296
    %v5422 = vpop.f32.mrb[0].mxu0
    %v5423 = vadd.f32 0.0, %v5422
    %v5424 = vpop.f32.mrb[0].mxu0
    %v5425 = vpop.f32.mrb[0].mxu0
    %v5426 = vadd.f32 0.0, %v5425
    %v5427 = vpop.f32.mrb[0].mxu0
    %5428 = vmatprep.mubr.bf16.mxu0 0
    %5429 = vmatmul.mubr.bf16.gmra.mrb[0].mxu0 %v5299
    %v5430 = vpop.f32.mrb[0].mxu0
    %v5431 = vadd.f32 0.0, %v5430
    %v5432 = vpop.f32.mrb[0].mxu0
    %v5433 = vpop.f32.mrb[0].mxu0
    %v5434 = vadd.f32 0.0, %v5433
    %v5435 = vpop.f32.mrb[0].mxu0
    %5436 = vmatprep.mubr.bf16.mxu0 0
    %5437 = vmatmul.mubr.bf16.gmra.mrb[0].mxu0 %v5302
    %v5438 = vpop.f32.mrb[0].mxu0
    %v5439 = vadd.f32 0.0, %v5438
    %v5440 = vpop.f32.mrb[0].mxu0
    %v5441 = vpop.f32.mrb[0].mxu0
    %v5442 = vadd.f32 0.0, %v5441
    %v5443 = vpop.f32.mrb[0].mxu0
    %5444 = vmatprep.mubr.bf16.mxu0 0
    %5445 = vmatmul.mubr.bf16.gmra.mrb[0].mxu0 %v5305
    %v5446 = vpop.f32.mrb[0].mxu0
    %v5447 = vadd.f32 0.0, %v5446
    %v5448 = vpop.f32.mrb[0].mxu0
    %v5449 = vpop.f32.mrb[0].mxu0
    %v5450 = vadd.f32 0.0, %v5449
    %v5451 = vpop.f32.mrb[0].mxu0
    %5452 = vmatprep.mubr.bf16.mxu0 0
    %5453 = vmatmul.mubr.bf16.gmra.mrb[0].mxu0 %v5308
    %v5454 = vpop.f32.mrb[0].mxu0
    %v5455 = vadd.f32 0.0, %v5454
    %v5456 = vpop.f32.mrb[0].mxu0
    %v5457 = vpop.f32.mrb[0].mxu0
    %v5458 = vadd.f32 0.0, %v5457
    %v5459 = vpop.f32.mrb[0].mxu0
    %5460 = vmatprep.mubr.bf16.mxu0 0
    %5461 = vmatmul.mubr.bf16.gmra.mrb[0].mxu0 %v5311
    %v5462 = vpop.f32.mrb[0].mxu0
    %v5463 = vadd.f32 0.0, %v5462
    %v5464 = vpop.f32.mrb[0].mxu0
    %v5465 = vpop.f32.mrb[0].mxu0
    %v5466 = vadd.f32 0.0, %v5465
    %v5467 = vpop.f32.mrb[0].mxu0
    %5468 = vmatprep.mubr.bf16.mxu0 0
    %5469 = vmatmul.mubr.bf16.gmra.mrb[0].mxu0 %v5314
    %v5470 = vpop.f32.mrb[0].mxu0
    %v5471 = vadd.f32 0.0, %v5470
    %v5472 = vpop.f32.mrb[0].mxu0
    %v5473 = vpop.f32.mrb[0].mxu0
    %v5474 = vadd.f32 0.0, %v5473
    %v5475 = vpop.f32.mrb[0].mxu0
    %5476 = vdwg.mxu0
    %v5477 = vadd.f32 %v5203, %v5351
    %v5478 = vadd.f32 %v5204, %v5354
    %v5479 = vadd.f32 %v5205, %v5359
    %v5480 = vadd.f32 %v5206, %v5362
    %v5481 = vadd.f32 %v5207, %v5367
    %v5482 = vadd.f32 %v5208, %v5370
    %v5483 = vadd.f32 %v5209, %v5375
    %v5484 = vadd.f32 %v5210, %v5378
    %v5485 = vadd.f32 %v5211, %v5383
    %v5486 = vadd.f32 %v5212, %v5386
    %v5487 = vadd.f32 %v5213, %v5391
    %v5488 = vadd.f32 %v5214, %v5394
    %v5489 = vadd.f32 %v5215, %v5399
    %v5490 = vadd.f32 %v5216, %v5402
    %v5491 = vadd.f32 %v5217, %v5407
    %v5492 = vadd.f32 %v5218, %v5410
    %v5493 = vadd.f32 %v5219, %v5415
    %v5494 = vadd.f32 %v5220, %v5418
    %v5495 = vadd.f32 %v5221, %v5423
    %v5496 = vadd.f32 %v5222, %v5426
    %v5497 = vadd.f32 %v5223, %v5431
    %v5498 = vadd.f32 %v5224, %v5434
    %v5499 = vadd.f32 %v5225, %v5439
    %v5500 = vadd.f32 %v5226, %v5442
    %v5501 = vadd.f32 %v5227, %v5447
    %v5502 = vadd.f32 %v5228, %v5450
    %v5503 = vadd.f32 %v5229, %v5455
    %v5504 = vadd.f32 %v5230, %v5458
    %v5505 = vadd.f32 %v5231, %v5463
    %v5506 = vadd.f32 %v5232, %v5466
    %v5507 = vadd.f32 %v5233, %v5471
    %v5508 = vadd.f32 %v5234, %v5474
    %v5509 = vld [vmem:[#allocation3 + $0x11] sm:$0xff]
    %v5510 = vld [vmem:[#allocation3 + $0x19] sm:$0xff]
    %v5511 = vld [vmem:[#allocation3 + $0x21] sm:$0xff]
    %v5512 = vld [vmem:[#allocation3 + $0x29] sm:$0xff]
    %v5513 = vld [vmem:[#allocation3 + $0x31] sm:$0xff]
    %v5514 = vld [vmem:[#allocation3 + $0x39] sm:$0xff]
    %v5515 = vld [vmem:[#allocation3 + $0x41] sm:$0xff]
    %v5516 = vld [vmem:[#allocation3 + $0x49] sm:$0xff]
    %v5517 = vld [vmem:[#allocation3 + $0x51] sm:$0xff]
    %v5518 = vld [vmem:[#allocation3 + $0x59] sm:$0xff]
    %v5519 = vld [vmem:[#allocation3 + $0x61] sm:$0xff]
    %v5520 = vld [vmem:[#allocation3 + $0x69] sm:$0xff]
    %v5521 = vld [vmem:[#allocation3 + $0x71] sm:$0xff]
    %v5522 = vld [vmem:[#allocation3 + $0x79] sm:$0xff]
    %v5523 = vld [vmem:[#allocation3 + $0x81] sm:$0xff]
    %v5524 = vld [vmem:[#allocation3 + $0x89] sm:$0xff]
    %v5525 = vld [vmem:[#allocation3 + $0x91] sm:$0xff]
    %v5526 = vld [vmem:[#allocation3 + $0x99] sm:$0xff]
    %v5527 = vld [vmem:[#allocation3 + $0xa1] sm:$0xff]
    %v5528 = vld [vmem:[#allocation3 + $0xa9] sm:$0xff]
    %v5529 = vld [vmem:[#allocation3 + $0xb1] sm:$0xff]
    %v5530 = vld [vmem:[#allocation3 + $0xb9] sm:$0xff]
    %v5531 = vld [vmem:[#allocation3 + $0xc1] sm:$0xff]
    %v5532 = vld [vmem:[#allocation3 + $0xc9] sm:$0xff]
    %v5533 = vld [vmem:[#allocation3 + $0xd1] sm:$0xff]
    %v5534 = vld [vmem:[#allocation3 + $0xd9] sm:$0xff]
    %v5535 = vld [vmem:[#allocation3 + $0xe1] sm:$0xff]
    %v5536 = vld [vmem:[#allocation3 + $0xe9] sm:$0xff]
    %v5537 = vld [vmem:[#allocation3 + $0xf1] sm:$0xff]
    %v5538 = vld [vmem:[#allocation3 + $0xf9] sm:$0xff]
    %v5539 = vld [vmem:[#allocation3 + $0x101] sm:$0xff]
    %v5540 = vld [vmem:[#allocation3 + $0x109] sm:$0xff]
    %v5541 = vsel %vm2229, %v5509, 0.0
    %v5542 = vsel %vm2230, %v5510, 0.0
    %v5543 = vsel %vm2231, %v5511, 0.0
    %v5544 = vsel %vm2232, %v5512, 0.0
    %v5545 = vsel %vm2233, %v5513, 0.0
    %v5546 = vsel %vm2234, %v5514, 0.0
    %v5547 = vsel %vm2235, %v5515, 0.0
    %v5548 = vsel %vm2236, %v5516, 0.0
    %v5549 = vsel %vm2237, %v5517, 0.0
    %v5550 = vsel %vm2238, %v5518, 0.0
    %v5551 = vsel %vm2239, %v5519, 0.0
    %v5552 = vsel %vm2240, %v5520, 0.0
    %v5553 = vsel %vm2241, %v5521, 0.0
    %v5554 = vsel %vm2242, %v5522, 0.0
    %v5555 = vsel %vm2243, %v5523, 0.0
    %v5556 = vsel %vm2244, %v5524, 0.0
    %v5557 = vsel %vm2245, %v5525, 0.0
    %v5558 = vsel %vm2246, %v5526, 0.0
    %v5559 = vsel %vm2247, %v5527, 0.0
    %v5560 = vsel %vm2248, %v5528, 0.0
    %v5561 = vsel %vm2249, %v5529, 0.0
    %v5562 = vsel %vm2250, %v5530, 0.0
    %v5563 = vsel %vm2251, %v5531, 0.0
    %v5564 = vsel %vm2252, %v5532, 0.0
    %v5565 = vsel %vm2253, %v5533, 0.0
    %v5566 = vsel %vm2254, %v5534, 0.0
    %v5567 = vsel %vm2255, %v5535, 0.0
    %v5568 = vsel %vm2256, %v5536, 0.0
    %v5569 = vsel %vm2257, %v5537, 0.0
    %v5570 = vsel %vm2258, %v5538, 0.0
    %v5571 = vsel %vm2259, %v5539, 0.0
    %v5572 = vsel %vm2260, %v5540, 0.0
    %v5573 = vpack.c.bf16 %v5542, %v5541
    %v5574 = vpack.c.bf16 %v5544, %v5543
    %v5575 = vpack.c.bf16 %v5546, %v5545
    %v5576 = vpack.c.bf16 %v5548, %v5547
    %v5577 = vpack.c.bf16 %v5550, %v5549
    %v5578 = vpack.c.bf16 %v5552, %v5551
    %v5579 = vpack.c.bf16 %v5554, %v5553
    %v5580 = vpack.c.bf16 %v5556, %v5555
    %v5581 = vpack.c.bf16 %v5558, %v5557
    %v5582 = vpack.c.bf16 %v5560, %v5559
    %v5583 = vpack.c.bf16 %v5562, %v5561
    %v5584 = vpack.c.bf16 %v5564, %v5563
    %v5585 = vpack.c.bf16 %v5566, %v5565
    %v5586 = vpack.c.bf16 %v5568, %v5567
    %v5587 = vpack.c.bf16 %v5570, %v5569
    %v5588 = vpack.c.bf16 %v5572, %v5571
    %s5589 = scalar_lea.vmem %s4, 80
    %v5590 = vld [vmem:[%s5589] sm:$0xf]
    %v5591 = vld [vmem:[%s5589 + $0x4] sm:$0xf]
    %v5592 = vld [vmem:[%s5589 + $0x8] sm:$0xf]
    %v5593 = vld [vmem:[%s5589 + $0xc] sm:$0xf]
    %v5598 = vunpack.c.l.b16 %v5590
    %v5599 = vunpack.c.l.b16 %v5591
    %v5600 = vunpack.c.l.b16 %v5592
    %v5601 = vunpack.c.l.b16 %v5593
    %v5602 = vpack.c.b16 %v5599, %v5598
    %v5603 = vpack.c.b16 %v5601, %v5600
    %v5607 = vsel %vm3915, %v5573, 0
    %v5610 = vsel %vm3915, %v5574, 0
    %v5613 = vsel %vm3915, %v5575, 0
    %v5616 = vsel %vm3915, %v5576, 0
    %v5619 = vsel %vm3915, %v5577, 0
    %v5622 = vsel %vm3915, %v5578, 0
    %v5625 = vsel %vm3915, %v5579, 0
    %v5628 = vsel %vm3915, %v5580, 0
    %v5631 = vsel %vm3915, %v5581, 0
    %v5634 = vsel %vm3915, %v5582, 0
    %v5637 = vsel %vm3915, %v5583, 0
    %v5640 = vsel %vm3915, %v5584, 0
    %v5643 = vsel %vm3915, %v5585, 0
    %v5646 = vsel %vm3915, %v5586, 0
    %v5649 = vsel %vm3915, %v5587, 0
    %v5652 = vsel %vm3915, %v5588, 0
    %5654 = vmatprep.subr.bf16.mxu0 0
    %5655 = vmatpush1.bf16.msra.mxu0 %v5602
    %5656 = vmatprep.subr.bf16.mxu0 0
    %5657 = vmatpush1.bf16.msra.mxu0 %v5603
    %5658 = vmatprep.subr.bf16.mxu0 0
    %5659 = vmatpush1.bf16.msra.mxu0 0
    %5660 = vmatprep.subr.bf16.mxu0 0
    %5661 = vmatpush1.bf16.msra.mxu0 0
    %5662 = vmatprep.subr.bf16.mxu0 0
    %5663 = vmatpush1.bf16.msra.mxu0 0
    %5664 = vmatprep.subr.bf16.mxu0 0
    %5665 = vmatpush1.bf16.msra.mxu0 0
    %5666 = vmatprep.subr.bf16.mxu0 0
    %5667 = vmatpush1.bf16.msra.mxu0 0
    %5668 = vmatprep.subr.bf16.mxu0 0
    %5669 = vmatpush1.bf16.msra.mxu0 0
    %5670 = vmatprep.subr.bf16.mxu0 0
    %5671 = vmatpush1.bf16.msra.mxu0 0
    %5672 = vmatprep.subr.bf16.mxu0 0
    %5673 = vmatpush1.bf16.msra.mxu0 0
    %5674 = vmatprep.subr.bf16.mxu0 0
    %5675 = vmatpush1.bf16.msra.mxu0 0
    %5676 = vmatprep.subr.bf16.mxu0 0
    %5677 = vmatpush1.bf16.msra.mxu0 0
    %5678 = vmatprep.subr.bf16.mxu0 0
    %5679 = vmatpush1.bf16.msra.mxu0 0
    %5680 = vmatprep.subr.bf16.mxu0 0
    %5681 = vmatpush1.bf16.msra.mxu0 0
    %5682 = vmatprep.subr.bf16.mxu0 0
    %5683 = vmatpush1.bf16.msra.mxu0 0
    %5684 = vmatprep.subr.bf16.mxu0 0
    %5685 = vmatpush1.bf16.msra.mxu0 0
    %5686 = vmatprep.mubr.bf16.mxu0 0
    %5687 = vmatmul.mubr.bf16.gmra.mrb[0].mxu0 %v5607
    %v5688 = vpop.f32.mrb[0].mxu0
    %v5689 = vadd.f32 0.0, %v5688
    %v5690 = vpop.f32.mrb[0].mxu0
    %v5691 = vpop.f32.mrb[0].mxu0
    %v5692 = vadd.f32 0.0, %v5691
    %v5693 = vpop.f32.mrb[0].mxu0
    %5694 = vmatprep.mubr.bf16.mxu0 0
    %5695 = vmatmul.mubr.bf16.gmra.mrb[0].mxu0 %v5610
    %v5696 = vpop.f32.mrb[0].mxu0
    %v5697 = vadd.f32 0.0, %v5696
    %v5698 = vpop.f32.mrb[0].mxu0
    %v5699 = vpop.f32.mrb[0].mxu0
    %v5700 = vadd.f32 0.0, %v5699
    %v5701 = vpop.f32.mrb[0].mxu0
    %5702 = vmatprep.mubr.bf16.mxu0 0
    %5703 = vmatmul.mubr.bf16.gmra.mrb[0].mxu0 %v5613
    %v5704 = vpop.f32.mrb[0].mxu0
    %v5705 = vadd.f32 0.0, %v5704
    %v5706 = vpop.f32.mrb[0].mxu0
    %v5707 = vpop.f32.mrb[0].mxu0
    %v5708 = vadd.f32 0.0, %v5707
    %v5709 = vpop.f32.mrb[0].mxu0
    %5710 = vmatprep.mubr.bf16.mxu0 0
    %5711 = vmatmul.mubr.bf16.gmra.mrb[0].mxu0 %v5616
    %v5712 = vpop.f32.mrb[0].mxu0
    %v5713 = vadd.f32 0.0, %v5712
    %v5714 = vpop.f32.mrb[0].mxu0
    %v5715 = vpop.f32.mrb[0].mxu0
    %v5716 = vadd.f32 0.0, %v5715
    %v5717 = vpop.f32.mrb[0].mxu0
    %5718 = vmatprep.mubr.bf16.mxu0 0
    %5719 = vmatmul.mubr.bf16.gmra.mrb[0].mxu0 %v5619
    %v5720 = vpop.f32.mrb[0].mxu0
    %v5721 = vadd.f32 0.0, %v5720
    %v5722 = vpop.f32.mrb[0].mxu0
    %v5723 = vpop.f32.mrb[0].mxu0
    %v5724 = vadd.f32 0.0, %v5723
    %v5725 = vpop.f32.mrb[0].mxu0
    %5726 = vmatprep.mubr.bf16.mxu0 0
    %5727 = vmatmul.mubr.bf16.gmra.mrb[0].mxu0 %v5622
    %v5728 = vpop.f32.mrb[0].mxu0
    %v5729 = vadd.f32 0.0, %v5728
    %v5730 = vpop.f32.mrb[0].mxu0
    %v5731 = vpop.f32.mrb[0].mxu0
    %v5732 = vadd.f32 0.0, %v5731
    %v5733 = vpop.f32.mrb[0].mxu0
    %5734 = vmatprep.mubr.bf16.mxu0 0
    %5735 = vmatmul.mubr.bf16.gmra.mrb[0].mxu0 %v5625
    %v5736 = vpop.f32.mrb[0].mxu0
    %v5737 = vadd.f32 0.0, %v5736
    %v5738 = vpop.f32.mrb[0].mxu0
    %v5739 = vpop.f32.mrb[0].mxu0
    %v5740 = vadd.f32 0.0, %v5739
    %v5741 = vpop.f32.mrb[0].mxu0
    %5742 = vmatprep.mubr.bf16.mxu0 0
    %5743 = vmatmul.mubr.bf16.gmra.mrb[0].mxu0 %v5628
    %v5744 = vpop.f32.mrb[0].mxu0
    %v5745 = vadd.f32 0.0, %v5744
    %v5746 = vpop.f32.mrb[0].mxu0
    %v5747 = vpop.f32.mrb[0].mxu0
    %v5748 = vadd.f32 0.0, %v5747
    %v5749 = vpop.f32.mrb[0].mxu0
    %5750 = vmatprep.mubr.bf16.mxu0 0
    %5751 = vmatmul.mubr.bf16.gmra.mrb[0].mxu0 %v5631
    %v5752 = vpop.f32.mrb[0].mxu0
    %v5753 = vadd.f32 0.0, %v5752
    %v5754 = vpop.f32.mrb[0].mxu0
    %v5755 = vpop.f32.mrb[0].mxu0
    %v5756 = vadd.f32 0.0, %v5755
    %v5757 = vpop.f32.mrb[0].mxu0
    %5758 = vmatprep.mubr.bf16.mxu0 0
    %5759 = vmatmul.mubr.bf16.gmra.mrb[0].mxu0 %v5634
    %v5760 = vpop.f32.mrb[0].mxu0
    %v5761 = vadd.f32 0.0, %v5760
    %v5762 = vpop.f32.mrb[0].mxu0
    %v5763 = vpop.f32.mrb[0].mxu0
    %v5764 = vadd.f32 0.0, %v5763
    %v5765 = vpop.f32.mrb[0].mxu0
    %5766 = vmatprep.mubr.bf16.mxu0 0
    %5767 = vmatmul.mubr.bf16.gmra.mrb[0].mxu0 %v5637
    %v5768 = vpop.f32.mrb[0].mxu0
    %v5769 = vadd.f32 0.0, %v5768
    %v5770 = vpop.f32.mrb[0].mxu0
    %v5771 = vpop.f32.mrb[0].mxu0
    %v5772 = vadd.f32 0.0, %v5771
    %v5773 = vpop.f32.mrb[0].mxu0
    %5774 = vmatprep.mubr.bf16.mxu0 0
    %5775 = vmatmul.mubr.bf16.gmra.mrb[0].mxu0 %v5640
    %v5776 = vpop.f32.mrb[0].mxu0
    %v5777 = vadd.f32 0.0, %v5776
    %v5778 = vpop.f32.mrb[0].mxu0
    %v5779 = vpop.f32.mrb[0].mxu0
    %v5780 = vadd.f32 0.0, %v5779
    %v5781 = vpop.f32.mrb[0].mxu0
    %5782 = vmatprep.mubr.bf16.mxu0 0
    %5783 = vmatmul.mubr.bf16.gmra.mrb[0].mxu0 %v5643
    %v5784 = vpop.f32.mrb[0].mxu0
    %v5785 = vadd.f32 0.0, %v5784
    %v5786 = vpop.f32.mrb[0].mxu0
    %v5787 = vpop.f32.mrb[0].mxu0
    %v5788 = vadd.f32 0.0, %v5787
    %v5789 = vpop.f32.mrb[0].mxu0
    %5790 = vmatprep.mubr.bf16.mxu0 0
    %5791 = vmatmul.mubr.bf16.gmra.mrb[0].mxu0 %v5646
    %v5792 = vpop.f32.mrb[0].mxu0
    %v5793 = vadd.f32 0.0, %v5792
    %v5794 = vpop.f32.mrb[0].mxu0
    %v5795 = vpop.f32.mrb[0].mxu0
    %v5796 = vadd.f32 0.0, %v5795
    %v5797 = vpop.f32.mrb[0].mxu0
    %5798 = vmatprep.mubr.bf16.mxu0 0
    %5799 = vmatmul.mubr.bf16.gmra.mrb[0].mxu0 %v5649
    %v5800 = vpop.f32.mrb[0].mxu0
    %v5801 = vadd.f32 0.0, %v5800
    %v5802 = vpop.f32.mrb[0].mxu0
    %v5803 = vpop.f32.mrb[0].mxu0
    %v5804 = vadd.f32 0.0, %v5803
    %v5805 = vpop.f32.mrb[0].mxu0
    %5806 = vmatprep.mubr.bf16.mxu0 0
    %5807 = vmatmul.mubr.bf16.gmra.mrb[0].mxu0 %v5652
    %v5808 = vpop.f32.mrb[0].mxu0
    %v5809 = vadd.f32 0.0, %v5808
    %v5810 = vpop.f32.mrb[0].mxu0
    %v5811 = vpop.f32.mrb[0].mxu0
    %v5812 = vadd.f32 0.0, %v5811
    %v5813 = vpop.f32.mrb[0].mxu0
    %5814 = vdwg.mxu0
    %v5815 = vadd.f32 %v5477, %v5689
    %v5816 = vadd.f32 %v5478, %v5692
    %v5817 = vadd.f32 %v5479, %v5697
    %v5818 = vadd.f32 %v5480, %v5700
    %v5819 = vadd.f32 %v5481, %v5705
    %v5820 = vadd.f32 %v5482, %v5708
    %v5821 = vadd.f32 %v5483, %v5713
    %v5822 = vadd.f32 %v5484, %v5716
    %v5823 = vadd.f32 %v5485, %v5721
    %v5824 = vadd.f32 %v5486, %v5724
    %v5825 = vadd.f32 %v5487, %v5729
    %v5826 = vadd.f32 %v5488, %v5732
    %v5827 = vadd.f32 %v5489, %v5737
    %v5828 = vadd.f32 %v5490, %v5740
    %v5829 = vadd.f32 %v5491, %v5745
    %v5830 = vadd.f32 %v5492, %v5748
    %v5831 = vadd.f32 %v5493, %v5753
    %v5832 = vadd.f32 %v5494, %v5756
    %v5833 = vadd.f32 %v5495, %v5761
    %v5834 = vadd.f32 %v5496, %v5764
    %v5835 = vadd.f32 %v5497, %v5769
    %v5836 = vadd.f32 %v5498, %v5772
    %v5837 = vadd.f32 %v5499, %v5777
    %v5838 = vadd.f32 %v5500, %v5780
    %v5839 = vadd.f32 %v5501, %v5785
    %v5840 = vadd.f32 %v5502, %v5788
    %v5841 = vadd.f32 %v5503, %v5793
    %v5842 = vadd.f32 %v5504, %v5796
    %v5843 = vadd.f32 %v5505, %v5801
    %v5844 = vadd.f32 %v5506, %v5804
    %v5845 = vadd.f32 %v5507, %v5809
    %v5846 = vadd.f32 %v5508, %v5812
    %v5847 = vld [vmem:[#allocation3 + $0x17] sm:$0xff]
    %v5848 = vld [vmem:[#allocation3 + $0x1f] sm:$0xff]
    %v5849 = vld [vmem:[#allocation3 + $0x27] sm:$0xff]
    %v5850 = vld [vmem:[#allocation3 + $0x2f] sm:$0xff]
    %v5851 = vld [vmem:[#allocation3 + $0x37] sm:$0xff]
    %v5852 = vld [vmem:[#allocation3 + $0x3f] sm:$0xff]
    %v5853 = vld [vmem:[#allocation3 + $0x47] sm:$0xff]
    %v5854 = vld [vmem:[#allocation3 + $0x4f] sm:$0xff]
    %v5855 = vld [vmem:[#allocation3 + $0x57] sm:$0xff]
    %v5856 = vld [vmem:[#allocation3 + $0x5f] sm:$0xff]
    %v5857 = vld [vmem:[#allocation3 + $0x67] sm:$0xff]
    %v5858 = vld [vmem:[#allocation3 + $0x6f] sm:$0xff]
    %v5859 = vld [vmem:[#allocation3 + $0x77] sm:$0xff]
    %v5860 = vld [vmem:[#allocation3 + $0x7f] sm:$0xff]
    %v5861 = vld [vmem:[#allocation3 + $0x87] sm:$0xff]
    %v5862 = vld [vmem:[#allocation3 + $0x8f] sm:$0xff]
    %v5863 = vld [vmem:[#allocation3 + $0x97] sm:$0xff]
    %v5864 = vld [vmem:[#allocation3 + $0x9f] sm:$0xff]
    %v5865 = vld [vmem:[#allocation3 + $0xa7] sm:$0xff]
    %v5866 = vld [vmem:[#allocation3 + $0xaf] sm:$0xff]
    %v5867 = vld [vmem:[#allocation3 + $0xb7] sm:$0xff]
    %v5868 = vld [vmem:[#allocation3 + $0xbf] sm:$0xff]
    %v5869 = vld [vmem:[#allocation3 + $0xc7] sm:$0xff]
    %v5870 = vld [vmem:[#allocation3 + $0xcf] sm:$0xff]
    %v5871 = vld [vmem:[#allocation3 + $0xd7] sm:$0xff]
    %v5872 = vld [vmem:[#allocation3 + $0xdf] sm:$0xff]
    %v5873 = vld [vmem:[#allocation3 + $0xe7] sm:$0xff]
    %v5874 = vld [vmem:[#allocation3 + $0xef] sm:$0xff]
    %v5875 = vld [vmem:[#allocation3 + $0xf7] sm:$0xff]
    %v5876 = vld [vmem:[#allocation3 + $0xff] sm:$0xff]
    %v5877 = vld [vmem:[#allocation3 + $0x107] sm:$0xff]
    %v5878 = vld [vmem:[#allocation3 + $0x10f] sm:$0xff]
    %v5879 = vsel %vm2655, %v5847, 0.0
    %v5880 = vsel %vm2656, %v5848, 0.0
    %v5881 = vsel %vm2657, %v5849, 0.0
    %v5882 = vsel %vm2658, %v5850, 0.0
    %v5883 = vsel %vm2659, %v5851, 0.0
    %v5884 = vsel %vm2660, %v5852, 0.0
    %v5885 = vsel %vm2661, %v5853, 0.0
    %v5886 = vsel %vm2662, %v5854, 0.0
    %v5887 = vsel %vm2663, %v5855, 0.0
    %v5888 = vsel %vm2664, %v5856, 0.0
    %v5889 = vsel %vm2665, %v5857, 0.0
    %v5890 = vsel %vm2666, %v5858, 0.0
    %v5891 = vsel %vm2667, %v5859, 0.0
    %v5892 = vsel %vm2668, %v5860, 0.0
    %v5893 = vsel %vm2669, %v5861, 0.0
    %v5894 = vsel %vm2670, %v5862, 0.0
    %v5895 = vsel %vm2671, %v5863, 0.0
    %v5896 = vsel %vm2672, %v5864, 0.0
    %v5897 = vsel %vm2673, %v5865, 0.0
    %v5898 = vsel %vm2674, %v5866, 0.0
    %v5899 = vsel %vm2675, %v5867, 0.0
    %v5900 = vsel %vm2676, %v5868, 0.0
    %v5901 = vsel %vm2677, %v5869, 0.0
    %v5902 = vsel %vm2678, %v5870, 0.0
    %v5903 = vsel %vm2679, %v5871, 0.0
    %v5904 = vsel %vm2680, %v5872, 0.0
    %v5905 = vsel %vm2681, %v5873, 0.0
    %v5906 = vsel %vm2682, %v5874, 0.0
    %v5907 = vsel %vm2683, %v5875, 0.0
    %v5908 = vsel %vm2684, %v5876, 0.0
    %v5909 = vsel %vm2685, %v5877, 0.0
    %v5910 = vsel %vm2686, %v5878, 0.0
    %v5911 = vpack.c.bf16 %v5880, %v5879
    %v5912 = vpack.c.bf16 %v5882, %v5881
    %v5913 = vpack.c.bf16 %v5884, %v5883
    %v5914 = vpack.c.bf16 %v5886, %v5885
    %v5915 = vpack.c.bf16 %v5888, %v5887
    %v5916 = vpack.c.bf16 %v5890, %v5889
    %v5917 = vpack.c.bf16 %v5892, %v5891
    %v5918 = vpack.c.bf16 %v5894, %v5893
    %v5919 = vpack.c.bf16 %v5896, %v5895
    %v5920 = vpack.c.bf16 %v5898, %v5897
    %v5921 = vpack.c.bf16 %v5900, %v5899
    %v5922 = vpack.c.bf16 %v5902, %v5901
    %v5923 = vpack.c.bf16 %v5904, %v5903
    %v5924 = vpack.c.bf16 %v5906, %v5905
    %v5925 = vpack.c.bf16 %v5908, %v5907
    %v5926 = vpack.c.bf16 %v5910, %v5909
    %s5927 = scalar_lea.vmem %s4, 96
    %v5928 = vld [vmem:[%s5927] sm:$0xf]
    %v5929 = vld [vmem:[%s5927 + $0x4] sm:$0xf]
    %v5930 = vld [vmem:[%s5927 + $0x8] sm:$0xf]
    %v5931 = vld [vmem:[%s5927 + $0xc] sm:$0xf]
    %v5936 = vunpack.c.l.b16 %v5928
    %v5937 = vunpack.c.l.b16 %v5929
    %v5938 = vunpack.c.l.b16 %v5930
    %v5939 = vunpack.c.l.b16 %v5931
    %v5940 = vpack.c.b16 %v5937, %v5936
    %v5941 = vpack.c.b16 %v5939, %v5938
    %v5945 = vsel %vm3915, %v5911, 0
    %v5948 = vsel %vm3915, %v5912, 0
    %v5951 = vsel %vm3915, %v5913, 0
    %v5954 = vsel %vm3915, %v5914, 0
    %v5957 = vsel %vm3915, %v5915, 0
    %v5960 = vsel %vm3915, %v5916, 0
    %v5963 = vsel %vm3915, %v5917, 0
    %v5966 = vsel %vm3915, %v5918, 0
    %v5969 = vsel %vm3915, %v5919, 0
    %v5972 = vsel %vm3915, %v5920, 0
    %v5975 = vsel %vm3915, %v5921, 0
    %v5978 = vsel %vm3915, %v5922, 0
    %v5981 = vsel %vm3915, %v5923, 0
    %v5984 = vsel %vm3915, %v5924, 0
    %v5987 = vsel %vm3915, %v5925, 0
    %v5990 = vsel %vm3915, %v5926, 0
    %5992 = vmatprep.subr.bf16.mxu0 0
    %5993 = vmatpush1.bf16.msra.mxu0 %v5940
    %5994 = vmatprep.subr.bf16.mxu0 0
    %5995 = vmatpush1.bf16.msra.mxu0 %v5941
    %5996 = vmatprep.subr.bf16.mxu0 0
    %5997 = vmatpush1.bf16.msra.mxu0 0
    %5998 = vmatprep.subr.bf16.mxu0 0
    %5999 = vmatpush1.bf16.msra.mxu0 0
    %6000 = vmatprep.subr.bf16.mxu0 0
    %6001 = vmatpush1.bf16.msra.mxu0 0
    %6002 = vmatprep.subr.bf16.mxu0 0
    %6003 = vmatpush1.bf16.msra.mxu0 0
    %6004 = vmatprep.subr.bf16.mxu0 0
    %6005 = vmatpush1.bf16.msra.mxu0 0
    %6006 = vmatprep.subr.bf16.mxu0 0
    %6007 = vmatpush1.bf16.msra.mxu0 0
    %6008 = vmatprep.subr.bf16.mxu0 0
    %6009 = vmatpush1.bf16.msra.mxu0 0
    %6010 = vmatprep.subr.bf16.mxu0 0
    %6011 = vmatpush1.bf16.msra.mxu0 0
    %6012 = vmatprep.subr.bf16.mxu0 0
    %6013 = vmatpush1.bf16.msra.mxu0 0
    %6014 = vmatprep.subr.bf16.mxu0 0
    %6015 = vmatpush1.bf16.msra.mxu0 0
    %6016 = vmatprep.subr.bf16.mxu0 0
    %6017 = vmatpush1.bf16.msra.mxu0 0
    %6018 = vmatprep.subr.bf16.mxu0 0
    %6019 = vmatpush1.bf16.msra.mxu0 0
    %6020 = vmatprep.subr.bf16.mxu0 0
    %6021 = vmatpush1.bf16.msra.mxu0 0
    %6022 = vmatprep.subr.bf16.mxu0 0
    %6023 = vmatpush1.bf16.msra.mxu0 0
    %6024 = vmatprep.mubr.bf16.mxu0 0
    %6025 = vmatmul.mubr.bf16.gmra.mrb[0].mxu0 %v5945
    %v6026 = vpop.f32.mrb[0].mxu0
    %v6027 = vadd.f32 0.0, %v6026
    %v6028 = vpop.f32.mrb[0].mxu0
    %v6029 = vpop.f32.mrb[0].mxu0
    %v6030 = vadd.f32 0.0, %v6029
    %v6031 = vpop.f32.mrb[0].mxu0
    %6032 = vmatprep.mubr.bf16.mxu0 0
    %6033 = vmatmul.mubr.bf16.gmra.mrb[0].mxu0 %v5948
    %v6034 = vpop.f32.mrb[0].mxu0
    %v6035 = vadd.f32 0.0, %v6034
    %v6036 = vpop.f32.mrb[0].mxu0
    %v6037 = vpop.f32.mrb[0].mxu0
    %v6038 = vadd.f32 0.0, %v6037
    %v6039 = vpop.f32.mrb[0].mxu0
    %6040 = vmatprep.mubr.bf16.mxu0 0
    %6041 = vmatmul.mubr.bf16.gmra.mrb[0].mxu0 %v5951
    %v6042 = vpop.f32.mrb[0].mxu0
    %v6043 = vadd.f32 0.0, %v6042
    %v6044 = vpop.f32.mrb[0].mxu0
    %v6045 = vpop.f32.mrb[0].mxu0
    %v6046 = vadd.f32 0.0, %v6045
    %v6047 = vpop.f32.mrb[0].mxu0
    %6048 = vmatprep.mubr.bf16.mxu0 0
    %6049 = vmatmul.mubr.bf16.gmra.mrb[0].mxu0 %v5954
    %v6050 = vpop.f32.mrb[0].mxu0
    %v6051 = vadd.f32 0.0, %v6050
    %v6052 = vpop.f32.mrb[0].mxu0
    %v6053 = vpop.f32.mrb[0].mxu0
    %v6054 = vadd.f32 0.0, %v6053
    %v6055 = vpop.f32.mrb[0].mxu0
    %6056 = vmatprep.mubr.bf16.mxu0 0
    %6057 = vmatmul.mubr.bf16.gmra.mrb[0].mxu0 %v5957
    %v6058 = vpop.f32.mrb[0].mxu0
    %v6059 = vadd.f32 0.0, %v6058
    %v6060 = vpop.f32.mrb[0].mxu0
    %v6061 = vpop.f32.mrb[0].mxu0
    %v6062 = vadd.f32 0.0, %v6061
    %v6063 = vpop.f32.mrb[0].mxu0
    %6064 = vmatprep.mubr.bf16.mxu0 0
    %6065 = vmatmul.mubr.bf16.gmra.mrb[0].mxu0 %v5960
    %v6066 = vpop.f32.mrb[0].mxu0
    %v6067 = vadd.f32 0.0, %v6066
    %v6068 = vpop.f32.mrb[0].mxu0
    %v6069 = vpop.f32.mrb[0].mxu0
    %v6070 = vadd.f32 0.0, %v6069
    %v6071 = vpop.f32.mrb[0].mxu0
    %6072 = vmatprep.mubr.bf16.mxu0 0
    %6073 = vmatmul.mubr.bf16.gmra.mrb[0].mxu0 %v5963
    %v6074 = vpop.f32.mrb[0].mxu0
    %v6075 = vadd.f32 0.0, %v6074
    %v6076 = vpop.f32.mrb[0].mxu0
    %v6077 = vpop.f32.mrb[0].mxu0
    %v6078 = vadd.f32 0.0, %v6077
    %v6079 = vpop.f32.mrb[0].mxu0
    %6080 = vmatprep.mubr.bf16.mxu0 0
    %6081 = vmatmul.mubr.bf16.gmra.mrb[0].mxu0 %v5966
    %v6082 = vpop.f32.mrb[0].mxu0
    %v6083 = vadd.f32 0.0, %v6082
    %v6084 = vpop.f32.mrb[0].mxu0
    %v6085 = vpop.f32.mrb[0].mxu0
    %v6086 = vadd.f32 0.0, %v6085
    %v6087 = vpop.f32.mrb[0].mxu0
    %6088 = vmatprep.mubr.bf16.mxu0 0
    %6089 = vmatmul.mubr.bf16.gmra.mrb[0].mxu0 %v5969
    %v6090 = vpop.f32.mrb[0].mxu0
    %v6091 = vadd.f32 0.0, %v6090
    %v6092 = vpop.f32.mrb[0].mxu0
    %v6093 = vpop.f32.mrb[0].mxu0
    %v6094 = vadd.f32 0.0, %v6093
    %v6095 = vpop.f32.mrb[0].mxu0
    %6096 = vmatprep.mubr.bf16.mxu0 0
    %6097 = vmatmul.mubr.bf16.gmra.mrb[0].mxu0 %v5972
    %v6098 = vpop.f32.mrb[0].mxu0
    %v6099 = vadd.f32 0.0, %v6098
    %v6100 = vpop.f32.mrb[0].mxu0
    %v6101 = vpop.f32.mrb[0].mxu0
    %v6102 = vadd.f32 0.0, %v6101
    %v6103 = vpop.f32.mrb[0].mxu0
    %6104 = vmatprep.mubr.bf16.mxu0 0
    %6105 = vmatmul.mubr.bf16.gmra.mrb[0].mxu0 %v5975
    %v6106 = vpop.f32.mrb[0].mxu0
    %v6107 = vadd.f32 0.0, %v6106
    %v6108 = vpop.f32.mrb[0].mxu0
    %v6109 = vpop.f32.mrb[0].mxu0
    %v6110 = vadd.f32 0.0, %v6109
    %v6111 = vpop.f32.mrb[0].mxu0
    %6112 = vmatprep.mubr.bf16.mxu0 0
    %6113 = vmatmul.mubr.bf16.gmra.mrb[0].mxu0 %v5978
    %v6114 = vpop.f32.mrb[0].mxu0
    %v6115 = vadd.f32 0.0, %v6114
    %v6116 = vpop.f32.mrb[0].mxu0
    %v6117 = vpop.f32.mrb[0].mxu0
    %v6118 = vadd.f32 0.0, %v6117
    %v6119 = vpop.f32.mrb[0].mxu0
    %6120 = vmatprep.mubr.bf16.mxu0 0
    %6121 = vmatmul.mubr.bf16.gmra.mrb[0].mxu0 %v5981
    %v6122 = vpop.f32.mrb[0].mxu0
    %v6123 = vadd.f32 0.0, %v6122
    %v6124 = vpop.f32.mrb[0].mxu0
    %v6125 = vpop.f32.mrb[0].mxu0
    %v6126 = vadd.f32 0.0, %v6125
    %v6127 = vpop.f32.mrb[0].mxu0
    %6128 = vmatprep.mubr.bf16.mxu0 0
    %6129 = vmatmul.mubr.bf16.gmra.mrb[0].mxu0 %v5984
    %v6130 = vpop.f32.mrb[0].mxu0
    %v6131 = vadd.f32 0.0, %v6130
    %v6132 = vpop.f32.mrb[0].mxu0
    %v6133 = vpop.f32.mrb[0].mxu0
    %v6134 = vadd.f32 0.0, %v6133
    %v6135 = vpop.f32.mrb[0].mxu0
    %6136 = vmatprep.mubr.bf16.mxu0 0
    %6137 = vmatmul.mubr.bf16.gmra.mrb[0].mxu0 %v5987
    %v6138 = vpop.f32.mrb[0].mxu0
    %v6139 = vadd.f32 0.0, %v6138
    %v6140 = vpop.f32.mrb[0].mxu0
    %v6141 = vpop.f32.mrb[0].mxu0
    %v6142 = vadd.f32 0.0, %v6141
    %v6143 = vpop.f32.mrb[0].mxu0
    %6144 = vmatprep.mubr.bf16.mxu0 0
    %6145 = vmatmul.mubr.bf16.gmra.mrb[0].mxu0 %v5990
    %v6146 = vpop.f32.mrb[0].mxu0
    %v6147 = vadd.f32 0.0, %v6146
    %v6148 = vpop.f32.mrb[0].mxu0
    %v6149 = vpop.f32.mrb[0].mxu0
    %v6150 = vadd.f32 0.0, %v6149
    %v6151 = vpop.f32.mrb[0].mxu0
    %6152 = vdwg.mxu0
    %v6153 = vadd.f32 %v5815, %v6027
    %v6154 = vadd.f32 %v5816, %v6030
    %v6155 = vadd.f32 %v5817, %v6035
    %v6156 = vadd.f32 %v5818, %v6038
    %v6157 = vadd.f32 %v5819, %v6043
    %v6158 = vadd.f32 %v5820, %v6046
    %v6159 = vadd.f32 %v5821, %v6051
    %v6160 = vadd.f32 %v5822, %v6054
    %v6161 = vadd.f32 %v5823, %v6059
    %v6162 = vadd.f32 %v5824, %v6062
    %v6163 = vadd.f32 %v5825, %v6067
    %v6164 = vadd.f32 %v5826, %v6070
    %v6165 = vadd.f32 %v5827, %v6075
    %v6166 = vadd.f32 %v5828, %v6078
    %v6167 = vadd.f32 %v5829, %v6083
    %v6168 = vadd.f32 %v5830, %v6086
    %v6169 = vadd.f32 %v5831, %v6091
    %v6170 = vadd.f32 %v5832, %v6094
    %v6171 = vadd.f32 %v5833, %v6099
    %v6172 = vadd.f32 %v5834, %v6102
    %v6173 = vadd.f32 %v5835, %v6107
    %v6174 = vadd.f32 %v5836, %v6110
    %v6175 = vadd.f32 %v5837, %v6115
    %v6176 = vadd.f32 %v5838, %v6118
    %v6177 = vadd.f32 %v5839, %v6123
    %v6178 = vadd.f32 %v5840, %v6126
    %v6179 = vadd.f32 %v5841, %v6131
    %v6180 = vadd.f32 %v5842, %v6134
    %v6181 = vadd.f32 %v5843, %v6139
    %v6182 = vadd.f32 %v5844, %v6142
    %v6183 = vadd.f32 %v5845, %v6147
    %v6184 = vadd.f32 %v5846, %v6150
    %v6185 = vld [vmem:[#allocation3 + $0x18] sm:$0xff]
    %v6186 = vld [vmem:[#allocation3 + $0x20] sm:$0xff]
    %v6187 = vld [vmem:[#allocation3 + $0x28] sm:$0xff]
    %v6188 = vld [vmem:[#allocation3 + $0x30] sm:$0xff]
    %v6189 = vld [vmem:[#allocation3 + $0x38] sm:$0xff]
    %v6190 = vld [vmem:[#allocation3 + $0x40] sm:$0xff]
    %v6191 = vld [vmem:[#allocation3 + $0x48] sm:$0xff]
    %v6192 = vld [vmem:[#allocation3 + $0x50] sm:$0xff]
    %v6193 = vld [vmem:[#allocation3 + $0x58] sm:$0xff]
    %v6194 = vld [vmem:[#allocation3 + $0x60] sm:$0xff]
    %v6195 = vld [vmem:[#allocation3 + $0x68] sm:$0xff]
    %v6196 = vld [vmem:[#allocation3 + $0x70] sm:$0xff]
    %v6197 = vld [vmem:[#allocation3 + $0x78] sm:$0xff]
    %v6198 = vld [vmem:[#allocation3 + $0x80] sm:$0xff]
    %v6199 = vld [vmem:[#allocation3 + $0x88] sm:$0xff]
    %v6200 = vld [vmem:[#allocation3 + $0x90] sm:$0xff]
    %v6201 = vld [vmem:[#allocation3 + $0x98] sm:$0xff]
    %v6202 = vld [vmem:[#allocation3 + $0xa0] sm:$0xff]
    %v6203 = vld [vmem:[#allocation3 + $0xa8] sm:$0xff]
    %v6204 = vld [vmem:[#allocation3 + $0xb0] sm:$0xff]
    %v6205 = vld [vmem:[#allocation3 + $0xb8] sm:$0xff]
    %v6206 = vld [vmem:[#allocation3 + $0xc0] sm:$0xff]
    %v6207 = vld [vmem:[#allocation3 + $0xc8] sm:$0xff]
    %v6208 = vld [vmem:[#allocation3 + $0xd0] sm:$0xff]
    %v6209 = vld [vmem:[#allocation3 + $0xd8] sm:$0xff]
    %v6210 = vld [vmem:[#allocation3 + $0xe0] sm:$0xff]
    %v6211 = vld [vmem:[#allocation3 + $0xe8] sm:$0xff]
    %v6212 = vld [vmem:[#allocation3 + $0xf0] sm:$0xff]
    %v6213 = vld [vmem:[#allocation3 + $0xf8] sm:$0xff]
    %v6214 = vld [vmem:[#allocation3 + $0x100] sm:$0xff]
    %v6215 = vld [vmem:[#allocation3 + $0x108] sm:$0xff]
    %v6216 = vld [vmem:[#allocation3 + $0x110] sm:$0xff]
    %v6217 = vsel %vm3049, %v6185, 0.0
    %v6218 = vsel %vm3050, %v6186, 0.0
    %v6219 = vsel %vm3051, %v6187, 0.0
    %v6220 = vsel %vm3052, %v6188, 0.0
    %v6221 = vsel %vm3053, %v6189, 0.0
    %v6222 = vsel %vm3054, %v6190, 0.0
    %v6223 = vsel %vm3055, %v6191, 0.0
    %v6224 = vsel %vm3056, %v6192, 0.0
    %v6225 = vsel %vm3057, %v6193, 0.0
    %v6226 = vsel %vm3058, %v6194, 0.0
    %v6227 = vsel %vm3059, %v6195, 0.0
    %v6228 = vsel %vm3060, %v6196, 0.0
    %v6229 = vsel %vm3061, %v6197, 0.0
    %v6230 = vsel %vm3062, %v6198, 0.0
    %v6231 = vsel %vm3063, %v6199, 0.0
    %v6232 = vsel %vm3064, %v6200, 0.0
    %v6233 = vsel %vm3065, %v6201, 0.0
    %v6234 = vsel %vm3066, %v6202, 0.0
    %v6235 = vsel %vm3067, %v6203, 0.0
    %v6236 = vsel %vm3068, %v6204, 0.0
    %v6237 = vsel %vm3069, %v6205, 0.0
    %v6238 = vsel %vm3070, %v6206, 0.0
    %v6239 = vsel %vm3071, %v6207, 0.0
    %v6240 = vsel %vm3072, %v6208, 0.0
    %v6241 = vsel %vm3073, %v6209, 0.0
    %v6242 = vsel %vm3074, %v6210, 0.0
    %v6243 = vsel %vm3075, %v6211, 0.0
    %v6244 = vsel %vm3076, %v6212, 0.0
    %v6245 = vsel %vm3077, %v6213, 0.0
    %v6246 = vsel %vm3078, %v6214, 0.0
    %v6247 = vsel %vm3079, %v6215, 0.0
    %v6248 = vsel %vm3080, %v6216, 0.0
    %v6249 = vpack.c.bf16 %v6218, %v6217
    %v6250 = vpack.c.bf16 %v6220, %v6219
    %v6251 = vpack.c.bf16 %v6222, %v6221
    %v6252 = vpack.c.bf16 %v6224, %v6223
    %v6253 = vpack.c.bf16 %v6226, %v6225
    %v6254 = vpack.c.bf16 %v6228, %v6227
    %v6255 = vpack.c.bf16 %v6230, %v6229
    %v6256 = vpack.c.bf16 %v6232, %v6231
    %v6257 = vpack.c.bf16 %v6234, %v6233
    %v6258 = vpack.c.bf16 %v6236, %v6235
    %v6259 = vpack.c.bf16 %v6238, %v6237
    %v6260 = vpack.c.bf16 %v6240, %v6239
    %v6261 = vpack.c.bf16 %v6242, %v6241
    %v6262 = vpack.c.bf16 %v6244, %v6243
    %v6263 = vpack.c.bf16 %v6246, %v6245
    %v6264 = vpack.c.bf16 %v6248, %v6247
    %s6265 = scalar_lea.vmem %s4, 112
    %v6266 = vld [vmem:[%s6265] sm:$0xf]
    %v6267 = vld [vmem:[%s6265 + $0x4] sm:$0xf]
    %v6268 = vld [vmem:[%s6265 + $0x8] sm:$0xf]
    %v6269 = vld [vmem:[%s6265 + $0xc] sm:$0xf]
    %v6274 = vunpack.c.l.b16 %v6266
    %v6275 = vunpack.c.l.b16 %v6267
    %v6276 = vunpack.c.l.b16 %v6268
    %v6277 = vunpack.c.l.b16 %v6269
    %v6278 = vpack.c.b16 %v6275, %v6274
    %v6279 = vpack.c.b16 %v6277, %v6276
    %v6283 = vsel %vm3915, %v6249, 0
    %v6286 = vsel %vm3915, %v6250, 0
    %v6289 = vsel %vm3915, %v6251, 0
    %v6292 = vsel %vm3915, %v6252, 0
    %v6295 = vsel %vm3915, %v6253, 0
    %v6298 = vsel %vm3915, %v6254, 0
    %v6301 = vsel %vm3915, %v6255, 0
    %v6304 = vsel %vm3915, %v6256, 0
    %v6307 = vsel %vm3915, %v6257, 0
    %v6310 = vsel %vm3915, %v6258, 0
    %v6313 = vsel %vm3915, %v6259, 0
    %v6316 = vsel %vm3915, %v6260, 0
    %v6319 = vsel %vm3915, %v6261, 0
    %v6322 = vsel %vm3915, %v6262, 0
    %v6325 = vsel %vm3915, %v6263, 0
    %v6328 = vsel %vm3915, %v6264, 0
    %6330 = vmatprep.subr.bf16.mxu0 0
    %6331 = vmatpush1.bf16.msra.mxu0 %v6278
    %6332 = vmatprep.subr.bf16.mxu0 0
    %6333 = vmatpush1.bf16.msra.mxu0 %v6279
    %6334 = vmatprep.subr.bf16.mxu0 0
    %6335 = vmatpush1.bf16.msra.mxu0 0
    %6336 = vmatprep.subr.bf16.mxu0 0
    %6337 = vmatpush1.bf16.msra.mxu0 0
    %6338 = vmatprep.subr.bf16.mxu0 0
    %6339 = vmatpush1.bf16.msra.mxu0 0
    %6340 = vmatprep.subr.bf16.mxu0 0
    %6341 = vmatpush1.bf16.msra.mxu0 0
    %6342 = vmatprep.subr.bf16.mxu0 0
    %6343 = vmatpush1.bf16.msra.mxu0 0
    %6344 = vmatprep.subr.bf16.mxu0 0
    %6345 = vmatpush1.bf16.msra.mxu0 0
    %6346 = vmatprep.subr.bf16.mxu0 0
    %6347 = vmatpush1.bf16.msra.mxu0 0
    %6348 = vmatprep.subr.bf16.mxu0 0
    %6349 = vmatpush1.bf16.msra.mxu0 0
    %6350 = vmatprep.subr.bf16.mxu0 0
    %6351 = vmatpush1.bf16.msra.mxu0 0
    %6352 = vmatprep.subr.bf16.mxu0 0
    %6353 = vmatpush1.bf16.msra.mxu0 0
    %6354 = vmatprep.subr.bf16.mxu0 0
    %6355 = vmatpush1.bf16.msra.mxu0 0
    %6356 = vmatprep.subr.bf16.mxu0 0
    %6357 = vmatpush1.bf16.msra.mxu0 0
    %6358 = vmatprep.subr.bf16.mxu0 0
    %6359 = vmatpush1.bf16.msra.mxu0 0
    %6360 = vmatprep.subr.bf16.mxu0 0
    %6361 = vmatpush1.bf16.msra.mxu0 0
    %6362 = vmatprep.mubr.bf16.mxu0 0
    %6363 = vmatmul.mubr.bf16.gmra.mrb[0].mxu0 %v6283
    %v6364 = vpop.f32.mrb[0].mxu0
    %v6365 = vadd.f32 0.0, %v6364
    %v6366 = vpop.f32.mrb[0].mxu0
    %v6367 = vpop.f32.mrb[0].mxu0
    %v6368 = vadd.f32 0.0, %v6367
    %v6369 = vpop.f32.mrb[0].mxu0
    %6370 = vmatprep.mubr.bf16.mxu0 0
    %6371 = vmatmul.mubr.bf16.gmra.mrb[0].mxu0 %v6286
    %v6372 = vpop.f32.mrb[0].mxu0
    %v6373 = vadd.f32 0.0, %v6372
    %v6374 = vpop.f32.mrb[0].mxu0
    %v6375 = vpop.f32.mrb[0].mxu0
    %v6376 = vadd.f32 0.0, %v6375
    %v6377 = vpop.f32.mrb[0].mxu0
    %6378 = vmatprep.mubr.bf16.mxu0 0
    %6379 = vmatmul.mubr.bf16.gmra.mrb[0].mxu0 %v6289
    %v6380 = vpop.f32.mrb[0].mxu0
    %v6381 = vadd.f32 0.0, %v6380
    %v6382 = vpop.f32.mrb[0].mxu0
    %v6383 = vpop.f32.mrb[0].mxu0
    %v6384 = vadd.f32 0.0, %v6383
    %v6385 = vpop.f32.mrb[0].mxu0
    %6386 = vmatprep.mubr.bf16.mxu0 0
    %6387 = vmatmul.mubr.bf16.gmra.mrb[0].mxu0 %v6292
    %v6388 = vpop.f32.mrb[0].mxu0
    %v6389 = vadd.f32 0.0, %v6388
    %v6390 = vpop.f32.mrb[0].mxu0
    %v6391 = vpop.f32.mrb[0].mxu0
    %v6392 = vadd.f32 0.0, %v6391
    %v6393 = vpop.f32.mrb[0].mxu0
    %6394 = vmatprep.mubr.bf16.mxu0 0
    %6395 = vmatmul.mubr.bf16.gmra.mrb[0].mxu0 %v6295
    %v6396 = vpop.f32.mrb[0].mxu0
    %v6397 = vadd.f32 0.0, %v6396
    %v6398 = vpop.f32.mrb[0].mxu0
    %v6399 = vpop.f32.mrb[0].mxu0
    %v6400 = vadd.f32 0.0, %v6399
    %v6401 = vpop.f32.mrb[0].mxu0
    %6402 = vmatprep.mubr.bf16.mxu0 0
    %6403 = vmatmul.mubr.bf16.gmra.mrb[0].mxu0 %v6298
    %v6404 = vpop.f32.mrb[0].mxu0
    %v6405 = vadd.f32 0.0, %v6404
    %v6406 = vpop.f32.mrb[0].mxu0
    %v6407 = vpop.f32.mrb[0].mxu0
    %v6408 = vadd.f32 0.0, %v6407
    %v6409 = vpop.f32.mrb[0].mxu0
    %6410 = vmatprep.mubr.bf16.mxu0 0
    %6411 = vmatmul.mubr.bf16.gmra.mrb[0].mxu0 %v6301
    %v6412 = vpop.f32.mrb[0].mxu0
    %v6413 = vadd.f32 0.0, %v6412
    %v6414 = vpop.f32.mrb[0].mxu0
    %v6415 = vpop.f32.mrb[0].mxu0
    %v6416 = vadd.f32 0.0, %v6415
    %v6417 = vpop.f32.mrb[0].mxu0
    %6418 = vmatprep.mubr.bf16.mxu0 0
    %6419 = vmatmul.mubr.bf16.gmra.mrb[0].mxu0 %v6304
    %v6420 = vpop.f32.mrb[0].mxu0
    %v6421 = vadd.f32 0.0, %v6420
    %v6422 = vpop.f32.mrb[0].mxu0
    %v6423 = vpop.f32.mrb[0].mxu0
    %v6424 = vadd.f32 0.0, %v6423
    %v6425 = vpop.f32.mrb[0].mxu0
    %6426 = vmatprep.mubr.bf16.mxu0 0
    %6427 = vmatmul.mubr.bf16.gmra.mrb[0].mxu0 %v6307
    %v6428 = vpop.f32.mrb[0].mxu0
    %v6429 = vadd.f32 0.0, %v6428
    %v6430 = vpop.f32.mrb[0].mxu0
    %v6431 = vpop.f32.mrb[0].mxu0
    %v6432 = vadd.f32 0.0, %v6431
    %v6433 = vpop.f32.mrb[0].mxu0
    %6434 = vmatprep.mubr.bf16.mxu0 0
    %6435 = vmatmul.mubr.bf16.gmra.mrb[0].mxu0 %v6310
    %v6436 = vpop.f32.mrb[0].mxu0
    %v6437 = vadd.f32 0.0, %v6436
    %v6438 = vpop.f32.mrb[0].mxu0
    %v6439 = vpop.f32.mrb[0].mxu0
    %v6440 = vadd.f32 0.0, %v6439
    %v6441 = vpop.f32.mrb[0].mxu0
    %6442 = vmatprep.mubr.bf16.mxu0 0
    %6443 = vmatmul.mubr.bf16.gmra.mrb[0].mxu0 %v6313
    %v6444 = vpop.f32.mrb[0].mxu0
    %v6445 = vadd.f32 0.0, %v6444
    %v6446 = vpop.f32.mrb[0].mxu0
    %v6447 = vpop.f32.mrb[0].mxu0
    %v6448 = vadd.f32 0.0, %v6447
    %v6449 = vpop.f32.mrb[0].mxu0
    %6450 = vmatprep.mubr.bf16.mxu0 0
    %6451 = vmatmul.mubr.bf16.gmra.mrb[0].mxu0 %v6316
    %v6452 = vpop.f32.mrb[0].mxu0
    %v6453 = vadd.f32 0.0, %v6452
    %v6454 = vpop.f32.mrb[0].mxu0
    %v6455 = vpop.f32.mrb[0].mxu0
    %v6456 = vadd.f32 0.0, %v6455
    %v6457 = vpop.f32.mrb[0].mxu0
    %6458 = vmatprep.mubr.bf16.mxu0 0
    %6459 = vmatmul.mubr.bf16.gmra.mrb[0].mxu0 %v6319
    %v6460 = vpop.f32.mrb[0].mxu0
    %v6461 = vadd.f32 0.0, %v6460
    %v6462 = vpop.f32.mrb[0].mxu0
    %v6463 = vpop.f32.mrb[0].mxu0
    %v6464 = vadd.f32 0.0, %v6463
    %v6465 = vpop.f32.mrb[0].mxu0
    %6466 = vmatprep.mubr.bf16.mxu0 0
    %6467 = vmatmul.mubr.bf16.gmra.mrb[0].mxu0 %v6322
    %v6468 = vpop.f32.mrb[0].mxu0
    %v6469 = vadd.f32 0.0, %v6468
    %v6470 = vpop.f32.mrb[0].mxu0
    %v6471 = vpop.f32.mrb[0].mxu0
    %v6472 = vadd.f32 0.0, %v6471
    %v6473 = vpop.f32.mrb[0].mxu0
    %6474 = vmatprep.mubr.bf16.mxu0 0
    %6475 = vmatmul.mubr.bf16.gmra.mrb[0].mxu0 %v6325
    %v6476 = vpop.f32.mrb[0].mxu0
    %v6477 = vadd.f32 0.0, %v6476
    %v6478 = vpop.f32.mrb[0].mxu0
    %v6479 = vpop.f32.mrb[0].mxu0
    %v6480 = vadd.f32 0.0, %v6479
    %v6481 = vpop.f32.mrb[0].mxu0
    %6482 = vmatprep.mubr.bf16.mxu0 0
    %6483 = vmatmul.mubr.bf16.gmra.mrb[0].mxu0 %v6328
    %v6484 = vpop.f32.mrb[0].mxu0
    %v6485 = vadd.f32 0.0, %v6484
    %v6486 = vpop.f32.mrb[0].mxu0
    %v6487 = vpop.f32.mrb[0].mxu0
    %v6488 = vadd.f32 0.0, %v6487
    %v6489 = vpop.f32.mrb[0].mxu0
    %6490 = vdwg.mxu0
    %v6491 = vadd.f32 %v6153, %v6365
    %v6492 = vadd.f32 %v6154, %v6368
    %v6493 = vadd.f32 %v6155, %v6373
    %v6494 = vadd.f32 %v6156, %v6376
    %v6495 = vadd.f32 %v6157, %v6381
    %v6496 = vadd.f32 %v6158, %v6384
    %v6497 = vadd.f32 %v6159, %v6389
    %v6498 = vadd.f32 %v6160, %v6392
    %v6499 = vadd.f32 %v6161, %v6397
    %v6500 = vadd.f32 %v6162, %v6400
    %v6501 = vadd.f32 %v6163, %v6405
    %v6502 = vadd.f32 %v6164, %v6408
    %v6503 = vadd.f32 %v6165, %v6413
    %v6504 = vadd.f32 %v6166, %v6416
    %v6505 = vadd.f32 %v6167, %v6421
    %v6506 = vadd.f32 %v6168, %v6424
    %v6507 = vadd.f32 %v6169, %v6429
    %v6508 = vadd.f32 %v6170, %v6432
    %v6509 = vadd.f32 %v6171, %v6437
    %v6510 = vadd.f32 %v6172, %v6440
    %v6511 = vadd.f32 %v6173, %v6445
    %v6512 = vadd.f32 %v6174, %v6448
    %v6513 = vadd.f32 %v6175, %v6453
    %v6514 = vadd.f32 %v6176, %v6456
    %v6515 = vadd.f32 %v6177, %v6461
    %v6516 = vadd.f32 %v6178, %v6464
    %v6517 = vadd.f32 %v6179, %v6469
    %v6518 = vadd.f32 %v6180, %v6472
    %v6519 = vadd.f32 %v6181, %v6477
    %v6520 = vadd.f32 %v6182, %v6480
    %v6521 = vadd.f32 %v6183, %v6485
    %v6522 = vadd.f32 %v6184, %v6488
    %v6523 = vld [vmem:[#allocation3 + $0x19] sm:$0xff]
    %v6524 = vld [vmem:[#allocation3 + $0x21] sm:$0xff]
    %v6525 = vld [vmem:[#allocation3 + $0x29] sm:$0xff]
    %v6526 = vld [vmem:[#allocation3 + $0x31] sm:$0xff]
    %v6527 = vld [vmem:[#allocation3 + $0x39] sm:$0xff]
    %v6528 = vld [vmem:[#allocation3 + $0x41] sm:$0xff]
    %v6529 = vld [vmem:[#allocation3 + $0x49] sm:$0xff]
    %v6530 = vld [vmem:[#allocation3 + $0x51] sm:$0xff]
    %v6531 = vld [vmem:[#allocation3 + $0x59] sm:$0xff]
    %v6532 = vld [vmem:[#allocation3 + $0x61] sm:$0xff]
    %v6533 = vld [vmem:[#allocation3 + $0x69] sm:$0xff]
    %v6534 = vld [vmem:[#allocation3 + $0x71] sm:$0xff]
    %v6535 = vld [vmem:[#allocation3 + $0x79] sm:$0xff]
    %v6536 = vld [vmem:[#allocation3 + $0x81] sm:$0xff]
    %v6537 = vld [vmem:[#allocation3 + $0x89] sm:$0xff]
    %v6538 = vld [vmem:[#allocation3 + $0x91] sm:$0xff]
    %v6539 = vld [vmem:[#allocation3 + $0x99] sm:$0xff]
    %v6540 = vld [vmem:[#allocation3 + $0xa1] sm:$0xff]
    %v6541 = vld [vmem:[#allocation3 + $0xa9] sm:$0xff]
    %v6542 = vld [vmem:[#allocation3 + $0xb1] sm:$0xff]
    %v6543 = vld [vmem:[#allocation3 + $0xb9] sm:$0xff]
    %v6544 = vld [vmem:[#allocation3 + $0xc1] sm:$0xff]
    %v6545 = vld [vmem:[#allocation3 + $0xc9] sm:$0xff]
    %v6546 = vld [vmem:[#allocation3 + $0xd1] sm:$0xff]
    %v6547 = vld [vmem:[#allocation3 + $0xd9] sm:$0xff]
    %v6548 = vld [vmem:[#allocation3 + $0xe1] sm:$0xff]
    %v6549 = vld [vmem:[#allocation3 + $0xe9] sm:$0xff]
    %v6550 = vld [vmem:[#allocation3 + $0xf1] sm:$0xff]
    %v6551 = vld [vmem:[#allocation3 + $0xf9] sm:$0xff]
    %v6552 = vld [vmem:[#allocation3 + $0x101] sm:$0xff]
    %v6553 = vld [vmem:[#allocation3 + $0x109] sm:$0xff]
    %v6554 = vld [vmem:[#allocation3 + $0x111] sm:$0xff]
    %v6555 = vsel %vm3475, %v6523, 0.0
    %v6556 = vsel %vm3476, %v6524, 0.0
    %v6557 = vsel %vm3477, %v6525, 0.0
    %v6558 = vsel %vm3478, %v6526, 0.0
    %v6559 = vsel %vm3479, %v6527, 0.0
    %v6560 = vsel %vm3480, %v6528, 0.0
    %v6561 = vsel %vm3481, %v6529, 0.0
    %v6562 = vsel %vm3482, %v6530, 0.0
    %v6563 = vsel %vm3483, %v6531, 0.0
    %v6564 = vsel %vm3484, %v6532, 0.0
    %v6565 = vsel %vm3485, %v6533, 0.0
    %v6566 = vsel %vm3486, %v6534, 0.0
    %v6567 = vsel %vm3487, %v6535, 0.0
    %v6568 = vsel %vm3488, %v6536, 0.0
    %v6569 = vsel %vm3489, %v6537, 0.0
    %v6570 = vsel %vm3490, %v6538, 0.0
    %v6571 = vsel %vm3491, %v6539, 0.0
    %v6572 = vsel %vm3492, %v6540, 0.0
    %v6573 = vsel %vm3493, %v6541, 0.0
    %v6574 = vsel %vm3494, %v6542, 0.0
    %v6575 = vsel %vm3495, %v6543, 0.0
    %v6576 = vsel %vm3496, %v6544, 0.0
    %v6577 = vsel %vm3497, %v6545, 0.0
    %v6578 = vsel %vm3498, %v6546, 0.0
    %v6579 = vsel %vm3499, %v6547, 0.0
    %v6580 = vsel %vm3500, %v6548, 0.0
    %v6581 = vsel %vm3501, %v6549, 0.0
    %v6582 = vsel %vm3502, %v6550, 0.0
    %v6583 = vsel %vm3503, %v6551, 0.0
    %v6584 = vsel %vm3504, %v6552, 0.0
    %v6585 = vsel %vm3505, %v6553, 0.0
    %v6586 = vsel %vm3506, %v6554, 0.0
    %v6587 = vpack.c.bf16 %v6556, %v6555
    %v6588 = vpack.c.bf16 %v6558, %v6557
    %v6589 = vpack.c.bf16 %v6560, %v6559
    %v6590 = vpack.c.bf16 %v6562, %v6561
    %v6591 = vpack.c.bf16 %v6564, %v6563
    %v6592 = vpack.c.bf16 %v6566, %v6565
    %v6593 = vpack.c.bf16 %v6568, %v6567
    %v6594 = vpack.c.bf16 %v6570, %v6569
    %v6595 = vpack.c.bf16 %v6572, %v6571
    %v6596 = vpack.c.bf16 %v6574, %v6573
    %v6597 = vpack.c.bf16 %v6576, %v6575
    %v6598 = vpack.c.bf16 %v6578, %v6577
    %v6599 = vpack.c.bf16 %v6580, %v6579
    %v6600 = vpack.c.bf16 %v6582, %v6581
    %v6601 = vpack.c.bf16 %v6584, %v6583
    %v6602 = vpack.c.bf16 %v6586, %v6585
    %s6603 = scalar_lea.vmem %s4, 128
    %v6604 = vld [vmem:[%s6603] sm:$0xf]
    %v6605 = vld [vmem:[%s6603 + $0x4] sm:$0xf]
    %v6606 = vld [vmem:[%s6603 + $0x8] sm:$0xf]
    %v6607 = vld [vmem:[%s6603 + $0xc] sm:$0xf]
    %v6612 = vunpack.c.l.b16 %v6604
    %v6613 = vunpack.c.l.b16 %v6605
    %v6614 = vunpack.c.l.b16 %v6606
    %v6615 = vunpack.c.l.b16 %v6607
    %v6616 = vpack.c.b16 %v6613, %v6612
    %v6617 = vpack.c.b16 %v6615, %v6614
    %v6621 = vsel %vm3915, %v6587, 0
    %v6624 = vsel %vm3915, %v6588, 0
    %v6627 = vsel %vm3915, %v6589, 0
    %v6630 = vsel %vm3915, %v6590, 0
    %v6633 = vsel %vm3915, %v6591, 0
    %v6636 = vsel %vm3915, %v6592, 0
    %v6639 = vsel %vm3915, %v6593, 0
    %v6642 = vsel %vm3915, %v6594, 0
    %v6645 = vsel %vm3915, %v6595, 0
    %v6648 = vsel %vm3915, %v6596, 0
    %v6651 = vsel %vm3915, %v6597, 0
    %v6654 = vsel %vm3915, %v6598, 0
    %v6657 = vsel %vm3915, %v6599, 0
    %v6660 = vsel %vm3915, %v6600, 0
    %v6663 = vsel %vm3915, %v6601, 0
    %v6666 = vsel %vm3915, %v6602, 0
    %6668 = vmatprep.subr.bf16.mxu0 0
    %6669 = vmatpush1.bf16.msra.mxu0 %v6616
    %6670 = vmatprep.subr.bf16.mxu0 0
    %6671 = vmatpush1.bf16.msra.mxu0 %v6617
    %6672 = vmatprep.subr.bf16.mxu0 0
    %6673 = vmatpush1.bf16.msra.mxu0 0
    %6674 = vmatprep.subr.bf16.mxu0 0
    %6675 = vmatpush1.bf16.msra.mxu0 0
    %6676 = vmatprep.subr.bf16.mxu0 0
    %6677 = vmatpush1.bf16.msra.mxu0 0
    %6678 = vmatprep.subr.bf16.mxu0 0
    %6679 = vmatpush1.bf16.msra.mxu0 0
    %6680 = vmatprep.subr.bf16.mxu0 0
    %6681 = vmatpush1.bf16.msra.mxu0 0
    %6682 = vmatprep.subr.bf16.mxu0 0
    %6683 = vmatpush1.bf16.msra.mxu0 0
    %6684 = vmatprep.subr.bf16.mxu0 0
    %6685 = vmatpush1.bf16.msra.mxu0 0
    %6686 = vmatprep.subr.bf16.mxu0 0
    %6687 = vmatpush1.bf16.msra.mxu0 0
    %6688 = vmatprep.subr.bf16.mxu0 0
    %6689 = vmatpush1.bf16.msra.mxu0 0
    %6690 = vmatprep.subr.bf16.mxu0 0
    %6691 = vmatpush1.bf16.msra.mxu0 0
    %6692 = vmatprep.subr.bf16.mxu0 0
    %6693 = vmatpush1.bf16.msra.mxu0 0
    %6694 = vmatprep.subr.bf16.mxu0 0
    %6695 = vmatpush1.bf16.msra.mxu0 0
    %6696 = vmatprep.subr.bf16.mxu0 0
    %6697 = vmatpush1.bf16.msra.mxu0 0
    %6698 = vmatprep.subr.bf16.mxu0 0
    %6699 = vmatpush1.bf16.msra.mxu0 0
    %6700 = vmatprep.mubr.bf16.mxu0 0
    %6701 = vmatmul.mubr.bf16.gmra.mrb[0].mxu0 %v6621
    %v6702 = vpop.f32.mrb[0].mxu0
    %v6703 = vadd.f32 0.0, %v6702
    %v6704 = vpop.f32.mrb[0].mxu0
    %v6705 = vpop.f32.mrb[0].mxu0
    %v6706 = vadd.f32 0.0, %v6705
    %v6707 = vpop.f32.mrb[0].mxu0
    %6708 = vmatprep.mubr.bf16.mxu0 0
    %6709 = vmatmul.mubr.bf16.gmra.mrb[0].mxu0 %v6624
    %v6710 = vpop.f32.mrb[0].mxu0
    %v6711 = vadd.f32 0.0, %v6710
    %v6712 = vpop.f32.mrb[0].mxu0
    %v6713 = vpop.f32.mrb[0].mxu0
    %v6714 = vadd.f32 0.0, %v6713
    %v6715 = vpop.f32.mrb[0].mxu0
    %6716 = vmatprep.mubr.bf16.mxu0 0
    %6717 = vmatmul.mubr.bf16.gmra.mrb[0].mxu0 %v6627
    %v6718 = vpop.f32.mrb[0].mxu0
    %v6719 = vadd.f32 0.0, %v6718
    %v6720 = vpop.f32.mrb[0].mxu0
    %v6721 = vpop.f32.mrb[0].mxu0
    %v6722 = vadd.f32 0.0, %v6721
    %v6723 = vpop.f32.mrb[0].mxu0
    %6724 = vmatprep.mubr.bf16.mxu0 0
    %6725 = vmatmul.mubr.bf16.gmra.mrb[0].mxu0 %v6630
    %v6726 = vpop.f32.mrb[0].mxu0
    %v6727 = vadd.f32 0.0, %v6726
    %v6728 = vpop.f32.mrb[0].mxu0
    %v6729 = vpop.f32.mrb[0].mxu0
    %v6730 = vadd.f32 0.0, %v6729
    %v6731 = vpop.f32.mrb[0].mxu0
    %6732 = vmatprep.mubr.bf16.mxu0 0
    %6733 = vmatmul.mubr.bf16.gmra.mrb[0].mxu0 %v6633
    %v6734 = vpop.f32.mrb[0].mxu0
    %v6735 = vadd.f32 0.0, %v6734
    %v6736 = vpop.f32.mrb[0].mxu0
    %v6737 = vpop.f32.mrb[0].mxu0
    %v6738 = vadd.f32 0.0, %v6737
    %v6739 = vpop.f32.mrb[0].mxu0
    %6740 = vmatprep.mubr.bf16.mxu0 0
    %6741 = vmatmul.mubr.bf16.gmra.mrb[0].mxu0 %v6636
    %v6742 = vpop.f32.mrb[0].mxu0
    %v6743 = vadd.f32 0.0, %v6742
    %v6744 = vpop.f32.mrb[0].mxu0
    %v6745 = vpop.f32.mrb[0].mxu0
    %v6746 = vadd.f32 0.0, %v6745
    %v6747 = vpop.f32.mrb[0].mxu0
    %6748 = vmatprep.mubr.bf16.mxu0 0
    %6749 = vmatmul.mubr.bf16.gmra.mrb[0].mxu0 %v6639
    %v6750 = vpop.f32.mrb[0].mxu0
    %v6751 = vadd.f32 0.0, %v6750
    %v6752 = vpop.f32.mrb[0].mxu0
    %v6753 = vpop.f32.mrb[0].mxu0
    %v6754 = vadd.f32 0.0, %v6753
    %v6755 = vpop.f32.mrb[0].mxu0
    %6756 = vmatprep.mubr.bf16.mxu0 0
    %6757 = vmatmul.mubr.bf16.gmra.mrb[0].mxu0 %v6642
    %v6758 = vpop.f32.mrb[0].mxu0
    %v6759 = vadd.f32 0.0, %v6758
    %v6760 = vpop.f32.mrb[0].mxu0
    %v6761 = vpop.f32.mrb[0].mxu0
    %v6762 = vadd.f32 0.0, %v6761
    %v6763 = vpop.f32.mrb[0].mxu0
    %6764 = vmatprep.mubr.bf16.mxu0 0
    %6765 = vmatmul.mubr.bf16.gmra.mrb[0].mxu0 %v6645
    %v6766 = vpop.f32.mrb[0].mxu0
    %v6767 = vadd.f32 0.0, %v6766
    %v6768 = vpop.f32.mrb[0].mxu0
    %v6769 = vpop.f32.mrb[0].mxu0
    %v6770 = vadd.f32 0.0, %v6769
    %v6771 = vpop.f32.mrb[0].mxu0
    %6772 = vmatprep.mubr.bf16.mxu0 0
    %6773 = vmatmul.mubr.bf16.gmra.mrb[0].mxu0 %v6648
    %v6774 = vpop.f32.mrb[0].mxu0
    %v6775 = vadd.f32 0.0, %v6774
    %v6776 = vpop.f32.mrb[0].mxu0
    %v6777 = vpop.f32.mrb[0].mxu0
    %v6778 = vadd.f32 0.0, %v6777
    %v6779 = vpop.f32.mrb[0].mxu0
    %6780 = vmatprep.mubr.bf16.mxu0 0
    %6781 = vmatmul.mubr.bf16.gmra.mrb[0].mxu0 %v6651
    %v6782 = vpop.f32.mrb[0].mxu0
    %v6783 = vadd.f32 0.0, %v6782
    %v6784 = vpop.f32.mrb[0].mxu0
    %v6785 = vpop.f32.mrb[0].mxu0
    %v6786 = vadd.f32 0.0, %v6785
    %v6787 = vpop.f32.mrb[0].mxu0
    %6788 = vmatprep.mubr.bf16.mxu0 0
    %6789 = vmatmul.mubr.bf16.gmra.mrb[0].mxu0 %v6654
    %v6790 = vpop.f32.mrb[0].mxu0
    %v6791 = vadd.f32 0.0, %v6790
    %v6792 = vpop.f32.mrb[0].mxu0
    %v6793 = vpop.f32.mrb[0].mxu0
    %v6794 = vadd.f32 0.0, %v6793
    %v6795 = vpop.f32.mrb[0].mxu0
    %6796 = vmatprep.mubr.bf16.mxu0 0
    %6797 = vmatmul.mubr.bf16.gmra.mrb[0].mxu0 %v6657
    %v6798 = vpop.f32.mrb[0].mxu0
    %v6799 = vadd.f32 0.0, %v6798
    %v6800 = vpop.f32.mrb[0].mxu0
    %v6801 = vpop.f32.mrb[0].mxu0
    %v6802 = vadd.f32 0.0, %v6801
    %v6803 = vpop.f32.mrb[0].mxu0
    %6804 = vmatprep.mubr.bf16.mxu0 0
    %6805 = vmatmul.mubr.bf16.gmra.mrb[0].mxu0 %v6660
    %v6806 = vpop.f32.mrb[0].mxu0
    %v6807 = vadd.f32 0.0, %v6806
    %v6808 = vpop.f32.mrb[0].mxu0
    %v6809 = vpop.f32.mrb[0].mxu0
    %v6810 = vadd.f32 0.0, %v6809
    %v6811 = vpop.f32.mrb[0].mxu0
    %6812 = vmatprep.mubr.bf16.mxu0 0
    %6813 = vmatmul.mubr.bf16.gmra.mrb[0].mxu0 %v6663
    %v6814 = vpop.f32.mrb[0].mxu0
    %v6815 = vadd.f32 0.0, %v6814
    %v6816 = vpop.f32.mrb[0].mxu0
    %v6817 = vpop.f32.mrb[0].mxu0
    %v6818 = vadd.f32 0.0, %v6817
    %v6819 = vpop.f32.mrb[0].mxu0
    %6820 = vmatprep.mubr.bf16.mxu0 0
    %6821 = vmatmul.mubr.bf16.gmra.mrb[0].mxu0 %v6666
    %v6822 = vpop.f32.mrb[0].mxu0
    %v6823 = vadd.f32 0.0, %v6822
    %v6824 = vpop.f32.mrb[0].mxu0
    %v6825 = vpop.f32.mrb[0].mxu0
    %v6826 = vadd.f32 0.0, %v6825
    %v6827 = vpop.f32.mrb[0].mxu0
    %6828 = vdwg.mxu0
    %v6829 = vadd.f32 %v6491, %v6703
    %v6830 = vadd.f32 %v6492, %v6706
    %v6831 = vadd.f32 %v6493, %v6711
    %v6832 = vadd.f32 %v6494, %v6714
    %v6833 = vadd.f32 %v6495, %v6719
    %v6834 = vadd.f32 %v6496, %v6722
    %v6835 = vadd.f32 %v6497, %v6727
    %v6836 = vadd.f32 %v6498, %v6730
    %v6837 = vadd.f32 %v6499, %v6735
    %v6838 = vadd.f32 %v6500, %v6738
    %v6839 = vadd.f32 %v6501, %v6743
    %v6840 = vadd.f32 %v6502, %v6746
    %v6841 = vadd.f32 %v6503, %v6751
    %v6842 = vadd.f32 %v6504, %v6754
    %v6843 = vadd.f32 %v6505, %v6759
    %v6844 = vadd.f32 %v6506, %v6762
    %v6845 = vadd.f32 %v6507, %v6767
    %v6846 = vadd.f32 %v6508, %v6770
    %v6847 = vadd.f32 %v6509, %v6775
    %v6848 = vadd.f32 %v6510, %v6778
    %v6849 = vadd.f32 %v6511, %v6783
    %v6850 = vadd.f32 %v6512, %v6786
    %v6851 = vadd.f32 %v6513, %v6791
    %v6852 = vadd.f32 %v6514, %v6794
    %v6853 = vadd.f32 %v6515, %v6799
    %v6854 = vadd.f32 %v6516, %v6802
    %v6855 = vadd.f32 %v6517, %v6807
    %v6856 = vadd.f32 %v6518, %v6810
    %v6857 = vadd.f32 %v6519, %v6815
    %v6858 = vadd.f32 %v6520, %v6818
    %v6859 = vadd.f32 %v6521, %v6823
    %v6860 = vadd.f32 %v6522, %v6826
    %v6861 = vld [vmem:[%s5] sm:$0x1]
    %v6863 = vlaneseq
    %v6864 = vshrl.u32 %v6863, 7
    %v6865 = vsub.s32 0, %v6864
    %v6866 = vrot.slane %v6861, %v6865
    %v6868 = vmul.f32 %v6829, %v6866
    %v6869 = vmul.f32 %v6830, %v6866
    %v6870 = vmul.f32 %v6831, %v6866
    %v6871 = vmul.f32 %v6832, %v6866
    %v6872 = vmul.f32 %v6833, %v6866
    %v6873 = vmul.f32 %v6834, %v6866
    %v6874 = vmul.f32 %v6835, %v6866
    %v6875 = vmul.f32 %v6836, %v6866
    %v6876 = vmul.f32 %v6837, %v6866
    %v6877 = vmul.f32 %v6838, %v6866
    %v6878 = vmul.f32 %v6839, %v6866
    %v6879 = vmul.f32 %v6840, %v6866
    %v6880 = vmul.f32 %v6841, %v6866
    %v6881 = vmul.f32 %v6842, %v6866
    %v6882 = vmul.f32 %v6843, %v6866
    %v6883 = vmul.f32 %v6844, %v6866
    %v6884 = vmul.f32 %v6845, %v6866
    %v6885 = vmul.f32 %v6846, %v6866
    %v6886 = vmul.f32 %v6847, %v6866
    %v6887 = vmul.f32 %v6848, %v6866
    %v6888 = vmul.f32 %v6849, %v6866
    %v6889 = vmul.f32 %v6850, %v6866
    %v6890 = vmul.f32 %v6851, %v6866
    %v6891 = vmul.f32 %v6852, %v6866
    %v6892 = vmul.f32 %v6853, %v6866
    %v6893 = vmul.f32 %v6854, %v6866
    %v6894 = vmul.f32 %v6855, %v6866
    %v6895 = vmul.f32 %v6856, %v6866
    %v6896 = vmul.f32 %v6857, %v6866
    %v6897 = vmul.f32 %v6858, %v6866
    %v6898 = vmul.f32 %v6859, %v6866
    %v6899 = vmul.f32 %v6860, %v6866
    %v6900 = vld [vmem:[%s6] sm:$0x1]
    %v6902 = vlaneseq
    %v6903 = vshrl.u32 %v6902, 7
    %v6904 = vsub.s32 0, %v6903
    %v6905 = vrot.slane %v6900, %v6904
    %v6907 = vadd.f32 %v6868, %v6905
    %v6908 = vadd.f32 %v6869, %v6905
    %v6909 = vadd.f32 %v6870, %v6905
    %v6910 = vadd.f32 %v6871, %v6905
    %v6911 = vadd.f32 %v6872, %v6905
    %v6912 = vadd.f32 %v6873, %v6905
    %v6913 = vadd.f32 %v6874, %v6905
    %v6914 = vadd.f32 %v6875, %v6905
    %v6915 = vadd.f32 %v6876, %v6905
    %v6916 = vadd.f32 %v6877, %v6905
    %v6917 = vadd.f32 %v6878, %v6905
    %v6918 = vadd.f32 %v6879, %v6905
    %v6919 = vadd.f32 %v6880, %v6905
    %v6920 = vadd.f32 %v6881, %v6905
    %v6921 = vadd.f32 %v6882, %v6905
    %v6922 = vadd.f32 %v6883, %v6905
    %v6923 = vadd.f32 %v6884, %v6905
    %v6924 = vadd.f32 %v6885, %v6905
    %v6925 = vadd.f32 %v6886, %v6905
    %v6926 = vadd.f32 %v6887, %v6905
    %v6927 = vadd.f32 %v6888, %v6905
    %v6928 = vadd.f32 %v6889, %v6905
    %v6929 = vadd.f32 %v6890, %v6905
    %v6930 = vadd.f32 %v6891, %v6905
    %v6931 = vadd.f32 %v6892, %v6905
    %v6932 = vadd.f32 %v6893, %v6905
    %v6933 = vadd.f32 %v6894, %v6905
    %v6934 = vadd.f32 %v6895, %v6905
    %v6935 = vadd.f32 %v6896, %v6905
    %v6936 = vadd.f32 %v6897, %v6905
    %v6937 = vadd.f32 %v6898, %v6905
    %v6938 = vadd.f32 %v6899, %v6905
    %v6939 = vsel %vm66, %v6907, 0.0
    %v6940 = vsel %vm66, %v6908, 0.0
    %v6941 = vadd.f32 %v6939, %v6940
    %v6942 = vsel %vm66, %v6909, 0.0
    %v6943 = vadd.f32 %v6941, %v6942
    %v6944 = vsel %vm66, %v6910, 0.0
    %v6945 = vadd.f32 %v6943, %v6944
    %v6946 = vsel %vm66, %v6911, 0.0
    %v6947 = vadd.f32 %v6945, %v6946
    %v6948 = vsel %vm66, %v6912, 0.0
    %v6949 = vadd.f32 %v6947, %v6948
    %v6950 = vsel %vm66, %v6913, 0.0
    %v6951 = vadd.f32 %v6949, %v6950
    %v6952 = vsel %vm66, %v6914, 0.0
    %v6953 = vadd.f32 %v6951, %v6952
    %v6954 = vrot.slane %v6953, 4
    %v6955 = vadd.f32 %v6953, %v6954
    %v6956 = vrot.slane %v6955, 2
    %v6957 = vadd.f32 %v6955, %v6956
    %v6958 = vrot.slane %v6957, 1
    %v6959 = vadd.f32 %v6957, %v6958
    %v6960 = vsel %vm66, %v6915, 0.0
    %v6961 = vsel %vm66, %v6916, 0.0
    %v6962 = vadd.f32 %v6960, %v6961
    %v6963 = vsel %vm66, %v6917, 0.0
    %v6964 = vadd.f32 %v6962, %v6963
    %v6965 = vsel %vm66, %v6918, 0.0
    %v6966 = vadd.f32 %v6964, %v6965
    %v6967 = vsel %vm66, %v6919, 0.0
    %v6968 = vadd.f32 %v6966, %v6967
    %v6969 = vsel %vm66, %v6920, 0.0
    %v6970 = vadd.f32 %v6968, %v6969
    %v6971 = vsel %vm66, %v6921, 0.0
    %v6972 = vadd.f32 %v6970, %v6971
    %v6973 = vsel %vm66, %v6922, 0.0
    %v6974 = vadd.f32 %v6972, %v6973
    %v6975 = vrot.slane %v6974, 4
    %v6976 = vadd.f32 %v6974, %v6975
    %v6977 = vrot.slane %v6976, 2
    %v6978 = vadd.f32 %v6976, %v6977
    %v6979 = vrot.slane %v6978, 1
    %v6980 = vadd.f32 %v6978, %v6979
    %v6981 = vsel %vm66, %v6923, 0.0
    %v6982 = vsel %vm66, %v6924, 0.0
    %v6983 = vadd.f32 %v6981, %v6982
    %v6984 = vsel %vm66, %v6925, 0.0
    %v6985 = vadd.f32 %v6983, %v6984
    %v6986 = vsel %vm66, %v6926, 0.0
    %v6987 = vadd.f32 %v6985, %v6986
    %v6988 = vsel %vm66, %v6927, 0.0
    %v6989 = vadd.f32 %v6987, %v6988
    %v6990 = vsel %vm66, %v6928, 0.0
    %v6991 = vadd.f32 %v6989, %v6990
    %v6992 = vsel %vm66, %v6929, 0.0
    %v6993 = vadd.f32 %v6991, %v6992
    %v6994 = vsel %vm66, %v6930, 0.0
    %v6995 = vadd.f32 %v6993, %v6994
    %v6996 = vrot.slane %v6995, 4
    %v6997 = vadd.f32 %v6995, %v6996
    %v6998 = vrot.slane %v6997, 2
    %v6999 = vadd.f32 %v6997, %v6998
    %v7000 = vrot.slane %v6999, 1
    %v7001 = vadd.f32 %v6999, %v7000
    %v7002 = vsel %vm66, %v6931, 0.0
    %v7003 = vsel %vm66, %v6932, 0.0
    %v7004 = vadd.f32 %v7002, %v7003
    %v7005 = vsel %vm66, %v6933, 0.0
    %v7006 = vadd.f32 %v7004, %v7005
    %v7007 = vsel %vm66, %v6934, 0.0
    %v7008 = vadd.f32 %v7006, %v7007
    %v7009 = vsel %vm66, %v6935, 0.0
    %v7010 = vadd.f32 %v7008, %v7009
    %v7011 = vsel %vm66, %v6936, 0.0
    %v7012 = vadd.f32 %v7010, %v7011
    %v7013 = vsel %vm66, %v6937, 0.0
    %v7014 = vadd.f32 %v7012, %v7013
    %v7015 = vsel %vm66, %v6938, 0.0
    %v7016 = vadd.f32 %v7014, %v7015
    %v7017 = vrot.slane %v7016, 4
    %v7018 = vadd.f32 %v7016, %v7017
    %v7019 = vrot.slane %v7018, 2
    %v7020 = vadd.f32 %v7018, %v7019
    %v7021 = vrot.slane %v7020, 1
    %v7022 = vadd.f32 %v7020, %v7021
    %v7023 = vmul.f32 %v6959, 0.015625
    %v7024 = vmul.f32 %v6980, 0.015625
    %v7025 = vmul.f32 %v7001, 0.015625
    %v7026 = vmul.f32 %v7022, 0.015625
    %v7027 = vld [vmem:[%s7] sm:$0xff]
    %v7028 = vld [vmem:[%s7 + $0x8] sm:$0xff]
    %vm7033 = vcmask 1041409
    %v7034 = vsel %vm7033, %v7024, %v7023
    %vm7035 = vcmask 1042434
    %v7036 = vsel %vm7035, %v7025, %v7034
    %vm7037 = vcmask 1043459
    %v7038 = vsel %vm7037, %v7026, %v7036
    %v7039 = vsel %vm66, %v7038, 0
    %7041 = vmatprep.subr.mxu0 0.0
    %7042 = vmatpush1.msra.mxu0 %v7027
    %7043 = vmatprep.subr.mxu0 0.0
    %7044 = vmatpush1.msra.mxu0 %v7028
    %7045 = vmatprep.subr.mxu0 0.0
    %7046 = vmatpush1.msra.mxu0 0.0
    %7047 = vmatprep.subr.mxu0 0.0
    %7048 = vmatpush1.msra.mxu0 0.0
    %7049 = vmatprep.subr.mxu0 0.0
    %7050 = vmatpush1.msra.mxu0 0.0
    %7051 = vmatprep.subr.mxu0 0.0
    %7052 = vmatpush1.msra.mxu0 0.0
    %7053 = vmatprep.subr.mxu0 0.0
    %7054 = vmatpush1.msra.mxu0 0.0
    %7055 = vmatprep.subr.mxu0 0.0
    %7056 = vmatpush1.msra.mxu0 0.0
    %7057 = vmatprep.subr.mxu0 0.0
    %7058 = vmatpush1.msra.mxu0 0.0
    %7059 = vmatprep.subr.mxu0 0.0
    %7060 = vmatpush1.msra.mxu0 0.0
    %7061 = vmatprep.subr.mxu0 0.0
    %7062 = vmatpush1.msra.mxu0 0.0
    %7063 = vmatprep.subr.mxu0 0.0
    %7064 = vmatpush1.msra.mxu0 0.0
    %7065 = vmatprep.subr.mxu0 0.0
    %7066 = vmatpush1.msra.mxu0 0.0
    %7067 = vmatprep.subr.mxu0 0.0
    %7068 = vmatpush1.msra.mxu0 0.0
    %7069 = vmatprep.subr.mxu0 0.0
    %7070 = vmatpush1.msra.mxu0 0.0
    %7071 = vmatprep.subr.mxu0 0.0
    %7072 = vmatpush1.msra.mxu0 0.0
    %7073 = vmatprep.subr.mxu0 0.0
    %7074 = vmatpush1.msra.mxu0 0.0
    %7075 = vmatprep.subr.mxu0 0.0
    %7076 = vmatpush1.msra.mxu0 0.0
    %7077 = vmatprep.subr.mxu0 0.0
    %7078 = vmatpush1.msra.mxu0 0.0
    %7079 = vmatprep.subr.mxu0 0.0
    %7080 = vmatpush1.msra.mxu0 0.0
    %7081 = vmatprep.subr.mxu0 0.0
    %7082 = vmatpush1.msra.mxu0 0.0
    %7083 = vmatprep.subr.mxu0 0.0
    %7084 = vmatpush1.msra.mxu0 0.0
    %7085 = vmatprep.subr.mxu0 0.0
    %7086 = vmatpush1.msra.mxu0 0.0
    %7087 = vmatprep.subr.mxu0 0.0
    %7088 = vmatpush1.msra.mxu0 0.0
    %7089 = vmatprep.subr.mxu0 0.0
    %7090 = vmatpush1.msra.mxu0 0.0
    %7091 = vmatprep.subr.mxu0 0.0
    %7092 = vmatpush1.msra.mxu0 0.0
    %7093 = vmatprep.subr.mxu0 0.0
    %7094 = vmatpush1.msra.mxu0 0.0
    %7095 = vmatprep.subr.mxu0 0.0
    %7096 = vmatpush1.msra.mxu0 0.0
    %7097 = vmatprep.subr.mxu0 0.0
    %7098 = vmatpush1.msra.mxu0 0.0
    %7099 = vmatprep.subr.mxu0 0.0
    %7100 = vmatpush1.msra.mxu0 0.0
    %7101 = vmatprep.subr.mxu0 0.0
    %7102 = vmatpush1.msra.mxu0 0.0
    %7103 = vmatprep.subr.mxu0 0.0
    %7104 = vmatpush1.msra.mxu0 0.0
    %7105 = vmatprep.mubr.f32.mxu0 0.0
    %7106 = vmatmul.mubr.f32.gmra.mrb[0].mxu0 %v7039
    %v7107 = vpop.f32.mrb[0].mxu0
    %v7108 = vadd.f32 0.0, %v7107
    %v7109 = vpop.f32.mrb[0].mxu0
    %7110 = vdwg.mxu0
    %v7111 = vmax.f32 %v7108, 0.0
    %v7112 = vld [vmem:[%s8] sm:$0xf]
    %vm7113 = vcmask 31744
    %v7115 = vsel %vm7113, %v7111, 0
    %vm7117 = vcmask 1043456
    %v7119 = vsel %vm7117, %v7112, 0
    %7121 = vmatprep.subr.mxu0 0.0
    %7122 = vmatpush1.msra.mxu0 %v7119
    %7123 = vmatprep.subr.mxu0 0.0
    %7124 = vmatpush1.msra.mxu0 0.0
    %7125 = vmatprep.subr.mxu0 0.0
    %7126 = vmatpush1.msra.mxu0 0.0
    %7127 = vmatprep.subr.mxu0 0.0
    %7128 = vmatpush1.msra.mxu0 0.0
    %7129 = vmatprep.subr.mxu0 0.0
    %7130 = vmatpush1.msra.mxu0 0.0
    %7131 = vmatprep.subr.mxu0 0.0
    %7132 = vmatpush1.msra.mxu0 0.0
    %7133 = vmatprep.subr.mxu0 0.0
    %7134 = vmatpush1.msra.mxu0 0.0
    %7135 = vmatprep.subr.mxu0 0.0
    %7136 = vmatpush1.msra.mxu0 0.0
    %7137 = vmatprep.subr.mxu0 0.0
    %7138 = vmatpush1.msra.mxu0 0.0
    %7139 = vmatprep.subr.mxu0 0.0
    %7140 = vmatpush1.msra.mxu0 0.0
    %7141 = vmatprep.subr.mxu0 0.0
    %7142 = vmatpush1.msra.mxu0 0.0
    %7143 = vmatprep.subr.mxu0 0.0
    %7144 = vmatpush1.msra.mxu0 0.0
    %7145 = vmatprep.subr.mxu0 0.0
    %7146 = vmatpush1.msra.mxu0 0.0
    %7147 = vmatprep.subr.mxu0 0.0
    %7148 = vmatpush1.msra.mxu0 0.0
    %7149 = vmatprep.subr.mxu0 0.0
    %7150 = vmatpush1.msra.mxu0 0.0
    %7151 = vmatprep.subr.mxu0 0.0
    %7152 = vmatpush1.msra.mxu0 0.0
    %7153 = vmatprep.subr.mxu0 0.0
    %7154 = vmatpush1.msra.mxu0 0.0
    %7155 = vmatprep.subr.mxu0 0.0
    %7156 = vmatpush1.msra.mxu0 0.0
    %7157 = vmatprep.subr.mxu0 0.0
    %7158 = vmatpush1.msra.mxu0 0.0
    %7159 = vmatprep.subr.mxu0 0.0
    %7160 = vmatpush1.msra.mxu0 0.0
    %7161 = vmatprep.subr.mxu0 0.0
    %7162 = vmatpush1.msra.mxu0 0.0
    %7163 = vmatprep.subr.mxu0 0.0
    %7164 = vmatpush1.msra.mxu0 0.0
    %7165 = vmatprep.subr.mxu0 0.0
    %7166 = vmatpush1.msra.mxu0 0.0
    %7167 = vmatprep.subr.mxu0 0.0
    %7168 = vmatpush1.msra.mxu0 0.0
    %7169 = vmatprep.subr.mxu0 0.0
    %7170 = vmatpush1.msra.mxu0 0.0
    %7171 = vmatprep.subr.mxu0 0.0
    %7172 = vmatpush1.msra.mxu0 0.0
    %7173 = vmatprep.subr.mxu0 0.0
    %7174 = vmatpush1.msra.mxu0 0.0
    %7175 = vmatprep.subr.mxu0 0.0
    %7176 = vmatpush1.msra.mxu0 0.0
    %7177 = vmatprep.subr.mxu0 0.0
    %7178 = vmatpush1.msra.mxu0 0.0
    %7179 = vmatprep.subr.mxu0 0.0
    %7180 = vmatpush1.msra.mxu0 0.0
    %7181 = vmatprep.subr.mxu0 0.0
    %7182 = vmatpush1.msra.mxu0 0.0
    %7183 = vmatprep.subr.mxu0 0.0
    %7184 = vmatpush1.msra.mxu0 0.0
    %7185 = vmatprep.mubr.f32.mxu0 0.0
    %7186 = vmatmul.mubr.f32.gmra.mrb[0].mxu0 %v7115
    %v7187 = vpop.f32.mrb[0].mxu0
    %v7188 = vadd.f32 0.0, %v7187
    %v7189 = vpop.f32.mrb[0].mxu0
    %7190 = vdwg.mxu0
    %v7191 = vsub.f32 0.0, %v7188
    %v7192 = vmul.f32 %v7191, 1.442695
    %v7193 = vpow.pop %v7192
    %v7194 = vadd.f32 %v7193, 1.0
    %v7195 = vrcp.pop %v7194
    %v7198 = vunpack.c.l.s4 1966171168
    %v7199 = vunpack.c.0.s8 %v7198
    %v7200 = vlaneseq
    %v7201 = vshrl.u32 %v7200, 7
    %v7202 = vsub.s32 %v7199, %v7201
    %v7203 = vrot.slane %v7195, %v7202
    %v7204 = vcombine.high %v7203, %v7203
    %v7206 = vunpack.c.l.s4 1966171168
    %v7207 = vunpack.c.0.s8 %v7206
    %v7208 = vlaneseq
    %v7209 = vshrl.u32 %v7208, 7
    %v7210 = vsub.s32 %v7207, %v7209
    %v7211 = vrot.slane %v7203, %v7210
    %v7213 = vunpack.c.l.s4 1966171168
    %v7214 = vunpack.c.0.s8 %v7213
    %v7215 = vlaneseq
    %v7216 = vshrl.u32 %v7215, 7
    %v7217 = vsub.s32 %v7214, %v7216
    %v7218 = vrot.slane %v7204, %v7217
    %v7219 = vcombine.high %v7211, %v7211
    %v7220 = vcombine.high %v7218, %v7218
    %v7221 = vlaneseq
    %v7222 = vshrl.u32 %v7221, 7
    %v7223 = vsub.s32 0, %v7222
    %v7224 = vrot.slane %v7211, %v7223
    %v7225 = vlaneseq
    %v7226 = vshrl.u32 %v7225, 7
    %v7227 = vsub.s32 0, %v7226
    %v7228 = vrot.slane %v7218, %v7227
    %v7229 = vlaneseq
    %v7230 = vshrl.u32 %v7229, 7
    %v7231 = vsub.s32 0, %v7230
    %v7232 = vrot.slane %v7219, %v7231
    %v7233 = vlaneseq
    %v7234 = vshrl.u32 %v7233, 7
    %v7235 = vsub.s32 0, %v7234
    %v7236 = vrot.slane %v7220, %v7235
    %v7241 = vmul.f32 %v6907, %v7224
    %v7242 = vmul.f32 %v6908, %v7224
    %v7243 = vmul.f32 %v6909, %v7224
    %v7244 = vmul.f32 %v6910, %v7224
    %v7245 = vmul.f32 %v6911, %v7224
    %v7246 = vmul.f32 %v6912, %v7224
    %v7247 = vmul.f32 %v6913, %v7224
    %v7248 = vmul.f32 %v6914, %v7224
    %v7249 = vmul.f32 %v6915, %v7228
    %v7250 = vmul.f32 %v6916, %v7228
    %v7251 = vmul.f32 %v6917, %v7228
    %v7252 = vmul.f32 %v6918, %v7228
    %v7253 = vmul.f32 %v6919, %v7228
    %v7254 = vmul.f32 %v6920, %v7228
    %v7255 = vmul.f32 %v6921, %v7228
    %v7256 = vmul.f32 %v6922, %v7228
    %v7257 = vmul.f32 %v6923, %v7232
    %v7258 = vmul.f32 %v6924, %v7232
    %v7259 = vmul.f32 %v6925, %v7232
    %v7260 = vmul.f32 %v6926, %v7232
    %v7261 = vmul.f32 %v6927, %v7232
    %v7262 = vmul.f32 %v6928, %v7232
    %v7263 = vmul.f32 %v6929, %v7232
    %v7264 = vmul.f32 %v6930, %v7232
    %v7265 = vmul.f32 %v6931, %v7236
    %v7266 = vmul.f32 %v6932, %v7236
    %v7267 = vmul.f32 %v6933, %v7236
    %v7268 = vmul.f32 %v6934, %v7236
    %v7269 = vmul.f32 %v6935, %v7236
    %v7270 = vmul.f32 %v6936, %v7236
    %v7271 = vmul.f32 %v6937, %v7236
    %v7272 = vmul.f32 %v6938, %v7236
    %v7273 = vadd.f32 %v7241, %v34
    %v7274 = vadd.f32 %v7242, %v35
    %v7275 = vadd.f32 %v7243, %v36
    %v7276 = vadd.f32 %v7244, %v37
    %v7277 = vadd.f32 %v7245, %v38
    %v7278 = vadd.f32 %v7246, %v39
    %v7279 = vadd.f32 %v7247, %v40
    %v7280 = vadd.f32 %v7248, %v41
    %v7281 = vadd.f32 %v7249, %v42
    %v7282 = vadd.f32 %v7250, %v43
    %v7283 = vadd.f32 %v7251, %v44
    %v7284 = vadd.f32 %v7252, %v45
    %v7285 = vadd.f32 %v7253, %v46
    %v7286 = vadd.f32 %v7254, %v47
    %v7287 = vadd.f32 %v7255, %v48
    %v7288 = vadd.f32 %v7256, %v49
    %v7289 = vadd.f32 %v7257, %v50
    %v7290 = vadd.f32 %v7258, %v51
    %v7291 = vadd.f32 %v7259, %v52
    %v7292 = vadd.f32 %v7260, %v53
    %v7293 = vadd.f32 %v7261, %v54
    %v7294 = vadd.f32 %v7262, %v55
    %v7295 = vadd.f32 %v7263, %v56
    %v7296 = vadd.f32 %v7264, %v57
    %v7297 = vadd.f32 %v7265, %v58
    %v7298 = vadd.f32 %v7266, %v59
    %v7299 = vadd.f32 %v7267, %v60
    %v7300 = vadd.f32 %v7268, %v61
    %v7301 = vadd.f32 %v7269, %v62
    %v7302 = vadd.f32 %v7270, %v63
    %v7303 = vadd.f32 %v7271, %v64
    %v7304 = vadd.f32 %v7272, %v65
    %v7305 = vmax.f32 %v7273, 0.0
    %v7306 = vmax.f32 %v7274, 0.0
    %v7307 = vmax.f32 %v7275, 0.0
    %v7308 = vmax.f32 %v7276, 0.0
    %v7309 = vmax.f32 %v7277, 0.0
    %v7310 = vmax.f32 %v7278, 0.0
    %v7311 = vmax.f32 %v7279, 0.0
    %v7312 = vmax.f32 %v7280, 0.0
    %v7313 = vmax.f32 %v7281, 0.0
    %v7314 = vmax.f32 %v7282, 0.0
    %v7315 = vmax.f32 %v7283, 0.0
    %v7316 = vmax.f32 %v7284, 0.0
    %v7317 = vmax.f32 %v7285, 0.0
    %v7318 = vmax.f32 %v7286, 0.0
    %v7319 = vmax.f32 %v7287, 0.0
    %v7320 = vmax.f32 %v7288, 0.0
    %v7321 = vmax.f32 %v7289, 0.0
    %v7322 = vmax.f32 %v7290, 0.0
    %v7323 = vmax.f32 %v7291, 0.0
    %v7324 = vmax.f32 %v7292, 0.0
    %v7325 = vmax.f32 %v7293, 0.0
    %v7326 = vmax.f32 %v7294, 0.0
    %v7327 = vmax.f32 %v7295, 0.0
    %v7328 = vmax.f32 %v7296, 0.0
    %v7329 = vmax.f32 %v7297, 0.0
    %v7330 = vmax.f32 %v7298, 0.0
    %v7331 = vmax.f32 %v7299, 0.0
    %v7332 = vmax.f32 %v7300, 0.0
    %v7333 = vmax.f32 %v7301, 0.0
    %v7334 = vmax.f32 %v7302, 0.0
    %v7335 = vmax.f32 %v7303, 0.0
    %v7336 = vmax.f32 %v7304, 0.0
    %7337 = vst.msk [vmem:[#allocation4] sm:$0xff] %vm66, %v7305
    %7338 = vst.msk [vmem:[#allocation4 + $0x8] sm:$0xff] %vm66, %v7306
    %7339 = vst.msk [vmem:[#allocation4 + $0x10] sm:$0xff] %vm66, %v7307
    %7340 = vst.msk [vmem:[#allocation4 + $0x18] sm:$0xff] %vm66, %v7308
    %7341 = vst.msk [vmem:[#allocation4 + $0x20] sm:$0xff] %vm66, %v7309
    %7342 = vst.msk [vmem:[#allocation4 + $0x28] sm:$0xff] %vm66, %v7310
    %7343 = vst.msk [vmem:[#allocation4 + $0x30] sm:$0xff] %vm66, %v7311
    %7344 = vst.msk [vmem:[#allocation4 + $0x38] sm:$0xff] %vm66, %v7312
    %7345 = vst.msk [vmem:[#allocation4 + $0x40] sm:$0xff] %vm66, %v7313
    %7346 = vst.msk [vmem:[#allocation4 + $0x48] sm:$0xff] %vm66, %v7314
    %7347 = vst.msk [vmem:[#allocation4 + $0x50] sm:$0xff] %vm66, %v7315
    %7348 = vst.msk [vmem:[#allocation4 + $0x58] sm:$0xff] %vm66, %v7316
    %7349 = vst.msk [vmem:[#allocation4 + $0x60] sm:$0xff] %vm66, %v7317
    %7350 = vst.msk [vmem:[#allocation4 + $0x68] sm:$0xff] %vm66, %v7318
    %7351 = vst.msk [vmem:[#allocation4 + $0x70] sm:$0xff] %vm66, %v7319
    %7352 = vst.msk [vmem:[#allocation4 + $0x78] sm:$0xff] %vm66, %v7320
    %7353 = vst.msk [vmem:[#allocation4 + $0x80] sm:$0xff] %vm66, %v7321
    %7354 = vst.msk [vmem:[#allocation4 + $0x88] sm:$0xff] %vm66, %v7322
    %7355 = vst.msk [vmem:[#allocation4 + $0x90] sm:$0xff] %vm66, %v7323
    %7356 = vst.msk [vmem:[#allocation4 + $0x98] sm:$0xff] %vm66, %v7324
    %7357 = vst.msk [vmem:[#allocation4 + $0xa0] sm:$0xff] %vm66, %v7325
    %7358 = vst.msk [vmem:[#allocation4 + $0xa8] sm:$0xff] %vm66, %v7326
    %7359 = vst.msk [vmem:[#allocation4 + $0xb0] sm:$0xff] %vm66, %v7327
    %7360 = vst.msk [vmem:[#allocation4 + $0xb8] sm:$0xff] %vm66, %v7328
    %7361 = vst.msk [vmem:[#allocation4 + $0xc0] sm:$0xff] %vm66, %v7329
    %7362 = vst.msk [vmem:[#allocation4 + $0xc8] sm:$0xff] %vm66, %v7330
    %7363 = vst.msk [vmem:[#allocation4 + $0xd0] sm:$0xff] %vm66, %v7331
    %7364 = vst.msk [vmem:[#allocation4 + $0xd8] sm:$0xff] %vm66, %v7332
    %7365 = vst.msk [vmem:[#allocation4 + $0xe0] sm:$0xff] %vm66, %v7333
    %7366 = vst.msk [vmem:[#allocation4 + $0xe8] sm:$0xff] %vm66, %v7334
    %7367 = vst.msk [vmem:[#allocation4 + $0xf0] sm:$0xff] %vm66, %v7335
    %7368 = vst.msk [vmem:[#allocation4 + $0xf8] sm:$0xff] %vm66, %v7336
    // Predicated region
    $region38: #{conv_block_se_forward.1} parent=1 // pred_check
      _
    $region39: #{conv_block_se_forward.1} parent=1 // pred_check_branch
      %7370 = sbr.rel (0) target = $region41
    $region40: #{conv_block_se_forward.1} parent=1 // pred_region
      %s7372 = ssub.s32 4096, 4096
      %7373 = vsyncadd [#allocation5], %s7372
      %s7374 = sshll.u32 [#allocation4], 4
      %s7375 = int_to_ptr.vmem [resolvable:$true] %s7374
      %7380 = dma.vmem_to_hbm [thread:$0]  %s7375, 4096, %s9, [#allocation5], 128, 128, 8
    $region41: #{conv_block_se_forward.1} parent=1 // pred_fallthru
      _
    // Predicated region
    $region42: #{conv_block_se_forward.1} parent=1 // pred_check
      _
    $region43: #{conv_block_se_forward.1} parent=1 // pred_check_branch
      %7382 = sbr.rel (0) target = $region45
    $region44: #{conv_block_se_forward.1} parent=1 // pred_region
      %7383 = dma.done [#allocation5], 4096
    $region45: #{conv_block_se_forward.1} parent=1 // pred_fallthru
      _
    %7384 = vsyncpa [#allocation5], 1

</llo_original>
